<compile_context>
chip_gen: v5e
topology: v5e:2x2
jax: 0.10.0
libtpu: 0.0.40
codegen_flags: <defaults>
</compile_context>

<pallas_src>
import functools

import jax
import jax.numpy as jnp
from jax.experimental import pallas as pl
from jax.experimental.pallas import tpu as pltpu


W_OFF = 8  # sublane-aligned column offset of the valid region in padded planes


def fused_gating_kernel(xp_ref, w1_ref, b1_ref, w2_ref, b2_ref, w3_ref, b3_ref,
                        wne_ref, bne_ref, pooled_ref,
                        h1s_ref, h2s_ref, p2_ref, p3_ref, *, H, W):
    """Per-batch-element conv1->conv2->conv3->noise->modulate->global-pool.

    xp_ref    : [HW, K1p]        bf16  conv1 im2col patches (K zero-padded)
    w1_ref    : [K1p, 64]        bf16  conv1 im2col weight
    w2_ref    : [576, 128]       bf16  conv2 im2col weight (tap-major)
    w3_ref    : [1152, 256]      bf16  conv3 im2col weight (tap-major)
    b*_ref    : [1, Cout]        f32
    wne_ref   : [1, 256] f32, bne_ref: [1, 1] f32   1x1 noise-estimator conv
    pooled_ref: [1, 256] f32     modulated global-average-pooled features
    h1s_ref   : [H+2, W+16, 64]  bf16 scratch (zero-haloed conv1 output plane)
    h2s_ref   : [H+2, W+16, 128] bf16 scratch (zero-haloed conv2 output plane)
    p2_ref    : [HW, 576]  bf16 scratch (conv2 im2col patches)
    p3_ref    : [HW, 1152] bf16 scratch (conv3 im2col patches)
    """
    HW = H * W

    def zero_halo(ref):
        # Only the 1-pixel halo that the conv taps read is zeroed; the interior
        # is fully overwritten every grid step.  (Done every step: scratch is
        # per-core persistent and the batch axis may split across TensorCores,
        # so a program_id==0 guard would be unsafe.)
        hp, wp, c = ref.shape
        z_row = jnp.zeros((1, wp, c), ref.dtype)
        ref[0:1, :, :] = z_row
        ref[H + 1:H + 2, :, :] = z_row
        z_col = jnp.zeros((hp, 1, c), ref.dtype)
        ref[:, W_OFF - 1:W_OFF, :] = z_col
        ref[:, W_OFF + W:W_OFF + W + 1, :] = z_col

    def gather_taps(src_ref, dst_ref):
        # In-kernel im2col: 9 shifted [H, W, C] bf16 reads of the padded plane,
        # packed along K so the following conv is ONE deep-K MXU matmul.
        c = src_ref.shape[-1]
        for t in range(9):
            dh, dw = divmod(t, 3)
            c0 = W_OFF - 1 + dw
            dst_ref[:, t * c:(t + 1) * c] = (
                src_ref[dh:dh + H, c0:c0 + W, :].reshape(HW, c))

    zero_halo(h1s_ref)
    zero_halo(h2s_ref)

    # conv1 + ReLU: single K=9*Cin (zero-padded) MXU matmul on wrapper patches.
    h1 = jnp.maximum(
        jnp.dot(xp_ref[...], w1_ref[...], preferred_element_type=jnp.float32)
        + b1_ref[...], 0.0)
    h1s_ref[1:H + 1, W_OFF:W_OFF + W, :] = (
        h1.astype(jnp.bfloat16).reshape(H, W, 64))

    # conv2 + ReLU: im2col (K = 9*64 = 576) -> single MXU matmul.
    gather_taps(h1s_ref, p2_ref)
    h2 = jnp.maximum(
        jnp.dot(p2_ref[...], w2_ref[...], preferred_element_type=jnp.float32)
        + b2_ref[...], 0.0)
    h2s_ref[1:H + 1, W_OFF:W_OFF + W, :] = (
        h2.astype(jnp.bfloat16).reshape(H, W, 128))

    # conv3 + ReLU: im2col (K = 9*128 = 1152) -> single MXU matmul.  f32 head.
    gather_taps(h2s_ref, p3_ref)
    feat = jnp.maximum(
        jnp.dot(p3_ref[...], w3_ref[...], preferred_element_type=jnp.float32)
        + b3_ref[...], 0.0)                                          # [HW, 256]

    # 1x1-conv noise estimator (single output channel), modulation and global
    # average pool, fused on the f32 feature tile:
    #   noise    = feat @ wne^T + bne                    (row-form wne, lane reduce)
    #   pooled   = mean_HW(feat * (1 + noise))
    noise = (jnp.sum(feat * wne_ref[...], axis=1, keepdims=True)
             + bne_ref[...])                                         # [HW, 1]
    pooled = jnp.sum(feat * (1.0 + noise), axis=0, keepdims=True) * (1.0 / HW)
    pooled_ref[...] = pooled


def _im2col_3x3(x_nhwc):
    """[B,H,W,C] -> tap-major 'same'-conv patches [B, H*W, 9*C]."""
    B, H, W, C = x_nhwc.shape
    xp = jnp.pad(x_nhwc, ((0, 0), (1, 1), (1, 1), (0, 0)))
    taps = [xp[:, dh:dh + H, dw:dw + W, :]
            for dh in range(3) for dw in range(3)]
    return jnp.concatenate(taps, axis=-1).reshape(B, H * W, 9 * C)


def _fused_forward_features(x_nhwc, params):
    """x_nhwc: [B,H,W,Cin] f32 -> modulated, global-avg-pooled features [B,256]."""
    B, H, W, Cin = x_nhwc.shape
    HW = H * W

    # conv1 im2col in the wrapper (input is tiny), K zero-padded to a 128
    # multiple so the first MXU operand is lane-dense and aligned.
    K1 = 9 * Cin
    K1p = ((K1 + 127) // 128) * 128
    xpatch = _im2col_3x3(x_nhwc).astype(jnp.bfloat16)          # [B, HW, 9*Cin]
    xpatch = jnp.pad(xpatch, ((0, 0), (0, 0), (0, K1p - K1)))
    # Tap-major im2col weight layout; a torch Conv2d weight [Cout,Cin,3,3] maps
    # to w[t, c, o] = w_torch[o, c, t//3, t%3], flattened K index = t*Cin + c.
    w1f = jnp.pad(params["w1"].reshape(K1, 64), ((0, K1p - K1), (0, 0)))
    w2f = params["w2"].reshape(9 * 64, 128)
    w3f = params["w3"].reshape(9 * 128, 256)

    kernel = functools.partial(fused_gating_kernel, H=H, W=W)
    pooled = pl.pallas_call(
        kernel,
        out_shape=jax.ShapeDtypeStruct((B, 1, 256), jnp.float32),
        grid=(B,),
        in_specs=[
            pl.BlockSpec((None, HW, K1p), lambda b: (b, 0, 0)),   # conv1 patches
            # TODO(synk): pipeline_mode=pl.Buffered(1) on the grid-invariant
            # weights below would save ~0.7 MiB of double-buffered VMEM (v7x).
            pl.BlockSpec((K1p, 64), lambda b: (0, 0)),            # w1 (im2col)
            pl.BlockSpec((1, 64), lambda b: (0, 0)),              # b1
            pl.BlockSpec((9 * 64, 128), lambda b: (0, 0)),        # w2 (im2col)
            pl.BlockSpec((1, 128), lambda b: (0, 0)),             # b2
            pl.BlockSpec((9 * 128, 256), lambda b: (0, 0)),       # w3 (im2col)
            pl.BlockSpec((1, 256), lambda b: (0, 0)),             # b3
            pl.BlockSpec((1, 256), lambda b: (0, 0)),             # wne (row form)
            pl.BlockSpec((1, 1), lambda b: (0, 0)),               # bne
        ],
        out_specs=pl.BlockSpec((None, 1, 256), lambda b: (b, 0, 0)),
        scratch_shapes=[
            pltpu.VMEM((H + 2, W + 16, 64), jnp.bfloat16),    # padded h1 plane
            pltpu.VMEM((H + 2, W + 16, 128), jnp.bfloat16),   # padded h2 plane
            pltpu.VMEM((HW, 9 * 64), jnp.bfloat16),           # conv2 patches
            pltpu.VMEM((HW, 9 * 128), jnp.bfloat16),          # conv3 patches
        ],
        compiler_params=pltpu.CompilerParams(
            dimension_semantics=("parallel",),
            vmem_limit_bytes=64 * 1024 * 1024),
    )(xpatch, w1f, params["b1"], w2f, params["b2"], w3f, params["b3"],
      params["wne"], params["bne"])
    return pooled[:, 0, :]


# ----------------------------------------------------------------------------
# Parameter init (deterministic, synthetic) and forward wrapper
# ----------------------------------------------------------------------------
def init_params(key, input_channels, expert_num):
    ks = jax.random.split(key, 12)

    def conv_w(k, cin, cout):
        scale = 1.0 / jnp.sqrt(jnp.float32(cin * 9))
        w = jax.random.normal(k, (9, cin, cout), jnp.float32) * scale
        return w.astype(jnp.bfloat16)      # bf16 MXU operands, f32 accumulation

    def lin_w(k, cin, cout):
        scale = 1.0 / jnp.sqrt(jnp.float32(cin))
        return jax.random.normal(k, (cin, cout), jnp.float32) * scale

    return {
        "w1": conv_w(ks[0], input_channels, 64),
        "b1": jax.random.normal(ks[1], (1, 64), jnp.float32) * 0.01,
        "w2": conv_w(ks[2], 64, 128),
        "b2": jax.random.normal(ks[3], (1, 128), jnp.float32) * 0.01,
        "w3": conv_w(ks[4], 128, 256),
        "b3": jax.random.normal(ks[5], (1, 256), jnp.float32) * 0.01,
        # 1x1 noise-estimator conv (Cout=1), stored in row form [1, 256].
        "wne": jax.random.normal(ks[6], (1, 256), jnp.float32) / 16.0,
        "bne": jax.random.normal(ks[7], (1, 1), jnp.float32) * 0.01,
        "wg": lin_w(ks[8], 256, expert_num),
        "bg": jax.random.normal(ks[9], (1, expert_num), jnp.float32) * 0.01,
        "wn": lin_w(ks[10], 256, expert_num),
        "bn": jax.random.normal(ks[11], (1, expert_num), jnp.float32) * 0.01,
    }


@functools.partial(jax.jit, static_argnames=("expert_num", "top_k",
                                             "noise_epsilon", "train"))
def noisy_topk_gating_forward(params, x_nchw, noise_key, *, expert_num, top_k,
                              noise_epsilon=0.01, train=True):
    # PyTorch NCHW -> NHWC for the TPU kernel.
    x = jnp.transpose(x_nchw, (0, 2, 3, 1)).astype(jnp.float32)
    B = x.shape[0]

    pooled = _fused_forward_features(x, params)                     # [B, 256]

    # fc_gate / fc_noise as ONE batched [B,256] x [256,2E] matmul (tiny; plain
    # XLA per the perf review -- lane-dense weights, no tiny masked MXU work).
    wgn = jnp.concatenate([params["wg"], params["wn"]], axis=1)     # [256, 2E]
    bgn = jnp.concatenate([params["bg"], params["bn"]], axis=1)     # [1, 2E]
    both = pooled @ wgn + bgn
    clean_logits = both[:, :expert_num]
    raw_noise = both[:, expert_num:]

    if train:
        noise_stddev = jax.nn.softplus(raw_noise) + noise_epsilon
        eps = jax.random.normal(noise_key, clean_logits.shape, jnp.float32)
        logits = clean_logits + eps * noise_stddev
    else:
        logits = clean_logits

    # Tiny [B, E] post-processing in plain JAX.
    k1 = min(top_k + 1, expert_num)
    top_logits, top_indices = jax.lax.top_k(logits, k1)
    top_k_logits = top_logits[:, :top_k]
    top_k_indices = top_indices[:, :top_k]
    top_k_gates = jax.nn.softmax(top_k_logits, axis=1)

    gates = jnp.zeros_like(logits)
    rows = jnp.arange(B)[:, None]
    gates = gates.at[rows, top_k_indices].set(top_k_gates)
    # Spec's _gates_to_load is literally gates.sum(0) (sum of probabilities).
    load = gates.sum(axis=0)
    return gates, load


if __name__ == "__main__":
    B, C, H, W = 2, 4, 16, 16
    expert_num, top_k = 8, 2

    key = jax.random.PRNGKey(0)
    pkey, xkey, nkey = jax.random.split(key, 3)

    params = init_params(pkey, C, expert_num)
    x = jax.random.normal(xkey, (B, C, H, W), jnp.float32)

    gates, load = noisy_topk_gating_forward(
        params, x, nkey, expert_num=expert_num, top_k=top_k, train=True)
    gates = jax.block_until_ready(gates)
    load = jax.block_until_ready(load)

    assert gates.shape == (B, expert_num), gates.shape
    assert load.shape == (expert_num,), load.shape
    # Each row's top-k gates are softmaxed -> row sums to 1; load sums to B.
    assert jnp.allclose(jnp.sum(gates, axis=1), 1.0, atol=1e-5)
    assert jnp.allclose(jnp.sum(load), float(B), atol=1e-4)
    assert int(jnp.sum(gates > 0)) == B * top_k

    print("KERNEL_OK")
</pallas_src>

<mosaic_0001>
module attributes {stable_mosaic.version = 11 : i64} {
  func.func @fused_gating_kernel(%arg0: i32, %arg1: memref<1x256x128xbf16, #tpu.memory_space<vmem>>, %arg2: memref<128x64xbf16, #tpu.memory_space<vmem>>, %arg3: memref<1x64xf32, #tpu.memory_space<vmem>>, %arg4: memref<576x128xbf16, #tpu.memory_space<vmem>>, %arg5: memref<1x128xf32, #tpu.memory_space<vmem>>, %arg6: memref<1152x256xbf16, #tpu.memory_space<vmem>>, %arg7: memref<1x256xf32, #tpu.memory_space<vmem>>, %arg8: memref<1x256xf32, #tpu.memory_space<vmem>>, %arg9: memref<1x1xf32, #tpu.memory_space<vmem>>, %arg10: memref<1x1x256xf32, #tpu.memory_space<vmem>>, %arg11: memref<18x32x64xbf16, #tpu.memory_space<vmem>>, %arg12: memref<18x32x128xbf16, #tpu.memory_space<vmem>>, %arg13: memref<256x576xbf16, #tpu.memory_space<vmem>>, %arg14: memref<256x1152xbf16, #tpu.memory_space<vmem>>) attributes {dimension_semantics = [#tpu.dimension_semantics<parallel>], iteration_bounds = array<i64: 2>, scalar_prefetch = 0 : i64, scratch_operands = 4 : i64, tpu.core_type = #tpu.core_type<tc>, window_params = [{transform_indices = @transform_0, window_bounds = array<i64: 1, 256, 128>}, {pipeline_mode = #tpu.pipeline_mode<synchronous>, transform_indices = @transform_1, window_bounds = array<i64: 128, 64>}, {pipeline_mode = #tpu.pipeline_mode<synchronous>, transform_indices = @transform_2, window_bounds = array<i64: 1, 64>}, {pipeline_mode = #tpu.pipeline_mode<synchronous>, transform_indices = @transform_3, window_bounds = array<i64: 576, 128>}, {pipeline_mode = #tpu.pipeline_mode<synchronous>, transform_indices = @transform_4, window_bounds = array<i64: 1, 128>}, {pipeline_mode = #tpu.pipeline_mode<synchronous>, transform_indices = @transform_5, window_bounds = array<i64: 1152, 256>}, {pipeline_mode = #tpu.pipeline_mode<synchronous>, transform_indices = @transform_6, window_bounds = array<i64: 1, 256>}, {pipeline_mode = #tpu.pipeline_mode<synchronous>, transform_indices = @transform_7, window_bounds = array<i64: 1, 256>}, {pipeline_mode = #tpu.pipeline_mode<synchronous>, transform_indices = @transform_8, window_bounds = array<i64: 1, 1>}, {transform_indices = @transform_9, window_bounds = array<i64: 1, 1, 256>}]} {
    %cst = arith.constant 0.000000e+00 : bf16
    %0 = vector.broadcast %cst : bf16 to vector<1x32x64xbf16>
    %c0 = arith.constant 0 : index
    %c0_0 = arith.constant 0 : index
    %c0_1 = arith.constant 0 : index
    %1 = vector.load %arg11[%c0, %c0_0, %c0_1] : memref<18x32x64xbf16, #tpu.memory_space<vmem>>, vector<1x32x64xbf16>
    tpu.vector_store %arg11[%c0, %c0_0, %c0_1], %0 {strides = array<i32>} : memref<18x32x64xbf16, #tpu.memory_space<vmem>>, vector<1x32x64xbf16>,
    %c17 = arith.constant 17 : index
    %c0_2 = arith.constant 0 : index
    %c0_3 = arith.constant 0 : index
    %2 = vector.load %arg11[%c17, %c0_2, %c0_3] : memref<18x32x64xbf16, #tpu.memory_space<vmem>>, vector<1x32x64xbf16>
    tpu.vector_store %arg11[%c17, %c0_2, %c0_3], %0 {strides = array<i32>} : memref<18x32x64xbf16, #tpu.memory_space<vmem>>, vector<1x32x64xbf16>,
    %cst_4 = arith.constant 0.000000e+00 : bf16
    %3 = vector.broadcast %cst_4 : bf16 to vector<18x1x64xbf16>
    %c0_5 = arith.constant 0 : index
    %c7 = arith.constant 7 : index
    %c0_6 = arith.constant 0 : index
    %4 = vector.load %arg11[%c0_5, %c7, %c0_6] : memref<18x32x64xbf16, #tpu.memory_space<vmem>>, vector<18x1x64xbf16>
    tpu.vector_store %arg11[%c0_5, %c7, %c0_6], %3 {strides = array<i32>} : memref<18x32x64xbf16, #tpu.memory_space<vmem>>, vector<18x1x64xbf16>,
    %c0_7 = arith.constant 0 : index
    %c24 = arith.constant 24 : index
    %c0_8 = arith.constant 0 : index
    %5 = vector.load %arg11[%c0_7, %c24, %c0_8] : memref<18x32x64xbf16, #tpu.memory_space<vmem>>, vector<18x1x64xbf16>
    tpu.vector_store %arg11[%c0_7, %c24, %c0_8], %3 {strides = array<i32>} : memref<18x32x64xbf16, #tpu.memory_space<vmem>>, vector<18x1x64xbf16>,
    %cst_9 = arith.constant 0.000000e+00 : bf16
    %6 = vector.broadcast %cst_9 : bf16 to vector<1x32x128xbf16>
    %c0_10 = arith.constant 0 : index
    %c0_11 = arith.constant 0 : index
    %c0_12 = arith.constant 0 : index
    %7 = vector.load %arg12[%c0_10, %c0_11, %c0_12] : memref<18x32x128xbf16, #tpu.memory_space<vmem>>, vector<1x32x128xbf16>
    tpu.vector_store %arg12[%c0_10, %c0_11, %c0_12], %6 {strides = array<i32>} : memref<18x32x128xbf16, #tpu.memory_space<vmem>>, vector<1x32x128xbf16>,
    %c17_13 = arith.constant 17 : index
    %c0_14 = arith.constant 0 : index
    %c0_15 = arith.constant 0 : index
    %8 = vector.load %arg12[%c17_13, %c0_14, %c0_15] : memref<18x32x128xbf16, #tpu.memory_space<vmem>>, vector<1x32x128xbf16>
    tpu.vector_store %arg12[%c17_13, %c0_14, %c0_15], %6 {strides = array<i32>} : memref<18x32x128xbf16, #tpu.memory_space<vmem>>, vector<1x32x128xbf16>,
    %cst_16 = arith.constant 0.000000e+00 : bf16
    %9 = vector.broadcast %cst_16 : bf16 to vector<18x1x128xbf16>
    %c0_17 = arith.constant 0 : index
    %c7_18 = arith.constant 7 : index
    %c0_19 = arith.constant 0 : index
    %10 = vector.load %arg12[%c0_17, %c7_18, %c0_19] : memref<18x32x128xbf16, #tpu.memory_space<vmem>>, vector<18x1x128xbf16>
    tpu.vector_store %arg12[%c0_17, %c7_18, %c0_19], %9 {strides = array<i32>} : memref<18x32x128xbf16, #tpu.memory_space<vmem>>, vector<18x1x128xbf16>,
    %c0_20 = arith.constant 0 : index
    %c24_21 = arith.constant 24 : index
    %c0_22 = arith.constant 0 : index
    %11 = vector.load %arg12[%c0_20, %c24_21, %c0_22] : memref<18x32x128xbf16, #tpu.memory_space<vmem>>, vector<18x1x128xbf16>
    tpu.vector_store %arg12[%c0_20, %c24_21, %c0_22], %9 {strides = array<i32>} : memref<18x32x128xbf16, #tpu.memory_space<vmem>>, vector<18x1x128xbf16>,
    %c0_23 = arith.constant 0 : index
    %c0_24 = arith.constant 0 : index
    %c0_25 = arith.constant 0 : index
    %12 = vector.load %arg1[%c0_23, %c0_24, %c0_25] : memref<1x256x128xbf16, #tpu.memory_space<vmem>>, vector<1x256x128xbf16>
    %13 = vector.shape_cast %12 : vector<1x256x128xbf16> to vector<256x128xbf16>
    %c0_26 = arith.constant 0 : index
    %c0_27 = arith.constant 0 : index
    %14 = vector.load %arg2[%c0_26, %c0_27] : memref<128x64xbf16, #tpu.memory_space<vmem>>, vector<128x64xbf16>
    %cst_28 = arith.constant dense<0.000000e+00> : vector<256x64xf32>
    %15 = tpu.matmul %13, %14, %cst_28 {dimension_numbers = #tpu.dot_dimension_numbers<[1], [0], [0], [1], [0, 0, 1, 1], [], []>} : vector<256x128xbf16>, vector<128x64xbf16>, vector<256x64xf32> -> vector<256x64xf32>
    %c0_29 = arith.constant 0 : index
    %c0_30 = arith.constant 0 : index
    %16 = vector.load %arg3[%c0_29, %c0_30] : memref<1x64xf32, #tpu.memory_space<vmem>>, vector<1x64xf32>
    %17 = vector.broadcast %16 : vector<1x64xf32> to vector<256x64xf32>
    %18 = arith.addf %15, %17 : vector<256x64xf32>
    %cst_31 = arith.constant 0.000000e+00 : f32
    %19 = vector.broadcast %cst_31 : f32 to vector<256x64xf32>
    %20 = arith.maximumf %18, %19 : vector<256x64xf32>
    %21 = arith.truncf %20 : vector<256x64xf32> to vector<256x64xbf16>
    %22 = vector.shape_cast %21 : vector<256x64xbf16> to vector<16x16x64xbf16>
    %c1 = arith.constant 1 : index
    %c8 = arith.constant 8 : index
    %c0_32 = arith.constant 0 : index
    %23 = vector.load %arg11[%c1, %c8, %c0_32] : memref<18x32x64xbf16, #tpu.memory_space<vmem>>, vector<16x16x64xbf16>
    tpu.vector_store %arg11[%c1, %c8, %c0_32], %22 {strides = array<i32>} : memref<18x32x64xbf16, #tpu.memory_space<vmem>>, vector<16x16x64xbf16>,
    %c0_33 = arith.constant 0 : index
    %c7_34 = arith.constant 7 : index
    %c0_35 = arith.constant 0 : index
    %24 = vector.load %arg11[%c0_33, %c7_34, %c0_35] : memref<18x32x64xbf16, #tpu.memory_space<vmem>>, vector<16x16x64xbf16>
    %25 = vector.shape_cast %24 : vector<16x16x64xbf16> to vector<256x64xbf16>
    %c0_36 = arith.constant 0 : index
    %c0_37 = arith.constant 0 : index
    %26 = vector.load %arg13[%c0_36, %c0_37] : memref<256x576xbf16, #tpu.memory_space<vmem>>, vector<256x64xbf16>
    tpu.vector_store %arg13[%c0_36, %c0_37], %25 {strides = array<i32>} : memref<256x576xbf16, #tpu.memory_space<vmem>>, vector<256x64xbf16>,
    %c0_38 = arith.constant 0 : index
    %c8_39 = arith.constant 8 : index
    %c0_40 = arith.constant 0 : index
    %27 = vector.load %arg11[%c0_38, %c8_39, %c0_40] : memref<18x32x64xbf16, #tpu.memory_space<vmem>>, vector<16x16x64xbf16>
    %28 = vector.shape_cast %27 : vector<16x16x64xbf16> to vector<256x64xbf16>
    %c0_41 = arith.constant 0 : index
    %c64 = arith.constant 64 : index
    %29 = vector.load %arg13[%c0_41, %c64] : memref<256x576xbf16, #tpu.memory_space<vmem>>, vector<256x64xbf16>
    tpu.vector_store %arg13[%c0_41, %c64], %28 {strides = array<i32>} : memref<256x576xbf16, #tpu.memory_space<vmem>>, vector<256x64xbf16>,
    %c0_42 = arith.constant 0 : index
    %c9 = arith.constant 9 : index
    %c0_43 = arith.constant 0 : index
    %30 = vector.load %arg11[%c0_42, %c9, %c0_43] : memref<18x32x64xbf16, #tpu.memory_space<vmem>>, vector<16x16x64xbf16>
    %31 = vector.shape_cast %30 : vector<16x16x64xbf16> to vector<256x64xbf16>
    %c0_44 = arith.constant 0 : index
    %c128 = arith.constant 128 : index
    %32 = vector.load %arg13[%c0_44, %c128] : memref<256x576xbf16, #tpu.memory_space<vmem>>, vector<256x64xbf16>
    tpu.vector_store %arg13[%c0_44, %c128], %31 {strides = array<i32>} : memref<256x576xbf16, #tpu.memory_space<vmem>>, vector<256x64xbf16>,
    %c1_45 = arith.constant 1 : index
    %c7_46 = arith.constant 7 : index
    %c0_47 = arith.constant 0 : index
    %33 = vector.load %arg11[%c1_45, %c7_46, %c0_47] : memref<18x32x64xbf16, #tpu.memory_space<vmem>>, vector<16x16x64xbf16>
    %34 = vector.shape_cast %33 : vector<16x16x64xbf16> to vector<256x64xbf16>
    %c0_48 = arith.constant 0 : index
    %c192 = arith.constant 192 : index
    %35 = vector.load %arg13[%c0_48, %c192] : memref<256x576xbf16, #tpu.memory_space<vmem>>, vector<256x64xbf16>
    tpu.vector_store %arg13[%c0_48, %c192], %34 {strides = array<i32>} : memref<256x576xbf16, #tpu.memory_space<vmem>>, vector<256x64xbf16>,
    %c1_49 = arith.constant 1 : index
    %c8_50 = arith.constant 8 : index
    %c0_51 = arith.constant 0 : index
    %36 = vector.load %arg11[%c1_49, %c8_50, %c0_51] : memref<18x32x64xbf16, #tpu.memory_space<vmem>>, vector<16x16x64xbf16>
    %37 = vector.shape_cast %36 : vector<16x16x64xbf16> to vector<256x64xbf16>
    %c0_52 = arith.constant 0 : index
    %c256 = arith.constant 256 : index
    %38 = vector.load %arg13[%c0_52, %c256] : memref<256x576xbf16, #tpu.memory_space<vmem>>, vector<256x64xbf16>
    tpu.vector_store %arg13[%c0_52, %c256], %37 {strides = array<i32>} : memref<256x576xbf16, #tpu.memory_space<vmem>>, vector<256x64xbf16>,
    %c1_53 = arith.constant 1 : index
    %c9_54 = arith.constant 9 : index
    %c0_55 = arith.constant 0 : index
    %39 = vector.load %arg11[%c1_53, %c9_54, %c0_55] : memref<18x32x64xbf16, #tpu.memory_space<vmem>>, vector<16x16x64xbf16>
    %40 = vector.shape_cast %39 : vector<16x16x64xbf16> to vector<256x64xbf16>
    %c0_56 = arith.constant 0 : index
    %c320 = arith.constant 320 : index
    %41 = vector.load %arg13[%c0_56, %c320] : memref<256x576xbf16, #tpu.memory_space<vmem>>, vector<256x64xbf16>
    tpu.vector_store %arg13[%c0_56, %c320], %40 {strides = array<i32>} : memref<256x576xbf16, #tpu.memory_space<vmem>>, vector<256x64xbf16>,
    %c2 = arith.constant 2 : index
    %c7_57 = arith.constant 7 : index
    %c0_58 = arith.constant 0 : index
    %42 = vector.load %arg11[%c2, %c7_57, %c0_58] : memref<18x32x64xbf16, #tpu.memory_space<vmem>>, vector<16x16x64xbf16>
    %43 = vector.shape_cast %42 : vector<16x16x64xbf16> to vector<256x64xbf16>
    %c0_59 = arith.constant 0 : index
    %c384 = arith.constant 384 : index
    %44 = vector.load %arg13[%c0_59, %c384] : memref<256x576xbf16, #tpu.memory_space<vmem>>, vector<256x64xbf16>
    tpu.vector_store %arg13[%c0_59, %c384], %43 {strides = array<i32>} : memref<256x576xbf16, #tpu.memory_space<vmem>>, vector<256x64xbf16>,
    %c2_60 = arith.constant 2 : index
    %c8_61 = arith.constant 8 : index
    %c0_62 = arith.constant 0 : index
    %45 = vector.load %arg11[%c2_60, %c8_61, %c0_62] : memref<18x32x64xbf16, #tpu.memory_space<vmem>>, vector<16x16x64xbf16>
    %46 = vector.shape_cast %45 : vector<16x16x64xbf16> to vector<256x64xbf16>
    %c0_63 = arith.constant 0 : index
    %c448 = arith.constant 448 : index
    %47 = vector.load %arg13[%c0_63, %c448] : memref<256x576xbf16, #tpu.memory_space<vmem>>, vector<256x64xbf16>
    tpu.vector_store %arg13[%c0_63, %c448], %46 {strides = array<i32>} : memref<256x576xbf16, #tpu.memory_space<vmem>>, vector<256x64xbf16>,
    %c2_64 = arith.constant 2 : index
    %c9_65 = arith.constant 9 : index
    %c0_66 = arith.constant 0 : index
    %48 = vector.load %arg11[%c2_64, %c9_65, %c0_66] : memref<18x32x64xbf16, #tpu.memory_space<vmem>>, vector<16x16x64xbf16>
    %49 = vector.shape_cast %48 : vector<16x16x64xbf16> to vector<256x64xbf16>
    %c0_67 = arith.constant 0 : index
    %c512 = arith.constant 512 : index
    %50 = vector.load %arg13[%c0_67, %c512] : memref<256x576xbf16, #tpu.memory_space<vmem>>, vector<256x64xbf16>
    tpu.vector_store %arg13[%c0_67, %c512], %49 {strides = array<i32>} : memref<256x576xbf16, #tpu.memory_space<vmem>>, vector<256x64xbf16>,
    %c0_68 = arith.constant 0 : index
    %c0_69 = arith.constant 0 : index
    %51 = vector.load %arg13[%c0_68, %c0_69] : memref<256x576xbf16, #tpu.memory_space<vmem>>, vector<256x576xbf16>
    %c0_70 = arith.constant 0 : index
    %c0_71 = arith.constant 0 : index
    %52 = vector.load %arg4[%c0_70, %c0_71] : memref<576x128xbf16, #tpu.memory_space<vmem>>, vector<576x128xbf16>
    %cst_72 = arith.constant dense<0.000000e+00> : vector<256x128xf32>
    %53 = tpu.matmul %51, %52, %cst_72 {dimension_numbers = #tpu.dot_dimension_numbers<[1], [0], [0], [1], [0, 0, 1, 1], [], []>} : vector<256x576xbf16>, vector<576x128xbf16>, vector<256x128xf32> -> vector<256x128xf32>
    %c0_73 = arith.constant 0 : index
    %c0_74 = arith.constant 0 : index
    %54 = vector.load %arg5[%c0_73, %c0_74] : memref<1x128xf32, #tpu.memory_space<vmem>>, vector<1x128xf32>
    %55 = vector.broadcast %54 : vector<1x128xf32> to vector<256x128xf32>
    %56 = arith.addf %53, %55 : vector<256x128xf32>
    %cst_75 = arith.constant 0.000000e+00 : f32
    %57 = vector.broadcast %cst_75 : f32 to vector<256x128xf32>
    %58 = arith.maximumf %56, %57 : vector<256x128xf32>
    %59 = arith.truncf %58 : vector<256x128xf32> to vector<256x128xbf16>
    %60 = vector.shape_cast %59 : vector<256x128xbf16> to vector<16x16x128xbf16>
    %c1_76 = arith.constant 1 : index
    %c8_77 = arith.constant 8 : index
    %c0_78 = arith.constant 0 : index
    %61 = vector.load %arg12[%c1_76, %c8_77, %c0_78] : memref<18x32x128xbf16, #tpu.memory_space<vmem>>, vector<16x16x128xbf16>
    tpu.vector_store %arg12[%c1_76, %c8_77, %c0_78], %60 {strides = array<i32>} : memref<18x32x128xbf16, #tpu.memory_space<vmem>>, vector<16x16x128xbf16>,
    %c0_79 = arith.constant 0 : index
    %c7_80 = arith.constant 7 : index
    %c0_81 = arith.constant 0 : index
    %62 = vector.load %arg12[%c0_79, %c7_80, %c0_81] : memref<18x32x128xbf16, #tpu.memory_space<vmem>>, vector<16x16x128xbf16>
    %63 = vector.shape_cast %62 : vector<16x16x128xbf16> to vector<256x128xbf16>
    %c0_82 = arith.constant 0 : index
    %c0_83 = arith.constant 0 : index
    %64 = vector.load %arg14[%c0_82, %c0_83] : memref<256x1152xbf16, #tpu.memory_space<vmem>>, vector<256x128xbf16>
    tpu.vector_store %arg14[%c0_82, %c0_83], %63 {strides = array<i32>} : memref<256x1152xbf16, #tpu.memory_space<vmem>>, vector<256x128xbf16>,
    %c0_84 = arith.constant 0 : index
    %c8_85 = arith.constant 8 : index
    %c0_86 = arith.constant 0 : index
    %65 = vector.load %arg12[%c0_84, %c8_85, %c0_86] : memref<18x32x128xbf16, #tpu.memory_space<vmem>>, vector<16x16x128xbf16>
    %66 = vector.shape_cast %65 : vector<16x16x128xbf16> to vector<256x128xbf16>
    %c0_87 = arith.constant 0 : index
    %c128_88 = arith.constant 128 : index
    %67 = vector.load %arg14[%c0_87, %c128_88] : memref<256x1152xbf16, #tpu.memory_space<vmem>>, vector<256x128xbf16>
    tpu.vector_store %arg14[%c0_87, %c128_88], %66 {strides = array<i32>} : memref<256x1152xbf16, #tpu.memory_space<vmem>>, vector<256x128xbf16>,
    %c0_89 = arith.constant 0 : index
    %c9_90 = arith.constant 9 : index
    %c0_91 = arith.constant 0 : index
    %68 = vector.load %arg12[%c0_89, %c9_90, %c0_91] : memref<18x32x128xbf16, #tpu.memory_space<vmem>>, vector<16x16x128xbf16>
    %69 = vector.shape_cast %68 : vector<16x16x128xbf16> to vector<256x128xbf16>
    %c0_92 = arith.constant 0 : index
    %c256_93 = arith.constant 256 : index
    %70 = vector.load %arg14[%c0_92, %c256_93] : memref<256x1152xbf16, #tpu.memory_space<vmem>>, vector<256x128xbf16>
    tpu.vector_store %arg14[%c0_92, %c256_93], %69 {strides = array<i32>} : memref<256x1152xbf16, #tpu.memory_space<vmem>>, vector<256x128xbf16>,
    %c1_94 = arith.constant 1 : index
    %c7_95 = arith.constant 7 : index
    %c0_96 = arith.constant 0 : index
    %71 = vector.load %arg12[%c1_94, %c7_95, %c0_96] : memref<18x32x128xbf16, #tpu.memory_space<vmem>>, vector<16x16x128xbf16>
    %72 = vector.shape_cast %71 : vector<16x16x128xbf16> to vector<256x128xbf16>
    %c0_97 = arith.constant 0 : index
    %c384_98 = arith.constant 384 : index
    %73 = vector.load %arg14[%c0_97, %c384_98] : memref<256x1152xbf16, #tpu.memory_space<vmem>>, vector<256x128xbf16>
    tpu.vector_store %arg14[%c0_97, %c384_98], %72 {strides = array<i32>} : memref<256x1152xbf16, #tpu.memory_space<vmem>>, vector<256x128xbf16>,
    %c1_99 = arith.constant 1 : index
    %c8_100 = arith.constant 8 : index
    %c0_101 = arith.constant 0 : index
    %74 = vector.load %arg12[%c1_99, %c8_100, %c0_101] : memref<18x32x128xbf16, #tpu.memory_space<vmem>>, vector<16x16x128xbf16>
    %75 = vector.shape_cast %74 : vector<16x16x128xbf16> to vector<256x128xbf16>
    %c0_102 = arith.constant 0 : index
    %c512_103 = arith.constant 512 : index
    %76 = vector.load %arg14[%c0_102, %c512_103] : memref<256x1152xbf16, #tpu.memory_space<vmem>>, vector<256x128xbf16>
    tpu.vector_store %arg14[%c0_102, %c512_103], %75 {strides = array<i32>} : memref<256x1152xbf16, #tpu.memory_space<vmem>>, vector<256x128xbf16>,
    %c1_104 = arith.constant 1 : index
    %c9_105 = arith.constant 9 : index
    %c0_106 = arith.constant 0 : index
    %77 = vector.load %arg12[%c1_104, %c9_105, %c0_106] : memref<18x32x128xbf16, #tpu.memory_space<vmem>>, vector<16x16x128xbf16>
    %78 = vector.shape_cast %77 : vector<16x16x128xbf16> to vector<256x128xbf16>
    %c0_107 = arith.constant 0 : index
    %c640 = arith.constant 640 : index
    %79 = vector.load %arg14[%c0_107, %c640] : memref<256x1152xbf16, #tpu.memory_space<vmem>>, vector<256x128xbf16>
    tpu.vector_store %arg14[%c0_107, %c640], %78 {strides = array<i32>} : memref<256x1152xbf16, #tpu.memory_space<vmem>>, vector<256x128xbf16>,
    %c2_108 = arith.constant 2 : index
    %c7_109 = arith.constant 7 : index
    %c0_110 = arith.constant 0 : index
    %80 = vector.load %arg12[%c2_108, %c7_109, %c0_110] : memref<18x32x128xbf16, #tpu.memory_space<vmem>>, vector<16x16x128xbf16>
    %81 = vector.shape_cast %80 : vector<16x16x128xbf16> to vector<256x128xbf16>
    %c0_111 = arith.constant 0 : index
    %c768 = arith.constant 768 : index
    %82 = vector.load %arg14[%c0_111, %c768] : memref<256x1152xbf16, #tpu.memory_space<vmem>>, vector<256x128xbf16>
    tpu.vector_store %arg14[%c0_111, %c768], %81 {strides = array<i32>} : memref<256x1152xbf16, #tpu.memory_space<vmem>>, vector<256x128xbf16>,
    %c2_112 = arith.constant 2 : index
    %c8_113 = arith.constant 8 : index
    %c0_114 = arith.constant 0 : index
    %83 = vector.load %arg12[%c2_112, %c8_113, %c0_114] : memref<18x32x128xbf16, #tpu.memory_space<vmem>>, vector<16x16x128xbf16>
    %84 = vector.shape_cast %83 : vector<16x16x128xbf16> to vector<256x128xbf16>
    %c0_115 = arith.constant 0 : index
    %c896 = arith.constant 896 : index
    %85 = vector.load %arg14[%c0_115, %c896] : memref<256x1152xbf16, #tpu.memory_space<vmem>>, vector<256x128xbf16>
    tpu.vector_store %arg14[%c0_115, %c896], %84 {strides = array<i32>} : memref<256x1152xbf16, #tpu.memory_space<vmem>>, vector<256x128xbf16>,
    %c2_116 = arith.constant 2 : index
    %c9_117 = arith.constant 9 : index
    %c0_118 = arith.constant 0 : index
    %86 = vector.load %arg12[%c2_116, %c9_117, %c0_118] : memref<18x32x128xbf16, #tpu.memory_space<vmem>>, vector<16x16x128xbf16>
    %87 = vector.shape_cast %86 : vector<16x16x128xbf16> to vector<256x128xbf16>
    %c0_119 = arith.constant 0 : index
    %c1024 = arith.constant 1024 : index
    %88 = vector.load %arg14[%c0_119, %c1024] : memref<256x1152xbf16, #tpu.memory_space<vmem>>, vector<256x128xbf16>
    tpu.vector_store %arg14[%c0_119, %c1024], %87 {strides = array<i32>} : memref<256x1152xbf16, #tpu.memory_space<vmem>>, vector<256x128xbf16>,
    %c0_120 = arith.constant 0 : index
    %c0_121 = arith.constant 0 : index
    %89 = vector.load %arg14[%c0_120, %c0_121] : memref<256x1152xbf16, #tpu.memory_space<vmem>>, vector<256x1152xbf16>
    %c0_122 = arith.constant 0 : index
    %c0_123 = arith.constant 0 : index
    %90 = vector.load %arg6[%c0_122, %c0_123] : memref<1152x256xbf16, #tpu.memory_space<vmem>>, vector<1152x256xbf16>
    %cst_124 = arith.constant dense<0.000000e+00> : vector<256x256xf32>
    %91 = tpu.matmul %89, %90, %cst_124 {dimension_numbers = #tpu.dot_dimension_numbers<[1], [0], [0], [1], [0, 0, 1, 1], [], []>} : vector<256x1152xbf16>, vector<1152x256xbf16>, vector<256x256xf32> -> vector<256x256xf32>
    %c0_125 = arith.constant 0 : index
    %c0_126 = arith.constant 0 : index
    %92 = vector.load %arg7[%c0_125, %c0_126] : memref<1x256xf32, #tpu.memory_space<vmem>>, vector<1x256xf32>
    %93 = vector.broadcast %92 : vector<1x256xf32> to vector<256x256xf32>
    %94 = arith.addf %91, %93 : vector<256x256xf32>
    %cst_127 = arith.constant 0.000000e+00 : f32
    %95 = vector.broadcast %cst_127 : f32 to vector<256x256xf32>
    %96 = arith.maximumf %94, %95 : vector<256x256xf32>
    %c0_128 = arith.constant 0 : index
    %c0_129 = arith.constant 0 : index
    %97 = vector.load %arg8[%c0_128, %c0_129] : memref<1x256xf32, #tpu.memory_space<vmem>>, vector<1x256xf32>
    %98 = vector.broadcast %97 : vector<1x256xf32> to vector<256x256xf32>
    %99 = arith.mulf %96, %98 : vector<256x256xf32>
    %cst_130 = arith.constant dense<0.000000e+00> : vector<256xf32>
    %100 = vector.multi_reduction <add>, %99, %cst_130 [1] : vector<256x256xf32> to vector<256xf32>
    %101 = vector.shape_cast %100 : vector<256xf32> to vector<256x1xf32>
    %c0_131 = arith.constant 0 : index
    %c0_132 = arith.constant 0 : index
    %102 = vector.load %arg9[%c0_131, %c0_132] : memref<1x1xf32, #tpu.memory_space<vmem>>, vector<1x1xf32>
    %103 = vector.broadcast %102 : vector<1x1xf32> to vector<256x1xf32>
    %104 = arith.addf %101, %103 : vector<256x1xf32>
    %cst_133 = arith.constant 1.000000e+00 : f32
    %105 = vector.broadcast %cst_133 : f32 to vector<256x1xf32>
    %106 = arith.addf %105, %104 : vector<256x1xf32>
    %107 = vector.broadcast %106 : vector<256x1xf32> to vector<256x256xf32>
    %108 = arith.mulf %96, %107 : vector<256x256xf32>
    %cst_134 = arith.constant dense<0.000000e+00> : vector<256xf32>
    %109 = vector.multi_reduction <add>, %108, %cst_134 [0] : vector<256x256xf32> to vector<256xf32>
    %110 = vector.shape_cast %109 : vector<256xf32> to vector<1x256xf32>
    %cst_135 = arith.constant 3.906250e-03 : f32
    %111 = vector.broadcast %cst_135 : f32 to vector<1x256xf32>
    %112 = arith.mulf %110, %111 : vector<1x256xf32>
    %c0_136 = arith.constant 0 : index
    %c0_137 = arith.constant 0 : index
    %c0_138 = arith.constant 0 : index
    %113 = vector.load %arg10[%c0_136, %c0_137, %c0_138] : memref<1x1x256xf32, #tpu.memory_space<vmem>>, vector<1x1x256xf32>
    %114 = vector.shape_cast %113 : vector<1x1x256xf32> to vector<1x256xf32>
    %115 = vector.shape_cast %112 : vector<1x256xf32> to vector<1x1x256xf32>
    tpu.vector_store %arg10[%c0_136, %c0_137, %c0_138], %115 {strides = array<i32>} : memref<1x1x256xf32, #tpu.memory_space<vmem>>, vector<1x1x256xf32>,
    return
  }
  func.func @transform_0(%arg0: i32) -> (i32, i32, i32) {
    %c0_i32 = arith.constant 0 : i32
    %c0_i32_0 = arith.constant 0 : i32
    %c0_i32_1 = arith.constant 0 : i32
    return %arg0, %c0_i32, %c0_i32_0 : i32, i32, i32
  }
  func.func @transform_1(%arg0: i32) -> (i32, i32) {
    %c0_i32 = arith.constant 0 : i32
    %c0_i32_0 = arith.constant 0 : i32
    %c0_i32_1 = arith.constant 0 : i32
    return %c0_i32, %c0_i32_0 : i32, i32
  }
  func.func @transform_2(%arg0: i32) -> (i32, i32) {
    %c0_i32 = arith.constant 0 : i32
    %c0_i32_0 = arith.constant 0 : i32
    %c0_i32_1 = arith.constant 0 : i32
    return %c0_i32, %c0_i32_0 : i32, i32
  }
  func.func @transform_3(%arg0: i32) -> (i32, i32) {
    %c0_i32 = arith.constant 0 : i32
    %c0_i32_0 = arith.constant 0 : i32
    %c0_i32_1 = arith.constant 0 : i32
    return %c0_i32, %c0_i32_0 : i32, i32
  }
  func.func @transform_4(%arg0: i32) -> (i32, i32) {
    %c0_i32 = arith.constant 0 : i32
    %c0_i32_0 = arith.constant 0 : i32
    %c0_i32_1 = arith.constant 0 : i32
    return %c0_i32, %c0_i32_0 : i32, i32
  }
  func.func @transform_5(%arg0: i32) -> (i32, i32) {
    %c0_i32 = arith.constant 0 : i32
    %c0_i32_0 = arith.constant 0 : i32
    %c0_i32_1 = arith.constant 0 : i32
    return %c0_i32, %c0_i32_0 : i32, i32
  }
  func.func @transform_6(%arg0: i32) -> (i32, i32) {
    %c0_i32 = arith.constant 0 : i32
    %c0_i32_0 = arith.constant 0 : i32
    %c0_i32_1 = arith.constant 0 : i32
    return %c0_i32, %c0_i32_0 : i32, i32
  }
  func.func @transform_7(%arg0: i32) -> (i32, i32) {
    %c0_i32 = arith.constant 0 : i32
    %c0_i32_0 = arith.constant 0 : i32
    %c0_i32_1 = arith.constant 0 : i32
    return %c0_i32, %c0_i32_0 : i32, i32
  }
  func.func @transform_8(%arg0: i32) -> (i32, i32) {
    %c0_i32 = arith.constant 0 : i32
    %c0_i32_0 = arith.constant 0 : i32
    %c0_i32_1 = arith.constant 0 : i32
    return %c0_i32, %c0_i32_0 : i32, i32
  }
  func.func @transform_9(%arg0: i32) -> (i32, i32, i32) {
    %c0_i32 = arith.constant 0 : i32
    %c0_i32_0 = arith.constant 0 : i32
    %c0_i32_1 = arith.constant 0 : i32
    return %arg0, %c0_i32, %c0_i32_0 : i32, i32, i32
  }
}

</mosaic_0001>

<llo_original>
// kernel: noisy_topk_gating_forward.1
$region0: #{noisy_topk_gating_forward.1}
  #allocation0 [shape = 'u32[]', space=smem, size = 0x4, offset = 0x4, fixed_abs, tag = 'smem constant byte address 0x4 - core index']
  #allocation1 [shape = 'u32[72,128]{1,0:T(1,128)}', space=vmem, size = 0x9000, scoped, tag = 'internal scratch']
  #allocation2 [shape = 'bf16[18,32,64]{2,1,0:T(8,128)(2,1)}', space=vmem, size = 0x24000, scoped, tag = 'scratch operand']
  #allocation3 [shape = 'bf16[18,32,128]{2,1,0:T(8,128)(2,1)}', space=vmem, size = 0x24000, scoped, tag = 'scratch operand']
  #allocation4 [shape = 'bf16[256,576]{1,0:T(8,128)(2,1)}', space=vmem, size = 0x50000, scoped, tag = 'scratch operand']
  #allocation5 [shape = 'bf16[256,1152]{1,0:T(8,128)(2,1)}', space=vmem, size = 0x90000, scoped, tag = 'scratch operand']
  #allocation6 [shape = 'f32[1,1]{1,0:T(1,128)S(1)}', space=vmem, size = 0x200, scoped, tag = 'scoped memory for noisy_topk_gating_forward.1']
  %s0 = inlined_call_operand.vmem [shape: bf16[2,256,128], index: 0, kind: input, shape index: {}]
  %s1 = inlined_call_operand.vmem [shape: bf16[128,64], index: 1, kind: input, shape index: {}]
  %s2 = inlined_call_operand.vmem [shape: f32[1,64], index: 2, kind: input, shape index: {}]
  %s3 = inlined_call_operand.vmem [shape: bf16[576,128], index: 3, kind: input, shape index: {}]
  %s4 = inlined_call_operand.vmem [shape: f32[1,128], index: 4, kind: input, shape index: {}]
  %s5 = inlined_call_operand.vmem [shape: bf16[1152,256], index: 5, kind: input, shape index: {}]
  %s6 = inlined_call_operand.vmem [shape: f32[1,256], index: 6, kind: input, shape index: {}]
  %s7 = inlined_call_operand.vmem [shape: f32[1,256], index: 7, kind: input, shape index: {}]
  %s8 = inlined_call_operand.<no memory space> [shape: f32[1,1], index: 8, kind: input, shape index: {}]
  %s9 = inlined_call_operand.vmem [shape: f32[2,1,256], index: 9, kind: output, shape index: {}]
  %s10 = sld [smem:[#allocation0]]
  $region69: #{noisy_topk_gating_forward.1} parent=0
    _
  %s12 = ssub.s32 1, %s10
  %s13 = scalar_select 0, %s12, %s10
  %v14 = vstv %s8
  %15 = vst [vmem:[#allocation6] sm:$0x1] %v14
  loop: start=0, step=1, limit=4
  $region2: #{noisy_topk_gating_forward.1} parent=0 // loop_pre_header
    _
  $region3: #{noisy_topk_gating_forward.1} parent=0 // loop_header
    %s17 = sphi 0, %s21
    %p18 = scmp.ge.s32.totalorder %s17, 4
    %s27 = sphi 0, %s29
    %s30 = sphi 0, %s27
    %s31 = sphi 0, %s30
    %s47 = sphi 0, %s31
    %s51 = sphi 0, %s51
    %s53 = sphi 0, %s51
    %s54 = sphi 0, %s53
    %s68 = sphi 0, %s54
    %s72 = sphi 0, %s72
    %s74 = sphi 0, %s72
    %s75 = sphi 0, %s74
    %s89 = sphi 0, %s75
    %s93 = sphi 0, %s93
    %s95 = sphi 0, %s93
    %s96 = sphi 0, %s95
    %s110 = sphi 0, %s96
    %s114 = sphi 0, %s114
    %s116 = sphi 0, %s114
    %s117 = sphi 0, %s116
    %s131 = sphi 0, %s117
    %s135 = sphi 0, %s135
    %s137 = sphi 0, %s135
    %s138 = sphi 0, %s137
    %s152 = sphi 0, %s138
    %s156 = sphi 0, %s156
    %s158 = sphi 0, %s156
    %s159 = sphi 0, %s158
    %s173 = sphi 0, %s159
    %s177 = sphi 0, %s177
    %s179 = sphi 0, %s177
    %s180 = sphi 0, %s179
    %s194 = sphi 0, %s180
    %s198 = sphi 0, %s198
    %s200 = sphi 0, %s198
    %s201 = sphi 0, %s200
    %s215 = sphi 0, %s201
    %s221 = sphi 0, %s223
    %s224 = sphi 0, %s221
    %s225 = sphi 0, %s224
    %s241 = sphi 0, %s225
  $region4: #{noisy_topk_gating_forward.1} parent=0 // loop_header_branch
    %20 = sbr.rel (%p18) target = $region8
  $region5: #{noisy_topk_gating_forward.1} parent=0 // loop_body
    %s22 = ssub.s32 %s17, 1
    %s23 = ssub.s32 %s17, 2
    %s24 = sadd.s32 %s17, 1
    %s25 = ssub.s32 %s17, %s24
    %p26 = scmp.eq.s32.totalorder %s25, 0
    %s28 = sadd.s32 %s27, 1
    %s29 = scalar_select %p26, %s27, %s28
    %p32 = pneg %p26
    %p33 = scmp.eq.s32.totalorder %s17, 1
    %p34 = por %p32, %p33
    %p35 = scmp.ne.s32.totalorder %s27, %s30
    %p36 = scmp.eq.s32.totalorder %s17, 0
    %p37 = por %p35, %p36
    %p38 = scmp.ne.s32.totalorder %s27, %s30
    %p39 = scmp.eq.s32.totalorder %s22, 1
    %p40 = por %p38, %p39
    %p41 = scmp.ne.s32.totalorder %s30, %s31
    %p42 = scmp.eq.s32.totalorder %s22, 0
    %p43 = por %p41, %p42
    %p44 = scmp.ne.s32.totalorder %s30, %s31
    %p45 = scmp.eq.s32.totalorder %s23, 1
    %p46 = por %p44, %p45
    %p48 = scmp.ne.s32.totalorder %s31, %s47
    %p49 = scmp.eq.s32.totalorder %s23, 0
    %p50 = por %p48, %p49
    %s52 = sadd.s32 %s51, 1
    %p55 = scmp.eq.s32.totalorder %s17, 1
    %p56 = scmp.ne.s32.totalorder %s51, %s53
    %p57 = scmp.eq.s32.totalorder %s17, 0
    %p58 = por %p56, %p57
    %p59 = scmp.ne.s32.totalorder %s51, %s53
    %p60 = scmp.eq.s32.totalorder %s22, 1
    %p61 = por %p59, %p60
    %p62 = scmp.ne.s32.totalorder %s53, %s54
    %p63 = scmp.eq.s32.totalorder %s22, 0
    %p64 = por %p62, %p63
    %p65 = scmp.ne.s32.totalorder %s53, %s54
    %p66 = scmp.eq.s32.totalorder %s23, 1
    %p67 = por %p65, %p66
    %p69 = scmp.ne.s32.totalorder %s54, %s68
    %p70 = scmp.eq.s32.totalorder %s23, 0
    %p71 = por %p69, %p70
    %s73 = sadd.s32 %s72, 1
    %p76 = scmp.eq.s32.totalorder %s17, 1
    %p77 = scmp.ne.s32.totalorder %s72, %s74
    %p78 = scmp.eq.s32.totalorder %s17, 0
    %p79 = por %p77, %p78
    %p80 = scmp.ne.s32.totalorder %s72, %s74
    %p81 = scmp.eq.s32.totalorder %s22, 1
    %p82 = por %p80, %p81
    %p83 = scmp.ne.s32.totalorder %s74, %s75
    %p84 = scmp.eq.s32.totalorder %s22, 0
    %p85 = por %p83, %p84
    %p86 = scmp.ne.s32.totalorder %s74, %s75
    %p87 = scmp.eq.s32.totalorder %s23, 1
    %p88 = por %p86, %p87
    %p90 = scmp.ne.s32.totalorder %s75, %s89
    %p91 = scmp.eq.s32.totalorder %s23, 0
    %p92 = por %p90, %p91
    %s94 = sadd.s32 %s93, 1
    %p97 = scmp.eq.s32.totalorder %s17, 1
    %p98 = scmp.ne.s32.totalorder %s93, %s95
    %p99 = scmp.eq.s32.totalorder %s17, 0
    %p100 = por %p98, %p99
    %p101 = scmp.ne.s32.totalorder %s93, %s95
    %p102 = scmp.eq.s32.totalorder %s22, 1
    %p103 = por %p101, %p102
    %p104 = scmp.ne.s32.totalorder %s95, %s96
    %p105 = scmp.eq.s32.totalorder %s22, 0
    %p106 = por %p104, %p105
    %p107 = scmp.ne.s32.totalorder %s95, %s96
    %p108 = scmp.eq.s32.totalorder %s23, 1
    %p109 = por %p107, %p108
    %p111 = scmp.ne.s32.totalorder %s96, %s110
    %p112 = scmp.eq.s32.totalorder %s23, 0
    %p113 = por %p111, %p112
    %s115 = sadd.s32 %s114, 1
    %p118 = scmp.eq.s32.totalorder %s17, 1
    %p119 = scmp.ne.s32.totalorder %s114, %s116
    %p120 = scmp.eq.s32.totalorder %s17, 0
    %p121 = por %p119, %p120
    %p122 = scmp.ne.s32.totalorder %s114, %s116
    %p123 = scmp.eq.s32.totalorder %s22, 1
    %p124 = por %p122, %p123
    %p125 = scmp.ne.s32.totalorder %s116, %s117
    %p126 = scmp.eq.s32.totalorder %s22, 0
    %p127 = por %p125, %p126
    %p128 = scmp.ne.s32.totalorder %s116, %s117
    %p129 = scmp.eq.s32.totalorder %s23, 1
    %p130 = por %p128, %p129
    %p132 = scmp.ne.s32.totalorder %s117, %s131
    %p133 = scmp.eq.s32.totalorder %s23, 0
    %p134 = por %p132, %p133
    %s136 = sadd.s32 %s135, 1
    %p139 = scmp.eq.s32.totalorder %s17, 1
    %p140 = scmp.ne.s32.totalorder %s135, %s137
    %p141 = scmp.eq.s32.totalorder %s17, 0
    %p142 = por %p140, %p141
    %p143 = scmp.ne.s32.totalorder %s135, %s137
    %p144 = scmp.eq.s32.totalorder %s22, 1
    %p145 = por %p143, %p144
    %p146 = scmp.ne.s32.totalorder %s137, %s138
    %p147 = scmp.eq.s32.totalorder %s22, 0
    %p148 = por %p146, %p147
    %p149 = scmp.ne.s32.totalorder %s137, %s138
    %p150 = scmp.eq.s32.totalorder %s23, 1
    %p151 = por %p149, %p150
    %p153 = scmp.ne.s32.totalorder %s138, %s152
    %p154 = scmp.eq.s32.totalorder %s23, 0
    %p155 = por %p153, %p154
    %s157 = sadd.s32 %s156, 1
    %p160 = scmp.eq.s32.totalorder %s17, 1
    %p161 = scmp.ne.s32.totalorder %s156, %s158
    %p162 = scmp.eq.s32.totalorder %s17, 0
    %p163 = por %p161, %p162
    %p164 = scmp.ne.s32.totalorder %s156, %s158
    %p165 = scmp.eq.s32.totalorder %s22, 1
    %p166 = por %p164, %p165
    %p167 = scmp.ne.s32.totalorder %s158, %s159
    %p168 = scmp.eq.s32.totalorder %s22, 0
    %p169 = por %p167, %p168
    %p170 = scmp.ne.s32.totalorder %s158, %s159
    %p171 = scmp.eq.s32.totalorder %s23, 1
    %p172 = por %p170, %p171
    %p174 = scmp.ne.s32.totalorder %s159, %s173
    %p175 = scmp.eq.s32.totalorder %s23, 0
    %p176 = por %p174, %p175
    %s178 = sadd.s32 %s177, 1
    %p181 = scmp.eq.s32.totalorder %s17, 1
    %p182 = scmp.ne.s32.totalorder %s177, %s179
    %p183 = scmp.eq.s32.totalorder %s17, 0
    %p184 = por %p182, %p183
    %p185 = scmp.ne.s32.totalorder %s177, %s179
    %p186 = scmp.eq.s32.totalorder %s22, 1
    %p187 = por %p185, %p186
    %p188 = scmp.ne.s32.totalorder %s179, %s180
    %p189 = scmp.eq.s32.totalorder %s22, 0
    %p190 = por %p188, %p189
    %p191 = scmp.ne.s32.totalorder %s179, %s180
    %p192 = scmp.eq.s32.totalorder %s23, 1
    %p193 = por %p191, %p192
    %p195 = scmp.ne.s32.totalorder %s180, %s194
    %p196 = scmp.eq.s32.totalorder %s23, 0
    %p197 = por %p195, %p196
    %s199 = sadd.s32 %s198, 1
    %p202 = scmp.eq.s32.totalorder %s17, 1
    %p203 = scmp.ne.s32.totalorder %s198, %s200
    %p204 = scmp.eq.s32.totalorder %s17, 0
    %p205 = por %p203, %p204
    %p206 = scmp.ne.s32.totalorder %s198, %s200
    %p207 = scmp.eq.s32.totalorder %s22, 1
    %p208 = por %p206, %p207
    %p209 = scmp.ne.s32.totalorder %s200, %s201
    %p210 = scmp.eq.s32.totalorder %s22, 0
    %p211 = por %p209, %p210
    %p212 = scmp.ne.s32.totalorder %s200, %s201
    %p213 = scmp.eq.s32.totalorder %s23, 1
    %p214 = por %p212, %p213
    %p216 = scmp.ne.s32.totalorder %s201, %s215
    %p217 = scmp.eq.s32.totalorder %s23, 0
    %p218 = por %p216, %p217
    %s219 = ssub.s32 %s17, %s24
    %p220 = scmp.eq.s32.totalorder %s219, 0
    %s222 = sadd.s32 %s221, 1
    %s223 = scalar_select %p220, %s221, %s222
    %p226 = pneg %p220
    %p227 = scmp.eq.s32.totalorder %s17, 1
    %p228 = por %p226, %p227
    %p229 = scmp.ne.s32.totalorder %s221, %s224
    %p230 = scmp.eq.s32.totalorder %s17, 0
    %p231 = por %p229, %p230
    %p232 = scmp.ne.s32.totalorder %s221, %s224
    %p233 = scmp.eq.s32.totalorder %s22, 1
    %p234 = por %p232, %p233
    %p235 = scmp.ne.s32.totalorder %s224, %s225
    %p236 = scmp.eq.s32.totalorder %s22, 0
    %p237 = por %p235, %p236
    %p238 = scmp.ne.s32.totalorder %s224, %s225
    %p239 = scmp.eq.s32.totalorder %s23, 1
    %p240 = por %p238, %p239
    %p242 = scmp.ne.s32.totalorder %s225, %s241
    %p243 = scmp.eq.s32.totalorder %s23, 0
    %p244 = por %p242, %p243
    %p245 = scmp.le.s32.totalorder 1, %s17
    %p246 = scmp.lt.s32.totalorder %s17, 3
    %p247 = pnand %p245, %p246
    %p248 = pneg %p247
    // Predicated region
    $region9: #{noisy_topk_gating_forward.1} parent=5 // pred_check
      _
    $region10: #{noisy_topk_gating_forward.1} parent=5 // pred_check_branch
      %250 = sbr.rel (%p247) target = $region12
    $region11: #{noisy_topk_gating_forward.1} parent=5 // pred_region
      %s251 = ssub.s32 %s17, 1
      // Predicated region
      $region13: #{noisy_topk_gating_forward.1} parent=11 // pred_check
        %p252 = pneg %p64
      $region14: #{noisy_topk_gating_forward.1} parent=11 // pred_check_branch
        %254 = sbr.rel (%p252) target = $region16
      $region15: #{noisy_topk_gating_forward.1} parent=11 // pred_region
        _
      $region16: #{noisy_topk_gating_forward.1} parent=11 // pred_fallthru
        _
      // Predicated region
      $region17: #{noisy_topk_gating_forward.1} parent=11 // pred_check
        %p255 = pneg %p85
      $region18: #{noisy_topk_gating_forward.1} parent=11 // pred_check_branch
        %257 = sbr.rel (%p255) target = $region20
      $region19: #{noisy_topk_gating_forward.1} parent=11 // pred_region
        _
      $region20: #{noisy_topk_gating_forward.1} parent=11 // pred_fallthru
        _
      // Predicated region
      $region21: #{noisy_topk_gating_forward.1} parent=11 // pred_check
        %p258 = pneg %p106
      $region22: #{noisy_topk_gating_forward.1} parent=11 // pred_check_branch
        %260 = sbr.rel (%p258) target = $region24
      $region23: #{noisy_topk_gating_forward.1} parent=11 // pred_region
        _
      $region24: #{noisy_topk_gating_forward.1} parent=11 // pred_fallthru
        _
      // Predicated region
      $region25: #{noisy_topk_gating_forward.1} parent=11 // pred_check
        %p261 = pneg %p127
      $region26: #{noisy_topk_gating_forward.1} parent=11 // pred_check_branch
        %263 = sbr.rel (%p261) target = $region28
      $region27: #{noisy_topk_gating_forward.1} parent=11 // pred_region
        _
      $region28: #{noisy_topk_gating_forward.1} parent=11 // pred_fallthru
        _
      // Predicated region
      $region29: #{noisy_topk_gating_forward.1} parent=11 // pred_check
        %p264 = pneg %p148
      $region30: #{noisy_topk_gating_forward.1} parent=11 // pred_check_branch
        %266 = sbr.rel (%p264) target = $region32
      $region31: #{noisy_topk_gating_forward.1} parent=11 // pred_region
        _
      $region32: #{noisy_topk_gating_forward.1} parent=11 // pred_fallthru
        _
      // Predicated region
      $region33: #{noisy_topk_gating_forward.1} parent=11 // pred_check
        %p267 = pneg %p169
      $region34: #{noisy_topk_gating_forward.1} parent=11 // pred_check_branch
        %269 = sbr.rel (%p267) target = $region36
      $region35: #{noisy_topk_gating_forward.1} parent=11 // pred_region
        _
      $region36: #{noisy_topk_gating_forward.1} parent=11 // pred_fallthru
        _
      // Predicated region
      $region37: #{noisy_topk_gating_forward.1} parent=11 // pred_check
        %p270 = pneg %p190
      $region38: #{noisy_topk_gating_forward.1} parent=11 // pred_check_branch
        %272 = sbr.rel (%p270) target = $region40
      $region39: #{noisy_topk_gating_forward.1} parent=11 // pred_region
        _
      $region40: #{noisy_topk_gating_forward.1} parent=11 // pred_fallthru
        _
      // Predicated region
      $region41: #{noisy_topk_gating_forward.1} parent=11 // pred_check
        %p273 = pneg %p211
      $region42: #{noisy_topk_gating_forward.1} parent=11 // pred_check_branch
        %275 = sbr.rel (%p273) target = $region44
      $region43: #{noisy_topk_gating_forward.1} parent=11 // pred_region
        _
      $region44: #{noisy_topk_gating_forward.1} parent=11 // pred_fallthru
        _
    $region12: #{noisy_topk_gating_forward.1} parent=5 // pred_fallthru
      _
    %p276 = scmp.lt.s32.totalorder %s17, 2
    // Predicated region
    $region45: #{noisy_topk_gating_forward.1} parent=5 // pred_check
      %p277 = pneg %p276
    $region46: #{noisy_topk_gating_forward.1} parent=5 // pred_check_branch
      %279 = sbr.rel (%p277) target = $region48
    $region47: #{noisy_topk_gating_forward.1} parent=5 // pred_region
      // Predicated region
      $region49: #{noisy_topk_gating_forward.1} parent=47 // pred_check
        %p280 = pneg %p37
      $region50: #{noisy_topk_gating_forward.1} parent=47 // pred_check_branch
        %282 = sbr.rel (%p280) target = $region52
      $region51: #{noisy_topk_gating_forward.1} parent=47 // pred_region
        %p283 = scmp.lt.s32.totalorder %s17, 1
        %s284 = scalar_select %p283, %s17, 1
        %s285 = smul.addr %s284, 32
        %s286 = smul.addr %s285, 4
        %s287 = scalar_lea.vmem %s0, %s286
      $region52: #{noisy_topk_gating_forward.1} parent=47 // pred_fallthru
        _
    $region48: #{noisy_topk_gating_forward.1} parent=5 // pred_fallthru
      _
    %p288 = scmp.le.s32.totalorder 1, %s17
    %p289 = scmp.lt.s32.totalorder %s17, 3
    %p290 = pnand %p288, %p289
    %p291 = pneg %p290
    // Predicated region
    $region53: #{noisy_topk_gating_forward.1} parent=5 // pred_check
      _
    $region54: #{noisy_topk_gating_forward.1} parent=5 // pred_check_branch
      %293 = sbr.rel (%p290) target = $region56
    $region55: #{noisy_topk_gating_forward.1} parent=5 // pred_region
      %s294 = ssub.s32 %s17, 1
      %p295 = scmp.lt.s32.totalorder %s22, 1
      %s296 = scalar_select %p295, %s22, 1
      %s297 = smul.addr %s296, 32
      %s298 = smul.addr %s297, 4
      %s299 = scalar_lea.vmem %s0, %s298
      %p300 = pneg %p43
      %p301 = pneg %p40
      %p302 = pneg %p64
      %p303 = pneg %p61
      %p304 = pneg %p85
      %p305 = pneg %p82
      %p306 = pneg %p106
      %p307 = pneg %p103
      %p308 = pneg %p127
      %p309 = pneg %p124
      %p310 = pneg %p148
      %p311 = pneg %p145
      %p312 = pneg %p169
      %p313 = pneg %p166
      %p314 = pneg %p190
      %p315 = pneg %p187
      %p316 = pneg %p211
      %p317 = pneg %p208
      %p318 = pneg %p237
      %p319 = pneg %p234
      %p320 = scmp.lt.s32.totalorder %s22, 1
      %s321 = scalar_select %p320, %s22, 1
      %s322 = smul.addr %s321, 2
      %s323 = scalar_lea.vmem %s9, %s322
      %p324 = scmp.lt.s32.totalorder %s22, 1
      %s325 = scalar_select %p324, %s22, 1
      %s326 = smul.addr %s325, 32
      %s327 = smul.addr %s326, 4
      %s328 = scalar_lea.vmem %s0, %s327
      %p329 = scmp.lt.s32.totalorder %s22, 1
      %s330 = scalar_select %p329, %s22, 1
      %s331 = smul.addr %s330, 2
      %s332 = scalar_lea.vmem %s9, %s331
      %vm334 = vcmask 519168
      %335 = vst.msk [vmem:[#allocation2] sm:$0xf] %vm334, 0
      %336 = vst.msk [vmem:[#allocation2 + $0x4] sm:$0xf] %vm334, 0
      %337 = vst.msk [vmem:[#allocation2 + $0x8] sm:$0xf] %vm334, 0
      %338 = vst.msk [vmem:[#allocation2 + $0xc] sm:$0xf] %vm334, 0
      %s339 = scalar_lea.vmem [#allocation2], 272
      %340 = vst.msk [vmem:[%s339] sm:$0xf] %vm334, 0
      %341 = vst.msk [vmem:[%s339 + $0x4] sm:$0xf] %vm334, 0
      %342 = vst.msk [vmem:[%s339 + $0x8] sm:$0xf] %vm334, 0
      %343 = vst.msk [vmem:[%s339 + $0xc] sm:$0xf] %vm334, 0
      %vm344 = vcmask 519171
      %vm345 = vsmask.f32 7950
      %vm346 = vmand %vm344, %vm345
      %v347 = vld [vmem:[#allocation2] sm:$0x8]
      %v348 = vsel %vm346, 0, %v347
      %349 = vst [vmem:[#allocation2] sm:$0x8] %v348
      %v350 = vld [vmem:[#allocation2 + $0x10] sm:$0x8]
      %v351 = vsel %vm346, 0, %v350
      %352 = vst [vmem:[#allocation2 + $0x10] sm:$0x8] %v351
      %v353 = vld [vmem:[#allocation2 + $0x20] sm:$0x8]
      %v354 = vsel %vm346, 0, %v353
      %355 = vst [vmem:[#allocation2 + $0x20] sm:$0x8] %v354
      %v356 = vld [vmem:[#allocation2 + $0x30] sm:$0x8]
      %v357 = vsel %vm346, 0, %v356
      %358 = vst [vmem:[#allocation2 + $0x30] sm:$0x8] %v357
      %v359 = vld [vmem:[#allocation2 + $0x40] sm:$0x8]
      %v360 = vsel %vm346, 0, %v359
      %361 = vst [vmem:[#allocation2 + $0x40] sm:$0x8] %v360
      %v362 = vld [vmem:[#allocation2 + $0x50] sm:$0x8]
      %v363 = vsel %vm346, 0, %v362
      %364 = vst [vmem:[#allocation2 + $0x50] sm:$0x8] %v363
      %v365 = vld [vmem:[#allocation2 + $0x60] sm:$0x8]
      %v366 = vsel %vm346, 0, %v365
      %367 = vst [vmem:[#allocation2 + $0x60] sm:$0x8] %v366
      %v368 = vld [vmem:[#allocation2 + $0x70] sm:$0x8]
      %v369 = vsel %vm346, 0, %v368
      %370 = vst [vmem:[#allocation2 + $0x70] sm:$0x8] %v369
      %v371 = vld [vmem:[#allocation2 + $0x80] sm:$0x8]
      %v372 = vsel %vm346, 0, %v371
      %373 = vst [vmem:[#allocation2 + $0x80] sm:$0x8] %v372
      %v374 = vld [vmem:[#allocation2 + $0x90] sm:$0x8]
      %v375 = vsel %vm346, 0, %v374
      %376 = vst [vmem:[#allocation2 + $0x90] sm:$0x8] %v375
      %v377 = vld [vmem:[#allocation2 + $0xa0] sm:$0x8]
      %v378 = vsel %vm346, 0, %v377
      %379 = vst [vmem:[#allocation2 + $0xa0] sm:$0x8] %v378
      %v380 = vld [vmem:[#allocation2 + $0xb0] sm:$0x8]
      %v381 = vsel %vm346, 0, %v380
      %382 = vst [vmem:[#allocation2 + $0xb0] sm:$0x8] %v381
      %v383 = vld [vmem:[#allocation2 + $0xc0] sm:$0x8]
      %v384 = vsel %vm346, 0, %v383
      %385 = vst [vmem:[#allocation2 + $0xc0] sm:$0x8] %v384
      %v386 = vld [vmem:[#allocation2 + $0xd0] sm:$0x8]
      %v387 = vsel %vm346, 0, %v386
      %388 = vst [vmem:[#allocation2 + $0xd0] sm:$0x8] %v387
      %v389 = vld [vmem:[#allocation2 + $0xe0] sm:$0x8]
      %v390 = vsel %vm346, 0, %v389
      %391 = vst [vmem:[#allocation2 + $0xe0] sm:$0x8] %v390
      %v392 = vld [vmem:[#allocation2 + $0xf0] sm:$0x8]
      %v393 = vsel %vm346, 0, %v392
      %394 = vst [vmem:[#allocation2 + $0xf0] sm:$0x8] %v393
      %v395 = vld [vmem:[#allocation2 + $0x100] sm:$0x8]
      %v396 = vsel %vm346, 0, %v395
      %397 = vst [vmem:[#allocation2 + $0x100] sm:$0x8] %v396
      %v398 = vld [vmem:[#allocation2 + $0x110] sm:$0x8]
      %v399 = vsel %vm346, 0, %v398
      %400 = vst [vmem:[#allocation2 + $0x110] sm:$0x8] %v399
      %vm401 = vcmask 516096
      %vm402 = vsmask.f32 256
      %vm403 = vmand %vm401, %vm402
      %v404 = vld [vmem:[#allocation2 + $0xc] sm:$0x1]
      %v405 = vsel %vm403, 0, %v404
      %406 = vst [vmem:[#allocation2 + $0xc] sm:$0x1] %v405
      %v407 = vld [vmem:[#allocation2 + $0x1c] sm:$0x1]
      %v408 = vsel %vm403, 0, %v407
      %409 = vst [vmem:[#allocation2 + $0x1c] sm:$0x1] %v408
      %v410 = vld [vmem:[#allocation2 + $0x2c] sm:$0x1]
      %v411 = vsel %vm403, 0, %v410
      %412 = vst [vmem:[#allocation2 + $0x2c] sm:$0x1] %v411
      %v413 = vld [vmem:[#allocation2 + $0x3c] sm:$0x1]
      %v414 = vsel %vm403, 0, %v413
      %415 = vst [vmem:[#allocation2 + $0x3c] sm:$0x1] %v414
      %v416 = vld [vmem:[#allocation2 + $0x4c] sm:$0x1]
      %v417 = vsel %vm403, 0, %v416
      %418 = vst [vmem:[#allocation2 + $0x4c] sm:$0x1] %v417
      %v419 = vld [vmem:[#allocation2 + $0x5c] sm:$0x1]
      %v420 = vsel %vm403, 0, %v419
      %421 = vst [vmem:[#allocation2 + $0x5c] sm:$0x1] %v420
      %v422 = vld [vmem:[#allocation2 + $0x6c] sm:$0x1]
      %v423 = vsel %vm403, 0, %v422
      %424 = vst [vmem:[#allocation2 + $0x6c] sm:$0x1] %v423
      %v425 = vld [vmem:[#allocation2 + $0x7c] sm:$0x1]
      %v426 = vsel %vm403, 0, %v425
      %427 = vst [vmem:[#allocation2 + $0x7c] sm:$0x1] %v426
      %v428 = vld [vmem:[#allocation2 + $0x8c] sm:$0x1]
      %v429 = vsel %vm403, 0, %v428
      %430 = vst [vmem:[#allocation2 + $0x8c] sm:$0x1] %v429
      %v431 = vld [vmem:[#allocation2 + $0x9c] sm:$0x1]
      %v432 = vsel %vm403, 0, %v431
      %433 = vst [vmem:[#allocation2 + $0x9c] sm:$0x1] %v432
      %v434 = vld [vmem:[#allocation2 + $0xac] sm:$0x1]
      %v435 = vsel %vm403, 0, %v434
      %436 = vst [vmem:[#allocation2 + $0xac] sm:$0x1] %v435
      %v437 = vld [vmem:[#allocation2 + $0xbc] sm:$0x1]
      %v438 = vsel %vm403, 0, %v437
      %439 = vst [vmem:[#allocation2 + $0xbc] sm:$0x1] %v438
      %v440 = vld [vmem:[#allocation2 + $0xcc] sm:$0x1]
      %v441 = vsel %vm403, 0, %v440
      %442 = vst [vmem:[#allocation2 + $0xcc] sm:$0x1] %v441
      %v443 = vld [vmem:[#allocation2 + $0xdc] sm:$0x1]
      %v444 = vsel %vm403, 0, %v443
      %445 = vst [vmem:[#allocation2 + $0xdc] sm:$0x1] %v444
      %v446 = vld [vmem:[#allocation2 + $0xec] sm:$0x1]
      %v447 = vsel %vm403, 0, %v446
      %448 = vst [vmem:[#allocation2 + $0xec] sm:$0x1] %v447
      %v449 = vld [vmem:[#allocation2 + $0xfc] sm:$0x1]
      %v450 = vsel %vm403, 0, %v449
      %451 = vst [vmem:[#allocation2 + $0xfc] sm:$0x1] %v450
      %v452 = vld [vmem:[#allocation2 + $0x10c] sm:$0x1]
      %v453 = vsel %vm403, 0, %v452
      %454 = vst [vmem:[#allocation2 + $0x10c] sm:$0x1] %v453
      %v455 = vld [vmem:[#allocation2 + $0x11c] sm:$0x1]
      %v456 = vsel %vm403, 0, %v455
      %457 = vst [vmem:[#allocation2 + $0x11c] sm:$0x1] %v456
      %458 = vst [vmem:[#allocation3] sm:$0xf] 0
      %459 = vst [vmem:[#allocation3 + $0x4] sm:$0xf] 0
      %460 = vst [vmem:[#allocation3 + $0x8] sm:$0xf] 0
      %461 = vst [vmem:[#allocation3 + $0xc] sm:$0xf] 0
      %s462 = scalar_lea.vmem [#allocation3], 272
      %463 = vst [vmem:[%s462] sm:$0xf] 0
      %464 = vst [vmem:[%s462 + $0x4] sm:$0xf] 0
      %465 = vst [vmem:[%s462 + $0x8] sm:$0xf] 0
      %466 = vst [vmem:[%s462 + $0xc] sm:$0xf] 0
      %vm467 = vcmask 1043459
      %vm468 = vmand %vm467, %vm345
      %v469 = vld [vmem:[#allocation3] sm:$0x8]
      %v470 = vsel %vm468, 0, %v469
      %471 = vst [vmem:[#allocation3] sm:$0x8] %v470
      %v472 = vld [vmem:[#allocation3 + $0x10] sm:$0x8]
      %v473 = vsel %vm468, 0, %v472
      %474 = vst [vmem:[#allocation3 + $0x10] sm:$0x8] %v473
      %v475 = vld [vmem:[#allocation3 + $0x20] sm:$0x8]
      %v476 = vsel %vm468, 0, %v475
      %477 = vst [vmem:[#allocation3 + $0x20] sm:$0x8] %v476
      %v478 = vld [vmem:[#allocation3 + $0x30] sm:$0x8]
      %v479 = vsel %vm468, 0, %v478
      %480 = vst [vmem:[#allocation3 + $0x30] sm:$0x8] %v479
      %v481 = vld [vmem:[#allocation3 + $0x40] sm:$0x8]
      %v482 = vsel %vm468, 0, %v481
      %483 = vst [vmem:[#allocation3 + $0x40] sm:$0x8] %v482
      %v484 = vld [vmem:[#allocation3 + $0x50] sm:$0x8]
      %v485 = vsel %vm468, 0, %v484
      %486 = vst [vmem:[#allocation3 + $0x50] sm:$0x8] %v485
      %v487 = vld [vmem:[#allocation3 + $0x60] sm:$0x8]
      %v488 = vsel %vm468, 0, %v487
      %489 = vst [vmem:[#allocation3 + $0x60] sm:$0x8] %v488
      %v490 = vld [vmem:[#allocation3 + $0x70] sm:$0x8]
      %v491 = vsel %vm468, 0, %v490
      %492 = vst [vmem:[#allocation3 + $0x70] sm:$0x8] %v491
      %v493 = vld [vmem:[#allocation3 + $0x80] sm:$0x8]
      %v494 = vsel %vm468, 0, %v493
      %495 = vst [vmem:[#allocation3 + $0x80] sm:$0x8] %v494
      %v496 = vld [vmem:[#allocation3 + $0x90] sm:$0x8]
      %v497 = vsel %vm468, 0, %v496
      %498 = vst [vmem:[#allocation3 + $0x90] sm:$0x8] %v497
      %v499 = vld [vmem:[#allocation3 + $0xa0] sm:$0x8]
      %v500 = vsel %vm468, 0, %v499
      %501 = vst [vmem:[#allocation3 + $0xa0] sm:$0x8] %v500
      %v502 = vld [vmem:[#allocation3 + $0xb0] sm:$0x8]
      %v503 = vsel %vm468, 0, %v502
      %504 = vst [vmem:[#allocation3 + $0xb0] sm:$0x8] %v503
      %v505 = vld [vmem:[#allocation3 + $0xc0] sm:$0x8]
      %v506 = vsel %vm468, 0, %v505
      %507 = vst [vmem:[#allocation3 + $0xc0] sm:$0x8] %v506
      %v508 = vld [vmem:[#allocation3 + $0xd0] sm:$0x8]
      %v509 = vsel %vm468, 0, %v508
      %510 = vst [vmem:[#allocation3 + $0xd0] sm:$0x8] %v509
      %v511 = vld [vmem:[#allocation3 + $0xe0] sm:$0x8]
      %v512 = vsel %vm468, 0, %v511
      %513 = vst [vmem:[#allocation3 + $0xe0] sm:$0x8] %v512
      %v514 = vld [vmem:[#allocation3 + $0xf0] sm:$0x8]
      %v515 = vsel %vm468, 0, %v514
      %516 = vst [vmem:[#allocation3 + $0xf0] sm:$0x8] %v515
      %v517 = vld [vmem:[#allocation3 + $0x100] sm:$0x8]
      %v518 = vsel %vm468, 0, %v517
      %519 = vst [vmem:[#allocation3 + $0x100] sm:$0x8] %v518
      %v520 = vld [vmem:[#allocation3 + $0x110] sm:$0x8]
      %v521 = vsel %vm468, 0, %v520
      %522 = vst [vmem:[#allocation3 + $0x110] sm:$0x8] %v521
      %vm523 = vcmask 1040384
      %vm524 = vmand %vm523, %vm402
      %v525 = vld [vmem:[#allocation3 + $0xc] sm:$0x1]
      %v526 = vsel %vm524, 0, %v525
      %527 = vst [vmem:[#allocation3 + $0xc] sm:$0x1] %v526
      %v528 = vld [vmem:[#allocation3 + $0x1c] sm:$0x1]
      %v529 = vsel %vm524, 0, %v528
      %530 = vst [vmem:[#allocation3 + $0x1c] sm:$0x1] %v529
      %v531 = vld [vmem:[#allocation3 + $0x2c] sm:$0x1]
      %v532 = vsel %vm524, 0, %v531
      %533 = vst [vmem:[#allocation3 + $0x2c] sm:$0x1] %v532
      %v534 = vld [vmem:[#allocation3 + $0x3c] sm:$0x1]
      %v535 = vsel %vm524, 0, %v534
      %536 = vst [vmem:[#allocation3 + $0x3c] sm:$0x1] %v535
      %v537 = vld [vmem:[#allocation3 + $0x4c] sm:$0x1]
      %v538 = vsel %vm524, 0, %v537
      %539 = vst [vmem:[#allocation3 + $0x4c] sm:$0x1] %v538
      %v540 = vld [vmem:[#allocation3 + $0x5c] sm:$0x1]
      %v541 = vsel %vm524, 0, %v540
      %542 = vst [vmem:[#allocation3 + $0x5c] sm:$0x1] %v541
      %v543 = vld [vmem:[#allocation3 + $0x6c] sm:$0x1]
      %v544 = vsel %vm524, 0, %v543
      %545 = vst [vmem:[#allocation3 + $0x6c] sm:$0x1] %v544
      %v546 = vld [vmem:[#allocation3 + $0x7c] sm:$0x1]
      %v547 = vsel %vm524, 0, %v546
      %548 = vst [vmem:[#allocation3 + $0x7c] sm:$0x1] %v547
      %v549 = vld [vmem:[#allocation3 + $0x8c] sm:$0x1]
      %v550 = vsel %vm524, 0, %v549
      %551 = vst [vmem:[#allocation3 + $0x8c] sm:$0x1] %v550
      %v552 = vld [vmem:[#allocation3 + $0x9c] sm:$0x1]
      %v553 = vsel %vm524, 0, %v552
      %554 = vst [vmem:[#allocation3 + $0x9c] sm:$0x1] %v553
      %v555 = vld [vmem:[#allocation3 + $0xac] sm:$0x1]
      %v556 = vsel %vm524, 0, %v555
      %557 = vst [vmem:[#allocation3 + $0xac] sm:$0x1] %v556
      %v558 = vld [vmem:[#allocation3 + $0xbc] sm:$0x1]
      %v559 = vsel %vm524, 0, %v558
      %560 = vst [vmem:[#allocation3 + $0xbc] sm:$0x1] %v559
      %v561 = vld [vmem:[#allocation3 + $0xcc] sm:$0x1]
      %v562 = vsel %vm524, 0, %v561
      %563 = vst [vmem:[#allocation3 + $0xcc] sm:$0x1] %v562
      %v564 = vld [vmem:[#allocation3 + $0xdc] sm:$0x1]
      %v565 = vsel %vm524, 0, %v564
      %566 = vst [vmem:[#allocation3 + $0xdc] sm:$0x1] %v565
      %v567 = vld [vmem:[#allocation3 + $0xec] sm:$0x1]
      %v568 = vsel %vm524, 0, %v567
      %569 = vst [vmem:[#allocation3 + $0xec] sm:$0x1] %v568
      %v570 = vld [vmem:[#allocation3 + $0xfc] sm:$0x1]
      %v571 = vsel %vm524, 0, %v570
      %572 = vst [vmem:[#allocation3 + $0xfc] sm:$0x1] %v571
      %v573 = vld [vmem:[#allocation3 + $0x10c] sm:$0x1]
      %v574 = vsel %vm524, 0, %v573
      %575 = vst [vmem:[#allocation3 + $0x10c] sm:$0x1] %v574
      %v576 = vld [vmem:[#allocation3 + $0x11c] sm:$0x1]
      %v577 = vsel %vm524, 0, %v576
      %578 = vst [vmem:[#allocation3 + $0x11c] sm:$0x1] %v577
      %v579 = vld [vmem:[%s328] sm:$0xf]
      %v580 = vld [vmem:[%s328 + $0x4] sm:$0xf]
      %v581 = vld [vmem:[%s328 + $0x8] sm:$0xf]
      %v582 = vld [vmem:[%s328 + $0xc] sm:$0xf]
      %v583 = vld [vmem:[%s328 + $0x10] sm:$0xf]
      %v584 = vld [vmem:[%s328 + $0x14] sm:$0xf]
      %v585 = vld [vmem:[%s328 + $0x18] sm:$0xf]
      %v586 = vld [vmem:[%s328 + $0x1c] sm:$0xf]
      %v587 = vld [vmem:[%s328 + $0x20] sm:$0xf]
      %v588 = vld [vmem:[%s328 + $0x24] sm:$0xf]
      %v589 = vld [vmem:[%s328 + $0x28] sm:$0xf]
      %v590 = vld [vmem:[%s328 + $0x2c] sm:$0xf]
      %v591 = vld [vmem:[%s328 + $0x30] sm:$0xf]
      %v592 = vld [vmem:[%s328 + $0x34] sm:$0xf]
      %v593 = vld [vmem:[%s328 + $0x38] sm:$0xf]
      %v594 = vld [vmem:[%s328 + $0x3c] sm:$0xf]
      %v595 = vld [vmem:[%s328 + $0x40] sm:$0xf]
      %v596 = vld [vmem:[%s328 + $0x44] sm:$0xf]
      %v597 = vld [vmem:[%s328 + $0x48] sm:$0xf]
      %v598 = vld [vmem:[%s328 + $0x4c] sm:$0xf]
      %v599 = vld [vmem:[%s328 + $0x50] sm:$0xf]
      %v600 = vld [vmem:[%s328 + $0x54] sm:$0xf]
      %v601 = vld [vmem:[%s328 + $0x58] sm:$0xf]
      %v602 = vld [vmem:[%s328 + $0x5c] sm:$0xf]
      %v603 = vld [vmem:[%s328 + $0x60] sm:$0xf]
      %v604 = vld [vmem:[%s328 + $0x64] sm:$0xf]
      %v605 = vld [vmem:[%s328 + $0x68] sm:$0xf]
      %v606 = vld [vmem:[%s328 + $0x6c] sm:$0xf]
      %v607 = vld [vmem:[%s328 + $0x70] sm:$0xf]
      %v608 = vld [vmem:[%s328 + $0x74] sm:$0xf]
      %v609 = vld [vmem:[%s328 + $0x78] sm:$0xf]
      %v610 = vld [vmem:[%s328 + $0x7c] sm:$0xf]
      %v611 = vld [vmem:[%s1] sm:$0xf]
      %v612 = vld [vmem:[%s1 + $0x4] sm:$0xf]
      %v613 = vld [vmem:[%s1 + $0x8] sm:$0xf]
      %v614 = vld [vmem:[%s1 + $0xc] sm:$0xf]
      %v615 = vld [vmem:[%s1 + $0x10] sm:$0xf]
      %v616 = vld [vmem:[%s1 + $0x14] sm:$0xf]
      %v617 = vld [vmem:[%s1 + $0x18] sm:$0xf]
      %v618 = vld [vmem:[%s1 + $0x1c] sm:$0xf]
      %v619 = vld [vmem:[%s1 + $0x20] sm:$0xf]
      %v620 = vld [vmem:[%s1 + $0x24] sm:$0xf]
      %v621 = vld [vmem:[%s1 + $0x28] sm:$0xf]
      %v622 = vld [vmem:[%s1 + $0x2c] sm:$0xf]
      %v623 = vld [vmem:[%s1 + $0x30] sm:$0xf]
      %v624 = vld [vmem:[%s1 + $0x34] sm:$0xf]
      %v625 = vld [vmem:[%s1 + $0x38] sm:$0xf]
      %v626 = vld [vmem:[%s1 + $0x3c] sm:$0xf]
      %v627 = vld [vmem:[%s2] sm:$0x1]
      %v629 = vperm.slane %v627, 0
      %v663 = vunpack.c.l.b16 %v579
      %v664 = vunpack.c.l.b16 %v580
      %v665 = vunpack.c.l.b16 %v581
      %v666 = vunpack.c.l.b16 %v582
      %v667 = vunpack.c.l.b16 %v583
      %v668 = vunpack.c.l.b16 %v584
      %v669 = vunpack.c.l.b16 %v585
      %v670 = vunpack.c.l.b16 %v586
      %v671 = vunpack.c.l.b16 %v587
      %v672 = vunpack.c.l.b16 %v588
      %v673 = vunpack.c.l.b16 %v589
      %v674 = vunpack.c.l.b16 %v590
      %v675 = vunpack.c.l.b16 %v591
      %v676 = vunpack.c.l.b16 %v592
      %v677 = vunpack.c.l.b16 %v593
      %v678 = vunpack.c.l.b16 %v594
      %v679 = vunpack.c.l.b16 %v595
      %v680 = vunpack.c.l.b16 %v596
      %v681 = vunpack.c.l.b16 %v597
      %v682 = vunpack.c.l.b16 %v598
      %v683 = vunpack.c.l.b16 %v599
      %v684 = vunpack.c.l.b16 %v600
      %v685 = vunpack.c.l.b16 %v601
      %v686 = vunpack.c.l.b16 %v602
      %v687 = vunpack.c.l.b16 %v603
      %v688 = vunpack.c.l.b16 %v604
      %v689 = vunpack.c.l.b16 %v605
      %v690 = vunpack.c.l.b16 %v606
      %v691 = vunpack.c.l.b16 %v607
      %v692 = vunpack.c.l.b16 %v608
      %v693 = vunpack.c.l.b16 %v609
      %v694 = vunpack.c.l.b16 %v610
      %v695 = vpack.c.b16 %v664, %v663
      %v696 = vpack.c.b16 %v666, %v665
      %v697 = vpack.c.b16 %v668, %v667
      %v698 = vpack.c.b16 %v670, %v669
      %v699 = vpack.c.b16 %v672, %v671
      %v700 = vpack.c.b16 %v674, %v673
      %v701 = vpack.c.b16 %v676, %v675
      %v702 = vpack.c.b16 %v678, %v677
      %v703 = vpack.c.b16 %v680, %v679
      %v704 = vpack.c.b16 %v682, %v681
      %v705 = vpack.c.b16 %v684, %v683
      %v706 = vpack.c.b16 %v686, %v685
      %v707 = vpack.c.b16 %v688, %v687
      %v708 = vpack.c.b16 %v690, %v689
      %v709 = vpack.c.b16 %v692, %v691
      %v710 = vpack.c.b16 %v694, %v693
      %v743 = vunpack.c.l.b16 %v611
      %v744 = vunpack.c.l.b16 %v612
      %v745 = vunpack.c.l.b16 %v613
      %v746 = vunpack.c.l.b16 %v614
      %v747 = vunpack.c.l.b16 %v615
      %v748 = vunpack.c.l.b16 %v616
      %v749 = vunpack.c.l.b16 %v617
      %v750 = vunpack.c.l.b16 %v618
      %v751 = vunpack.c.l.b16 %v619
      %v752 = vunpack.c.l.b16 %v620
      %v753 = vunpack.c.l.b16 %v621
      %v754 = vunpack.c.l.b16 %v622
      %v755 = vunpack.c.l.b16 %v623
      %v756 = vunpack.c.l.b16 %v624
      %v757 = vunpack.c.l.b16 %v625
      %v758 = vunpack.c.l.b16 %v626
      %v759 = vpack.c.b16 %v744, %v743
      %v760 = vpack.c.b16 %v746, %v745
      %v761 = vpack.c.b16 %v748, %v747
      %v762 = vpack.c.b16 %v750, %v749
      %v763 = vpack.c.b16 %v752, %v751
      %v764 = vpack.c.b16 %v754, %v753
      %v765 = vpack.c.b16 %v756, %v755
      %v766 = vpack.c.b16 %v758, %v757
      %775 = vmatpush.bf16.msra.mxu0 %v766
      %776 = vmatpush.bf16.msra.mxu0 %v765
      %777 = vmatpush.bf16.msra.mxu0 %v764
      %778 = vmatpush.bf16.msra.mxu0 %v763
      %779 = vmatpush.bf16.msra.mxu0 %v762
      %780 = vmatpush.bf16.msra.mxu0 %v761
      %781 = vmatpush.bf16.msra.mxu0 %v760
      %782 = vmatpush.bf16.msra.mxu0 %v759
      %783 = vmatmul.bf16.gmra.mxu0 %v695
      %v784 = vpop.f32.mrf.mxu0
      %v785 = vadd.f32 %v629, %v784
      %v786 = vpop.f32.mrf.mxu0
      %v787 = vadd.f32 %v629, %v786
      %788 = vmatmul.bf16.gmra.mxu0 %v696
      %v789 = vpop.f32.mrf.mxu0
      %v790 = vadd.f32 %v629, %v789
      %v791 = vpop.f32.mrf.mxu0
      %v792 = vadd.f32 %v629, %v791
      %793 = vmatmul.bf16.gmra.mxu0 %v697
      %v794 = vpop.f32.mrf.mxu0
      %v795 = vadd.f32 %v629, %v794
      %v796 = vpop.f32.mrf.mxu0
      %v797 = vadd.f32 %v629, %v796
      %798 = vmatmul.bf16.gmra.mxu0 %v698
      %v799 = vpop.f32.mrf.mxu0
      %v800 = vadd.f32 %v629, %v799
      %v801 = vpop.f32.mrf.mxu0
      %v802 = vadd.f32 %v629, %v801
      %803 = vmatmul.bf16.gmra.mxu0 %v699
      %v804 = vpop.f32.mrf.mxu0
      %v805 = vadd.f32 %v629, %v804
      %v806 = vpop.f32.mrf.mxu0
      %v807 = vadd.f32 %v629, %v806
      %808 = vmatmul.bf16.gmra.mxu0 %v700
      %v809 = vpop.f32.mrf.mxu0
      %v810 = vadd.f32 %v629, %v809
      %v811 = vpop.f32.mrf.mxu0
      %v812 = vadd.f32 %v629, %v811
      %813 = vmatmul.bf16.gmra.mxu0 %v701
      %v814 = vpop.f32.mrf.mxu0
      %v815 = vadd.f32 %v629, %v814
      %v816 = vpop.f32.mrf.mxu0
      %v817 = vadd.f32 %v629, %v816
      %818 = vmatmul.bf16.gmra.mxu0 %v702
      %v819 = vpop.f32.mrf.mxu0
      %v820 = vadd.f32 %v629, %v819
      %v821 = vpop.f32.mrf.mxu0
      %v822 = vadd.f32 %v629, %v821
      %823 = vmatmul.bf16.gmra.mxu0 %v703
      %v824 = vpop.f32.mrf.mxu0
      %v825 = vadd.f32 %v629, %v824
      %v826 = vpop.f32.mrf.mxu0
      %v827 = vadd.f32 %v629, %v826
      %828 = vmatmul.bf16.gmra.mxu0 %v704
      %v829 = vpop.f32.mrf.mxu0
      %v830 = vadd.f32 %v629, %v829
      %v831 = vpop.f32.mrf.mxu0
      %v832 = vadd.f32 %v629, %v831
      %833 = vmatmul.bf16.gmra.mxu0 %v705
      %v834 = vpop.f32.mrf.mxu0
      %v835 = vadd.f32 %v629, %v834
      %v836 = vpop.f32.mrf.mxu0
      %v837 = vadd.f32 %v629, %v836
      %838 = vmatmul.bf16.gmra.mxu0 %v706
      %v839 = vpop.f32.mrf.mxu0
      %v840 = vadd.f32 %v629, %v839
      %v841 = vpop.f32.mrf.mxu0
      %v842 = vadd.f32 %v629, %v841
      %843 = vmatmul.bf16.gmra.mxu0 %v707
      %v844 = vpop.f32.mrf.mxu0
      %v845 = vadd.f32 %v629, %v844
      %v846 = vpop.f32.mrf.mxu0
      %v847 = vadd.f32 %v629, %v846
      %848 = vmatmul.bf16.gmra.mxu0 %v708
      %v849 = vpop.f32.mrf.mxu0
      %v850 = vadd.f32 %v629, %v849
      %v851 = vpop.f32.mrf.mxu0
      %v852 = vadd.f32 %v629, %v851
      %853 = vmatmul.bf16.gmra.mxu0 %v709
      %v854 = vpop.f32.mrf.mxu0
      %v855 = vadd.f32 %v629, %v854
      %v856 = vpop.f32.mrf.mxu0
      %v857 = vadd.f32 %v629, %v856
      %858 = vmatmul.bf16.gmra.mxu0 %v710
      %v859 = vpop.f32.mrf.mxu0
      %v860 = vadd.f32 %v629, %v859
      %v861 = vpop.f32.mrf.mxu0
      %v862 = vadd.f32 %v629, %v861
      %863 = vdwg.mxu0
      %v864 = vmax.f32 %v785, 0.0
      %v865 = vmax.f32 %v787, 0.0
      %v866 = vmax.f32 %v790, 0.0
      %v867 = vmax.f32 %v792, 0.0
      %v868 = vmax.f32 %v795, 0.0
      %v869 = vmax.f32 %v797, 0.0
      %v870 = vmax.f32 %v800, 0.0
      %v871 = vmax.f32 %v802, 0.0
      %v872 = vmax.f32 %v805, 0.0
      %v873 = vmax.f32 %v807, 0.0
      %v874 = vmax.f32 %v810, 0.0
      %v875 = vmax.f32 %v812, 0.0
      %v876 = vmax.f32 %v815, 0.0
      %v877 = vmax.f32 %v817, 0.0
      %v878 = vmax.f32 %v820, 0.0
      %v879 = vmax.f32 %v822, 0.0
      %v880 = vmax.f32 %v825, 0.0
      %v881 = vmax.f32 %v827, 0.0
      %v882 = vmax.f32 %v830, 0.0
      %v883 = vmax.f32 %v832, 0.0
      %v884 = vmax.f32 %v835, 0.0
      %v885 = vmax.f32 %v837, 0.0
      %v886 = vmax.f32 %v840, 0.0
      %v887 = vmax.f32 %v842, 0.0
      %v888 = vmax.f32 %v845, 0.0
      %v889 = vmax.f32 %v847, 0.0
      %v890 = vmax.f32 %v850, 0.0
      %v891 = vmax.f32 %v852, 0.0
      %v892 = vmax.f32 %v855, 0.0
      %v893 = vmax.f32 %v857, 0.0
      %v894 = vmax.f32 %v860, 0.0
      %v895 = vmax.f32 %v862, 0.0
      %v896 = vpack.c.bf16 %v864, %v864
      %v897 = vpack.c.bf16 %v865, %v865
      %v898 = vpack.c.bf16 %v866, %v866
      %v899 = vpack.c.bf16 %v867, %v867
      %v900 = vpack.c.bf16 %v868, %v868
      %v901 = vpack.c.bf16 %v869, %v869
      %v902 = vpack.c.bf16 %v870, %v870
      %v903 = vpack.c.bf16 %v871, %v871
      %v904 = vpack.c.bf16 %v872, %v872
      %v905 = vpack.c.bf16 %v873, %v873
      %v906 = vpack.c.bf16 %v874, %v874
      %v907 = vpack.c.bf16 %v875, %v875
      %v908 = vpack.c.bf16 %v876, %v876
      %v909 = vpack.c.bf16 %v877, %v877
      %v910 = vpack.c.bf16 %v878, %v878
      %v911 = vpack.c.bf16 %v879, %v879
      %v912 = vpack.c.bf16 %v880, %v880
      %v913 = vpack.c.bf16 %v881, %v881
      %v914 = vpack.c.bf16 %v882, %v882
      %v915 = vpack.c.bf16 %v883, %v883
      %v916 = vpack.c.bf16 %v884, %v884
      %v917 = vpack.c.bf16 %v885, %v885
      %v918 = vpack.c.bf16 %v886, %v886
      %v919 = vpack.c.bf16 %v887, %v887
      %v920 = vpack.c.bf16 %v888, %v888
      %v921 = vpack.c.bf16 %v889, %v889
      %v922 = vpack.c.bf16 %v890, %v890
      %v923 = vpack.c.bf16 %v891, %v891
      %v924 = vpack.c.bf16 %v892, %v892
      %v925 = vpack.c.bf16 %v893, %v893
      %v926 = vpack.c.bf16 %v894, %v894
      %v927 = vpack.c.bf16 %v895, %v895
      %s928 = scalar_lea.vmem [#allocation2], 16
      %929 = vst.msk [vmem:[%s928 + $0x4] sm:$0xf] %vm334, %v896
      %930 = vst.msk [vmem:[%s928 + $0x8] sm:$0xf] %vm334, %v897
      %931 = vst.msk [vmem:[%s928 + $0x14] sm:$0xf] %vm334, %v898
      %932 = vst.msk [vmem:[%s928 + $0x18] sm:$0xf] %vm334, %v899
      %933 = vst.msk [vmem:[%s928 + $0x24] sm:$0xf] %vm334, %v900
      %934 = vst.msk [vmem:[%s928 + $0x28] sm:$0xf] %vm334, %v901
      %935 = vst.msk [vmem:[%s928 + $0x34] sm:$0xf] %vm334, %v902
      %936 = vst.msk [vmem:[%s928 + $0x38] sm:$0xf] %vm334, %v903
      %937 = vst.msk [vmem:[%s928 + $0x44] sm:$0xf] %vm334, %v904
      %938 = vst.msk [vmem:[%s928 + $0x48] sm:$0xf] %vm334, %v905
      %939 = vst.msk [vmem:[%s928 + $0x54] sm:$0xf] %vm334, %v906
      %940 = vst.msk [vmem:[%s928 + $0x58] sm:$0xf] %vm334, %v907
      %941 = vst.msk [vmem:[%s928 + $0x64] sm:$0xf] %vm334, %v908
      %942 = vst.msk [vmem:[%s928 + $0x68] sm:$0xf] %vm334, %v909
      %943 = vst.msk [vmem:[%s928 + $0x74] sm:$0xf] %vm334, %v910
      %944 = vst.msk [vmem:[%s928 + $0x78] sm:$0xf] %vm334, %v911
      %945 = vst.msk [vmem:[%s928 + $0x84] sm:$0xf] %vm334, %v912
      %946 = vst.msk [vmem:[%s928 + $0x88] sm:$0xf] %vm334, %v913
      %947 = vst.msk [vmem:[%s928 + $0x94] sm:$0xf] %vm334, %v914
      %948 = vst.msk [vmem:[%s928 + $0x98] sm:$0xf] %vm334, %v915
      %949 = vst.msk [vmem:[%s928 + $0xa4] sm:$0xf] %vm334, %v916
      %950 = vst.msk [vmem:[%s928 + $0xa8] sm:$0xf] %vm334, %v917
      %951 = vst.msk [vmem:[%s928 + $0xb4] sm:$0xf] %vm334, %v918
      %952 = vst.msk [vmem:[%s928 + $0xb8] sm:$0xf] %vm334, %v919
      %953 = vst.msk [vmem:[%s928 + $0xc4] sm:$0xf] %vm334, %v920
      %954 = vst.msk [vmem:[%s928 + $0xc8] sm:$0xf] %vm334, %v921
      %955 = vst.msk [vmem:[%s928 + $0xd4] sm:$0xf] %vm334, %v922
      %956 = vst.msk [vmem:[%s928 + $0xd8] sm:$0xf] %vm334, %v923
      %957 = vst.msk [vmem:[%s928 + $0xe4] sm:$0xf] %vm334, %v924
      %958 = vst.msk [vmem:[%s928 + $0xe8] sm:$0xf] %vm334, %v925
      %959 = vst.msk [vmem:[%s928 + $0xf4] sm:$0xf] %vm334, %v926
      %960 = vst.msk [vmem:[%s928 + $0xf8] sm:$0xf] %vm334, %v927
      %v961 = vld [vmem:[#allocation2] sm:$0x8]
      %v962 = vld [vmem:[#allocation2 + $0x4] sm:$0xf]
      %v963 = vld [vmem:[#allocation2 + $0x8] sm:$0xf]
      %v964 = vld [vmem:[#allocation2 + $0x10] sm:$0x8]
      %v965 = vld [vmem:[#allocation2 + $0x14] sm:$0xf]
      %v966 = vld [vmem:[#allocation2 + $0x18] sm:$0xf]
      %v967 = vld [vmem:[#allocation2 + $0x20] sm:$0x8]
      %v968 = vld [vmem:[#allocation2 + $0x24] sm:$0xf]
      %v969 = vld [vmem:[#allocation2 + $0x28] sm:$0xf]
      %v970 = vld [vmem:[#allocation2 + $0x30] sm:$0x8]
      %v971 = vld [vmem:[#allocation2 + $0x34] sm:$0xf]
      %v972 = vld [vmem:[#allocation2 + $0x38] sm:$0xf]
      %v973 = vld [vmem:[#allocation2 + $0x40] sm:$0x8]
      %v974 = vld [vmem:[#allocation2 + $0x44] sm:$0xf]
      %v975 = vld [vmem:[#allocation2 + $0x48] sm:$0xf]
      %v976 = vld [vmem:[#allocation2 + $0x50] sm:$0x8]
      %v977 = vld [vmem:[#allocation2 + $0x54] sm:$0xf]
      %v978 = vld [vmem:[#allocation2 + $0x58] sm:$0xf]
      %v979 = vld [vmem:[#allocation2 + $0x60] sm:$0x8]
      %v980 = vld [vmem:[#allocation2 + $0x64] sm:$0xf]
      %v981 = vld [vmem:[#allocation2 + $0x68] sm:$0xf]
      %v982 = vld [vmem:[#allocation2 + $0x70] sm:$0x8]
      %v983 = vld [vmem:[#allocation2 + $0x74] sm:$0xf]
      %v984 = vld [vmem:[#allocation2 + $0x78] sm:$0xf]
      %v985 = vld [vmem:[#allocation2 + $0x80] sm:$0x8]
      %v986 = vld [vmem:[#allocation2 + $0x84] sm:$0xf]
      %v987 = vld [vmem:[#allocation2 + $0x88] sm:$0xf]
      %v988 = vld [vmem:[#allocation2 + $0x90] sm:$0x8]
      %v989 = vld [vmem:[#allocation2 + $0x94] sm:$0xf]
      %v990 = vld [vmem:[#allocation2 + $0x98] sm:$0xf]
      %v991 = vld [vmem:[#allocation2 + $0xa0] sm:$0x8]
      %v992 = vld [vmem:[#allocation2 + $0xa4] sm:$0xf]
      %v993 = vld [vmem:[#allocation2 + $0xa8] sm:$0xf]
      %v994 = vld [vmem:[#allocation2 + $0xb0] sm:$0x8]
      %v995 = vld [vmem:[#allocation2 + $0xb4] sm:$0xf]
      %v996 = vld [vmem:[#allocation2 + $0xb8] sm:$0xf]
      %v997 = vld [vmem:[#allocation2 + $0xc0] sm:$0x8]
      %v998 = vld [vmem:[#allocation2 + $0xc4] sm:$0xf]
      %v999 = vld [vmem:[#allocation2 + $0xc8] sm:$0xf]
      %v1000 = vld [vmem:[#allocation2 + $0xd0] sm:$0x8]
      %v1001 = vld [vmem:[#allocation2 + $0xd4] sm:$0xf]
      %v1002 = vld [vmem:[#allocation2 + $0xd8] sm:$0xf]
      %v1003 = vld [vmem:[#allocation2 + $0xe0] sm:$0x8]
      %v1004 = vld [vmem:[#allocation2 + $0xe4] sm:$0xf]
      %v1005 = vld [vmem:[#allocation2 + $0xe8] sm:$0xf]
      %v1006 = vld [vmem:[#allocation2 + $0xf0] sm:$0x8]
      %v1007 = vld [vmem:[#allocation2 + $0xf4] sm:$0xf]
      %v1008 = vld [vmem:[#allocation2 + $0xf8] sm:$0xf]
      %vm1009 = vsmask.f32 4368
      %vm1010 = vmor %vm402, %vm1009
      %v1012 = vshrl.u32 %v961, 16
      %v1014 = vrot.slane %v1012, 7
      %v1015 = vrot.slane %v1014, 4
      %v1017 = vshrl.u32 %v962, 16
      %v1019 = vrot.slane %v1017, 7
      %v1020 = vshll.u32 %v962, 16
      %v1022 = vor.u32 %v1019, %v1020
      %v1023 = vsel %vm1010, %v1015, %v1022
      %v1024 = vrot.slane %v1019, 4
      %v1026 = vshrl.u32 %v963, 16
      %v1028 = vrot.slane %v1026, 7
      %v1029 = vshll.u32 %v963, 16
      %v1031 = vor.u32 %v1028, %v1029
      %v1032 = vsel %vm1010, %v1024, %v1031
      %v1034 = vshrl.u32 %v964, 16
      %v1036 = vrot.slane %v1034, 7
      %v1037 = vrot.slane %v1036, 4
      %v1039 = vshrl.u32 %v965, 16
      %v1041 = vrot.slane %v1039, 7
      %v1042 = vshll.u32 %v965, 16
      %v1044 = vor.u32 %v1041, %v1042
      %v1045 = vsel %vm1010, %v1037, %v1044
      %v1046 = vrot.slane %v1041, 4
      %v1048 = vshrl.u32 %v966, 16
      %v1050 = vrot.slane %v1048, 7
      %v1051 = vshll.u32 %v966, 16
      %v1053 = vor.u32 %v1050, %v1051
      %v1054 = vsel %vm1010, %v1046, %v1053
      %v1056 = vshrl.u32 %v967, 16
      %v1058 = vrot.slane %v1056, 7
      %v1059 = vrot.slane %v1058, 4
      %v1061 = vshrl.u32 %v968, 16
      %v1063 = vrot.slane %v1061, 7
      %v1064 = vshll.u32 %v968, 16
      %v1066 = vor.u32 %v1063, %v1064
      %v1067 = vsel %vm1010, %v1059, %v1066
      %v1068 = vrot.slane %v1063, 4
      %v1070 = vshrl.u32 %v969, 16
      %v1072 = vrot.slane %v1070, 7
      %v1073 = vshll.u32 %v969, 16
      %v1075 = vor.u32 %v1072, %v1073
      %v1076 = vsel %vm1010, %v1068, %v1075
      %v1078 = vshrl.u32 %v970, 16
      %v1080 = vrot.slane %v1078, 7
      %v1081 = vrot.slane %v1080, 4
      %v1083 = vshrl.u32 %v971, 16
      %v1085 = vrot.slane %v1083, 7
      %v1086 = vshll.u32 %v971, 16
      %v1088 = vor.u32 %v1085, %v1086
      %v1089 = vsel %vm1010, %v1081, %v1088
      %v1090 = vrot.slane %v1085, 4
      %v1092 = vshrl.u32 %v972, 16
      %v1094 = vrot.slane %v1092, 7
      %v1095 = vshll.u32 %v972, 16
      %v1097 = vor.u32 %v1094, %v1095
      %v1098 = vsel %vm1010, %v1090, %v1097
      %v1100 = vshrl.u32 %v973, 16
      %v1102 = vrot.slane %v1100, 7
      %v1103 = vrot.slane %v1102, 4
      %v1105 = vshrl.u32 %v974, 16
      %v1107 = vrot.slane %v1105, 7
      %v1108 = vshll.u32 %v974, 16
      %v1110 = vor.u32 %v1107, %v1108
      %v1111 = vsel %vm1010, %v1103, %v1110
      %v1112 = vrot.slane %v1107, 4
      %v1114 = vshrl.u32 %v975, 16
      %v1116 = vrot.slane %v1114, 7
      %v1117 = vshll.u32 %v975, 16
      %v1119 = vor.u32 %v1116, %v1117
      %v1120 = vsel %vm1010, %v1112, %v1119
      %v1122 = vshrl.u32 %v976, 16
      %v1124 = vrot.slane %v1122, 7
      %v1125 = vrot.slane %v1124, 4
      %v1127 = vshrl.u32 %v977, 16
      %v1129 = vrot.slane %v1127, 7
      %v1130 = vshll.u32 %v977, 16
      %v1132 = vor.u32 %v1129, %v1130
      %v1133 = vsel %vm1010, %v1125, %v1132
      %v1134 = vrot.slane %v1129, 4
      %v1136 = vshrl.u32 %v978, 16
      %v1138 = vrot.slane %v1136, 7
      %v1139 = vshll.u32 %v978, 16
      %v1141 = vor.u32 %v1138, %v1139
      %v1142 = vsel %vm1010, %v1134, %v1141
      %v1144 = vshrl.u32 %v979, 16
      %v1146 = vrot.slane %v1144, 7
      %v1147 = vrot.slane %v1146, 4
      %v1149 = vshrl.u32 %v980, 16
      %v1151 = vrot.slane %v1149, 7
      %v1152 = vshll.u32 %v980, 16
      %v1154 = vor.u32 %v1151, %v1152
      %v1155 = vsel %vm1010, %v1147, %v1154
      %v1156 = vrot.slane %v1151, 4
      %v1158 = vshrl.u32 %v981, 16
      %v1160 = vrot.slane %v1158, 7
      %v1161 = vshll.u32 %v981, 16
      %v1163 = vor.u32 %v1160, %v1161
      %v1164 = vsel %vm1010, %v1156, %v1163
      %v1166 = vshrl.u32 %v982, 16
      %v1168 = vrot.slane %v1166, 7
      %v1169 = vrot.slane %v1168, 4
      %v1171 = vshrl.u32 %v983, 16
      %v1173 = vrot.slane %v1171, 7
      %v1174 = vshll.u32 %v983, 16
      %v1176 = vor.u32 %v1173, %v1174
      %v1177 = vsel %vm1010, %v1169, %v1176
      %v1178 = vrot.slane %v1173, 4
      %v1180 = vshrl.u32 %v984, 16
      %v1182 = vrot.slane %v1180, 7
      %v1183 = vshll.u32 %v984, 16
      %v1185 = vor.u32 %v1182, %v1183
      %v1186 = vsel %vm1010, %v1178, %v1185
      %v1188 = vshrl.u32 %v985, 16
      %v1190 = vrot.slane %v1188, 7
      %v1191 = vrot.slane %v1190, 4
      %v1193 = vshrl.u32 %v986, 16
      %v1195 = vrot.slane %v1193, 7
      %v1196 = vshll.u32 %v986, 16
      %v1198 = vor.u32 %v1195, %v1196
      %v1199 = vsel %vm1010, %v1191, %v1198
      %v1200 = vrot.slane %v1195, 4
      %v1202 = vshrl.u32 %v987, 16
      %v1204 = vrot.slane %v1202, 7
      %v1205 = vshll.u32 %v987, 16
      %v1207 = vor.u32 %v1204, %v1205
      %v1208 = vsel %vm1010, %v1200, %v1207
      %v1210 = vshrl.u32 %v988, 16
      %v1212 = vrot.slane %v1210, 7
      %v1213 = vrot.slane %v1212, 4
      %v1215 = vshrl.u32 %v989, 16
      %v1217 = vrot.slane %v1215, 7
      %v1218 = vshll.u32 %v989, 16
      %v1220 = vor.u32 %v1217, %v1218
      %v1221 = vsel %vm1010, %v1213, %v1220
      %v1222 = vrot.slane %v1217, 4
      %v1224 = vshrl.u32 %v990, 16
      %v1226 = vrot.slane %v1224, 7
      %v1227 = vshll.u32 %v990, 16
      %v1229 = vor.u32 %v1226, %v1227
      %v1230 = vsel %vm1010, %v1222, %v1229
      %v1232 = vshrl.u32 %v991, 16
      %v1234 = vrot.slane %v1232, 7
      %v1235 = vrot.slane %v1234, 4
      %v1237 = vshrl.u32 %v992, 16
      %v1239 = vrot.slane %v1237, 7
      %v1240 = vshll.u32 %v992, 16
      %v1242 = vor.u32 %v1239, %v1240
      %v1243 = vsel %vm1010, %v1235, %v1242
      %v1244 = vrot.slane %v1239, 4
      %v1246 = vshrl.u32 %v993, 16
      %v1248 = vrot.slane %v1246, 7
      %v1249 = vshll.u32 %v993, 16
      %v1251 = vor.u32 %v1248, %v1249
      %v1252 = vsel %vm1010, %v1244, %v1251
      %v1254 = vshrl.u32 %v994, 16
      %v1256 = vrot.slane %v1254, 7
      %v1257 = vrot.slane %v1256, 4
      %v1259 = vshrl.u32 %v995, 16
      %v1261 = vrot.slane %v1259, 7
      %v1262 = vshll.u32 %v995, 16
      %v1264 = vor.u32 %v1261, %v1262
      %v1265 = vsel %vm1010, %v1257, %v1264
      %v1266 = vrot.slane %v1261, 4
      %v1268 = vshrl.u32 %v996, 16
      %v1270 = vrot.slane %v1268, 7
      %v1271 = vshll.u32 %v996, 16
      %v1273 = vor.u32 %v1270, %v1271
      %v1274 = vsel %vm1010, %v1266, %v1273
      %v1276 = vshrl.u32 %v997, 16
      %v1278 = vrot.slane %v1276, 7
      %v1279 = vrot.slane %v1278, 4
      %v1281 = vshrl.u32 %v998, 16
      %v1283 = vrot.slane %v1281, 7
      %v1284 = vshll.u32 %v998, 16
      %v1286 = vor.u32 %v1283, %v1284
      %v1287 = vsel %vm1010, %v1279, %v1286
      %v1288 = vrot.slane %v1283, 4
      %v1290 = vshrl.u32 %v999, 16
      %v1292 = vrot.slane %v1290, 7
      %v1293 = vshll.u32 %v999, 16
      %v1295 = vor.u32 %v1292, %v1293
      %v1296 = vsel %vm1010, %v1288, %v1295
      %v1298 = vshrl.u32 %v1000, 16
      %v1300 = vrot.slane %v1298, 7
      %v1301 = vrot.slane %v1300, 4
      %v1303 = vshrl.u32 %v1001, 16
      %v1305 = vrot.slane %v1303, 7
      %v1306 = vshll.u32 %v1001, 16
      %v1308 = vor.u32 %v1305, %v1306
      %v1309 = vsel %vm1010, %v1301, %v1308
      %v1310 = vrot.slane %v1305, 4
      %v1312 = vshrl.u32 %v1002, 16
      %v1314 = vrot.slane %v1312, 7
      %v1315 = vshll.u32 %v1002, 16
      %v1317 = vor.u32 %v1314, %v1315
      %v1318 = vsel %vm1010, %v1310, %v1317
      %v1320 = vshrl.u32 %v1003, 16
      %v1322 = vrot.slane %v1320, 7
      %v1323 = vrot.slane %v1322, 4
      %v1325 = vshrl.u32 %v1004, 16
      %v1327 = vrot.slane %v1325, 7
      %v1328 = vshll.u32 %v1004, 16
      %v1330 = vor.u32 %v1327, %v1328
      %v1331 = vsel %vm1010, %v1323, %v1330
      %v1332 = vrot.slane %v1327, 4
      %v1334 = vshrl.u32 %v1005, 16
      %v1336 = vrot.slane %v1334, 7
      %v1337 = vshll.u32 %v1005, 16
      %v1339 = vor.u32 %v1336, %v1337
      %v1340 = vsel %vm1010, %v1332, %v1339
      %v1342 = vshrl.u32 %v1006, 16
      %v1344 = vrot.slane %v1342, 7
      %v1345 = vrot.slane %v1344, 4
      %v1347 = vshrl.u32 %v1007, 16
      %v1349 = vrot.slane %v1347, 7
      %v1350 = vshll.u32 %v1007, 16
      %v1352 = vor.u32 %v1349, %v1350
      %v1353 = vsel %vm1010, %v1345, %v1352
      %v1354 = vrot.slane %v1349, 4
      %v1356 = vshrl.u32 %v1008, 16
      %v1358 = vrot.slane %v1356, 7
      %v1359 = vshll.u32 %v1008, 16
      %v1361 = vor.u32 %v1358, %v1359
      %v1362 = vsel %vm1010, %v1354, %v1361
      %1395 = vst.msk [vmem:[#allocation4] sm:$0xf] %vm334, %v1023
      %1396 = vst.msk [vmem:[#allocation4 + $0x14] sm:$0xf] %vm334, %v1032
      %1397 = vst.msk [vmem:[#allocation4 + $0x28] sm:$0xf] %vm334, %v1045
      %1398 = vst.msk [vmem:[#allocation4 + $0x3c] sm:$0xf] %vm334, %v1054
      %1399 = vst.msk [vmem:[#allocation4 + $0x50] sm:$0xf] %vm334, %v1067
      %1400 = vst.msk [vmem:[#allocation4 + $0x64] sm:$0xf] %vm334, %v1076
      %1401 = vst.msk [vmem:[#allocation4 + $0x78] sm:$0xf] %vm334, %v1089
      %1402 = vst.msk [vmem:[#allocation4 + $0x8c] sm:$0xf] %vm334, %v1098
      %1403 = vst.msk [vmem:[#allocation4 + $0xa0] sm:$0xf] %vm334, %v1111
      %1404 = vst.msk [vmem:[#allocation4 + $0xb4] sm:$0xf] %vm334, %v1120
      %1405 = vst.msk [vmem:[#allocation4 + $0xc8] sm:$0xf] %vm334, %v1133
      %1406 = vst.msk [vmem:[#allocation4 + $0xdc] sm:$0xf] %vm334, %v1142
      %1407 = vst.msk [vmem:[#allocation4 + $0xf0] sm:$0xf] %vm334, %v1155
      %1408 = vst.msk [vmem:[#allocation4 + $0x104] sm:$0xf] %vm334, %v1164
      %1409 = vst.msk [vmem:[#allocation4 + $0x118] sm:$0xf] %vm334, %v1177
      %1410 = vst.msk [vmem:[#allocation4 + $0x12c] sm:$0xf] %vm334, %v1186
      %1411 = vst.msk [vmem:[#allocation4 + $0x140] sm:$0xf] %vm334, %v1199
      %1412 = vst.msk [vmem:[#allocation4 + $0x154] sm:$0xf] %vm334, %v1208
      %1413 = vst.msk [vmem:[#allocation4 + $0x168] sm:$0xf] %vm334, %v1221
      %1414 = vst.msk [vmem:[#allocation4 + $0x17c] sm:$0xf] %vm334, %v1230
      %1415 = vst.msk [vmem:[#allocation4 + $0x190] sm:$0xf] %vm334, %v1243
      %1416 = vst.msk [vmem:[#allocation4 + $0x1a4] sm:$0xf] %vm334, %v1252
      %1417 = vst.msk [vmem:[#allocation4 + $0x1b8] sm:$0xf] %vm334, %v1265
      %1418 = vst.msk [vmem:[#allocation4 + $0x1cc] sm:$0xf] %vm334, %v1274
      %1419 = vst.msk [vmem:[#allocation4 + $0x1e0] sm:$0xf] %vm334, %v1287
      %1420 = vst.msk [vmem:[#allocation4 + $0x1f4] sm:$0xf] %vm334, %v1296
      %1421 = vst.msk [vmem:[#allocation4 + $0x208] sm:$0xf] %vm334, %v1309
      %1422 = vst.msk [vmem:[#allocation4 + $0x21c] sm:$0xf] %vm334, %v1318
      %1423 = vst.msk [vmem:[#allocation4 + $0x230] sm:$0xf] %vm334, %v1331
      %1424 = vst.msk [vmem:[#allocation4 + $0x244] sm:$0xf] %vm334, %v1340
      %1425 = vst.msk [vmem:[#allocation4 + $0x258] sm:$0xf] %vm334, %v1353
      %1426 = vst.msk [vmem:[#allocation4 + $0x26c] sm:$0xf] %vm334, %v1362
      %v1427 = vld [vmem:[#allocation2 + $0x4] sm:$0xf]
      %v1428 = vld [vmem:[#allocation2 + $0x8] sm:$0xf]
      %v1429 = vld [vmem:[#allocation2 + $0x14] sm:$0xf]
      %v1430 = vld [vmem:[#allocation2 + $0x18] sm:$0xf]
      %v1431 = vld [vmem:[#allocation2 + $0x24] sm:$0xf]
      %v1432 = vld [vmem:[#allocation2 + $0x28] sm:$0xf]
      %v1433 = vld [vmem:[#allocation2 + $0x34] sm:$0xf]
      %v1434 = vld [vmem:[#allocation2 + $0x38] sm:$0xf]
      %v1435 = vld [vmem:[#allocation2 + $0x44] sm:$0xf]
      %v1436 = vld [vmem:[#allocation2 + $0x48] sm:$0xf]
      %v1437 = vld [vmem:[#allocation2 + $0x54] sm:$0xf]
      %v1438 = vld [vmem:[#allocation2 + $0x58] sm:$0xf]
      %v1439 = vld [vmem:[#allocation2 + $0x64] sm:$0xf]
      %v1440 = vld [vmem:[#allocation2 + $0x68] sm:$0xf]
      %v1441 = vld [vmem:[#allocation2 + $0x74] sm:$0xf]
      %v1442 = vld [vmem:[#allocation2 + $0x78] sm:$0xf]
      %v1443 = vld [vmem:[#allocation2 + $0x84] sm:$0xf]
      %v1444 = vld [vmem:[#allocation2 + $0x88] sm:$0xf]
      %v1445 = vld [vmem:[#allocation2 + $0x94] sm:$0xf]
      %v1446 = vld [vmem:[#allocation2 + $0x98] sm:$0xf]
      %v1447 = vld [vmem:[#allocation2 + $0xa4] sm:$0xf]
      %v1448 = vld [vmem:[#allocation2 + $0xa8] sm:$0xf]
      %v1449 = vld [vmem:[#allocation2 + $0xb4] sm:$0xf]
      %v1450 = vld [vmem:[#allocation2 + $0xb8] sm:$0xf]
      %v1451 = vld [vmem:[#allocation2 + $0xc4] sm:$0xf]
      %v1452 = vld [vmem:[#allocation2 + $0xc8] sm:$0xf]
      %v1453 = vld [vmem:[#allocation2 + $0xd4] sm:$0xf]
      %v1454 = vld [vmem:[#allocation2 + $0xd8] sm:$0xf]
      %v1455 = vld [vmem:[#allocation2 + $0xe4] sm:$0xf]
      %v1456 = vld [vmem:[#allocation2 + $0xe8] sm:$0xf]
      %v1457 = vld [vmem:[#allocation2 + $0xf4] sm:$0xf]
      %v1458 = vld [vmem:[#allocation2 + $0xf8] sm:$0xf]
      %1491 = vrot.lane.b32.xlu0 %v1427, 64
      %v1492 = vpop.permute.xlu0 %1491
      %1493 = vrot.lane.b32.xlu0 %v1428, 64
      %v1494 = vpop.permute.xlu0 %1493
      %1495 = vrot.lane.b32.xlu0 %v1429, 64
      %v1496 = vpop.permute.xlu0 %1495
      %1497 = vrot.lane.b32.xlu0 %v1430, 64
      %v1498 = vpop.permute.xlu0 %1497
      %1499 = vrot.lane.b32.xlu0 %v1431, 64
      %v1500 = vpop.permute.xlu0 %1499
      %1501 = vrot.lane.b32.xlu0 %v1432, 64
      %v1502 = vpop.permute.xlu0 %1501
      %1503 = vrot.lane.b32.xlu0 %v1433, 64
      %v1504 = vpop.permute.xlu0 %1503
      %1505 = vrot.lane.b32.xlu0 %v1434, 64
      %v1506 = vpop.permute.xlu0 %1505
      %1507 = vrot.lane.b32.xlu0 %v1435, 64
      %v1508 = vpop.permute.xlu0 %1507
      %1509 = vrot.lane.b32.xlu0 %v1436, 64
      %v1510 = vpop.permute.xlu0 %1509
      %1511 = vrot.lane.b32.xlu0 %v1437, 64
      %v1512 = vpop.permute.xlu0 %1511
      %1513 = vrot.lane.b32.xlu0 %v1438, 64
      %v1514 = vpop.permute.xlu0 %1513
      %1515 = vrot.lane.b32.xlu0 %v1439, 64
      %v1516 = vpop.permute.xlu0 %1515
      %1517 = vrot.lane.b32.xlu0 %v1440, 64
      %v1518 = vpop.permute.xlu0 %1517
      %1519 = vrot.lane.b32.xlu0 %v1441, 64
      %v1520 = vpop.permute.xlu0 %1519
      %1521 = vrot.lane.b32.xlu0 %v1442, 64
      %v1522 = vpop.permute.xlu0 %1521
      %1523 = vrot.lane.b32.xlu0 %v1443, 64
      %v1524 = vpop.permute.xlu0 %1523
      %1525 = vrot.lane.b32.xlu0 %v1444, 64
      %v1526 = vpop.permute.xlu0 %1525
      %1527 = vrot.lane.b32.xlu0 %v1445, 64
      %v1528 = vpop.permute.xlu0 %1527
      %1529 = vrot.lane.b32.xlu0 %v1446, 64
      %v1530 = vpop.permute.xlu0 %1529
      %1531 = vrot.lane.b32.xlu0 %v1447, 64
      %v1532 = vpop.permute.xlu0 %1531
      %1533 = vrot.lane.b32.xlu0 %v1448, 64
      %v1534 = vpop.permute.xlu0 %1533
      %1535 = vrot.lane.b32.xlu0 %v1449, 64
      %v1536 = vpop.permute.xlu0 %1535
      %1537 = vrot.lane.b32.xlu0 %v1450, 64
      %v1538 = vpop.permute.xlu0 %1537
      %1539 = vrot.lane.b32.xlu0 %v1451, 64
      %v1540 = vpop.permute.xlu0 %1539
      %1541 = vrot.lane.b32.xlu0 %v1452, 64
      %v1542 = vpop.permute.xlu0 %1541
      %1543 = vrot.lane.b32.xlu0 %v1453, 64
      %v1544 = vpop.permute.xlu0 %1543
      %1545 = vrot.lane.b32.xlu0 %v1454, 64
      %v1546 = vpop.permute.xlu0 %1545
      %1547 = vrot.lane.b32.xlu0 %v1455, 64
      %v1548 = vpop.permute.xlu0 %1547
      %1549 = vrot.lane.b32.xlu0 %v1456, 64
      %v1550 = vpop.permute.xlu0 %1549
      %1551 = vrot.lane.b32.xlu0 %v1457, 64
      %v1552 = vpop.permute.xlu0 %1551
      %1553 = vrot.lane.b32.xlu0 %v1458, 64
      %v1554 = vpop.permute.xlu0 %1553
      %vm1587 = vcmask 1043968
      %1588 = vst.msk [vmem:[#allocation4] sm:$0xf] %vm1587, %v1492
      %1589 = vst.msk [vmem:[#allocation4 + $0x14] sm:$0xf] %vm1587, %v1494
      %1590 = vst.msk [vmem:[#allocation4 + $0x28] sm:$0xf] %vm1587, %v1496
      %1591 = vst.msk [vmem:[#allocation4 + $0x3c] sm:$0xf] %vm1587, %v1498
      %1592 = vst.msk [vmem:[#allocation4 + $0x50] sm:$0xf] %vm1587, %v1500
      %1593 = vst.msk [vmem:[#allocation4 + $0x64] sm:$0xf] %vm1587, %v1502
      %1594 = vst.msk [vmem:[#allocation4 + $0x78] sm:$0xf] %vm1587, %v1504
      %1595 = vst.msk [vmem:[#allocation4 + $0x8c] sm:$0xf] %vm1587, %v1506
      %1596 = vst.msk [vmem:[#allocation4 + $0xa0] sm:$0xf] %vm1587, %v1508
      %1597 = vst.msk [vmem:[#allocation4 + $0xb4] sm:$0xf] %vm1587, %v1510
      %1598 = vst.msk [vmem:[#allocation4 + $0xc8] sm:$0xf] %vm1587, %v1512
      %1599 = vst.msk [vmem:[#allocation4 + $0xdc] sm:$0xf] %vm1587, %v1514
      %1600 = vst.msk [vmem:[#allocation4 + $0xf0] sm:$0xf] %vm1587, %v1516
      %1601 = vst.msk [vmem:[#allocation4 + $0x104] sm:$0xf] %vm1587, %v1518
      %1602 = vst.msk [vmem:[#allocation4 + $0x118] sm:$0xf] %vm1587, %v1520
      %1603 = vst.msk [vmem:[#allocation4 + $0x12c] sm:$0xf] %vm1587, %v1522
      %1604 = vst.msk [vmem:[#allocation4 + $0x140] sm:$0xf] %vm1587, %v1524
      %1605 = vst.msk [vmem:[#allocation4 + $0x154] sm:$0xf] %vm1587, %v1526
      %1606 = vst.msk [vmem:[#allocation4 + $0x168] sm:$0xf] %vm1587, %v1528
      %1607 = vst.msk [vmem:[#allocation4 + $0x17c] sm:$0xf] %vm1587, %v1530
      %1608 = vst.msk [vmem:[#allocation4 + $0x190] sm:$0xf] %vm1587, %v1532
      %1609 = vst.msk [vmem:[#allocation4 + $0x1a4] sm:$0xf] %vm1587, %v1534
      %1610 = vst.msk [vmem:[#allocation4 + $0x1b8] sm:$0xf] %vm1587, %v1536
      %1611 = vst.msk [vmem:[#allocation4 + $0x1cc] sm:$0xf] %vm1587, %v1538
      %1612 = vst.msk [vmem:[#allocation4 + $0x1e0] sm:$0xf] %vm1587, %v1540
      %1613 = vst.msk [vmem:[#allocation4 + $0x1f4] sm:$0xf] %vm1587, %v1542
      %1614 = vst.msk [vmem:[#allocation4 + $0x208] sm:$0xf] %vm1587, %v1544
      %1615 = vst.msk [vmem:[#allocation4 + $0x21c] sm:$0xf] %vm1587, %v1546
      %1616 = vst.msk [vmem:[#allocation4 + $0x230] sm:$0xf] %vm1587, %v1548
      %1617 = vst.msk [vmem:[#allocation4 + $0x244] sm:$0xf] %vm1587, %v1550
      %1618 = vst.msk [vmem:[#allocation4 + $0x258] sm:$0xf] %vm1587, %v1552
      %1619 = vst.msk [vmem:[#allocation4 + $0x26c] sm:$0xf] %vm1587, %v1554
      %v1620 = vld [vmem:[#allocation2 + $0x4] sm:$0xf]
      %v1621 = vld [vmem:[#allocation2 + $0x8] sm:$0xf]
      %v1622 = vld [vmem:[#allocation2 + $0xc] sm:$0x1]
      %v1623 = vld [vmem:[#allocation2 + $0x14] sm:$0xf]
      %v1624 = vld [vmem:[#allocation2 + $0x18] sm:$0xf]
      %v1625 = vld [vmem:[#allocation2 + $0x1c] sm:$0x1]
      %v1626 = vld [vmem:[#allocation2 + $0x24] sm:$0xf]
      %v1627 = vld [vmem:[#allocation2 + $0x28] sm:$0xf]
      %v1628 = vld [vmem:[#allocation2 + $0x2c] sm:$0x1]
      %v1629 = vld [vmem:[#allocation2 + $0x34] sm:$0xf]
      %v1630 = vld [vmem:[#allocation2 + $0x38] sm:$0xf]
      %v1631 = vld [vmem:[#allocation2 + $0x3c] sm:$0x1]
      %v1632 = vld [vmem:[#allocation2 + $0x44] sm:$0xf]
      %v1633 = vld [vmem:[#allocation2 + $0x48] sm:$0xf]
      %v1634 = vld [vmem:[#allocation2 + $0x4c] sm:$0x1]
      %v1635 = vld [vmem:[#allocation2 + $0x54] sm:$0xf]
      %v1636 = vld [vmem:[#allocation2 + $0x58] sm:$0xf]
      %v1637 = vld [vmem:[#allocation2 + $0x5c] sm:$0x1]
      %v1638 = vld [vmem:[#allocation2 + $0x64] sm:$0xf]
      %v1639 = vld [vmem:[#allocation2 + $0x68] sm:$0xf]
      %v1640 = vld [vmem:[#allocation2 + $0x6c] sm:$0x1]
      %v1641 = vld [vmem:[#allocation2 + $0x74] sm:$0xf]
      %v1642 = vld [vmem:[#allocation2 + $0x78] sm:$0xf]
      %v1643 = vld [vmem:[#allocation2 + $0x7c] sm:$0x1]
      %v1644 = vld [vmem:[#allocation2 + $0x84] sm:$0xf]
      %v1645 = vld [vmem:[#allocation2 + $0x88] sm:$0xf]
      %v1646 = vld [vmem:[#allocation2 + $0x8c] sm:$0x1]
      %v1647 = vld [vmem:[#allocation2 + $0x94] sm:$0xf]
      %v1648 = vld [vmem:[#allocation2 + $0x98] sm:$0xf]
      %v1649 = vld [vmem:[#allocation2 + $0x9c] sm:$0x1]
      %v1650 = vld [vmem:[#allocation2 + $0xa4] sm:$0xf]
      %v1651 = vld [vmem:[#allocation2 + $0xa8] sm:$0xf]
      %v1652 = vld [vmem:[#allocation2 + $0xac] sm:$0x1]
      %v1653 = vld [vmem:[#allocation2 + $0xb4] sm:$0xf]
      %v1654 = vld [vmem:[#allocation2 + $0xb8] sm:$0xf]
      %v1655 = vld [vmem:[#allocation2 + $0xbc] sm:$0x1]
      %v1656 = vld [vmem:[#allocation2 + $0xc4] sm:$0xf]
      %v1657 = vld [vmem:[#allocation2 + $0xc8] sm:$0xf]
      %v1658 = vld [vmem:[#allocation2 + $0xcc] sm:$0x1]
      %v1659 = vld [vmem:[#allocation2 + $0xd4] sm:$0xf]
      %v1660 = vld [vmem:[#allocation2 + $0xd8] sm:$0xf]
      %v1661 = vld [vmem:[#allocation2 + $0xdc] sm:$0x1]
      %v1662 = vld [vmem:[#allocation2 + $0xe4] sm:$0xf]
      %v1663 = vld [vmem:[#allocation2 + $0xe8] sm:$0xf]
      %v1664 = vld [vmem:[#allocation2 + $0xec] sm:$0x1]
      %v1665 = vld [vmem:[#allocation2 + $0xf4] sm:$0xf]
      %v1666 = vld [vmem:[#allocation2 + $0xf8] sm:$0xf]
      %v1667 = vld [vmem:[#allocation2 + $0xfc] sm:$0x1]
      %vm1668 = vsmask.f32 3328
      %vm1669 = vsmask.f32 7440
      %vm1670 = vmor %vm1668, %vm1669
      %v1672 = vshrl.u32 %v1620, 16
      %v1674 = vrot.slane %v1672, 4
      %v1675 = vshll.u32 %v1620, 16
      %v1677 = vrot.slane %v1675, 5
      %v1678 = vor.u32 %v1674, %v1677
      %v1679 = vrot.slane %v1678, 4
      %v1681 = vshll.u32 %v1621, 16
      %v1683 = vrot.slane %v1681, 5
      %v1684 = vsel %vm1670, %v1679, %v1683
      %v1685 = vshrl.u32 %v1621, 16
      %v1687 = vrot.slane %v1685, 4
      %v1688 = vor.u32 %v1687, %v1683
      %v1689 = vrot.slane %v1688, 4
      %v1691 = vshll.u32 %v1622, 16
      %v1693 = vrot.slane %v1691, 5
      %v1694 = vsel %vm1670, %v1689, %v1693
      %v1696 = vshrl.u32 %v1623, 16
      %v1698 = vrot.slane %v1696, 4
      %v1699 = vshll.u32 %v1623, 16
      %v1701 = vrot.slane %v1699, 5
      %v1702 = vor.u32 %v1698, %v1701
      %v1703 = vrot.slane %v1702, 4
      %v1705 = vshll.u32 %v1624, 16
      %v1707 = vrot.slane %v1705, 5
      %v1708 = vsel %vm1670, %v1703, %v1707
      %v1709 = vshrl.u32 %v1624, 16
      %v1711 = vrot.slane %v1709, 4
      %v1712 = vor.u32 %v1711, %v1707
      %v1713 = vrot.slane %v1712, 4
      %v1715 = vshll.u32 %v1625, 16
      %v1717 = vrot.slane %v1715, 5
      %v1718 = vsel %vm1670, %v1713, %v1717
      %v1720 = vshrl.u32 %v1626, 16
      %v1722 = vrot.slane %v1720, 4
      %v1723 = vshll.u32 %v1626, 16
      %v1725 = vrot.slane %v1723, 5
      %v1726 = vor.u32 %v1722, %v1725
      %v1727 = vrot.slane %v1726, 4
      %v1729 = vshll.u32 %v1627, 16
      %v1731 = vrot.slane %v1729, 5
      %v1732 = vsel %vm1670, %v1727, %v1731
      %v1733 = vshrl.u32 %v1627, 16
      %v1735 = vrot.slane %v1733, 4
      %v1736 = vor.u32 %v1735, %v1731
      %v1737 = vrot.slane %v1736, 4
      %v1739 = vshll.u32 %v1628, 16
      %v1741 = vrot.slane %v1739, 5
      %v1742 = vsel %vm1670, %v1737, %v1741
      %v1744 = vshrl.u32 %v1629, 16
      %v1746 = vrot.slane %v1744, 4
      %v1747 = vshll.u32 %v1629, 16
      %v1749 = vrot.slane %v1747, 5
      %v1750 = vor.u32 %v1746, %v1749
      %v1751 = vrot.slane %v1750, 4
      %v1753 = vshll.u32 %v1630, 16
      %v1755 = vrot.slane %v1753, 5
      %v1756 = vsel %vm1670, %v1751, %v1755
      %v1757 = vshrl.u32 %v1630, 16
      %v1759 = vrot.slane %v1757, 4
      %v1760 = vor.u32 %v1759, %v1755
      %v1761 = vrot.slane %v1760, 4
      %v1763 = vshll.u32 %v1631, 16
      %v1765 = vrot.slane %v1763, 5
      %v1766 = vsel %vm1670, %v1761, %v1765
      %v1768 = vshrl.u32 %v1632, 16
      %v1770 = vrot.slane %v1768, 4
      %v1771 = vshll.u32 %v1632, 16
      %v1773 = vrot.slane %v1771, 5
      %v1774 = vor.u32 %v1770, %v1773
      %v1775 = vrot.slane %v1774, 4
      %v1777 = vshll.u32 %v1633, 16
      %v1779 = vrot.slane %v1777, 5
      %v1780 = vsel %vm1670, %v1775, %v1779
      %v1781 = vshrl.u32 %v1633, 16
      %v1783 = vrot.slane %v1781, 4
      %v1784 = vor.u32 %v1783, %v1779
      %v1785 = vrot.slane %v1784, 4
      %v1787 = vshll.u32 %v1634, 16
      %v1789 = vrot.slane %v1787, 5
      %v1790 = vsel %vm1670, %v1785, %v1789
      %v1792 = vshrl.u32 %v1635, 16
      %v1794 = vrot.slane %v1792, 4
      %v1795 = vshll.u32 %v1635, 16
      %v1797 = vrot.slane %v1795, 5
      %v1798 = vor.u32 %v1794, %v1797
      %v1799 = vrot.slane %v1798, 4
      %v1801 = vshll.u32 %v1636, 16
      %v1803 = vrot.slane %v1801, 5
      %v1804 = vsel %vm1670, %v1799, %v1803
      %v1805 = vshrl.u32 %v1636, 16
      %v1807 = vrot.slane %v1805, 4
      %v1808 = vor.u32 %v1807, %v1803
      %v1809 = vrot.slane %v1808, 4
      %v1811 = vshll.u32 %v1637, 16
      %v1813 = vrot.slane %v1811, 5
      %v1814 = vsel %vm1670, %v1809, %v1813
      %v1816 = vshrl.u32 %v1638, 16
      %v1818 = vrot.slane %v1816, 4
      %v1819 = vshll.u32 %v1638, 16
      %v1821 = vrot.slane %v1819, 5
      %v1822 = vor.u32 %v1818, %v1821
      %v1823 = vrot.slane %v1822, 4
      %v1825 = vshll.u32 %v1639, 16
      %v1827 = vrot.slane %v1825, 5
      %v1828 = vsel %vm1670, %v1823, %v1827
      %v1829 = vshrl.u32 %v1639, 16
      %v1831 = vrot.slane %v1829, 4
      %v1832 = vor.u32 %v1831, %v1827
      %v1833 = vrot.slane %v1832, 4
      %v1835 = vshll.u32 %v1640, 16
      %v1837 = vrot.slane %v1835, 5
      %v1838 = vsel %vm1670, %v1833, %v1837
      %v1840 = vshrl.u32 %v1641, 16
      %v1842 = vrot.slane %v1840, 4
      %v1843 = vshll.u32 %v1641, 16
      %v1845 = vrot.slane %v1843, 5
      %v1846 = vor.u32 %v1842, %v1845
      %v1847 = vrot.slane %v1846, 4
      %v1849 = vshll.u32 %v1642, 16
      %v1851 = vrot.slane %v1849, 5
      %v1852 = vsel %vm1670, %v1847, %v1851
      %v1853 = vshrl.u32 %v1642, 16
      %v1855 = vrot.slane %v1853, 4
      %v1856 = vor.u32 %v1855, %v1851
      %v1857 = vrot.slane %v1856, 4
      %v1859 = vshll.u32 %v1643, 16
      %v1861 = vrot.slane %v1859, 5
      %v1862 = vsel %vm1670, %v1857, %v1861
      %v1864 = vshrl.u32 %v1644, 16
      %v1866 = vrot.slane %v1864, 4
      %v1867 = vshll.u32 %v1644, 16
      %v1869 = vrot.slane %v1867, 5
      %v1870 = vor.u32 %v1866, %v1869
      %v1871 = vrot.slane %v1870, 4
      %v1873 = vshll.u32 %v1645, 16
      %v1875 = vrot.slane %v1873, 5
      %v1876 = vsel %vm1670, %v1871, %v1875
      %v1877 = vshrl.u32 %v1645, 16
      %v1879 = vrot.slane %v1877, 4
      %v1880 = vor.u32 %v1879, %v1875
      %v1881 = vrot.slane %v1880, 4
      %v1883 = vshll.u32 %v1646, 16
      %v1885 = vrot.slane %v1883, 5
      %v1886 = vsel %vm1670, %v1881, %v1885
      %v1888 = vshrl.u32 %v1647, 16
      %v1890 = vrot.slane %v1888, 4
      %v1891 = vshll.u32 %v1647, 16
      %v1893 = vrot.slane %v1891, 5
      %v1894 = vor.u32 %v1890, %v1893
      %v1895 = vrot.slane %v1894, 4
      %v1897 = vshll.u32 %v1648, 16
      %v1899 = vrot.slane %v1897, 5
      %v1900 = vsel %vm1670, %v1895, %v1899
      %v1901 = vshrl.u32 %v1648, 16
      %v1903 = vrot.slane %v1901, 4
      %v1904 = vor.u32 %v1903, %v1899
      %v1905 = vrot.slane %v1904, 4
      %v1907 = vshll.u32 %v1649, 16
      %v1909 = vrot.slane %v1907, 5
      %v1910 = vsel %vm1670, %v1905, %v1909
      %v1912 = vshrl.u32 %v1650, 16
      %v1914 = vrot.slane %v1912, 4
      %v1915 = vshll.u32 %v1650, 16
      %v1917 = vrot.slane %v1915, 5
      %v1918 = vor.u32 %v1914, %v1917
      %v1919 = vrot.slane %v1918, 4
      %v1921 = vshll.u32 %v1651, 16
      %v1923 = vrot.slane %v1921, 5
      %v1924 = vsel %vm1670, %v1919, %v1923
      %v1925 = vshrl.u32 %v1651, 16
      %v1927 = vrot.slane %v1925, 4
      %v1928 = vor.u32 %v1927, %v1923
      %v1929 = vrot.slane %v1928, 4
      %v1931 = vshll.u32 %v1652, 16
      %v1933 = vrot.slane %v1931, 5
      %v1934 = vsel %vm1670, %v1929, %v1933
      %v1936 = vshrl.u32 %v1653, 16
      %v1938 = vrot.slane %v1936, 4
      %v1939 = vshll.u32 %v1653, 16
      %v1941 = vrot.slane %v1939, 5
      %v1942 = vor.u32 %v1938, %v1941
      %v1943 = vrot.slane %v1942, 4
      %v1945 = vshll.u32 %v1654, 16
      %v1947 = vrot.slane %v1945, 5
      %v1948 = vsel %vm1670, %v1943, %v1947
      %v1949 = vshrl.u32 %v1654, 16
      %v1951 = vrot.slane %v1949, 4
      %v1952 = vor.u32 %v1951, %v1947
      %v1953 = vrot.slane %v1952, 4
      %v1955 = vshll.u32 %v1655, 16
      %v1957 = vrot.slane %v1955, 5
      %v1958 = vsel %vm1670, %v1953, %v1957
      %v1960 = vshrl.u32 %v1656, 16
      %v1962 = vrot.slane %v1960, 4
      %v1963 = vshll.u32 %v1656, 16
      %v1965 = vrot.slane %v1963, 5
      %v1966 = vor.u32 %v1962, %v1965
      %v1967 = vrot.slane %v1966, 4
      %v1969 = vshll.u32 %v1657, 16
      %v1971 = vrot.slane %v1969, 5
      %v1972 = vsel %vm1670, %v1967, %v1971
      %v1973 = vshrl.u32 %v1657, 16
      %v1975 = vrot.slane %v1973, 4
      %v1976 = vor.u32 %v1975, %v1971
      %v1977 = vrot.slane %v1976, 4
      %v1979 = vshll.u32 %v1658, 16
      %v1981 = vrot.slane %v1979, 5
      %v1982 = vsel %vm1670, %v1977, %v1981
      %v1984 = vshrl.u32 %v1659, 16
      %v1986 = vrot.slane %v1984, 4
      %v1987 = vshll.u32 %v1659, 16
      %v1989 = vrot.slane %v1987, 5
      %v1990 = vor.u32 %v1986, %v1989
      %v1991 = vrot.slane %v1990, 4
      %v1993 = vshll.u32 %v1660, 16
      %v1995 = vrot.slane %v1993, 5
      %v1996 = vsel %vm1670, %v1991, %v1995
      %v1997 = vshrl.u32 %v1660, 16
      %v1999 = vrot.slane %v1997, 4
      %v2000 = vor.u32 %v1999, %v1995
      %v2001 = vrot.slane %v2000, 4
      %v2003 = vshll.u32 %v1661, 16
      %v2005 = vrot.slane %v2003, 5
      %v2006 = vsel %vm1670, %v2001, %v2005
      %v2008 = vshrl.u32 %v1662, 16
      %v2010 = vrot.slane %v2008, 4
      %v2011 = vshll.u32 %v1662, 16
      %v2013 = vrot.slane %v2011, 5
      %v2014 = vor.u32 %v2010, %v2013
      %v2015 = vrot.slane %v2014, 4
      %v2017 = vshll.u32 %v1663, 16
      %v2019 = vrot.slane %v2017, 5
      %v2020 = vsel %vm1670, %v2015, %v2019
      %v2021 = vshrl.u32 %v1663, 16
      %v2023 = vrot.slane %v2021, 4
      %v2024 = vor.u32 %v2023, %v2019
      %v2025 = vrot.slane %v2024, 4
      %v2027 = vshll.u32 %v1664, 16
      %v2029 = vrot.slane %v2027, 5
      %v2030 = vsel %vm1670, %v2025, %v2029
      %v2032 = vshrl.u32 %v1665, 16
      %v2034 = vrot.slane %v2032, 4
      %v2035 = vshll.u32 %v1665, 16
      %v2037 = vrot.slane %v2035, 5
      %v2038 = vor.u32 %v2034, %v2037
      %v2039 = vrot.slane %v2038, 4
      %v2041 = vshll.u32 %v1666, 16
      %v2043 = vrot.slane %v2041, 5
      %v2044 = vsel %vm1670, %v2039, %v2043
      %v2045 = vshrl.u32 %v1666, 16
      %v2047 = vrot.slane %v2045, 4
      %v2048 = vor.u32 %v2047, %v2043
      %v2049 = vrot.slane %v2048, 4
      %v2051 = vshll.u32 %v1667, 16
      %v2053 = vrot.slane %v2051, 5
      %v2054 = vsel %vm1670, %v2049, %v2053
      %2087 = vst.msk [vmem:[#allocation4 + $0x4] sm:$0xf] %vm334, %v1684
      %2088 = vst.msk [vmem:[#allocation4 + $0x18] sm:$0xf] %vm334, %v1694
      %2089 = vst.msk [vmem:[#allocation4 + $0x2c] sm:$0xf] %vm334, %v1708
      %2090 = vst.msk [vmem:[#allocation4 + $0x40] sm:$0xf] %vm334, %v1718
      %2091 = vst.msk [vmem:[#allocation4 + $0x54] sm:$0xf] %vm334, %v1732
      %2092 = vst.msk [vmem:[#allocation4 + $0x68] sm:$0xf] %vm334, %v1742
      %2093 = vst.msk [vmem:[#allocation4 + $0x7c] sm:$0xf] %vm334, %v1756
      %2094 = vst.msk [vmem:[#allocation4 + $0x90] sm:$0xf] %vm334, %v1766
      %2095 = vst.msk [vmem:[#allocation4 + $0xa4] sm:$0xf] %vm334, %v1780
      %2096 = vst.msk [vmem:[#allocation4 + $0xb8] sm:$0xf] %vm334, %v1790
      %2097 = vst.msk [vmem:[#allocation4 + $0xcc] sm:$0xf] %vm334, %v1804
      %2098 = vst.msk [vmem:[#allocation4 + $0xe0] sm:$0xf] %vm334, %v1814
      %2099 = vst.msk [vmem:[#allocation4 + $0xf4] sm:$0xf] %vm334, %v1828
      %2100 = vst.msk [vmem:[#allocation4 + $0x108] sm:$0xf] %vm334, %v1838
      %2101 = vst.msk [vmem:[#allocation4 + $0x11c] sm:$0xf] %vm334, %v1852
      %2102 = vst.msk [vmem:[#allocation4 + $0x130] sm:$0xf] %vm334, %v1862
      %2103 = vst.msk [vmem:[#allocation4 + $0x144] sm:$0xf] %vm334, %v1876
      %2104 = vst.msk [vmem:[#allocation4 + $0x158] sm:$0xf] %vm334, %v1886
      %2105 = vst.msk [vmem:[#allocation4 + $0x16c] sm:$0xf] %vm334, %v1900
      %2106 = vst.msk [vmem:[#allocation4 + $0x180] sm:$0xf] %vm334, %v1910
      %2107 = vst.msk [vmem:[#allocation4 + $0x194] sm:$0xf] %vm334, %v1924
      %2108 = vst.msk [vmem:[#allocation4 + $0x1a8] sm:$0xf] %vm334, %v1934
      %2109 = vst.msk [vmem:[#allocation4 + $0x1bc] sm:$0xf] %vm334, %v1948
      %2110 = vst.msk [vmem:[#allocation4 + $0x1d0] sm:$0xf] %vm334, %v1958
      %2111 = vst.msk [vmem:[#allocation4 + $0x1e4] sm:$0xf] %vm334, %v1972
      %2112 = vst.msk [vmem:[#allocation4 + $0x1f8] sm:$0xf] %vm334, %v1982
      %2113 = vst.msk [vmem:[#allocation4 + $0x20c] sm:$0xf] %vm334, %v1996
      %2114 = vst.msk [vmem:[#allocation4 + $0x220] sm:$0xf] %vm334, %v2006
      %2115 = vst.msk [vmem:[#allocation4 + $0x234] sm:$0xf] %vm334, %v2020
      %2116 = vst.msk [vmem:[#allocation4 + $0x248] sm:$0xf] %vm334, %v2030
      %2117 = vst.msk [vmem:[#allocation4 + $0x25c] sm:$0xf] %vm334, %v2044
      %2118 = vst.msk [vmem:[#allocation4 + $0x270] sm:$0xf] %vm334, %v2054
      %v2119 = vld [vmem:[%s928] sm:$0x8]
      %v2120 = vld [vmem:[%s928 + $0x4] sm:$0xf]
      %v2121 = vld [vmem:[%s928 + $0x8] sm:$0xf]
      %v2122 = vld [vmem:[%s928 + $0x10] sm:$0x8]
      %v2123 = vld [vmem:[%s928 + $0x14] sm:$0xf]
      %v2124 = vld [vmem:[%s928 + $0x18] sm:$0xf]
      %v2125 = vld [vmem:[%s928 + $0x20] sm:$0x8]
      %v2126 = vld [vmem:[%s928 + $0x24] sm:$0xf]
      %v2127 = vld [vmem:[%s928 + $0x28] sm:$0xf]
      %v2128 = vld [vmem:[%s928 + $0x30] sm:$0x8]
      %v2129 = vld [vmem:[%s928 + $0x34] sm:$0xf]
      %v2130 = vld [vmem:[%s928 + $0x38] sm:$0xf]
      %v2131 = vld [vmem:[%s928 + $0x40] sm:$0x8]
      %v2132 = vld [vmem:[%s928 + $0x44] sm:$0xf]
      %v2133 = vld [vmem:[%s928 + $0x48] sm:$0xf]
      %v2134 = vld [vmem:[%s928 + $0x50] sm:$0x8]
      %v2135 = vld [vmem:[%s928 + $0x54] sm:$0xf]
      %v2136 = vld [vmem:[%s928 + $0x58] sm:$0xf]
      %v2137 = vld [vmem:[%s928 + $0x60] sm:$0x8]
      %v2138 = vld [vmem:[%s928 + $0x64] sm:$0xf]
      %v2139 = vld [vmem:[%s928 + $0x68] sm:$0xf]
      %v2140 = vld [vmem:[%s928 + $0x70] sm:$0x8]
      %v2141 = vld [vmem:[%s928 + $0x74] sm:$0xf]
      %v2142 = vld [vmem:[%s928 + $0x78] sm:$0xf]
      %v2143 = vld [vmem:[%s928 + $0x80] sm:$0x8]
      %v2144 = vld [vmem:[%s928 + $0x84] sm:$0xf]
      %v2145 = vld [vmem:[%s928 + $0x88] sm:$0xf]
      %v2146 = vld [vmem:[%s928 + $0x90] sm:$0x8]
      %v2147 = vld [vmem:[%s928 + $0x94] sm:$0xf]
      %v2148 = vld [vmem:[%s928 + $0x98] sm:$0xf]
      %v2149 = vld [vmem:[%s928 + $0xa0] sm:$0x8]
      %v2150 = vld [vmem:[%s928 + $0xa4] sm:$0xf]
      %v2151 = vld [vmem:[%s928 + $0xa8] sm:$0xf]
      %v2152 = vld [vmem:[%s928 + $0xb0] sm:$0x8]
      %v2153 = vld [vmem:[%s928 + $0xb4] sm:$0xf]
      %v2154 = vld [vmem:[%s928 + $0xb8] sm:$0xf]
      %v2155 = vld [vmem:[%s928 + $0xc0] sm:$0x8]
      %v2156 = vld [vmem:[%s928 + $0xc4] sm:$0xf]
      %v2157 = vld [vmem:[%s928 + $0xc8] sm:$0xf]
      %v2158 = vld [vmem:[%s928 + $0xd0] sm:$0x8]
      %v2159 = vld [vmem:[%s928 + $0xd4] sm:$0xf]
      %v2160 = vld [vmem:[%s928 + $0xd8] sm:$0xf]
      %v2161 = vld [vmem:[%s928 + $0xe0] sm:$0x8]
      %v2162 = vld [vmem:[%s928 + $0xe4] sm:$0xf]
      %v2163 = vld [vmem:[%s928 + $0xe8] sm:$0xf]
      %v2164 = vld [vmem:[%s928 + $0xf0] sm:$0x8]
      %v2165 = vld [vmem:[%s928 + $0xf4] sm:$0xf]
      %v2166 = vld [vmem:[%s928 + $0xf8] sm:$0xf]
      %v2168 = vshrl.u32 %v2119, 16
      %v2170 = vrot.slane %v2168, 7
      %v2171 = vrot.slane %v2170, 4
      %v2173 = vshrl.u32 %v2120, 16
      %v2175 = vrot.slane %v2173, 7
      %v2176 = vshll.u32 %v2120, 16
      %v2178 = vor.u32 %v2175, %v2176
      %v2179 = vsel %vm1010, %v2171, %v2178
      %v2180 = vrot.slane %v2175, 4
      %v2182 = vshrl.u32 %v2121, 16
      %v2184 = vrot.slane %v2182, 7
      %v2185 = vshll.u32 %v2121, 16
      %v2187 = vor.u32 %v2184, %v2185
      %v2188 = vsel %vm1010, %v2180, %v2187
      %v2190 = vshrl.u32 %v2122, 16
      %v2192 = vrot.slane %v2190, 7
      %v2193 = vrot.slane %v2192, 4
      %v2195 = vshrl.u32 %v2123, 16
      %v2197 = vrot.slane %v2195, 7
      %v2198 = vshll.u32 %v2123, 16
      %v2200 = vor.u32 %v2197, %v2198
      %v2201 = vsel %vm1010, %v2193, %v2200
      %v2202 = vrot.slane %v2197, 4
      %v2204 = vshrl.u32 %v2124, 16
      %v2206 = vrot.slane %v2204, 7
      %v2207 = vshll.u32 %v2124, 16
      %v2209 = vor.u32 %v2206, %v2207
      %v2210 = vsel %vm1010, %v2202, %v2209
      %v2212 = vshrl.u32 %v2125, 16
      %v2214 = vrot.slane %v2212, 7
      %v2215 = vrot.slane %v2214, 4
      %v2217 = vshrl.u32 %v2126, 16
      %v2219 = vrot.slane %v2217, 7
      %v2220 = vshll.u32 %v2126, 16
      %v2222 = vor.u32 %v2219, %v2220
      %v2223 = vsel %vm1010, %v2215, %v2222
      %v2224 = vrot.slane %v2219, 4
      %v2226 = vshrl.u32 %v2127, 16
      %v2228 = vrot.slane %v2226, 7
      %v2229 = vshll.u32 %v2127, 16
      %v2231 = vor.u32 %v2228, %v2229
      %v2232 = vsel %vm1010, %v2224, %v2231
      %v2234 = vshrl.u32 %v2128, 16
      %v2236 = vrot.slane %v2234, 7
      %v2237 = vrot.slane %v2236, 4
      %v2239 = vshrl.u32 %v2129, 16
      %v2241 = vrot.slane %v2239, 7
      %v2242 = vshll.u32 %v2129, 16
      %v2244 = vor.u32 %v2241, %v2242
      %v2245 = vsel %vm1010, %v2237, %v2244
      %v2246 = vrot.slane %v2241, 4
      %v2248 = vshrl.u32 %v2130, 16
      %v2250 = vrot.slane %v2248, 7
      %v2251 = vshll.u32 %v2130, 16
      %v2253 = vor.u32 %v2250, %v2251
      %v2254 = vsel %vm1010, %v2246, %v2253
      %v2256 = vshrl.u32 %v2131, 16
      %v2258 = vrot.slane %v2256, 7
      %v2259 = vrot.slane %v2258, 4
      %v2261 = vshrl.u32 %v2132, 16
      %v2263 = vrot.slane %v2261, 7
      %v2264 = vshll.u32 %v2132, 16
      %v2266 = vor.u32 %v2263, %v2264
      %v2267 = vsel %vm1010, %v2259, %v2266
      %v2268 = vrot.slane %v2263, 4
      %v2270 = vshrl.u32 %v2133, 16
      %v2272 = vrot.slane %v2270, 7
      %v2273 = vshll.u32 %v2133, 16
      %v2275 = vor.u32 %v2272, %v2273
      %v2276 = vsel %vm1010, %v2268, %v2275
      %v2278 = vshrl.u32 %v2134, 16
      %v2280 = vrot.slane %v2278, 7
      %v2281 = vrot.slane %v2280, 4
      %v2283 = vshrl.u32 %v2135, 16
      %v2285 = vrot.slane %v2283, 7
      %v2286 = vshll.u32 %v2135, 16
      %v2288 = vor.u32 %v2285, %v2286
      %v2289 = vsel %vm1010, %v2281, %v2288
      %v2290 = vrot.slane %v2285, 4
      %v2292 = vshrl.u32 %v2136, 16
      %v2294 = vrot.slane %v2292, 7
      %v2295 = vshll.u32 %v2136, 16
      %v2297 = vor.u32 %v2294, %v2295
      %v2298 = vsel %vm1010, %v2290, %v2297
      %v2300 = vshrl.u32 %v2137, 16
      %v2302 = vrot.slane %v2300, 7
      %v2303 = vrot.slane %v2302, 4
      %v2305 = vshrl.u32 %v2138, 16
      %v2307 = vrot.slane %v2305, 7
      %v2308 = vshll.u32 %v2138, 16
      %v2310 = vor.u32 %v2307, %v2308
      %v2311 = vsel %vm1010, %v2303, %v2310
      %v2312 = vrot.slane %v2307, 4
      %v2314 = vshrl.u32 %v2139, 16
      %v2316 = vrot.slane %v2314, 7
      %v2317 = vshll.u32 %v2139, 16
      %v2319 = vor.u32 %v2316, %v2317
      %v2320 = vsel %vm1010, %v2312, %v2319
      %v2322 = vshrl.u32 %v2140, 16
      %v2324 = vrot.slane %v2322, 7
      %v2325 = vrot.slane %v2324, 4
      %v2327 = vshrl.u32 %v2141, 16
      %v2329 = vrot.slane %v2327, 7
      %v2330 = vshll.u32 %v2141, 16
      %v2332 = vor.u32 %v2329, %v2330
      %v2333 = vsel %vm1010, %v2325, %v2332
      %v2334 = vrot.slane %v2329, 4
      %v2336 = vshrl.u32 %v2142, 16
      %v2338 = vrot.slane %v2336, 7
      %v2339 = vshll.u32 %v2142, 16
      %v2341 = vor.u32 %v2338, %v2339
      %v2342 = vsel %vm1010, %v2334, %v2341
      %v2344 = vshrl.u32 %v2143, 16
      %v2346 = vrot.slane %v2344, 7
      %v2347 = vrot.slane %v2346, 4
      %v2349 = vshrl.u32 %v2144, 16
      %v2351 = vrot.slane %v2349, 7
      %v2352 = vshll.u32 %v2144, 16
      %v2354 = vor.u32 %v2351, %v2352
      %v2355 = vsel %vm1010, %v2347, %v2354
      %v2356 = vrot.slane %v2351, 4
      %v2358 = vshrl.u32 %v2145, 16
      %v2360 = vrot.slane %v2358, 7
      %v2361 = vshll.u32 %v2145, 16
      %v2363 = vor.u32 %v2360, %v2361
      %v2364 = vsel %vm1010, %v2356, %v2363
      %v2366 = vshrl.u32 %v2146, 16
      %v2368 = vrot.slane %v2366, 7
      %v2369 = vrot.slane %v2368, 4
      %v2371 = vshrl.u32 %v2147, 16
      %v2373 = vrot.slane %v2371, 7
      %v2374 = vshll.u32 %v2147, 16
      %v2376 = vor.u32 %v2373, %v2374
      %v2377 = vsel %vm1010, %v2369, %v2376
      %v2378 = vrot.slane %v2373, 4
      %v2380 = vshrl.u32 %v2148, 16
      %v2382 = vrot.slane %v2380, 7
      %v2383 = vshll.u32 %v2148, 16
      %v2385 = vor.u32 %v2382, %v2383
      %v2386 = vsel %vm1010, %v2378, %v2385
      %v2388 = vshrl.u32 %v2149, 16
      %v2390 = vrot.slane %v2388, 7
      %v2391 = vrot.slane %v2390, 4
      %v2393 = vshrl.u32 %v2150, 16
      %v2395 = vrot.slane %v2393, 7
      %v2396 = vshll.u32 %v2150, 16
      %v2398 = vor.u32 %v2395, %v2396
      %v2399 = vsel %vm1010, %v2391, %v2398
      %v2400 = vrot.slane %v2395, 4
      %v2402 = vshrl.u32 %v2151, 16
      %v2404 = vrot.slane %v2402, 7
      %v2405 = vshll.u32 %v2151, 16
      %v2407 = vor.u32 %v2404, %v2405
      %v2408 = vsel %vm1010, %v2400, %v2407
      %v2410 = vshrl.u32 %v2152, 16
      %v2412 = vrot.slane %v2410, 7
      %v2413 = vrot.slane %v2412, 4
      %v2415 = vshrl.u32 %v2153, 16
      %v2417 = vrot.slane %v2415, 7
      %v2418 = vshll.u32 %v2153, 16
      %v2420 = vor.u32 %v2417, %v2418
      %v2421 = vsel %vm1010, %v2413, %v2420
      %v2422 = vrot.slane %v2417, 4
      %v2424 = vshrl.u32 %v2154, 16
      %v2426 = vrot.slane %v2424, 7
      %v2427 = vshll.u32 %v2154, 16
      %v2429 = vor.u32 %v2426, %v2427
      %v2430 = vsel %vm1010, %v2422, %v2429
      %v2432 = vshrl.u32 %v2155, 16
      %v2434 = vrot.slane %v2432, 7
      %v2435 = vrot.slane %v2434, 4
      %v2437 = vshrl.u32 %v2156, 16
      %v2439 = vrot.slane %v2437, 7
      %v2440 = vshll.u32 %v2156, 16
      %v2442 = vor.u32 %v2439, %v2440
      %v2443 = vsel %vm1010, %v2435, %v2442
      %v2444 = vrot.slane %v2439, 4
      %v2446 = vshrl.u32 %v2157, 16
      %v2448 = vrot.slane %v2446, 7
      %v2449 = vshll.u32 %v2157, 16
      %v2451 = vor.u32 %v2448, %v2449
      %v2452 = vsel %vm1010, %v2444, %v2451
      %v2454 = vshrl.u32 %v2158, 16
      %v2456 = vrot.slane %v2454, 7
      %v2457 = vrot.slane %v2456, 4
      %v2459 = vshrl.u32 %v2159, 16
      %v2461 = vrot.slane %v2459, 7
      %v2462 = vshll.u32 %v2159, 16
      %v2464 = vor.u32 %v2461, %v2462
      %v2465 = vsel %vm1010, %v2457, %v2464
      %v2466 = vrot.slane %v2461, 4
      %v2468 = vshrl.u32 %v2160, 16
      %v2470 = vrot.slane %v2468, 7
      %v2471 = vshll.u32 %v2160, 16
      %v2473 = vor.u32 %v2470, %v2471
      %v2474 = vsel %vm1010, %v2466, %v2473
      %v2476 = vshrl.u32 %v2161, 16
      %v2478 = vrot.slane %v2476, 7
      %v2479 = vrot.slane %v2478, 4
      %v2481 = vshrl.u32 %v2162, 16
      %v2483 = vrot.slane %v2481, 7
      %v2484 = vshll.u32 %v2162, 16
      %v2486 = vor.u32 %v2483, %v2484
      %v2487 = vsel %vm1010, %v2479, %v2486
      %v2488 = vrot.slane %v2483, 4
      %v2490 = vshrl.u32 %v2163, 16
      %v2492 = vrot.slane %v2490, 7
      %v2493 = vshll.u32 %v2163, 16
      %v2495 = vor.u32 %v2492, %v2493
      %v2496 = vsel %vm1010, %v2488, %v2495
      %v2498 = vshrl.u32 %v2164, 16
      %v2500 = vrot.slane %v2498, 7
      %v2501 = vrot.slane %v2500, 4
      %v2503 = vshrl.u32 %v2165, 16
      %v2505 = vrot.slane %v2503, 7
      %v2506 = vshll.u32 %v2165, 16
      %v2508 = vor.u32 %v2505, %v2506
      %v2509 = vsel %vm1010, %v2501, %v2508
      %v2510 = vrot.slane %v2505, 4
      %v2512 = vshrl.u32 %v2166, 16
      %v2514 = vrot.slane %v2512, 7
      %v2515 = vshll.u32 %v2166, 16
      %v2517 = vor.u32 %v2514, %v2515
      %v2518 = vsel %vm1010, %v2510, %v2517
      %2519 = vrot.lane.b32.xlu0 %v2179, 64
      %v2520 = vpop.permute.xlu0 %2519
      %2521 = vrot.lane.b32.xlu0 %v2188, 64
      %v2522 = vpop.permute.xlu0 %2521
      %2523 = vrot.lane.b32.xlu0 %v2201, 64
      %v2524 = vpop.permute.xlu0 %2523
      %2525 = vrot.lane.b32.xlu0 %v2210, 64
      %v2526 = vpop.permute.xlu0 %2525
      %2527 = vrot.lane.b32.xlu0 %v2223, 64
      %v2528 = vpop.permute.xlu0 %2527
      %2529 = vrot.lane.b32.xlu0 %v2232, 64
      %v2530 = vpop.permute.xlu0 %2529
      %2531 = vrot.lane.b32.xlu0 %v2245, 64
      %v2532 = vpop.permute.xlu0 %2531
      %2533 = vrot.lane.b32.xlu0 %v2254, 64
      %v2534 = vpop.permute.xlu0 %2533
      %2535 = vrot.lane.b32.xlu0 %v2267, 64
      %v2536 = vpop.permute.xlu0 %2535
      %2537 = vrot.lane.b32.xlu0 %v2276, 64
      %v2538 = vpop.permute.xlu0 %2537
      %2539 = vrot.lane.b32.xlu0 %v2289, 64
      %v2540 = vpop.permute.xlu0 %2539
      %2541 = vrot.lane.b32.xlu0 %v2298, 64
      %v2542 = vpop.permute.xlu0 %2541
      %2543 = vrot.lane.b32.xlu0 %v2311, 64
      %v2544 = vpop.permute.xlu0 %2543
      %2545 = vrot.lane.b32.xlu0 %v2320, 64
      %v2546 = vpop.permute.xlu0 %2545
      %2547 = vrot.lane.b32.xlu0 %v2333, 64
      %v2548 = vpop.permute.xlu0 %2547
      %2549 = vrot.lane.b32.xlu0 %v2342, 64
      %v2550 = vpop.permute.xlu0 %2549
      %2551 = vrot.lane.b32.xlu0 %v2355, 64
      %v2552 = vpop.permute.xlu0 %2551
      %2553 = vrot.lane.b32.xlu0 %v2364, 64
      %v2554 = vpop.permute.xlu0 %2553
      %2555 = vrot.lane.b32.xlu0 %v2377, 64
      %v2556 = vpop.permute.xlu0 %2555
      %2557 = vrot.lane.b32.xlu0 %v2386, 64
      %v2558 = vpop.permute.xlu0 %2557
      %2559 = vrot.lane.b32.xlu0 %v2399, 64
      %v2560 = vpop.permute.xlu0 %2559
      %2561 = vrot.lane.b32.xlu0 %v2408, 64
      %v2562 = vpop.permute.xlu0 %2561
      %2563 = vrot.lane.b32.xlu0 %v2421, 64
      %v2564 = vpop.permute.xlu0 %2563
      %2565 = vrot.lane.b32.xlu0 %v2430, 64
      %v2566 = vpop.permute.xlu0 %2565
      %2567 = vrot.lane.b32.xlu0 %v2443, 64
      %v2568 = vpop.permute.xlu0 %2567
      %2569 = vrot.lane.b32.xlu0 %v2452, 64
      %v2570 = vpop.permute.xlu0 %2569
      %2571 = vrot.lane.b32.xlu0 %v2465, 64
      %v2572 = vpop.permute.xlu0 %2571
      %2573 = vrot.lane.b32.xlu0 %v2474, 64
      %v2574 = vpop.permute.xlu0 %2573
      %2575 = vrot.lane.b32.xlu0 %v2487, 64
      %v2576 = vpop.permute.xlu0 %2575
      %2577 = vrot.lane.b32.xlu0 %v2496, 64
      %v2578 = vpop.permute.xlu0 %2577
      %2579 = vrot.lane.b32.xlu0 %v2509, 64
      %v2580 = vpop.permute.xlu0 %2579
      %2581 = vrot.lane.b32.xlu0 %v2518, 64
      %v2582 = vpop.permute.xlu0 %2581
      %2615 = vst.msk [vmem:[#allocation4 + $0x4] sm:$0xf] %vm1587, %v2520
      %2616 = vst.msk [vmem:[#allocation4 + $0x18] sm:$0xf] %vm1587, %v2522
      %2617 = vst.msk [vmem:[#allocation4 + $0x2c] sm:$0xf] %vm1587, %v2524
      %2618 = vst.msk [vmem:[#allocation4 + $0x40] sm:$0xf] %vm1587, %v2526
      %2619 = vst.msk [vmem:[#allocation4 + $0x54] sm:$0xf] %vm1587, %v2528
      %2620 = vst.msk [vmem:[#allocation4 + $0x68] sm:$0xf] %vm1587, %v2530
      %2621 = vst.msk [vmem:[#allocation4 + $0x7c] sm:$0xf] %vm1587, %v2532
      %2622 = vst.msk [vmem:[#allocation4 + $0x90] sm:$0xf] %vm1587, %v2534
      %2623 = vst.msk [vmem:[#allocation4 + $0xa4] sm:$0xf] %vm1587, %v2536
      %2624 = vst.msk [vmem:[#allocation4 + $0xb8] sm:$0xf] %vm1587, %v2538
      %2625 = vst.msk [vmem:[#allocation4 + $0xcc] sm:$0xf] %vm1587, %v2540
      %2626 = vst.msk [vmem:[#allocation4 + $0xe0] sm:$0xf] %vm1587, %v2542
      %2627 = vst.msk [vmem:[#allocation4 + $0xf4] sm:$0xf] %vm1587, %v2544
      %2628 = vst.msk [vmem:[#allocation4 + $0x108] sm:$0xf] %vm1587, %v2546
      %2629 = vst.msk [vmem:[#allocation4 + $0x11c] sm:$0xf] %vm1587, %v2548
      %2630 = vst.msk [vmem:[#allocation4 + $0x130] sm:$0xf] %vm1587, %v2550
      %2631 = vst.msk [vmem:[#allocation4 + $0x144] sm:$0xf] %vm1587, %v2552
      %2632 = vst.msk [vmem:[#allocation4 + $0x158] sm:$0xf] %vm1587, %v2554
      %2633 = vst.msk [vmem:[#allocation4 + $0x16c] sm:$0xf] %vm1587, %v2556
      %2634 = vst.msk [vmem:[#allocation4 + $0x180] sm:$0xf] %vm1587, %v2558
      %2635 = vst.msk [vmem:[#allocation4 + $0x194] sm:$0xf] %vm1587, %v2560
      %2636 = vst.msk [vmem:[#allocation4 + $0x1a8] sm:$0xf] %vm1587, %v2562
      %2637 = vst.msk [vmem:[#allocation4 + $0x1bc] sm:$0xf] %vm1587, %v2564
      %2638 = vst.msk [vmem:[#allocation4 + $0x1d0] sm:$0xf] %vm1587, %v2566
      %2639 = vst.msk [vmem:[#allocation4 + $0x1e4] sm:$0xf] %vm1587, %v2568
      %2640 = vst.msk [vmem:[#allocation4 + $0x1f8] sm:$0xf] %vm1587, %v2570
      %2641 = vst.msk [vmem:[#allocation4 + $0x20c] sm:$0xf] %vm1587, %v2572
      %2642 = vst.msk [vmem:[#allocation4 + $0x220] sm:$0xf] %vm1587, %v2574
      %2643 = vst.msk [vmem:[#allocation4 + $0x234] sm:$0xf] %vm1587, %v2576
      %2644 = vst.msk [vmem:[#allocation4 + $0x248] sm:$0xf] %vm1587, %v2578
      %2645 = vst.msk [vmem:[#allocation4 + $0x25c] sm:$0xf] %vm1587, %v2580
      %2646 = vst.msk [vmem:[#allocation4 + $0x270] sm:$0xf] %vm1587, %v2582
      %v2647 = vld [vmem:[%s928 + $0x4] sm:$0xf]
      %v2648 = vld [vmem:[%s928 + $0x8] sm:$0xf]
      %v2649 = vld [vmem:[%s928 + $0x14] sm:$0xf]
      %v2650 = vld [vmem:[%s928 + $0x18] sm:$0xf]
      %v2651 = vld [vmem:[%s928 + $0x24] sm:$0xf]
      %v2652 = vld [vmem:[%s928 + $0x28] sm:$0xf]
      %v2653 = vld [vmem:[%s928 + $0x34] sm:$0xf]
      %v2654 = vld [vmem:[%s928 + $0x38] sm:$0xf]
      %v2655 = vld [vmem:[%s928 + $0x44] sm:$0xf]
      %v2656 = vld [vmem:[%s928 + $0x48] sm:$0xf]
      %v2657 = vld [vmem:[%s928 + $0x54] sm:$0xf]
      %v2658 = vld [vmem:[%s928 + $0x58] sm:$0xf]
      %v2659 = vld [vmem:[%s928 + $0x64] sm:$0xf]
      %v2660 = vld [vmem:[%s928 + $0x68] sm:$0xf]
      %v2661 = vld [vmem:[%s928 + $0x74] sm:$0xf]
      %v2662 = vld [vmem:[%s928 + $0x78] sm:$0xf]
      %v2663 = vld [vmem:[%s928 + $0x84] sm:$0xf]
      %v2664 = vld [vmem:[%s928 + $0x88] sm:$0xf]
      %v2665 = vld [vmem:[%s928 + $0x94] sm:$0xf]
      %v2666 = vld [vmem:[%s928 + $0x98] sm:$0xf]
      %v2667 = vld [vmem:[%s928 + $0xa4] sm:$0xf]
      %v2668 = vld [vmem:[%s928 + $0xa8] sm:$0xf]
      %v2669 = vld [vmem:[%s928 + $0xb4] sm:$0xf]
      %v2670 = vld [vmem:[%s928 + $0xb8] sm:$0xf]
      %v2671 = vld [vmem:[%s928 + $0xc4] sm:$0xf]
      %v2672 = vld [vmem:[%s928 + $0xc8] sm:$0xf]
      %v2673 = vld [vmem:[%s928 + $0xd4] sm:$0xf]
      %v2674 = vld [vmem:[%s928 + $0xd8] sm:$0xf]
      %v2675 = vld [vmem:[%s928 + $0xe4] sm:$0xf]
      %v2676 = vld [vmem:[%s928 + $0xe8] sm:$0xf]
      %v2677 = vld [vmem:[%s928 + $0xf4] sm:$0xf]
      %v2678 = vld [vmem:[%s928 + $0xf8] sm:$0xf]
      %2679 = vst.msk [vmem:[#allocation4 + $0x8] sm:$0xf] %vm334, %v2647
      %2680 = vst.msk [vmem:[#allocation4 + $0x1c] sm:$0xf] %vm334, %v2648
      %2681 = vst.msk [vmem:[#allocation4 + $0x30] sm:$0xf] %vm334, %v2649
      %2682 = vst.msk [vmem:[#allocation4 + $0x44] sm:$0xf] %vm334, %v2650
      %2683 = vst.msk [vmem:[#allocation4 + $0x58] sm:$0xf] %vm334, %v2651
      %2684 = vst.msk [vmem:[#allocation4 + $0x6c] sm:$0xf] %vm334, %v2652
      %2685 = vst.msk [vmem:[#allocation4 + $0x80] sm:$0xf] %vm334, %v2653
      %2686 = vst.msk [vmem:[#allocation4 + $0x94] sm:$0xf] %vm334, %v2654
      %2687 = vst.msk [vmem:[#allocation4 + $0xa8] sm:$0xf] %vm334, %v2655
      %2688 = vst.msk [vmem:[#allocation4 + $0xbc] sm:$0xf] %vm334, %v2656
      %2689 = vst.msk [vmem:[#allocation4 + $0xd0] sm:$0xf] %vm334, %v2657
      %2690 = vst.msk [vmem:[#allocation4 + $0xe4] sm:$0xf] %vm334, %v2658
      %2691 = vst.msk [vmem:[#allocation4 + $0xf8] sm:$0xf] %vm334, %v2659
      %2692 = vst.msk [vmem:[#allocation4 + $0x10c] sm:$0xf] %vm334, %v2660
      %2693 = vst.msk [vmem:[#allocation4 + $0x120] sm:$0xf] %vm334, %v2661
      %2694 = vst.msk [vmem:[#allocation4 + $0x134] sm:$0xf] %vm334, %v2662
      %2695 = vst.msk [vmem:[#allocation4 + $0x148] sm:$0xf] %vm334, %v2663
      %2696 = vst.msk [vmem:[#allocation4 + $0x15c] sm:$0xf] %vm334, %v2664
      %2697 = vst.msk [vmem:[#allocation4 + $0x170] sm:$0xf] %vm334, %v2665
      %2698 = vst.msk [vmem:[#allocation4 + $0x184] sm:$0xf] %vm334, %v2666
      %2699 = vst.msk [vmem:[#allocation4 + $0x198] sm:$0xf] %vm334, %v2667
      %2700 = vst.msk [vmem:[#allocation4 + $0x1ac] sm:$0xf] %vm334, %v2668
      %2701 = vst.msk [vmem:[#allocation4 + $0x1c0] sm:$0xf] %vm334, %v2669
      %2702 = vst.msk [vmem:[#allocation4 + $0x1d4] sm:$0xf] %vm334, %v2670
      %2703 = vst.msk [vmem:[#allocation4 + $0x1e8] sm:$0xf] %vm334, %v2671
      %2704 = vst.msk [vmem:[#allocation4 + $0x1fc] sm:$0xf] %vm334, %v2672
      %2705 = vst.msk [vmem:[#allocation4 + $0x210] sm:$0xf] %vm334, %v2673
      %2706 = vst.msk [vmem:[#allocation4 + $0x224] sm:$0xf] %vm334, %v2674
      %2707 = vst.msk [vmem:[#allocation4 + $0x238] sm:$0xf] %vm334, %v2675
      %2708 = vst.msk [vmem:[#allocation4 + $0x24c] sm:$0xf] %vm334, %v2676
      %2709 = vst.msk [vmem:[#allocation4 + $0x260] sm:$0xf] %vm334, %v2677
      %2710 = vst.msk [vmem:[#allocation4 + $0x274] sm:$0xf] %vm334, %v2678
      %v2711 = vld [vmem:[%s928 + $0x4] sm:$0xf]
      %v2712 = vld [vmem:[%s928 + $0x8] sm:$0xf]
      %v2713 = vld [vmem:[%s928 + $0xc] sm:$0x1]
      %v2714 = vld [vmem:[%s928 + $0x14] sm:$0xf]
      %v2715 = vld [vmem:[%s928 + $0x18] sm:$0xf]
      %v2716 = vld [vmem:[%s928 + $0x1c] sm:$0x1]
      %v2717 = vld [vmem:[%s928 + $0x24] sm:$0xf]
      %v2718 = vld [vmem:[%s928 + $0x28] sm:$0xf]
      %v2719 = vld [vmem:[%s928 + $0x2c] sm:$0x1]
      %v2720 = vld [vmem:[%s928 + $0x34] sm:$0xf]
      %v2721 = vld [vmem:[%s928 + $0x38] sm:$0xf]
      %v2722 = vld [vmem:[%s928 + $0x3c] sm:$0x1]
      %v2723 = vld [vmem:[%s928 + $0x44] sm:$0xf]
      %v2724 = vld [vmem:[%s928 + $0x48] sm:$0xf]
      %v2725 = vld [vmem:[%s928 + $0x4c] sm:$0x1]
      %v2726 = vld [vmem:[%s928 + $0x54] sm:$0xf]
      %v2727 = vld [vmem:[%s928 + $0x58] sm:$0xf]
      %v2728 = vld [vmem:[%s928 + $0x5c] sm:$0x1]
      %v2729 = vld [vmem:[%s928 + $0x64] sm:$0xf]
      %v2730 = vld [vmem:[%s928 + $0x68] sm:$0xf]
      %v2731 = vld [vmem:[%s928 + $0x6c] sm:$0x1]
      %v2732 = vld [vmem:[%s928 + $0x74] sm:$0xf]
      %v2733 = vld [vmem:[%s928 + $0x78] sm:$0xf]
      %v2734 = vld [vmem:[%s928 + $0x7c] sm:$0x1]
      %v2735 = vld [vmem:[%s928 + $0x84] sm:$0xf]
      %v2736 = vld [vmem:[%s928 + $0x88] sm:$0xf]
      %v2737 = vld [vmem:[%s928 + $0x8c] sm:$0x1]
      %v2738 = vld [vmem:[%s928 + $0x94] sm:$0xf]
      %v2739 = vld [vmem:[%s928 + $0x98] sm:$0xf]
      %v2740 = vld [vmem:[%s928 + $0x9c] sm:$0x1]
      %v2741 = vld [vmem:[%s928 + $0xa4] sm:$0xf]
      %v2742 = vld [vmem:[%s928 + $0xa8] sm:$0xf]
      %v2743 = vld [vmem:[%s928 + $0xac] sm:$0x1]
      %v2744 = vld [vmem:[%s928 + $0xb4] sm:$0xf]
      %v2745 = vld [vmem:[%s928 + $0xb8] sm:$0xf]
      %v2746 = vld [vmem:[%s928 + $0xbc] sm:$0x1]
      %v2747 = vld [vmem:[%s928 + $0xc4] sm:$0xf]
      %v2748 = vld [vmem:[%s928 + $0xc8] sm:$0xf]
      %v2749 = vld [vmem:[%s928 + $0xcc] sm:$0x1]
      %v2750 = vld [vmem:[%s928 + $0xd4] sm:$0xf]
      %v2751 = vld [vmem:[%s928 + $0xd8] sm:$0xf]
      %v2752 = vld [vmem:[%s928 + $0xdc] sm:$0x1]
      %v2753 = vld [vmem:[%s928 + $0xe4] sm:$0xf]
      %v2754 = vld [vmem:[%s928 + $0xe8] sm:$0xf]
      %v2755 = vld [vmem:[%s928 + $0xec] sm:$0x1]
      %v2756 = vld [vmem:[%s928 + $0xf4] sm:$0xf]
      %v2757 = vld [vmem:[%s928 + $0xf8] sm:$0xf]
      %v2758 = vld [vmem:[%s928 + $0xfc] sm:$0x1]
      %v2760 = vshrl.u32 %v2711, 16
      %v2762 = vrot.slane %v2760, 4
      %v2763 = vshll.u32 %v2711, 16
      %v2765 = vrot.slane %v2763, 5
      %v2766 = vor.u32 %v2762, %v2765
      %v2767 = vrot.slane %v2766, 4
      %v2769 = vshll.u32 %v2712, 16
      %v2771 = vrot.slane %v2769, 5
      %v2772 = vsel %vm1670, %v2767, %v2771
      %v2773 = vshrl.u32 %v2712, 16
      %v2775 = vrot.slane %v2773, 4
      %v2776 = vor.u32 %v2775, %v2771
      %v2777 = vrot.slane %v2776, 4
      %v2779 = vshll.u32 %v2713, 16
      %v2781 = vrot.slane %v2779, 5
      %v2782 = vsel %vm1670, %v2777, %v2781
      %v2784 = vshrl.u32 %v2714, 16
      %v2786 = vrot.slane %v2784, 4
      %v2787 = vshll.u32 %v2714, 16
      %v2789 = vrot.slane %v2787, 5
      %v2790 = vor.u32 %v2786, %v2789
      %v2791 = vrot.slane %v2790, 4
      %v2793 = vshll.u32 %v2715, 16
      %v2795 = vrot.slane %v2793, 5
      %v2796 = vsel %vm1670, %v2791, %v2795
      %v2797 = vshrl.u32 %v2715, 16
      %v2799 = vrot.slane %v2797, 4
      %v2800 = vor.u32 %v2799, %v2795
      %v2801 = vrot.slane %v2800, 4
      %v2803 = vshll.u32 %v2716, 16
      %v2805 = vrot.slane %v2803, 5
      %v2806 = vsel %vm1670, %v2801, %v2805
      %v2808 = vshrl.u32 %v2717, 16
      %v2810 = vrot.slane %v2808, 4
      %v2811 = vshll.u32 %v2717, 16
      %v2813 = vrot.slane %v2811, 5
      %v2814 = vor.u32 %v2810, %v2813
      %v2815 = vrot.slane %v2814, 4
      %v2817 = vshll.u32 %v2718, 16
      %v2819 = vrot.slane %v2817, 5
      %v2820 = vsel %vm1670, %v2815, %v2819
      %v2821 = vshrl.u32 %v2718, 16
      %v2823 = vrot.slane %v2821, 4
      %v2824 = vor.u32 %v2823, %v2819
      %v2825 = vrot.slane %v2824, 4
      %v2827 = vshll.u32 %v2719, 16
      %v2829 = vrot.slane %v2827, 5
      %v2830 = vsel %vm1670, %v2825, %v2829
      %v2832 = vshrl.u32 %v2720, 16
      %v2834 = vrot.slane %v2832, 4
      %v2835 = vshll.u32 %v2720, 16
      %v2837 = vrot.slane %v2835, 5
      %v2838 = vor.u32 %v2834, %v2837
      %v2839 = vrot.slane %v2838, 4
      %v2841 = vshll.u32 %v2721, 16
      %v2843 = vrot.slane %v2841, 5
      %v2844 = vsel %vm1670, %v2839, %v2843
      %v2845 = vshrl.u32 %v2721, 16
      %v2847 = vrot.slane %v2845, 4
      %v2848 = vor.u32 %v2847, %v2843
      %v2849 = vrot.slane %v2848, 4
      %v2851 = vshll.u32 %v2722, 16
      %v2853 = vrot.slane %v2851, 5
      %v2854 = vsel %vm1670, %v2849, %v2853
      %v2856 = vshrl.u32 %v2723, 16
      %v2858 = vrot.slane %v2856, 4
      %v2859 = vshll.u32 %v2723, 16
      %v2861 = vrot.slane %v2859, 5
      %v2862 = vor.u32 %v2858, %v2861
      %v2863 = vrot.slane %v2862, 4
      %v2865 = vshll.u32 %v2724, 16
      %v2867 = vrot.slane %v2865, 5
      %v2868 = vsel %vm1670, %v2863, %v2867
      %v2869 = vshrl.u32 %v2724, 16
      %v2871 = vrot.slane %v2869, 4
      %v2872 = vor.u32 %v2871, %v2867
      %v2873 = vrot.slane %v2872, 4
      %v2875 = vshll.u32 %v2725, 16
      %v2877 = vrot.slane %v2875, 5
      %v2878 = vsel %vm1670, %v2873, %v2877
      %v2880 = vshrl.u32 %v2726, 16
      %v2882 = vrot.slane %v2880, 4
      %v2883 = vshll.u32 %v2726, 16
      %v2885 = vrot.slane %v2883, 5
      %v2886 = vor.u32 %v2882, %v2885
      %v2887 = vrot.slane %v2886, 4
      %v2889 = vshll.u32 %v2727, 16
      %v2891 = vrot.slane %v2889, 5
      %v2892 = vsel %vm1670, %v2887, %v2891
      %v2893 = vshrl.u32 %v2727, 16
      %v2895 = vrot.slane %v2893, 4
      %v2896 = vor.u32 %v2895, %v2891
      %v2897 = vrot.slane %v2896, 4
      %v2899 = vshll.u32 %v2728, 16
      %v2901 = vrot.slane %v2899, 5
      %v2902 = vsel %vm1670, %v2897, %v2901
      %v2904 = vshrl.u32 %v2729, 16
      %v2906 = vrot.slane %v2904, 4
      %v2907 = vshll.u32 %v2729, 16
      %v2909 = vrot.slane %v2907, 5
      %v2910 = vor.u32 %v2906, %v2909
      %v2911 = vrot.slane %v2910, 4
      %v2913 = vshll.u32 %v2730, 16
      %v2915 = vrot.slane %v2913, 5
      %v2916 = vsel %vm1670, %v2911, %v2915
      %v2917 = vshrl.u32 %v2730, 16
      %v2919 = vrot.slane %v2917, 4
      %v2920 = vor.u32 %v2919, %v2915
      %v2921 = vrot.slane %v2920, 4
      %v2923 = vshll.u32 %v2731, 16
      %v2925 = vrot.slane %v2923, 5
      %v2926 = vsel %vm1670, %v2921, %v2925
      %v2928 = vshrl.u32 %v2732, 16
      %v2930 = vrot.slane %v2928, 4
      %v2931 = vshll.u32 %v2732, 16
      %v2933 = vrot.slane %v2931, 5
      %v2934 = vor.u32 %v2930, %v2933
      %v2935 = vrot.slane %v2934, 4
      %v2937 = vshll.u32 %v2733, 16
      %v2939 = vrot.slane %v2937, 5
      %v2940 = vsel %vm1670, %v2935, %v2939
      %v2941 = vshrl.u32 %v2733, 16
      %v2943 = vrot.slane %v2941, 4
      %v2944 = vor.u32 %v2943, %v2939
      %v2945 = vrot.slane %v2944, 4
      %v2947 = vshll.u32 %v2734, 16
      %v2949 = vrot.slane %v2947, 5
      %v2950 = vsel %vm1670, %v2945, %v2949
      %v2952 = vshrl.u32 %v2735, 16
      %v2954 = vrot.slane %v2952, 4
      %v2955 = vshll.u32 %v2735, 16
      %v2957 = vrot.slane %v2955, 5
      %v2958 = vor.u32 %v2954, %v2957
      %v2959 = vrot.slane %v2958, 4
      %v2961 = vshll.u32 %v2736, 16
      %v2963 = vrot.slane %v2961, 5
      %v2964 = vsel %vm1670, %v2959, %v2963
      %v2965 = vshrl.u32 %v2736, 16
      %v2967 = vrot.slane %v2965, 4
      %v2968 = vor.u32 %v2967, %v2963
      %v2969 = vrot.slane %v2968, 4
      %v2971 = vshll.u32 %v2737, 16
      %v2973 = vrot.slane %v2971, 5
      %v2974 = vsel %vm1670, %v2969, %v2973
      %v2976 = vshrl.u32 %v2738, 16
      %v2978 = vrot.slane %v2976, 4
      %v2979 = vshll.u32 %v2738, 16
      %v2981 = vrot.slane %v2979, 5
      %v2982 = vor.u32 %v2978, %v2981
      %v2983 = vrot.slane %v2982, 4
      %v2985 = vshll.u32 %v2739, 16
      %v2987 = vrot.slane %v2985, 5
      %v2988 = vsel %vm1670, %v2983, %v2987
      %v2989 = vshrl.u32 %v2739, 16
      %v2991 = vrot.slane %v2989, 4
      %v2992 = vor.u32 %v2991, %v2987
      %v2993 = vrot.slane %v2992, 4
      %v2995 = vshll.u32 %v2740, 16
      %v2997 = vrot.slane %v2995, 5
      %v2998 = vsel %vm1670, %v2993, %v2997
      %v3000 = vshrl.u32 %v2741, 16
      %v3002 = vrot.slane %v3000, 4
      %v3003 = vshll.u32 %v2741, 16
      %v3005 = vrot.slane %v3003, 5
      %v3006 = vor.u32 %v3002, %v3005
      %v3007 = vrot.slane %v3006, 4
      %v3009 = vshll.u32 %v2742, 16
      %v3011 = vrot.slane %v3009, 5
      %v3012 = vsel %vm1670, %v3007, %v3011
      %v3013 = vshrl.u32 %v2742, 16
      %v3015 = vrot.slane %v3013, 4
      %v3016 = vor.u32 %v3015, %v3011
      %v3017 = vrot.slane %v3016, 4
      %v3019 = vshll.u32 %v2743, 16
      %v3021 = vrot.slane %v3019, 5
      %v3022 = vsel %vm1670, %v3017, %v3021
      %v3024 = vshrl.u32 %v2744, 16
      %v3026 = vrot.slane %v3024, 4
      %v3027 = vshll.u32 %v2744, 16
      %v3029 = vrot.slane %v3027, 5
      %v3030 = vor.u32 %v3026, %v3029
      %v3031 = vrot.slane %v3030, 4
      %v3033 = vshll.u32 %v2745, 16
      %v3035 = vrot.slane %v3033, 5
      %v3036 = vsel %vm1670, %v3031, %v3035
      %v3037 = vshrl.u32 %v2745, 16
      %v3039 = vrot.slane %v3037, 4
      %v3040 = vor.u32 %v3039, %v3035
      %v3041 = vrot.slane %v3040, 4
      %v3043 = vshll.u32 %v2746, 16
      %v3045 = vrot.slane %v3043, 5
      %v3046 = vsel %vm1670, %v3041, %v3045
      %v3048 = vshrl.u32 %v2747, 16
      %v3050 = vrot.slane %v3048, 4
      %v3051 = vshll.u32 %v2747, 16
      %v3053 = vrot.slane %v3051, 5
      %v3054 = vor.u32 %v3050, %v3053
      %v3055 = vrot.slane %v3054, 4
      %v3057 = vshll.u32 %v2748, 16
      %v3059 = vrot.slane %v3057, 5
      %v3060 = vsel %vm1670, %v3055, %v3059
      %v3061 = vshrl.u32 %v2748, 16
      %v3063 = vrot.slane %v3061, 4
      %v3064 = vor.u32 %v3063, %v3059
      %v3065 = vrot.slane %v3064, 4
      %v3067 = vshll.u32 %v2749, 16
      %v3069 = vrot.slane %v3067, 5
      %v3070 = vsel %vm1670, %v3065, %v3069
      %v3072 = vshrl.u32 %v2750, 16
      %v3074 = vrot.slane %v3072, 4
      %v3075 = vshll.u32 %v2750, 16
      %v3077 = vrot.slane %v3075, 5
      %v3078 = vor.u32 %v3074, %v3077
      %v3079 = vrot.slane %v3078, 4
      %v3081 = vshll.u32 %v2751, 16
      %v3083 = vrot.slane %v3081, 5
      %v3084 = vsel %vm1670, %v3079, %v3083
      %v3085 = vshrl.u32 %v2751, 16
      %v3087 = vrot.slane %v3085, 4
      %v3088 = vor.u32 %v3087, %v3083
      %v3089 = vrot.slane %v3088, 4
      %v3091 = vshll.u32 %v2752, 16
      %v3093 = vrot.slane %v3091, 5
      %v3094 = vsel %vm1670, %v3089, %v3093
      %v3096 = vshrl.u32 %v2753, 16
      %v3098 = vrot.slane %v3096, 4
      %v3099 = vshll.u32 %v2753, 16
      %v3101 = vrot.slane %v3099, 5
      %v3102 = vor.u32 %v3098, %v3101
      %v3103 = vrot.slane %v3102, 4
      %v3105 = vshll.u32 %v2754, 16
      %v3107 = vrot.slane %v3105, 5
      %v3108 = vsel %vm1670, %v3103, %v3107
      %v3109 = vshrl.u32 %v2754, 16
      %v3111 = vrot.slane %v3109, 4
      %v3112 = vor.u32 %v3111, %v3107
      %v3113 = vrot.slane %v3112, 4
      %v3115 = vshll.u32 %v2755, 16
      %v3117 = vrot.slane %v3115, 5
      %v3118 = vsel %vm1670, %v3113, %v3117
      %v3120 = vshrl.u32 %v2756, 16
      %v3122 = vrot.slane %v3120, 4
      %v3123 = vshll.u32 %v2756, 16
      %v3125 = vrot.slane %v3123, 5
      %v3126 = vor.u32 %v3122, %v3125
      %v3127 = vrot.slane %v3126, 4
      %v3129 = vshll.u32 %v2757, 16
      %v3131 = vrot.slane %v3129, 5
      %v3132 = vsel %vm1670, %v3127, %v3131
      %v3133 = vshrl.u32 %v2757, 16
      %v3135 = vrot.slane %v3133, 4
      %v3136 = vor.u32 %v3135, %v3131
      %v3137 = vrot.slane %v3136, 4
      %v3139 = vshll.u32 %v2758, 16
      %v3141 = vrot.slane %v3139, 5
      %v3142 = vsel %vm1670, %v3137, %v3141
      %3143 = vrot.lane.b32.xlu0 %v2772, 64
      %v3144 = vpop.permute.xlu0 %3143
      %3145 = vrot.lane.b32.xlu0 %v2782, 64
      %v3146 = vpop.permute.xlu0 %3145
      %3147 = vrot.lane.b32.xlu0 %v2796, 64
      %v3148 = vpop.permute.xlu0 %3147
      %3149 = vrot.lane.b32.xlu0 %v2806, 64
      %v3150 = vpop.permute.xlu0 %3149
      %3151 = vrot.lane.b32.xlu0 %v2820, 64
      %v3152 = vpop.permute.xlu0 %3151
      %3153 = vrot.lane.b32.xlu0 %v2830, 64
      %v3154 = vpop.permute.xlu0 %3153
      %3155 = vrot.lane.b32.xlu0 %v2844, 64
      %v3156 = vpop.permute.xlu0 %3155
      %3157 = vrot.lane.b32.xlu0 %v2854, 64
      %v3158 = vpop.permute.xlu0 %3157
      %3159 = vrot.lane.b32.xlu0 %v2868, 64
      %v3160 = vpop.permute.xlu0 %3159
      %3161 = vrot.lane.b32.xlu0 %v2878, 64
      %v3162 = vpop.permute.xlu0 %3161
      %3163 = vrot.lane.b32.xlu0 %v2892, 64
      %v3164 = vpop.permute.xlu0 %3163
      %3165 = vrot.lane.b32.xlu0 %v2902, 64
      %v3166 = vpop.permute.xlu0 %3165
      %3167 = vrot.lane.b32.xlu0 %v2916, 64
      %v3168 = vpop.permute.xlu0 %3167
      %3169 = vrot.lane.b32.xlu0 %v2926, 64
      %v3170 = vpop.permute.xlu0 %3169
      %3171 = vrot.lane.b32.xlu0 %v2940, 64
      %v3172 = vpop.permute.xlu0 %3171
      %3173 = vrot.lane.b32.xlu0 %v2950, 64
      %v3174 = vpop.permute.xlu0 %3173
      %3175 = vrot.lane.b32.xlu0 %v2964, 64
      %v3176 = vpop.permute.xlu0 %3175
      %3177 = vrot.lane.b32.xlu0 %v2974, 64
      %v3178 = vpop.permute.xlu0 %3177
      %3179 = vrot.lane.b32.xlu0 %v2988, 64
      %v3180 = vpop.permute.xlu0 %3179
      %3181 = vrot.lane.b32.xlu0 %v2998, 64
      %v3182 = vpop.permute.xlu0 %3181
      %3183 = vrot.lane.b32.xlu0 %v3012, 64
      %v3184 = vpop.permute.xlu0 %3183
      %3185 = vrot.lane.b32.xlu0 %v3022, 64
      %v3186 = vpop.permute.xlu0 %3185
      %3187 = vrot.lane.b32.xlu0 %v3036, 64
      %v3188 = vpop.permute.xlu0 %3187
      %3189 = vrot.lane.b32.xlu0 %v3046, 64
      %v3190 = vpop.permute.xlu0 %3189
      %3191 = vrot.lane.b32.xlu0 %v3060, 64
      %v3192 = vpop.permute.xlu0 %3191
      %3193 = vrot.lane.b32.xlu0 %v3070, 64
      %v3194 = vpop.permute.xlu0 %3193
      %3195 = vrot.lane.b32.xlu0 %v3084, 64
      %v3196 = vpop.permute.xlu0 %3195
      %3197 = vrot.lane.b32.xlu0 %v3094, 64
      %v3198 = vpop.permute.xlu0 %3197
      %3199 = vrot.lane.b32.xlu0 %v3108, 64
      %v3200 = vpop.permute.xlu0 %3199
      %3201 = vrot.lane.b32.xlu0 %v3118, 64
      %v3202 = vpop.permute.xlu0 %3201
      %3203 = vrot.lane.b32.xlu0 %v3132, 64
      %v3204 = vpop.permute.xlu0 %3203
      %3205 = vrot.lane.b32.xlu0 %v3142, 64
      %v3206 = vpop.permute.xlu0 %3205
      %3239 = vst.msk [vmem:[#allocation4 + $0x8] sm:$0xf] %vm1587, %v3144
      %3240 = vst.msk [vmem:[#allocation4 + $0x1c] sm:$0xf] %vm1587, %v3146
      %3241 = vst.msk [vmem:[#allocation4 + $0x30] sm:$0xf] %vm1587, %v3148
      %3242 = vst.msk [vmem:[#allocation4 + $0x44] sm:$0xf] %vm1587, %v3150
      %3243 = vst.msk [vmem:[#allocation4 + $0x58] sm:$0xf] %vm1587, %v3152
      %3244 = vst.msk [vmem:[#allocation4 + $0x6c] sm:$0xf] %vm1587, %v3154
      %3245 = vst.msk [vmem:[#allocation4 + $0x80] sm:$0xf] %vm1587, %v3156
      %3246 = vst.msk [vmem:[#allocation4 + $0x94] sm:$0xf] %vm1587, %v3158
      %3247 = vst.msk [vmem:[#allocation4 + $0xa8] sm:$0xf] %vm1587, %v3160
      %3248 = vst.msk [vmem:[#allocation4 + $0xbc] sm:$0xf] %vm1587, %v3162
      %3249 = vst.msk [vmem:[#allocation4 + $0xd0] sm:$0xf] %vm1587, %v3164
      %3250 = vst.msk [vmem:[#allocation4 + $0xe4] sm:$0xf] %vm1587, %v3166
      %3251 = vst.msk [vmem:[#allocation4 + $0xf8] sm:$0xf] %vm1587, %v3168
      %3252 = vst.msk [vmem:[#allocation4 + $0x10c] sm:$0xf] %vm1587, %v3170
      %3253 = vst.msk [vmem:[#allocation4 + $0x120] sm:$0xf] %vm1587, %v3172
      %3254 = vst.msk [vmem:[#allocation4 + $0x134] sm:$0xf] %vm1587, %v3174
      %3255 = vst.msk [vmem:[#allocation4 + $0x148] sm:$0xf] %vm1587, %v3176
      %3256 = vst.msk [vmem:[#allocation4 + $0x15c] sm:$0xf] %vm1587, %v3178
      %3257 = vst.msk [vmem:[#allocation4 + $0x170] sm:$0xf] %vm1587, %v3180
      %3258 = vst.msk [vmem:[#allocation4 + $0x184] sm:$0xf] %vm1587, %v3182
      %3259 = vst.msk [vmem:[#allocation4 + $0x198] sm:$0xf] %vm1587, %v3184
      %3260 = vst.msk [vmem:[#allocation4 + $0x1ac] sm:$0xf] %vm1587, %v3186
      %3261 = vst.msk [vmem:[#allocation4 + $0x1c0] sm:$0xf] %vm1587, %v3188
      %3262 = vst.msk [vmem:[#allocation4 + $0x1d4] sm:$0xf] %vm1587, %v3190
      %3263 = vst.msk [vmem:[#allocation4 + $0x1e8] sm:$0xf] %vm1587, %v3192
      %3264 = vst.msk [vmem:[#allocation4 + $0x1fc] sm:$0xf] %vm1587, %v3194
      %3265 = vst.msk [vmem:[#allocation4 + $0x210] sm:$0xf] %vm1587, %v3196
      %3266 = vst.msk [vmem:[#allocation4 + $0x224] sm:$0xf] %vm1587, %v3198
      %3267 = vst.msk [vmem:[#allocation4 + $0x238] sm:$0xf] %vm1587, %v3200
      %3268 = vst.msk [vmem:[#allocation4 + $0x24c] sm:$0xf] %vm1587, %v3202
      %3269 = vst.msk [vmem:[#allocation4 + $0x260] sm:$0xf] %vm1587, %v3204
      %3270 = vst.msk [vmem:[#allocation4 + $0x274] sm:$0xf] %vm1587, %v3206
      %s3271 = scalar_lea.vmem [#allocation2], 32
      %v3272 = vld [vmem:[%s3271] sm:$0x8]
      %v3273 = vld [vmem:[%s3271 + $0x4] sm:$0xf]
      %v3274 = vld [vmem:[%s3271 + $0x8] sm:$0xf]
      %v3275 = vld [vmem:[%s3271 + $0x10] sm:$0x8]
      %v3276 = vld [vmem:[%s3271 + $0x14] sm:$0xf]
      %v3277 = vld [vmem:[%s3271 + $0x18] sm:$0xf]
      %v3278 = vld [vmem:[%s3271 + $0x20] sm:$0x8]
      %v3279 = vld [vmem:[%s3271 + $0x24] sm:$0xf]
      %v3280 = vld [vmem:[%s3271 + $0x28] sm:$0xf]
      %v3281 = vld [vmem:[%s3271 + $0x30] sm:$0x8]
      %v3282 = vld [vmem:[%s3271 + $0x34] sm:$0xf]
      %v3283 = vld [vmem:[%s3271 + $0x38] sm:$0xf]
      %v3284 = vld [vmem:[%s3271 + $0x40] sm:$0x8]
      %v3285 = vld [vmem:[%s3271 + $0x44] sm:$0xf]
      %v3286 = vld [vmem:[%s3271 + $0x48] sm:$0xf]
      %v3287 = vld [vmem:[%s3271 + $0x50] sm:$0x8]
      %v3288 = vld [vmem:[%s3271 + $0x54] sm:$0xf]
      %v3289 = vld [vmem:[%s3271 + $0x58] sm:$0xf]
      %v3290 = vld [vmem:[%s3271 + $0x60] sm:$0x8]
      %v3291 = vld [vmem:[%s3271 + $0x64] sm:$0xf]
      %v3292 = vld [vmem:[%s3271 + $0x68] sm:$0xf]
      %v3293 = vld [vmem:[%s3271 + $0x70] sm:$0x8]
      %v3294 = vld [vmem:[%s3271 + $0x74] sm:$0xf]
      %v3295 = vld [vmem:[%s3271 + $0x78] sm:$0xf]
      %v3296 = vld [vmem:[%s3271 + $0x80] sm:$0x8]
      %v3297 = vld [vmem:[%s3271 + $0x84] sm:$0xf]
      %v3298 = vld [vmem:[%s3271 + $0x88] sm:$0xf]
      %v3299 = vld [vmem:[%s3271 + $0x90] sm:$0x8]
      %v3300 = vld [vmem:[%s3271 + $0x94] sm:$0xf]
      %v3301 = vld [vmem:[%s3271 + $0x98] sm:$0xf]
      %v3302 = vld [vmem:[%s3271 + $0xa0] sm:$0x8]
      %v3303 = vld [vmem:[%s3271 + $0xa4] sm:$0xf]
      %v3304 = vld [vmem:[%s3271 + $0xa8] sm:$0xf]
      %v3305 = vld [vmem:[%s3271 + $0xb0] sm:$0x8]
      %v3306 = vld [vmem:[%s3271 + $0xb4] sm:$0xf]
      %v3307 = vld [vmem:[%s3271 + $0xb8] sm:$0xf]
      %v3308 = vld [vmem:[%s3271 + $0xc0] sm:$0x8]
      %v3309 = vld [vmem:[%s3271 + $0xc4] sm:$0xf]
      %v3310 = vld [vmem:[%s3271 + $0xc8] sm:$0xf]
      %v3311 = vld [vmem:[%s3271 + $0xd0] sm:$0x8]
      %v3312 = vld [vmem:[%s3271 + $0xd4] sm:$0xf]
      %v3313 = vld [vmem:[%s3271 + $0xd8] sm:$0xf]
      %v3314 = vld [vmem:[%s3271 + $0xe0] sm:$0x8]
      %v3315 = vld [vmem:[%s3271 + $0xe4] sm:$0xf]
      %v3316 = vld [vmem:[%s3271 + $0xe8] sm:$0xf]
      %v3317 = vld [vmem:[%s3271 + $0xf0] sm:$0x8]
      %v3318 = vld [vmem:[%s3271 + $0xf4] sm:$0xf]
      %v3319 = vld [vmem:[%s3271 + $0xf8] sm:$0xf]
      %v3321 = vshrl.u32 %v3272, 16
      %v3323 = vrot.slane %v3321, 7
      %v3324 = vrot.slane %v3323, 4
      %v3326 = vshrl.u32 %v3273, 16
      %v3328 = vrot.slane %v3326, 7
      %v3329 = vshll.u32 %v3273, 16
      %v3331 = vor.u32 %v3328, %v3329
      %v3332 = vsel %vm1010, %v3324, %v3331
      %v3333 = vrot.slane %v3328, 4
      %v3335 = vshrl.u32 %v3274, 16
      %v3337 = vrot.slane %v3335, 7
      %v3338 = vshll.u32 %v3274, 16
      %v3340 = vor.u32 %v3337, %v3338
      %v3341 = vsel %vm1010, %v3333, %v3340
      %v3343 = vshrl.u32 %v3275, 16
      %v3345 = vrot.slane %v3343, 7
      %v3346 = vrot.slane %v3345, 4
      %v3348 = vshrl.u32 %v3276, 16
      %v3350 = vrot.slane %v3348, 7
      %v3351 = vshll.u32 %v3276, 16
      %v3353 = vor.u32 %v3350, %v3351
      %v3354 = vsel %vm1010, %v3346, %v3353
      %v3355 = vrot.slane %v3350, 4
      %v3357 = vshrl.u32 %v3277, 16
      %v3359 = vrot.slane %v3357, 7
      %v3360 = vshll.u32 %v3277, 16
      %v3362 = vor.u32 %v3359, %v3360
      %v3363 = vsel %vm1010, %v3355, %v3362
      %v3365 = vshrl.u32 %v3278, 16
      %v3367 = vrot.slane %v3365, 7
      %v3368 = vrot.slane %v3367, 4
      %v3370 = vshrl.u32 %v3279, 16
      %v3372 = vrot.slane %v3370, 7
      %v3373 = vshll.u32 %v3279, 16
      %v3375 = vor.u32 %v3372, %v3373
      %v3376 = vsel %vm1010, %v3368, %v3375
      %v3377 = vrot.slane %v3372, 4
      %v3379 = vshrl.u32 %v3280, 16
      %v3381 = vrot.slane %v3379, 7
      %v3382 = vshll.u32 %v3280, 16
      %v3384 = vor.u32 %v3381, %v3382
      %v3385 = vsel %vm1010, %v3377, %v3384
      %v3387 = vshrl.u32 %v3281, 16
      %v3389 = vrot.slane %v3387, 7
      %v3390 = vrot.slane %v3389, 4
      %v3392 = vshrl.u32 %v3282, 16
      %v3394 = vrot.slane %v3392, 7
      %v3395 = vshll.u32 %v3282, 16
      %v3397 = vor.u32 %v3394, %v3395
      %v3398 = vsel %vm1010, %v3390, %v3397
      %v3399 = vrot.slane %v3394, 4
      %v3401 = vshrl.u32 %v3283, 16
      %v3403 = vrot.slane %v3401, 7
      %v3404 = vshll.u32 %v3283, 16
      %v3406 = vor.u32 %v3403, %v3404
      %v3407 = vsel %vm1010, %v3399, %v3406
      %v3409 = vshrl.u32 %v3284, 16
      %v3411 = vrot.slane %v3409, 7
      %v3412 = vrot.slane %v3411, 4
      %v3414 = vshrl.u32 %v3285, 16
      %v3416 = vrot.slane %v3414, 7
      %v3417 = vshll.u32 %v3285, 16
      %v3419 = vor.u32 %v3416, %v3417
      %v3420 = vsel %vm1010, %v3412, %v3419
      %v3421 = vrot.slane %v3416, 4
      %v3423 = vshrl.u32 %v3286, 16
      %v3425 = vrot.slane %v3423, 7
      %v3426 = vshll.u32 %v3286, 16
      %v3428 = vor.u32 %v3425, %v3426
      %v3429 = vsel %vm1010, %v3421, %v3428
      %v3431 = vshrl.u32 %v3287, 16
      %v3433 = vrot.slane %v3431, 7
      %v3434 = vrot.slane %v3433, 4
      %v3436 = vshrl.u32 %v3288, 16
      %v3438 = vrot.slane %v3436, 7
      %v3439 = vshll.u32 %v3288, 16
      %v3441 = vor.u32 %v3438, %v3439
      %v3442 = vsel %vm1010, %v3434, %v3441
      %v3443 = vrot.slane %v3438, 4
      %v3445 = vshrl.u32 %v3289, 16
      %v3447 = vrot.slane %v3445, 7
      %v3448 = vshll.u32 %v3289, 16
      %v3450 = vor.u32 %v3447, %v3448
      %v3451 = vsel %vm1010, %v3443, %v3450
      %v3453 = vshrl.u32 %v3290, 16
      %v3455 = vrot.slane %v3453, 7
      %v3456 = vrot.slane %v3455, 4
      %v3458 = vshrl.u32 %v3291, 16
      %v3460 = vrot.slane %v3458, 7
      %v3461 = vshll.u32 %v3291, 16
      %v3463 = vor.u32 %v3460, %v3461
      %v3464 = vsel %vm1010, %v3456, %v3463
      %v3465 = vrot.slane %v3460, 4
      %v3467 = vshrl.u32 %v3292, 16
      %v3469 = vrot.slane %v3467, 7
      %v3470 = vshll.u32 %v3292, 16
      %v3472 = vor.u32 %v3469, %v3470
      %v3473 = vsel %vm1010, %v3465, %v3472
      %v3475 = vshrl.u32 %v3293, 16
      %v3477 = vrot.slane %v3475, 7
      %v3478 = vrot.slane %v3477, 4
      %v3480 = vshrl.u32 %v3294, 16
      %v3482 = vrot.slane %v3480, 7
      %v3483 = vshll.u32 %v3294, 16
      %v3485 = vor.u32 %v3482, %v3483
      %v3486 = vsel %vm1010, %v3478, %v3485
      %v3487 = vrot.slane %v3482, 4
      %v3489 = vshrl.u32 %v3295, 16
      %v3491 = vrot.slane %v3489, 7
      %v3492 = vshll.u32 %v3295, 16
      %v3494 = vor.u32 %v3491, %v3492
      %v3495 = vsel %vm1010, %v3487, %v3494
      %v3497 = vshrl.u32 %v3296, 16
      %v3499 = vrot.slane %v3497, 7
      %v3500 = vrot.slane %v3499, 4
      %v3502 = vshrl.u32 %v3297, 16
      %v3504 = vrot.slane %v3502, 7
      %v3505 = vshll.u32 %v3297, 16
      %v3507 = vor.u32 %v3504, %v3505
      %v3508 = vsel %vm1010, %v3500, %v3507
      %v3509 = vrot.slane %v3504, 4
      %v3511 = vshrl.u32 %v3298, 16
      %v3513 = vrot.slane %v3511, 7
      %v3514 = vshll.u32 %v3298, 16
      %v3516 = vor.u32 %v3513, %v3514
      %v3517 = vsel %vm1010, %v3509, %v3516
      %v3519 = vshrl.u32 %v3299, 16
      %v3521 = vrot.slane %v3519, 7
      %v3522 = vrot.slane %v3521, 4
      %v3524 = vshrl.u32 %v3300, 16
      %v3526 = vrot.slane %v3524, 7
      %v3527 = vshll.u32 %v3300, 16
      %v3529 = vor.u32 %v3526, %v3527
      %v3530 = vsel %vm1010, %v3522, %v3529
      %v3531 = vrot.slane %v3526, 4
      %v3533 = vshrl.u32 %v3301, 16
      %v3535 = vrot.slane %v3533, 7
      %v3536 = vshll.u32 %v3301, 16
      %v3538 = vor.u32 %v3535, %v3536
      %v3539 = vsel %vm1010, %v3531, %v3538
      %v3541 = vshrl.u32 %v3302, 16
      %v3543 = vrot.slane %v3541, 7
      %v3544 = vrot.slane %v3543, 4
      %v3546 = vshrl.u32 %v3303, 16
      %v3548 = vrot.slane %v3546, 7
      %v3549 = vshll.u32 %v3303, 16
      %v3551 = vor.u32 %v3548, %v3549
      %v3552 = vsel %vm1010, %v3544, %v3551
      %v3553 = vrot.slane %v3548, 4
      %v3555 = vshrl.u32 %v3304, 16
      %v3557 = vrot.slane %v3555, 7
      %v3558 = vshll.u32 %v3304, 16
      %v3560 = vor.u32 %v3557, %v3558
      %v3561 = vsel %vm1010, %v3553, %v3560
      %v3563 = vshrl.u32 %v3305, 16
      %v3565 = vrot.slane %v3563, 7
      %v3566 = vrot.slane %v3565, 4
      %v3568 = vshrl.u32 %v3306, 16
      %v3570 = vrot.slane %v3568, 7
      %v3571 = vshll.u32 %v3306, 16
      %v3573 = vor.u32 %v3570, %v3571
      %v3574 = vsel %vm1010, %v3566, %v3573
      %v3575 = vrot.slane %v3570, 4
      %v3577 = vshrl.u32 %v3307, 16
      %v3579 = vrot.slane %v3577, 7
      %v3580 = vshll.u32 %v3307, 16
      %v3582 = vor.u32 %v3579, %v3580
      %v3583 = vsel %vm1010, %v3575, %v3582
      %v3585 = vshrl.u32 %v3308, 16
      %v3587 = vrot.slane %v3585, 7
      %v3588 = vrot.slane %v3587, 4
      %v3590 = vshrl.u32 %v3309, 16
      %v3592 = vrot.slane %v3590, 7
      %v3593 = vshll.u32 %v3309, 16
      %v3595 = vor.u32 %v3592, %v3593
      %v3596 = vsel %vm1010, %v3588, %v3595
      %v3597 = vrot.slane %v3592, 4
      %v3599 = vshrl.u32 %v3310, 16
      %v3601 = vrot.slane %v3599, 7
      %v3602 = vshll.u32 %v3310, 16
      %v3604 = vor.u32 %v3601, %v3602
      %v3605 = vsel %vm1010, %v3597, %v3604
      %v3607 = vshrl.u32 %v3311, 16
      %v3609 = vrot.slane %v3607, 7
      %v3610 = vrot.slane %v3609, 4
      %v3612 = vshrl.u32 %v3312, 16
      %v3614 = vrot.slane %v3612, 7
      %v3615 = vshll.u32 %v3312, 16
      %v3617 = vor.u32 %v3614, %v3615
      %v3618 = vsel %vm1010, %v3610, %v3617
      %v3619 = vrot.slane %v3614, 4
      %v3621 = vshrl.u32 %v3313, 16
      %v3623 = vrot.slane %v3621, 7
      %v3624 = vshll.u32 %v3313, 16
      %v3626 = vor.u32 %v3623, %v3624
      %v3627 = vsel %vm1010, %v3619, %v3626
      %v3629 = vshrl.u32 %v3314, 16
      %v3631 = vrot.slane %v3629, 7
      %v3632 = vrot.slane %v3631, 4
      %v3634 = vshrl.u32 %v3315, 16
      %v3636 = vrot.slane %v3634, 7
      %v3637 = vshll.u32 %v3315, 16
      %v3639 = vor.u32 %v3636, %v3637
      %v3640 = vsel %vm1010, %v3632, %v3639
      %v3641 = vrot.slane %v3636, 4
      %v3643 = vshrl.u32 %v3316, 16
      %v3645 = vrot.slane %v3643, 7
      %v3646 = vshll.u32 %v3316, 16
      %v3648 = vor.u32 %v3645, %v3646
      %v3649 = vsel %vm1010, %v3641, %v3648
      %v3651 = vshrl.u32 %v3317, 16
      %v3653 = vrot.slane %v3651, 7
      %v3654 = vrot.slane %v3653, 4
      %v3656 = vshrl.u32 %v3318, 16
      %v3658 = vrot.slane %v3656, 7
      %v3659 = vshll.u32 %v3318, 16
      %v3661 = vor.u32 %v3658, %v3659
      %v3662 = vsel %vm1010, %v3654, %v3661
      %v3663 = vrot.slane %v3658, 4
      %v3665 = vshrl.u32 %v3319, 16
      %v3667 = vrot.slane %v3665, 7
      %v3668 = vshll.u32 %v3319, 16
      %v3670 = vor.u32 %v3667, %v3668
      %v3671 = vsel %vm1010, %v3663, %v3670
      %3704 = vst.msk [vmem:[#allocation4 + $0xc] sm:$0xf] %vm334, %v3332
      %3705 = vst.msk [vmem:[#allocation4 + $0x20] sm:$0xf] %vm334, %v3341
      %3706 = vst.msk [vmem:[#allocation4 + $0x34] sm:$0xf] %vm334, %v3354
      %3707 = vst.msk [vmem:[#allocation4 + $0x48] sm:$0xf] %vm334, %v3363
      %3708 = vst.msk [vmem:[#allocation4 + $0x5c] sm:$0xf] %vm334, %v3376
      %3709 = vst.msk [vmem:[#allocation4 + $0x70] sm:$0xf] %vm334, %v3385
      %3710 = vst.msk [vmem:[#allocation4 + $0x84] sm:$0xf] %vm334, %v3398
      %3711 = vst.msk [vmem:[#allocation4 + $0x98] sm:$0xf] %vm334, %v3407
      %3712 = vst.msk [vmem:[#allocation4 + $0xac] sm:$0xf] %vm334, %v3420
      %3713 = vst.msk [vmem:[#allocation4 + $0xc0] sm:$0xf] %vm334, %v3429
      %3714 = vst.msk [vmem:[#allocation4 + $0xd4] sm:$0xf] %vm334, %v3442
      %3715 = vst.msk [vmem:[#allocation4 + $0xe8] sm:$0xf] %vm334, %v3451
      %3716 = vst.msk [vmem:[#allocation4 + $0xfc] sm:$0xf] %vm334, %v3464
      %3717 = vst.msk [vmem:[#allocation4 + $0x110] sm:$0xf] %vm334, %v3473
      %3718 = vst.msk [vmem:[#allocation4 + $0x124] sm:$0xf] %vm334, %v3486
      %3719 = vst.msk [vmem:[#allocation4 + $0x138] sm:$0xf] %vm334, %v3495
      %3720 = vst.msk [vmem:[#allocation4 + $0x14c] sm:$0xf] %vm334, %v3508
      %3721 = vst.msk [vmem:[#allocation4 + $0x160] sm:$0xf] %vm334, %v3517
      %3722 = vst.msk [vmem:[#allocation4 + $0x174] sm:$0xf] %vm334, %v3530
      %3723 = vst.msk [vmem:[#allocation4 + $0x188] sm:$0xf] %vm334, %v3539
      %3724 = vst.msk [vmem:[#allocation4 + $0x19c] sm:$0xf] %vm334, %v3552
      %3725 = vst.msk [vmem:[#allocation4 + $0x1b0] sm:$0xf] %vm334, %v3561
      %3726 = vst.msk [vmem:[#allocation4 + $0x1c4] sm:$0xf] %vm334, %v3574
      %3727 = vst.msk [vmem:[#allocation4 + $0x1d8] sm:$0xf] %vm334, %v3583
      %3728 = vst.msk [vmem:[#allocation4 + $0x1ec] sm:$0xf] %vm334, %v3596
      %3729 = vst.msk [vmem:[#allocation4 + $0x200] sm:$0xf] %vm334, %v3605
      %3730 = vst.msk [vmem:[#allocation4 + $0x214] sm:$0xf] %vm334, %v3618
      %3731 = vst.msk [vmem:[#allocation4 + $0x228] sm:$0xf] %vm334, %v3627
      %3732 = vst.msk [vmem:[#allocation4 + $0x23c] sm:$0xf] %vm334, %v3640
      %3733 = vst.msk [vmem:[#allocation4 + $0x250] sm:$0xf] %vm334, %v3649
      %3734 = vst.msk [vmem:[#allocation4 + $0x264] sm:$0xf] %vm334, %v3662
      %3735 = vst.msk [vmem:[#allocation4 + $0x278] sm:$0xf] %vm334, %v3671
      %v3736 = vld [vmem:[%s3271 + $0x4] sm:$0xf]
      %v3737 = vld [vmem:[%s3271 + $0x8] sm:$0xf]
      %v3738 = vld [vmem:[%s3271 + $0x14] sm:$0xf]
      %v3739 = vld [vmem:[%s3271 + $0x18] sm:$0xf]
      %v3740 = vld [vmem:[%s3271 + $0x24] sm:$0xf]
      %v3741 = vld [vmem:[%s3271 + $0x28] sm:$0xf]
      %v3742 = vld [vmem:[%s3271 + $0x34] sm:$0xf]
      %v3743 = vld [vmem:[%s3271 + $0x38] sm:$0xf]
      %v3744 = vld [vmem:[%s3271 + $0x44] sm:$0xf]
      %v3745 = vld [vmem:[%s3271 + $0x48] sm:$0xf]
      %v3746 = vld [vmem:[%s3271 + $0x54] sm:$0xf]
      %v3747 = vld [vmem:[%s3271 + $0x58] sm:$0xf]
      %v3748 = vld [vmem:[%s3271 + $0x64] sm:$0xf]
      %v3749 = vld [vmem:[%s3271 + $0x68] sm:$0xf]
      %v3750 = vld [vmem:[%s3271 + $0x74] sm:$0xf]
      %v3751 = vld [vmem:[%s3271 + $0x78] sm:$0xf]
      %v3752 = vld [vmem:[%s3271 + $0x84] sm:$0xf]
      %v3753 = vld [vmem:[%s3271 + $0x88] sm:$0xf]
      %v3754 = vld [vmem:[%s3271 + $0x94] sm:$0xf]
      %v3755 = vld [vmem:[%s3271 + $0x98] sm:$0xf]
      %v3756 = vld [vmem:[%s3271 + $0xa4] sm:$0xf]
      %v3757 = vld [vmem:[%s3271 + $0xa8] sm:$0xf]
      %v3758 = vld [vmem:[%s3271 + $0xb4] sm:$0xf]
      %v3759 = vld [vmem:[%s3271 + $0xb8] sm:$0xf]
      %v3760 = vld [vmem:[%s3271 + $0xc4] sm:$0xf]
      %v3761 = vld [vmem:[%s3271 + $0xc8] sm:$0xf]
      %v3762 = vld [vmem:[%s3271 + $0xd4] sm:$0xf]
      %v3763 = vld [vmem:[%s3271 + $0xd8] sm:$0xf]
      %v3764 = vld [vmem:[%s3271 + $0xe4] sm:$0xf]
      %v3765 = vld [vmem:[%s3271 + $0xe8] sm:$0xf]
      %v3766 = vld [vmem:[%s3271 + $0xf4] sm:$0xf]
      %v3767 = vld [vmem:[%s3271 + $0xf8] sm:$0xf]
      %3800 = vrot.lane.b32.xlu0 %v3736, 64
      %v3801 = vpop.permute.xlu0 %3800
      %3802 = vrot.lane.b32.xlu0 %v3737, 64
      %v3803 = vpop.permute.xlu0 %3802
      %3804 = vrot.lane.b32.xlu0 %v3738, 64
      %v3805 = vpop.permute.xlu0 %3804
      %3806 = vrot.lane.b32.xlu0 %v3739, 64
      %v3807 = vpop.permute.xlu0 %3806
      %3808 = vrot.lane.b32.xlu0 %v3740, 64
      %v3809 = vpop.permute.xlu0 %3808
      %3810 = vrot.lane.b32.xlu0 %v3741, 64
      %v3811 = vpop.permute.xlu0 %3810
      %3812 = vrot.lane.b32.xlu0 %v3742, 64
      %v3813 = vpop.permute.xlu0 %3812
      %3814 = vrot.lane.b32.xlu0 %v3743, 64
      %v3815 = vpop.permute.xlu0 %3814
      %3816 = vrot.lane.b32.xlu0 %v3744, 64
      %v3817 = vpop.permute.xlu0 %3816
      %3818 = vrot.lane.b32.xlu0 %v3745, 64
      %v3819 = vpop.permute.xlu0 %3818
      %3820 = vrot.lane.b32.xlu0 %v3746, 64
      %v3821 = vpop.permute.xlu0 %3820
      %3822 = vrot.lane.b32.xlu0 %v3747, 64
      %v3823 = vpop.permute.xlu0 %3822
      %3824 = vrot.lane.b32.xlu0 %v3748, 64
      %v3825 = vpop.permute.xlu0 %3824
      %3826 = vrot.lane.b32.xlu0 %v3749, 64
      %v3827 = vpop.permute.xlu0 %3826
      %3828 = vrot.lane.b32.xlu0 %v3750, 64
      %v3829 = vpop.permute.xlu0 %3828
      %3830 = vrot.lane.b32.xlu0 %v3751, 64
      %v3831 = vpop.permute.xlu0 %3830
      %3832 = vrot.lane.b32.xlu0 %v3752, 64
      %v3833 = vpop.permute.xlu0 %3832
      %3834 = vrot.lane.b32.xlu0 %v3753, 64
      %v3835 = vpop.permute.xlu0 %3834
      %3836 = vrot.lane.b32.xlu0 %v3754, 64
      %v3837 = vpop.permute.xlu0 %3836
      %3838 = vrot.lane.b32.xlu0 %v3755, 64
      %v3839 = vpop.permute.xlu0 %3838
      %3840 = vrot.lane.b32.xlu0 %v3756, 64
      %v3841 = vpop.permute.xlu0 %3840
      %3842 = vrot.lane.b32.xlu0 %v3757, 64
      %v3843 = vpop.permute.xlu0 %3842
      %3844 = vrot.lane.b32.xlu0 %v3758, 64
      %v3845 = vpop.permute.xlu0 %3844
      %3846 = vrot.lane.b32.xlu0 %v3759, 64
      %v3847 = vpop.permute.xlu0 %3846
      %3848 = vrot.lane.b32.xlu0 %v3760, 64
      %v3849 = vpop.permute.xlu0 %3848
      %3850 = vrot.lane.b32.xlu0 %v3761, 64
      %v3851 = vpop.permute.xlu0 %3850
      %3852 = vrot.lane.b32.xlu0 %v3762, 64
      %v3853 = vpop.permute.xlu0 %3852
      %3854 = vrot.lane.b32.xlu0 %v3763, 64
      %v3855 = vpop.permute.xlu0 %3854
      %3856 = vrot.lane.b32.xlu0 %v3764, 64
      %v3857 = vpop.permute.xlu0 %3856
      %3858 = vrot.lane.b32.xlu0 %v3765, 64
      %v3859 = vpop.permute.xlu0 %3858
      %3860 = vrot.lane.b32.xlu0 %v3766, 64
      %v3861 = vpop.permute.xlu0 %3860
      %3862 = vrot.lane.b32.xlu0 %v3767, 64
      %v3863 = vpop.permute.xlu0 %3862
      %3896 = vst.msk [vmem:[#allocation4 + $0xc] sm:$0xf] %vm1587, %v3801
      %3897 = vst.msk [vmem:[#allocation4 + $0x20] sm:$0xf] %vm1587, %v3803
      %3898 = vst.msk [vmem:[#allocation4 + $0x34] sm:$0xf] %vm1587, %v3805
      %3899 = vst.msk [vmem:[#allocation4 + $0x48] sm:$0xf] %vm1587, %v3807
      %3900 = vst.msk [vmem:[#allocation4 + $0x5c] sm:$0xf] %vm1587, %v3809
      %3901 = vst.msk [vmem:[#allocation4 + $0x70] sm:$0xf] %vm1587, %v3811
      %3902 = vst.msk [vmem:[#allocation4 + $0x84] sm:$0xf] %vm1587, %v3813
      %3903 = vst.msk [vmem:[#allocation4 + $0x98] sm:$0xf] %vm1587, %v3815
      %3904 = vst.msk [vmem:[#allocation4 + $0xac] sm:$0xf] %vm1587, %v3817
      %3905 = vst.msk [vmem:[#allocation4 + $0xc0] sm:$0xf] %vm1587, %v3819
      %3906 = vst.msk [vmem:[#allocation4 + $0xd4] sm:$0xf] %vm1587, %v3821
      %3907 = vst.msk [vmem:[#allocation4 + $0xe8] sm:$0xf] %vm1587, %v3823
      %3908 = vst.msk [vmem:[#allocation4 + $0xfc] sm:$0xf] %vm1587, %v3825
      %3909 = vst.msk [vmem:[#allocation4 + $0x110] sm:$0xf] %vm1587, %v3827
      %3910 = vst.msk [vmem:[#allocation4 + $0x124] sm:$0xf] %vm1587, %v3829
      %3911 = vst.msk [vmem:[#allocation4 + $0x138] sm:$0xf] %vm1587, %v3831
      %3912 = vst.msk [vmem:[#allocation4 + $0x14c] sm:$0xf] %vm1587, %v3833
      %3913 = vst.msk [vmem:[#allocation4 + $0x160] sm:$0xf] %vm1587, %v3835
      %3914 = vst.msk [vmem:[#allocation4 + $0x174] sm:$0xf] %vm1587, %v3837
      %3915 = vst.msk [vmem:[#allocation4 + $0x188] sm:$0xf] %vm1587, %v3839
      %3916 = vst.msk [vmem:[#allocation4 + $0x19c] sm:$0xf] %vm1587, %v3841
      %3917 = vst.msk [vmem:[#allocation4 + $0x1b0] sm:$0xf] %vm1587, %v3843
      %3918 = vst.msk [vmem:[#allocation4 + $0x1c4] sm:$0xf] %vm1587, %v3845
      %3919 = vst.msk [vmem:[#allocation4 + $0x1d8] sm:$0xf] %vm1587, %v3847
      %3920 = vst.msk [vmem:[#allocation4 + $0x1ec] sm:$0xf] %vm1587, %v3849
      %3921 = vst.msk [vmem:[#allocation4 + $0x200] sm:$0xf] %vm1587, %v3851
      %3922 = vst.msk [vmem:[#allocation4 + $0x214] sm:$0xf] %vm1587, %v3853
      %3923 = vst.msk [vmem:[#allocation4 + $0x228] sm:$0xf] %vm1587, %v3855
      %3924 = vst.msk [vmem:[#allocation4 + $0x23c] sm:$0xf] %vm1587, %v3857
      %3925 = vst.msk [vmem:[#allocation4 + $0x250] sm:$0xf] %vm1587, %v3859
      %3926 = vst.msk [vmem:[#allocation4 + $0x264] sm:$0xf] %vm1587, %v3861
      %3927 = vst.msk [vmem:[#allocation4 + $0x278] sm:$0xf] %vm1587, %v3863
      %v3928 = vld [vmem:[%s3271 + $0x4] sm:$0xf]
      %v3929 = vld [vmem:[%s3271 + $0x8] sm:$0xf]
      %v3930 = vld [vmem:[%s3271 + $0xc] sm:$0x1]
      %v3931 = vld [vmem:[%s3271 + $0x14] sm:$0xf]
      %v3932 = vld [vmem:[%s3271 + $0x18] sm:$0xf]
      %v3933 = vld [vmem:[%s3271 + $0x1c] sm:$0x1]
      %v3934 = vld [vmem:[%s3271 + $0x24] sm:$0xf]
      %v3935 = vld [vmem:[%s3271 + $0x28] sm:$0xf]
      %v3936 = vld [vmem:[%s3271 + $0x2c] sm:$0x1]
      %v3937 = vld [vmem:[%s3271 + $0x34] sm:$0xf]
      %v3938 = vld [vmem:[%s3271 + $0x38] sm:$0xf]
      %v3939 = vld [vmem:[%s3271 + $0x3c] sm:$0x1]
      %v3940 = vld [vmem:[%s3271 + $0x44] sm:$0xf]
      %v3941 = vld [vmem:[%s3271 + $0x48] sm:$0xf]
      %v3942 = vld [vmem:[%s3271 + $0x4c] sm:$0x1]
      %v3943 = vld [vmem:[%s3271 + $0x54] sm:$0xf]
      %v3944 = vld [vmem:[%s3271 + $0x58] sm:$0xf]
      %v3945 = vld [vmem:[%s3271 + $0x5c] sm:$0x1]
      %v3946 = vld [vmem:[%s3271 + $0x64] sm:$0xf]
      %v3947 = vld [vmem:[%s3271 + $0x68] sm:$0xf]
      %v3948 = vld [vmem:[%s3271 + $0x6c] sm:$0x1]
      %v3949 = vld [vmem:[%s3271 + $0x74] sm:$0xf]
      %v3950 = vld [vmem:[%s3271 + $0x78] sm:$0xf]
      %v3951 = vld [vmem:[%s3271 + $0x7c] sm:$0x1]
      %v3952 = vld [vmem:[%s3271 + $0x84] sm:$0xf]
      %v3953 = vld [vmem:[%s3271 + $0x88] sm:$0xf]
      %v3954 = vld [vmem:[%s3271 + $0x8c] sm:$0x1]
      %v3955 = vld [vmem:[%s3271 + $0x94] sm:$0xf]
      %v3956 = vld [vmem:[%s3271 + $0x98] sm:$0xf]
      %v3957 = vld [vmem:[%s3271 + $0x9c] sm:$0x1]
      %v3958 = vld [vmem:[%s3271 + $0xa4] sm:$0xf]
      %v3959 = vld [vmem:[%s3271 + $0xa8] sm:$0xf]
      %v3960 = vld [vmem:[%s3271 + $0xac] sm:$0x1]
      %v3961 = vld [vmem:[%s3271 + $0xb4] sm:$0xf]
      %v3962 = vld [vmem:[%s3271 + $0xb8] sm:$0xf]
      %v3963 = vld [vmem:[%s3271 + $0xbc] sm:$0x1]
      %v3964 = vld [vmem:[%s3271 + $0xc4] sm:$0xf]
      %v3965 = vld [vmem:[%s3271 + $0xc8] sm:$0xf]
      %v3966 = vld [vmem:[%s3271 + $0xcc] sm:$0x1]
      %v3967 = vld [vmem:[%s3271 + $0xd4] sm:$0xf]
      %v3968 = vld [vmem:[%s3271 + $0xd8] sm:$0xf]
      %v3969 = vld [vmem:[%s3271 + $0xdc] sm:$0x1]
      %v3970 = vld [vmem:[%s3271 + $0xe4] sm:$0xf]
      %v3971 = vld [vmem:[%s3271 + $0xe8] sm:$0xf]
      %v3972 = vld [vmem:[%s3271 + $0xec] sm:$0x1]
      %v3973 = vld [vmem:[%s3271 + $0xf4] sm:$0xf]
      %v3974 = vld [vmem:[%s3271 + $0xf8] sm:$0xf]
      %v3975 = vld [vmem:[%s3271 + $0xfc] sm:$0x1]
      %v3977 = vshrl.u32 %v3928, 16
      %v3979 = vrot.slane %v3977, 4
      %v3980 = vshll.u32 %v3928, 16
      %v3982 = vrot.slane %v3980, 5
      %v3983 = vor.u32 %v3979, %v3982
      %v3984 = vrot.slane %v3983, 4
      %v3986 = vshll.u32 %v3929, 16
      %v3988 = vrot.slane %v3986, 5
      %v3989 = vsel %vm1670, %v3984, %v3988
      %v3990 = vshrl.u32 %v3929, 16
      %v3992 = vrot.slane %v3990, 4
      %v3993 = vor.u32 %v3992, %v3988
      %v3994 = vrot.slane %v3993, 4
      %v3996 = vshll.u32 %v3930, 16
      %v3998 = vrot.slane %v3996, 5
      %v3999 = vsel %vm1670, %v3994, %v3998
      %v4001 = vshrl.u32 %v3931, 16
      %v4003 = vrot.slane %v4001, 4
      %v4004 = vshll.u32 %v3931, 16
      %v4006 = vrot.slane %v4004, 5
      %v4007 = vor.u32 %v4003, %v4006
      %v4008 = vrot.slane %v4007, 4
      %v4010 = vshll.u32 %v3932, 16
      %v4012 = vrot.slane %v4010, 5
      %v4013 = vsel %vm1670, %v4008, %v4012
      %v4014 = vshrl.u32 %v3932, 16
      %v4016 = vrot.slane %v4014, 4
      %v4017 = vor.u32 %v4016, %v4012
      %v4018 = vrot.slane %v4017, 4
      %v4020 = vshll.u32 %v3933, 16
      %v4022 = vrot.slane %v4020, 5
      %v4023 = vsel %vm1670, %v4018, %v4022
      %v4025 = vshrl.u32 %v3934, 16
      %v4027 = vrot.slane %v4025, 4
      %v4028 = vshll.u32 %v3934, 16
      %v4030 = vrot.slane %v4028, 5
      %v4031 = vor.u32 %v4027, %v4030
      %v4032 = vrot.slane %v4031, 4
      %v4034 = vshll.u32 %v3935, 16
      %v4036 = vrot.slane %v4034, 5
      %v4037 = vsel %vm1670, %v4032, %v4036
      %v4038 = vshrl.u32 %v3935, 16
      %v4040 = vrot.slane %v4038, 4
      %v4041 = vor.u32 %v4040, %v4036
      %v4042 = vrot.slane %v4041, 4
      %v4044 = vshll.u32 %v3936, 16
      %v4046 = vrot.slane %v4044, 5
      %v4047 = vsel %vm1670, %v4042, %v4046
      %v4049 = vshrl.u32 %v3937, 16
      %v4051 = vrot.slane %v4049, 4
      %v4052 = vshll.u32 %v3937, 16
      %v4054 = vrot.slane %v4052, 5
      %v4055 = vor.u32 %v4051, %v4054
      %v4056 = vrot.slane %v4055, 4
      %v4058 = vshll.u32 %v3938, 16
      %v4060 = vrot.slane %v4058, 5
      %v4061 = vsel %vm1670, %v4056, %v4060
      %v4062 = vshrl.u32 %v3938, 16
      %v4064 = vrot.slane %v4062, 4
      %v4065 = vor.u32 %v4064, %v4060
      %v4066 = vrot.slane %v4065, 4
      %v4068 = vshll.u32 %v3939, 16
      %v4070 = vrot.slane %v4068, 5
      %v4071 = vsel %vm1670, %v4066, %v4070
      %v4073 = vshrl.u32 %v3940, 16
      %v4075 = vrot.slane %v4073, 4
      %v4076 = vshll.u32 %v3940, 16
      %v4078 = vrot.slane %v4076, 5
      %v4079 = vor.u32 %v4075, %v4078
      %v4080 = vrot.slane %v4079, 4
      %v4082 = vshll.u32 %v3941, 16
      %v4084 = vrot.slane %v4082, 5
      %v4085 = vsel %vm1670, %v4080, %v4084
      %v4086 = vshrl.u32 %v3941, 16
      %v4088 = vrot.slane %v4086, 4
      %v4089 = vor.u32 %v4088, %v4084
      %v4090 = vrot.slane %v4089, 4
      %v4092 = vshll.u32 %v3942, 16
      %v4094 = vrot.slane %v4092, 5
      %v4095 = vsel %vm1670, %v4090, %v4094
      %v4097 = vshrl.u32 %v3943, 16
      %v4099 = vrot.slane %v4097, 4
      %v4100 = vshll.u32 %v3943, 16
      %v4102 = vrot.slane %v4100, 5
      %v4103 = vor.u32 %v4099, %v4102
      %v4104 = vrot.slane %v4103, 4
      %v4106 = vshll.u32 %v3944, 16
      %v4108 = vrot.slane %v4106, 5
      %v4109 = vsel %vm1670, %v4104, %v4108
      %v4110 = vshrl.u32 %v3944, 16
      %v4112 = vrot.slane %v4110, 4
      %v4113 = vor.u32 %v4112, %v4108
      %v4114 = vrot.slane %v4113, 4
      %v4116 = vshll.u32 %v3945, 16
      %v4118 = vrot.slane %v4116, 5
      %v4119 = vsel %vm1670, %v4114, %v4118
      %v4121 = vshrl.u32 %v3946, 16
      %v4123 = vrot.slane %v4121, 4
      %v4124 = vshll.u32 %v3946, 16
      %v4126 = vrot.slane %v4124, 5
      %v4127 = vor.u32 %v4123, %v4126
      %v4128 = vrot.slane %v4127, 4
      %v4130 = vshll.u32 %v3947, 16
      %v4132 = vrot.slane %v4130, 5
      %v4133 = vsel %vm1670, %v4128, %v4132
      %v4134 = vshrl.u32 %v3947, 16
      %v4136 = vrot.slane %v4134, 4
      %v4137 = vor.u32 %v4136, %v4132
      %v4138 = vrot.slane %v4137, 4
      %v4140 = vshll.u32 %v3948, 16
      %v4142 = vrot.slane %v4140, 5
      %v4143 = vsel %vm1670, %v4138, %v4142
      %v4145 = vshrl.u32 %v3949, 16
      %v4147 = vrot.slane %v4145, 4
      %v4148 = vshll.u32 %v3949, 16
      %v4150 = vrot.slane %v4148, 5
      %v4151 = vor.u32 %v4147, %v4150
      %v4152 = vrot.slane %v4151, 4
      %v4154 = vshll.u32 %v3950, 16
      %v4156 = vrot.slane %v4154, 5
      %v4157 = vsel %vm1670, %v4152, %v4156
      %v4158 = vshrl.u32 %v3950, 16
      %v4160 = vrot.slane %v4158, 4
      %v4161 = vor.u32 %v4160, %v4156
      %v4162 = vrot.slane %v4161, 4
      %v4164 = vshll.u32 %v3951, 16
      %v4166 = vrot.slane %v4164, 5
      %v4167 = vsel %vm1670, %v4162, %v4166
      %v4169 = vshrl.u32 %v3952, 16
      %v4171 = vrot.slane %v4169, 4
      %v4172 = vshll.u32 %v3952, 16
      %v4174 = vrot.slane %v4172, 5
      %v4175 = vor.u32 %v4171, %v4174
      %v4176 = vrot.slane %v4175, 4
      %v4178 = vshll.u32 %v3953, 16
      %v4180 = vrot.slane %v4178, 5
      %v4181 = vsel %vm1670, %v4176, %v4180
      %v4182 = vshrl.u32 %v3953, 16
      %v4184 = vrot.slane %v4182, 4
      %v4185 = vor.u32 %v4184, %v4180
      %v4186 = vrot.slane %v4185, 4
      %v4188 = vshll.u32 %v3954, 16
      %v4190 = vrot.slane %v4188, 5
      %v4191 = vsel %vm1670, %v4186, %v4190
      %v4193 = vshrl.u32 %v3955, 16
      %v4195 = vrot.slane %v4193, 4
      %v4196 = vshll.u32 %v3955, 16
      %v4198 = vrot.slane %v4196, 5
      %v4199 = vor.u32 %v4195, %v4198
      %v4200 = vrot.slane %v4199, 4
      %v4202 = vshll.u32 %v3956, 16
      %v4204 = vrot.slane %v4202, 5
      %v4205 = vsel %vm1670, %v4200, %v4204
      %v4206 = vshrl.u32 %v3956, 16
      %v4208 = vrot.slane %v4206, 4
      %v4209 = vor.u32 %v4208, %v4204
      %v4210 = vrot.slane %v4209, 4
      %v4212 = vshll.u32 %v3957, 16
      %v4214 = vrot.slane %v4212, 5
      %v4215 = vsel %vm1670, %v4210, %v4214
      %v4217 = vshrl.u32 %v3958, 16
      %v4219 = vrot.slane %v4217, 4
      %v4220 = vshll.u32 %v3958, 16
      %v4222 = vrot.slane %v4220, 5
      %v4223 = vor.u32 %v4219, %v4222
      %v4224 = vrot.slane %v4223, 4
      %v4226 = vshll.u32 %v3959, 16
      %v4228 = vrot.slane %v4226, 5
      %v4229 = vsel %vm1670, %v4224, %v4228
      %v4230 = vshrl.u32 %v3959, 16
      %v4232 = vrot.slane %v4230, 4
      %v4233 = vor.u32 %v4232, %v4228
      %v4234 = vrot.slane %v4233, 4
      %v4236 = vshll.u32 %v3960, 16
      %v4238 = vrot.slane %v4236, 5
      %v4239 = vsel %vm1670, %v4234, %v4238
      %v4241 = vshrl.u32 %v3961, 16
      %v4243 = vrot.slane %v4241, 4
      %v4244 = vshll.u32 %v3961, 16
      %v4246 = vrot.slane %v4244, 5
      %v4247 = vor.u32 %v4243, %v4246
      %v4248 = vrot.slane %v4247, 4
      %v4250 = vshll.u32 %v3962, 16
      %v4252 = vrot.slane %v4250, 5
      %v4253 = vsel %vm1670, %v4248, %v4252
      %v4254 = vshrl.u32 %v3962, 16
      %v4256 = vrot.slane %v4254, 4
      %v4257 = vor.u32 %v4256, %v4252
      %v4258 = vrot.slane %v4257, 4
      %v4260 = vshll.u32 %v3963, 16
      %v4262 = vrot.slane %v4260, 5
      %v4263 = vsel %vm1670, %v4258, %v4262
      %v4265 = vshrl.u32 %v3964, 16
      %v4267 = vrot.slane %v4265, 4
      %v4268 = vshll.u32 %v3964, 16
      %v4270 = vrot.slane %v4268, 5
      %v4271 = vor.u32 %v4267, %v4270
      %v4272 = vrot.slane %v4271, 4
      %v4274 = vshll.u32 %v3965, 16
      %v4276 = vrot.slane %v4274, 5
      %v4277 = vsel %vm1670, %v4272, %v4276
      %v4278 = vshrl.u32 %v3965, 16
      %v4280 = vrot.slane %v4278, 4
      %v4281 = vor.u32 %v4280, %v4276
      %v4282 = vrot.slane %v4281, 4
      %v4284 = vshll.u32 %v3966, 16
      %v4286 = vrot.slane %v4284, 5
      %v4287 = vsel %vm1670, %v4282, %v4286
      %v4289 = vshrl.u32 %v3967, 16
      %v4291 = vrot.slane %v4289, 4
      %v4292 = vshll.u32 %v3967, 16
      %v4294 = vrot.slane %v4292, 5
      %v4295 = vor.u32 %v4291, %v4294
      %v4296 = vrot.slane %v4295, 4
      %v4298 = vshll.u32 %v3968, 16
      %v4300 = vrot.slane %v4298, 5
      %v4301 = vsel %vm1670, %v4296, %v4300
      %v4302 = vshrl.u32 %v3968, 16
      %v4304 = vrot.slane %v4302, 4
      %v4305 = vor.u32 %v4304, %v4300
      %v4306 = vrot.slane %v4305, 4
      %v4308 = vshll.u32 %v3969, 16
      %v4310 = vrot.slane %v4308, 5
      %v4311 = vsel %vm1670, %v4306, %v4310
      %v4313 = vshrl.u32 %v3970, 16
      %v4315 = vrot.slane %v4313, 4
      %v4316 = vshll.u32 %v3970, 16
      %v4318 = vrot.slane %v4316, 5
      %v4319 = vor.u32 %v4315, %v4318
      %v4320 = vrot.slane %v4319, 4
      %v4322 = vshll.u32 %v3971, 16
      %v4324 = vrot.slane %v4322, 5
      %v4325 = vsel %vm1670, %v4320, %v4324
      %v4326 = vshrl.u32 %v3971, 16
      %v4328 = vrot.slane %v4326, 4
      %v4329 = vor.u32 %v4328, %v4324
      %v4330 = vrot.slane %v4329, 4
      %v4332 = vshll.u32 %v3972, 16
      %v4334 = vrot.slane %v4332, 5
      %v4335 = vsel %vm1670, %v4330, %v4334
      %v4337 = vshrl.u32 %v3973, 16
      %v4339 = vrot.slane %v4337, 4
      %v4340 = vshll.u32 %v3973, 16
      %v4342 = vrot.slane %v4340, 5
      %v4343 = vor.u32 %v4339, %v4342
      %v4344 = vrot.slane %v4343, 4
      %v4346 = vshll.u32 %v3974, 16
      %v4348 = vrot.slane %v4346, 5
      %v4349 = vsel %vm1670, %v4344, %v4348
      %v4350 = vshrl.u32 %v3974, 16
      %v4352 = vrot.slane %v4350, 4
      %v4353 = vor.u32 %v4352, %v4348
      %v4354 = vrot.slane %v4353, 4
      %v4356 = vshll.u32 %v3975, 16
      %v4358 = vrot.slane %v4356, 5
      %v4359 = vsel %vm1670, %v4354, %v4358
      %4392 = vst.msk [vmem:[#allocation4 + $0x10] sm:$0xf] %vm334, %v3989
      %4393 = vst.msk [vmem:[#allocation4 + $0x24] sm:$0xf] %vm334, %v3999
      %4394 = vst.msk [vmem:[#allocation4 + $0x38] sm:$0xf] %vm334, %v4013
      %4395 = vst.msk [vmem:[#allocation4 + $0x4c] sm:$0xf] %vm334, %v4023
      %4396 = vst.msk [vmem:[#allocation4 + $0x60] sm:$0xf] %vm334, %v4037
      %4397 = vst.msk [vmem:[#allocation4 + $0x74] sm:$0xf] %vm334, %v4047
      %4398 = vst.msk [vmem:[#allocation4 + $0x88] sm:$0xf] %vm334, %v4061
      %4399 = vst.msk [vmem:[#allocation4 + $0x9c] sm:$0xf] %vm334, %v4071
      %4400 = vst.msk [vmem:[#allocation4 + $0xb0] sm:$0xf] %vm334, %v4085
      %4401 = vst.msk [vmem:[#allocation4 + $0xc4] sm:$0xf] %vm334, %v4095
      %4402 = vst.msk [vmem:[#allocation4 + $0xd8] sm:$0xf] %vm334, %v4109
      %4403 = vst.msk [vmem:[#allocation4 + $0xec] sm:$0xf] %vm334, %v4119
      %4404 = vst.msk [vmem:[#allocation4 + $0x100] sm:$0xf] %vm334, %v4133
      %4405 = vst.msk [vmem:[#allocation4 + $0x114] sm:$0xf] %vm334, %v4143
      %4406 = vst.msk [vmem:[#allocation4 + $0x128] sm:$0xf] %vm334, %v4157
      %4407 = vst.msk [vmem:[#allocation4 + $0x13c] sm:$0xf] %vm334, %v4167
      %4408 = vst.msk [vmem:[#allocation4 + $0x150] sm:$0xf] %vm334, %v4181
      %4409 = vst.msk [vmem:[#allocation4 + $0x164] sm:$0xf] %vm334, %v4191
      %4410 = vst.msk [vmem:[#allocation4 + $0x178] sm:$0xf] %vm334, %v4205
      %4411 = vst.msk [vmem:[#allocation4 + $0x18c] sm:$0xf] %vm334, %v4215
      %4412 = vst.msk [vmem:[#allocation4 + $0x1a0] sm:$0xf] %vm334, %v4229
      %4413 = vst.msk [vmem:[#allocation4 + $0x1b4] sm:$0xf] %vm334, %v4239
      %4414 = vst.msk [vmem:[#allocation4 + $0x1c8] sm:$0xf] %vm334, %v4253
      %4415 = vst.msk [vmem:[#allocation4 + $0x1dc] sm:$0xf] %vm334, %v4263
      %4416 = vst.msk [vmem:[#allocation4 + $0x1f0] sm:$0xf] %vm334, %v4277
      %4417 = vst.msk [vmem:[#allocation4 + $0x204] sm:$0xf] %vm334, %v4287
      %4418 = vst.msk [vmem:[#allocation4 + $0x218] sm:$0xf] %vm334, %v4301
      %4419 = vst.msk [vmem:[#allocation4 + $0x22c] sm:$0xf] %vm334, %v4311
      %4420 = vst.msk [vmem:[#allocation4 + $0x240] sm:$0xf] %vm334, %v4325
      %4421 = vst.msk [vmem:[#allocation4 + $0x254] sm:$0xf] %vm334, %v4335
      %4422 = vst.msk [vmem:[#allocation4 + $0x268] sm:$0xf] %vm334, %v4349
      %4423 = vst.msk [vmem:[#allocation4 + $0x27c] sm:$0xf] %vm334, %v4359
      %v4424 = vld [vmem:[#allocation4] sm:$0xff]
      %v4425 = vld [vmem:[#allocation4 + $0x8] sm:$0xff]
      %v4426 = vld [vmem:[#allocation4 + $0x10] sm:$0xf]
      %v4427 = vld [vmem:[#allocation4 + $0x14] sm:$0xff]
      %v4428 = vld [vmem:[#allocation4 + $0x1c] sm:$0xff]
      %v4429 = vld [vmem:[#allocation4 + $0x24] sm:$0xf]
      %v4430 = vld [vmem:[#allocation4 + $0x28] sm:$0xff]
      %v4431 = vld [vmem:[#allocation4 + $0x30] sm:$0xff]
      %v4432 = vld [vmem:[#allocation4 + $0x38] sm:$0xf]
      %v4433 = vld [vmem:[#allocation4 + $0x3c] sm:$0xff]
      %v4434 = vld [vmem:[#allocation4 + $0x44] sm:$0xff]
      %v4435 = vld [vmem:[#allocation4 + $0x4c] sm:$0xf]
      %v4436 = vld [vmem:[#allocation4 + $0x50] sm:$0xff]
      %v4437 = vld [vmem:[#allocation4 + $0x58] sm:$0xff]
      %v4438 = vld [vmem:[#allocation4 + $0x60] sm:$0xf]
      %v4439 = vld [vmem:[#allocation4 + $0x64] sm:$0xff]
      %v4440 = vld [vmem:[#allocation4 + $0x6c] sm:$0xff]
      %v4441 = vld [vmem:[#allocation4 + $0x74] sm:$0xf]
      %v4442 = vld [vmem:[#allocation4 + $0x78] sm:$0xff]
      %v4443 = vld [vmem:[#allocation4 + $0x80] sm:$0xff]
      %v4444 = vld [vmem:[#allocation4 + $0x88] sm:$0xf]
      %v4445 = vld [vmem:[#allocation4 + $0x8c] sm:$0xff]
      %v4446 = vld [vmem:[#allocation4 + $0x94] sm:$0xff]
      %v4447 = vld [vmem:[#allocation4 + $0x9c] sm:$0xf]
      %v4448 = vld [vmem:[#allocation4 + $0xa0] sm:$0xff]
      %v4449 = vld [vmem:[#allocation4 + $0xa8] sm:$0xff]
      %v4450 = vld [vmem:[#allocation4 + $0xb0] sm:$0xf]
      %v4451 = vld [vmem:[#allocation4 + $0xb4] sm:$0xff]
      %v4452 = vld [vmem:[#allocation4 + $0xbc] sm:$0xff]
      %v4453 = vld [vmem:[#allocation4 + $0xc4] sm:$0xf]
      %v4454 = vld [vmem:[#allocation4 + $0xc8] sm:$0xff]
      %v4455 = vld [vmem:[#allocation4 + $0xd0] sm:$0xff]
      %v4456 = vld [vmem:[#allocation4 + $0xd8] sm:$0xf]
      %v4457 = vld [vmem:[#allocation4 + $0xdc] sm:$0xff]
      %v4458 = vld [vmem:[#allocation4 + $0xe4] sm:$0xff]
      %v4459 = vld [vmem:[#allocation4 + $0xec] sm:$0xf]
      %v4460 = vld [vmem:[#allocation4 + $0xf0] sm:$0xff]
      %v4461 = vld [vmem:[#allocation4 + $0xf8] sm:$0xff]
      %v4462 = vld [vmem:[#allocation4 + $0x100] sm:$0xf]
      %v4463 = vld [vmem:[#allocation4 + $0x104] sm:$0xff]
      %v4464 = vld [vmem:[#allocation4 + $0x10c] sm:$0xff]
      %v4465 = vld [vmem:[#allocation4 + $0x114] sm:$0xf]
      %v4466 = vld [vmem:[#allocation4 + $0x118] sm:$0xff]
      %v4467 = vld [vmem:[#allocation4 + $0x120] sm:$0xff]
      %v4468 = vld [vmem:[#allocation4 + $0x128] sm:$0xf]
      %v4469 = vld [vmem:[#allocation4 + $0x12c] sm:$0xff]
      %v4470 = vld [vmem:[#allocation4 + $0x134] sm:$0xff]
      %v4471 = vld [vmem:[#allocation4 + $0x13c] sm:$0xf]
      %v4472 = vld [vmem:[#allocation4 + $0x140] sm:$0xff]
      %v4473 = vld [vmem:[#allocation4 + $0x148] sm:$0xff]
      %v4474 = vld [vmem:[#allocation4 + $0x150] sm:$0xf]
      %v4475 = vld [vmem:[#allocation4 + $0x154] sm:$0xff]
      %v4476 = vld [vmem:[#allocation4 + $0x15c] sm:$0xff]
      %v4477 = vld [vmem:[#allocation4 + $0x164] sm:$0xf]
      %v4478 = vld [vmem:[#allocation4 + $0x168] sm:$0xff]
      %v4479 = vld [vmem:[#allocation4 + $0x170] sm:$0xff]
      %v4480 = vld [vmem:[#allocation4 + $0x178] sm:$0xf]
      %v4481 = vld [vmem:[#allocation4 + $0x17c] sm:$0xff]
      %v4482 = vld [vmem:[#allocation4 + $0x184] sm:$0xff]
      %v4483 = vld [vmem:[#allocation4 + $0x18c] sm:$0xf]
      %v4484 = vld [vmem:[#allocation4 + $0x190] sm:$0xff]
      %v4485 = vld [vmem:[#allocation4 + $0x198] sm:$0xff]
      %v4486 = vld [vmem:[#allocation4 + $0x1a0] sm:$0xf]
      %v4487 = vld [vmem:[#allocation4 + $0x1a4] sm:$0xff]
      %v4488 = vld [vmem:[#allocation4 + $0x1ac] sm:$0xff]
      %v4489 = vld [vmem:[#allocation4 + $0x1b4] sm:$0xf]
      %v4490 = vld [vmem:[#allocation4 + $0x1b8] sm:$0xff]
      %v4491 = vld [vmem:[#allocation4 + $0x1c0] sm:$0xff]
      %v4492 = vld [vmem:[#allocation4 + $0x1c8] sm:$0xf]
      %v4493 = vld [vmem:[#allocation4 + $0x1cc] sm:$0xff]
      %v4494 = vld [vmem:[#allocation4 + $0x1d4] sm:$0xff]
      %v4495 = vld [vmem:[#allocation4 + $0x1dc] sm:$0xf]
      %v4496 = vld [vmem:[#allocation4 + $0x1e0] sm:$0xff]
      %v4497 = vld [vmem:[#allocation4 + $0x1e8] sm:$0xff]
      %v4498 = vld [vmem:[#allocation4 + $0x1f0] sm:$0xf]
      %v4499 = vld [vmem:[#allocation4 + $0x1f4] sm:$0xff]
      %v4500 = vld [vmem:[#allocation4 + $0x1fc] sm:$0xff]
      %v4501 = vld [vmem:[#allocation4 + $0x204] sm:$0xf]
      %v4502 = vld [vmem:[#allocation4 + $0x208] sm:$0xff]
      %v4503 = vld [vmem:[#allocation4 + $0x210] sm:$0xff]
      %v4504 = vld [vmem:[#allocation4 + $0x218] sm:$0xf]
      %v4505 = vld [vmem:[#allocation4 + $0x21c] sm:$0xff]
      %v4506 = vld [vmem:[#allocation4 + $0x224] sm:$0xff]
      %v4507 = vld [vmem:[#allocation4 + $0x22c] sm:$0xf]
      %v4508 = vld [vmem:[#allocation4 + $0x230] sm:$0xff]
      %v4509 = vld [vmem:[#allocation4 + $0x238] sm:$0xff]
      %v4510 = vld [vmem:[#allocation4 + $0x240] sm:$0xf]
      %v4511 = vld [vmem:[#allocation4 + $0x244] sm:$0xff]
      %v4512 = vld [vmem:[#allocation4 + $0x24c] sm:$0xff]
      %v4513 = vld [vmem:[#allocation4 + $0x254] sm:$0xf]
      %v4514 = vld [vmem:[#allocation4 + $0x258] sm:$0xff]
      %v4515 = vld [vmem:[#allocation4 + $0x260] sm:$0xff]
      %v4516 = vld [vmem:[#allocation4 + $0x268] sm:$0xf]
      %v4517 = vld [vmem:[#allocation4 + $0x26c] sm:$0xff]
      %v4518 = vld [vmem:[#allocation4 + $0x274] sm:$0xff]
      %v4519 = vld [vmem:[#allocation4 + $0x27c] sm:$0xf]
      %v4520 = vld [vmem:[%s3] sm:$0xf]
      %v4521 = vld [vmem:[%s3 + $0x4] sm:$0xf]
      %v4522 = vld [vmem:[%s3 + $0x8] sm:$0xf]
      %v4523 = vld [vmem:[%s3 + $0xc] sm:$0xf]
      %v4524 = vld [vmem:[%s3 + $0x10] sm:$0xf]
      %v4525 = vld [vmem:[%s3 + $0x14] sm:$0xf]
      %v4526 = vld [vmem:[%s3 + $0x18] sm:$0xf]
      %v4527 = vld [vmem:[%s3 + $0x1c] sm:$0xf]
      %v4528 = vld [vmem:[%s3 + $0x20] sm:$0xf]
      %v4529 = vld [vmem:[%s3 + $0x24] sm:$0xf]
      %v4530 = vld [vmem:[%s3 + $0x28] sm:$0xf]
      %v4531 = vld [vmem:[%s3 + $0x2c] sm:$0xf]
      %v4532 = vld [vmem:[%s3 + $0x30] sm:$0xf]
      %v4533 = vld [vmem:[%s3 + $0x34] sm:$0xf]
      %v4534 = vld [vmem:[%s3 + $0x38] sm:$0xf]
      %v4535 = vld [vmem:[%s3 + $0x3c] sm:$0xf]
      %v4536 = vld [vmem:[%s3 + $0x40] sm:$0xf]
      %v4537 = vld [vmem:[%s3 + $0x44] sm:$0xf]
      %v4538 = vld [vmem:[%s3 + $0x48] sm:$0xf]
      %v4539 = vld [vmem:[%s3 + $0x4c] sm:$0xf]
      %v4540 = vld [vmem:[%s3 + $0x50] sm:$0xf]
      %v4541 = vld [vmem:[%s3 + $0x54] sm:$0xf]
      %v4542 = vld [vmem:[%s3 + $0x58] sm:$0xf]
      %v4543 = vld [vmem:[%s3 + $0x5c] sm:$0xf]
      %v4544 = vld [vmem:[%s3 + $0x60] sm:$0xf]
      %v4545 = vld [vmem:[%s3 + $0x64] sm:$0xf]
      %v4546 = vld [vmem:[%s3 + $0x68] sm:$0xf]
      %v4547 = vld [vmem:[%s3 + $0x6c] sm:$0xf]
      %v4548 = vld [vmem:[%s3 + $0x70] sm:$0xf]
      %v4549 = vld [vmem:[%s3 + $0x74] sm:$0xf]
      %v4550 = vld [vmem:[%s3 + $0x78] sm:$0xf]
      %v4551 = vld [vmem:[%s3 + $0x7c] sm:$0xf]
      %v4552 = vld [vmem:[%s3 + $0x80] sm:$0xf]
      %v4553 = vld [vmem:[%s3 + $0x84] sm:$0xf]
      %v4554 = vld [vmem:[%s3 + $0x88] sm:$0xf]
      %v4555 = vld [vmem:[%s3 + $0x8c] sm:$0xf]
      %v4556 = vld [vmem:[%s3 + $0x90] sm:$0xf]
      %v4557 = vld [vmem:[%s3 + $0x94] sm:$0xf]
      %v4558 = vld [vmem:[%s3 + $0x98] sm:$0xf]
      %v4559 = vld [vmem:[%s3 + $0x9c] sm:$0xf]
      %v4560 = vld [vmem:[%s3 + $0xa0] sm:$0xf]
      %v4561 = vld [vmem:[%s3 + $0xa4] sm:$0xf]
      %v4562 = vld [vmem:[%s3 + $0xa8] sm:$0xf]
      %v4563 = vld [vmem:[%s3 + $0xac] sm:$0xf]
      %v4564 = vld [vmem:[%s3 + $0xb0] sm:$0xf]
      %v4565 = vld [vmem:[%s3 + $0xb4] sm:$0xf]
      %v4566 = vld [vmem:[%s3 + $0xb8] sm:$0xf]
      %v4567 = vld [vmem:[%s3 + $0xbc] sm:$0xf]
      %v4568 = vld [vmem:[%s3 + $0xc0] sm:$0xf]
      %v4569 = vld [vmem:[%s3 + $0xc4] sm:$0xf]
      %v4570 = vld [vmem:[%s3 + $0xc8] sm:$0xf]
      %v4571 = vld [vmem:[%s3 + $0xcc] sm:$0xf]
      %v4572 = vld [vmem:[%s3 + $0xd0] sm:$0xf]
      %v4573 = vld [vmem:[%s3 + $0xd4] sm:$0xf]
      %v4574 = vld [vmem:[%s3 + $0xd8] sm:$0xf]
      %v4575 = vld [vmem:[%s3 + $0xdc] sm:$0xf]
      %v4576 = vld [vmem:[%s3 + $0xe0] sm:$0xf]
      %v4577 = vld [vmem:[%s3 + $0xe4] sm:$0xf]
      %v4578 = vld [vmem:[%s3 + $0xe8] sm:$0xf]
      %v4579 = vld [vmem:[%s3 + $0xec] sm:$0xf]
      %v4580 = vld [vmem:[%s3 + $0xf0] sm:$0xf]
      %v4581 = vld [vmem:[%s3 + $0xf4] sm:$0xf]
      %v4582 = vld [vmem:[%s3 + $0xf8] sm:$0xf]
      %v4583 = vld [vmem:[%s3 + $0xfc] sm:$0xf]
      %v4584 = vld [vmem:[%s3 + $0x100] sm:$0xf]
      %v4585 = vld [vmem:[%s3 + $0x104] sm:$0xf]
      %v4586 = vld [vmem:[%s3 + $0x108] sm:$0xf]
      %v4587 = vld [vmem:[%s3 + $0x10c] sm:$0xf]
      %v4588 = vld [vmem:[%s3 + $0x110] sm:$0xf]
      %v4589 = vld [vmem:[%s3 + $0x114] sm:$0xf]
      %v4590 = vld [vmem:[%s3 + $0x118] sm:$0xf]
      %v4591 = vld [vmem:[%s3 + $0x11c] sm:$0xf]
      %v4592 = vld [vmem:[%s4] sm:$0x1]
      %v4594 = vperm.slane %v4592, 0
      %v4692 = vunpack.c.l.b16 %v4424
      %v4693 = vunpack.c.h.b16 %v4424
      %v4694 = vunpack.c.l.b16 %v4425
      %v4695 = vunpack.c.h.b16 %v4425
      %v4696 = vunpack.c.l.b16 %v4426
      %v4697 = vunpack.c.l.b16 %v4427
      %v4698 = vunpack.c.h.b16 %v4427
      %v4699 = vunpack.c.l.b16 %v4428
      %v4700 = vunpack.c.h.b16 %v4428
      %v4701 = vunpack.c.l.b16 %v4429
      %v4702 = vunpack.c.l.b16 %v4430
      %v4703 = vunpack.c.h.b16 %v4430
      %v4704 = vunpack.c.l.b16 %v4431
      %v4705 = vunpack.c.h.b16 %v4431
      %v4706 = vunpack.c.l.b16 %v4432
      %v4707 = vunpack.c.l.b16 %v4433
      %v4708 = vunpack.c.h.b16 %v4433
      %v4709 = vunpack.c.l.b16 %v4434
      %v4710 = vunpack.c.h.b16 %v4434
      %v4711 = vunpack.c.l.b16 %v4435
      %v4712 = vunpack.c.l.b16 %v4436
      %v4713 = vunpack.c.h.b16 %v4436
      %v4714 = vunpack.c.l.b16 %v4437
      %v4715 = vunpack.c.h.b16 %v4437
      %v4716 = vunpack.c.l.b16 %v4438
      %v4717 = vunpack.c.l.b16 %v4439
      %v4718 = vunpack.c.h.b16 %v4439
      %v4719 = vunpack.c.l.b16 %v4440
      %v4720 = vunpack.c.h.b16 %v4440
      %v4721 = vunpack.c.l.b16 %v4441
      %v4722 = vunpack.c.l.b16 %v4442
      %v4723 = vunpack.c.h.b16 %v4442
      %v4724 = vunpack.c.l.b16 %v4443
      %v4725 = vunpack.c.h.b16 %v4443
      %v4726 = vunpack.c.l.b16 %v4444
      %v4727 = vunpack.c.l.b16 %v4445
      %v4728 = vunpack.c.h.b16 %v4445
      %v4729 = vunpack.c.l.b16 %v4446
      %v4730 = vunpack.c.h.b16 %v4446
      %v4731 = vunpack.c.l.b16 %v4447
      %v4732 = vunpack.c.l.b16 %v4448
      %v4733 = vunpack.c.h.b16 %v4448
      %v4734 = vunpack.c.l.b16 %v4449
      %v4735 = vunpack.c.h.b16 %v4449
      %v4736 = vunpack.c.l.b16 %v4450
      %v4737 = vunpack.c.l.b16 %v4451
      %v4738 = vunpack.c.h.b16 %v4451
      %v4739 = vunpack.c.l.b16 %v4452
      %v4740 = vunpack.c.h.b16 %v4452
      %v4741 = vunpack.c.l.b16 %v4453
      %v4742 = vunpack.c.l.b16 %v4454
      %v4743 = vunpack.c.h.b16 %v4454
      %v4744 = vunpack.c.l.b16 %v4455
      %v4745 = vunpack.c.h.b16 %v4455
      %v4746 = vunpack.c.l.b16 %v4456
      %v4747 = vunpack.c.l.b16 %v4457
      %v4748 = vunpack.c.h.b16 %v4457
      %v4749 = vunpack.c.l.b16 %v4458
      %v4750 = vunpack.c.h.b16 %v4458
      %v4751 = vunpack.c.l.b16 %v4459
      %v4752 = vunpack.c.l.b16 %v4460
      %v4753 = vunpack.c.h.b16 %v4460
      %v4754 = vunpack.c.l.b16 %v4461
      %v4755 = vunpack.c.h.b16 %v4461
      %v4756 = vunpack.c.l.b16 %v4462
      %v4757 = vunpack.c.l.b16 %v4463
      %v4758 = vunpack.c.h.b16 %v4463
      %v4759 = vunpack.c.l.b16 %v4464
      %v4760 = vunpack.c.h.b16 %v4464
      %v4761 = vunpack.c.l.b16 %v4465
      %v4762 = vunpack.c.l.b16 %v4466
      %v4763 = vunpack.c.h.b16 %v4466
      %v4764 = vunpack.c.l.b16 %v4467
      %v4765 = vunpack.c.h.b16 %v4467
      %v4766 = vunpack.c.l.b16 %v4468
      %v4767 = vunpack.c.l.b16 %v4469
      %v4768 = vunpack.c.h.b16 %v4469
      %v4769 = vunpack.c.l.b16 %v4470
      %v4770 = vunpack.c.h.b16 %v4470
      %v4771 = vunpack.c.l.b16 %v4471
      %v4772 = vunpack.c.l.b16 %v4472
      %v4773 = vunpack.c.h.b16 %v4472
      %v4774 = vunpack.c.l.b16 %v4473
      %v4775 = vunpack.c.h.b16 %v4473
      %v4776 = vunpack.c.l.b16 %v4474
      %v4777 = vunpack.c.l.b16 %v4475
      %v4778 = vunpack.c.h.b16 %v4475
      %v4779 = vunpack.c.l.b16 %v4476
      %v4780 = vunpack.c.h.b16 %v4476
      %v4781 = vunpack.c.l.b16 %v4477
      %v4782 = vunpack.c.l.b16 %v4478
      %v4783 = vunpack.c.h.b16 %v4478
      %v4784 = vunpack.c.l.b16 %v4479
      %v4785 = vunpack.c.h.b16 %v4479
      %v4786 = vunpack.c.l.b16 %v4480
      %v4787 = vunpack.c.l.b16 %v4481
      %v4788 = vunpack.c.h.b16 %v4481
      %v4789 = vunpack.c.l.b16 %v4482
      %v4790 = vunpack.c.h.b16 %v4482
      %v4791 = vunpack.c.l.b16 %v4483
      %v4792 = vunpack.c.l.b16 %v4484
      %v4793 = vunpack.c.h.b16 %v4484
      %v4794 = vunpack.c.l.b16 %v4485
      %v4795 = vunpack.c.h.b16 %v4485
      %v4796 = vunpack.c.l.b16 %v4486
      %v4797 = vunpack.c.l.b16 %v4487
      %v4798 = vunpack.c.h.b16 %v4487
      %v4799 = vunpack.c.l.b16 %v4488
      %v4800 = vunpack.c.h.b16 %v4488
      %v4801 = vunpack.c.l.b16 %v4489
      %v4802 = vunpack.c.l.b16 %v4490
      %v4803 = vunpack.c.h.b16 %v4490
      %v4804 = vunpack.c.l.b16 %v4491
      %v4805 = vunpack.c.h.b16 %v4491
      %v4806 = vunpack.c.l.b16 %v4492
      %v4807 = vunpack.c.l.b16 %v4493
      %v4808 = vunpack.c.h.b16 %v4493
      %v4809 = vunpack.c.l.b16 %v4494
      %v4810 = vunpack.c.h.b16 %v4494
      %v4811 = vunpack.c.l.b16 %v4495
      %v4812 = vunpack.c.l.b16 %v4496
      %v4813 = vunpack.c.h.b16 %v4496
      %v4814 = vunpack.c.l.b16 %v4497
      %v4815 = vunpack.c.h.b16 %v4497
      %v4816 = vunpack.c.l.b16 %v4498
      %v4817 = vunpack.c.l.b16 %v4499
      %v4818 = vunpack.c.h.b16 %v4499
      %v4819 = vunpack.c.l.b16 %v4500
      %v4820 = vunpack.c.h.b16 %v4500
      %v4821 = vunpack.c.l.b16 %v4501
      %v4822 = vunpack.c.l.b16 %v4502
      %v4823 = vunpack.c.h.b16 %v4502
      %v4824 = vunpack.c.l.b16 %v4503
      %v4825 = vunpack.c.h.b16 %v4503
      %v4826 = vunpack.c.l.b16 %v4504
      %v4827 = vunpack.c.l.b16 %v4505
      %v4828 = vunpack.c.h.b16 %v4505
      %v4829 = vunpack.c.l.b16 %v4506
      %v4830 = vunpack.c.h.b16 %v4506
      %v4831 = vunpack.c.l.b16 %v4507
      %v4832 = vunpack.c.l.b16 %v4508
      %v4833 = vunpack.c.h.b16 %v4508
      %v4834 = vunpack.c.l.b16 %v4509
      %v4835 = vunpack.c.h.b16 %v4509
      %v4836 = vunpack.c.l.b16 %v4510
      %v4837 = vunpack.c.l.b16 %v4511
      %v4838 = vunpack.c.h.b16 %v4511
      %v4839 = vunpack.c.l.b16 %v4512
      %v4840 = vunpack.c.h.b16 %v4512
      %v4841 = vunpack.c.l.b16 %v4513
      %v4842 = vunpack.c.l.b16 %v4514
      %v4843 = vunpack.c.h.b16 %v4514
      %v4844 = vunpack.c.l.b16 %v4515
      %v4845 = vunpack.c.h.b16 %v4515
      %v4846 = vunpack.c.l.b16 %v4516
      %v4847 = vunpack.c.l.b16 %v4517
      %v4848 = vunpack.c.h.b16 %v4517
      %v4849 = vunpack.c.l.b16 %v4518
      %v4850 = vunpack.c.h.b16 %v4518
      %v4851 = vunpack.c.l.b16 %v4519
      %v4852 = vpack.c.b16 %v4697, %v4692
      %v4853 = vpack.c.b16 %v4698, %v4693
      %v4854 = vpack.c.b16 %v4699, %v4694
      %v4855 = vpack.c.b16 %v4700, %v4695
      %v4856 = vpack.c.b16 %v4701, %v4696
      %v4857 = vpack.c.b16 %v4707, %v4702
      %v4858 = vpack.c.b16 %v4708, %v4703
      %v4859 = vpack.c.b16 %v4709, %v4704
      %v4860 = vpack.c.b16 %v4710, %v4705
      %v4861 = vpack.c.b16 %v4711, %v4706
      %v4862 = vpack.c.b16 %v4717, %v4712
      %v4863 = vpack.c.b16 %v4718, %v4713
      %v4864 = vpack.c.b16 %v4719, %v4714
      %v4865 = vpack.c.b16 %v4720, %v4715
      %v4866 = vpack.c.b16 %v4721, %v4716
      %v4867 = vpack.c.b16 %v4727, %v4722
      %v4868 = vpack.c.b16 %v4728, %v4723
      %v4869 = vpack.c.b16 %v4729, %v4724
      %v4870 = vpack.c.b16 %v4730, %v4725
      %v4871 = vpack.c.b16 %v4731, %v4726
      %v4872 = vpack.c.b16 %v4737, %v4732
      %v4873 = vpack.c.b16 %v4738, %v4733
      %v4874 = vpack.c.b16 %v4739, %v4734
      %v4875 = vpack.c.b16 %v4740, %v4735
      %v4876 = vpack.c.b16 %v4741, %v4736
      %v4877 = vpack.c.b16 %v4747, %v4742
      %v4878 = vpack.c.b16 %v4748, %v4743
      %v4879 = vpack.c.b16 %v4749, %v4744
      %v4880 = vpack.c.b16 %v4750, %v4745
      %v4881 = vpack.c.b16 %v4751, %v4746
      %v4882 = vpack.c.b16 %v4757, %v4752
      %v4883 = vpack.c.b16 %v4758, %v4753
      %v4884 = vpack.c.b16 %v4759, %v4754
      %v4885 = vpack.c.b16 %v4760, %v4755
      %v4886 = vpack.c.b16 %v4761, %v4756
      %v4887 = vpack.c.b16 %v4767, %v4762
      %v4888 = vpack.c.b16 %v4768, %v4763
      %v4889 = vpack.c.b16 %v4769, %v4764
      %v4890 = vpack.c.b16 %v4770, %v4765
      %v4891 = vpack.c.b16 %v4771, %v4766
      %v4892 = vpack.c.b16 %v4777, %v4772
      %v4893 = vpack.c.b16 %v4778, %v4773
      %v4894 = vpack.c.b16 %v4779, %v4774
      %v4895 = vpack.c.b16 %v4780, %v4775
      %v4896 = vpack.c.b16 %v4781, %v4776
      %v4897 = vpack.c.b16 %v4787, %v4782
      %v4898 = vpack.c.b16 %v4788, %v4783
      %v4899 = vpack.c.b16 %v4789, %v4784
      %v4900 = vpack.c.b16 %v4790, %v4785
      %v4901 = vpack.c.b16 %v4791, %v4786
      %v4902 = vpack.c.b16 %v4797, %v4792
      %v4903 = vpack.c.b16 %v4798, %v4793
      %v4904 = vpack.c.b16 %v4799, %v4794
      %v4905 = vpack.c.b16 %v4800, %v4795
      %v4906 = vpack.c.b16 %v4801, %v4796
      %v4907 = vpack.c.b16 %v4807, %v4802
      %v4908 = vpack.c.b16 %v4808, %v4803
      %v4909 = vpack.c.b16 %v4809, %v4804
      %v4910 = vpack.c.b16 %v4810, %v4805
      %v4911 = vpack.c.b16 %v4811, %v4806
      %v4912 = vpack.c.b16 %v4817, %v4812
      %v4913 = vpack.c.b16 %v4818, %v4813
      %v4914 = vpack.c.b16 %v4819, %v4814
      %v4915 = vpack.c.b16 %v4820, %v4815
      %v4916 = vpack.c.b16 %v4821, %v4816
      %v4917 = vpack.c.b16 %v4827, %v4822
      %v4918 = vpack.c.b16 %v4828, %v4823
      %v4919 = vpack.c.b16 %v4829, %v4824
      %v4920 = vpack.c.b16 %v4830, %v4825
      %v4921 = vpack.c.b16 %v4831, %v4826
      %v4922 = vpack.c.b16 %v4837, %v4832
      %v4923 = vpack.c.b16 %v4838, %v4833
      %v4924 = vpack.c.b16 %v4839, %v4834
      %v4925 = vpack.c.b16 %v4840, %v4835
      %v4926 = vpack.c.b16 %v4841, %v4836
      %v4927 = vpack.c.b16 %v4847, %v4842
      %v4928 = vpack.c.b16 %v4848, %v4843
      %v4929 = vpack.c.b16 %v4849, %v4844
      %v4930 = vpack.c.b16 %v4850, %v4845
      %v4931 = vpack.c.b16 %v4851, %v4846
      %v5068 = vunpack.c.l.b16 %v4520
      %v5069 = vunpack.c.l.b16 %v4521
      %v5070 = vunpack.c.l.b16 %v4522
      %v5071 = vunpack.c.l.b16 %v4523
      %v5072 = vunpack.c.l.b16 %v4524
      %v5073 = vunpack.c.l.b16 %v4525
      %v5074 = vunpack.c.l.b16 %v4526
      %v5075 = vunpack.c.l.b16 %v4527
      %v5076 = vunpack.c.l.b16 %v4528
      %v5077 = vunpack.c.l.b16 %v4529
      %v5078 = vunpack.c.l.b16 %v4530
      %v5079 = vunpack.c.l.b16 %v4531
      %v5080 = vunpack.c.l.b16 %v4532
      %v5081 = vunpack.c.l.b16 %v4533
      %v5082 = vunpack.c.l.b16 %v4534
      %v5083 = vunpack.c.l.b16 %v4535
      %v5084 = vunpack.c.l.b16 %v4536
      %v5085 = vunpack.c.l.b16 %v4537
      %v5086 = vunpack.c.l.b16 %v4538
      %v5087 = vunpack.c.l.b16 %v4539
      %v5088 = vunpack.c.l.b16 %v4540
      %v5089 = vunpack.c.l.b16 %v4541
      %v5090 = vunpack.c.l.b16 %v4542
      %v5091 = vunpack.c.l.b16 %v4543
      %v5092 = vunpack.c.l.b16 %v4544
      %v5093 = vunpack.c.l.b16 %v4545
      %v5094 = vunpack.c.l.b16 %v4546
      %v5095 = vunpack.c.l.b16 %v4547
      %v5096 = vunpack.c.l.b16 %v4548
      %v5097 = vunpack.c.l.b16 %v4549
      %v5098 = vunpack.c.l.b16 %v4550
      %v5099 = vunpack.c.l.b16 %v4551
      %v5100 = vunpack.c.l.b16 %v4552
      %v5101 = vunpack.c.l.b16 %v4553
      %v5102 = vunpack.c.l.b16 %v4554
      %v5103 = vunpack.c.l.b16 %v4555
      %v5104 = vunpack.c.l.b16 %v4556
      %v5105 = vunpack.c.l.b16 %v4557
      %v5106 = vunpack.c.l.b16 %v4558
      %v5107 = vunpack.c.l.b16 %v4559
      %v5108 = vunpack.c.l.b16 %v4560
      %v5109 = vunpack.c.l.b16 %v4561
      %v5110 = vunpack.c.l.b16 %v4562
      %v5111 = vunpack.c.l.b16 %v4563
      %v5112 = vunpack.c.l.b16 %v4564
      %v5113 = vunpack.c.l.b16 %v4565
      %v5114 = vunpack.c.l.b16 %v4566
      %v5115 = vunpack.c.l.b16 %v4567
      %v5116 = vunpack.c.l.b16 %v4568
      %v5117 = vunpack.c.l.b16 %v4569
      %v5118 = vunpack.c.l.b16 %v4570
      %v5119 = vunpack.c.l.b16 %v4571
      %v5120 = vunpack.c.l.b16 %v4572
      %v5121 = vunpack.c.l.b16 %v4573
      %v5122 = vunpack.c.l.b16 %v4574
      %v5123 = vunpack.c.l.b16 %v4575
      %v5124 = vunpack.c.l.b16 %v4576
      %v5125 = vunpack.c.l.b16 %v4577
      %v5126 = vunpack.c.l.b16 %v4578
      %v5127 = vunpack.c.l.b16 %v4579
      %v5128 = vunpack.c.l.b16 %v4580
      %v5129 = vunpack.c.l.b16 %v4581
      %v5130 = vunpack.c.l.b16 %v4582
      %v5131 = vunpack.c.l.b16 %v4583
      %v5132 = vunpack.c.l.b16 %v4584
      %v5133 = vunpack.c.l.b16 %v4585
      %v5134 = vunpack.c.l.b16 %v4586
      %v5135 = vunpack.c.l.b16 %v4587
      %v5136 = vunpack.c.l.b16 %v4588
      %v5137 = vunpack.c.l.b16 %v4589
      %v5138 = vunpack.c.l.b16 %v4590
      %v5139 = vunpack.c.l.b16 %v4591
      %v5140 = vpack.c.b16 %v5069, %v5068
      %v5141 = vpack.c.b16 %v5071, %v5070
      %v5142 = vpack.c.b16 %v5073, %v5072
      %v5143 = vpack.c.b16 %v5075, %v5074
      %v5144 = vpack.c.b16 %v5077, %v5076
      %v5145 = vpack.c.b16 %v5079, %v5078
      %v5146 = vpack.c.b16 %v5081, %v5080
      %v5147 = vpack.c.b16 %v5083, %v5082
      %v5148 = vpack.c.b16 %v5085, %v5084
      %v5149 = vpack.c.b16 %v5087, %v5086
      %v5150 = vpack.c.b16 %v5089, %v5088
      %v5151 = vpack.c.b16 %v5091, %v5090
      %v5152 = vpack.c.b16 %v5093, %v5092
      %v5153 = vpack.c.b16 %v5095, %v5094
      %v5154 = vpack.c.b16 %v5097, %v5096
      %v5155 = vpack.c.b16 %v5099, %v5098
      %v5156 = vpack.c.b16 %v5101, %v5100
      %v5157 = vpack.c.b16 %v5103, %v5102
      %v5158 = vpack.c.b16 %v5105, %v5104
      %v5159 = vpack.c.b16 %v5107, %v5106
      %v5160 = vpack.c.b16 %v5109, %v5108
      %v5161 = vpack.c.b16 %v5111, %v5110
      %v5162 = vpack.c.b16 %v5113, %v5112
      %v5163 = vpack.c.b16 %v5115, %v5114
      %v5164 = vpack.c.b16 %v5117, %v5116
      %v5165 = vpack.c.b16 %v5119, %v5118
      %v5166 = vpack.c.b16 %v5121, %v5120
      %v5167 = vpack.c.b16 %v5123, %v5122
      %v5168 = vpack.c.b16 %v5125, %v5124
      %v5169 = vpack.c.b16 %v5127, %v5126
      %v5170 = vpack.c.b16 %v5129, %v5128
      %v5171 = vpack.c.b16 %v5131, %v5130
      %v5172 = vpack.c.b16 %v5133, %v5132
      %v5173 = vpack.c.b16 %v5135, %v5134
      %v5174 = vpack.c.b16 %v5137, %v5136
      %v5175 = vpack.c.b16 %v5139, %v5138
      %vm5212 = vcmask 523264
      %v5214 = vsel %vm5212, %v4856, 0
      %v5217 = vsel %vm5212, %v4861, 0
      %v5220 = vsel %vm5212, %v4866, 0
      %v5223 = vsel %vm5212, %v4871, 0
      %v5226 = vsel %vm5212, %v4876, 0
      %v5229 = vsel %vm5212, %v4881, 0
      %v5232 = vsel %vm5212, %v4886, 0
      %v5235 = vsel %vm5212, %v4891, 0
      %v5238 = vsel %vm5212, %v4896, 0
      %v5241 = vsel %vm5212, %v4901, 0
      %v5244 = vsel %vm5212, %v4906, 0
      %v5247 = vsel %vm5212, %v4911, 0
      %v5250 = vsel %vm5212, %v4916, 0
      %v5253 = vsel %vm5212, %v4921, 0
      %v5256 = vsel %vm5212, %v4926, 0
      %v5259 = vsel %vm5212, %v4931, 0
      %5261 = vmatpush.bf16.msra.mxu0 %v5147
      %5262 = vmatpush.bf16.msra.mxu0 %v5146
      %5263 = vmatpush.bf16.msra.mxu0 %v5145
      %5264 = vmatpush.bf16.msra.mxu0 %v5144
      %5265 = vmatpush.bf16.msra.mxu0 %v5143
      %5266 = vmatpush.bf16.msra.mxu0 %v5142
      %5267 = vmatpush.bf16.msra.mxu0 %v5141
      %5268 = vmatpush.bf16.msra.mxu0 %v5140
      %5269 = vmatmul.bf16.gmra.mxu0 %v4852
      %v5270 = vpop.f32.mrf.mxu0
      %v5271 = vadd.f32 %v4594, %v5270
      %v5272 = vpop.f32.mrf.mxu0
      %v5273 = vadd.f32 %v4594, %v5272
      %5274 = vmatmul.bf16.gmra.mxu0 %v4857
      %v5275 = vpop.f32.mrf.mxu0
      %v5276 = vadd.f32 %v4594, %v5275
      %v5277 = vpop.f32.mrf.mxu0
      %v5278 = vadd.f32 %v4594, %v5277
      %5279 = vmatmul.bf16.gmra.mxu0 %v4862
      %v5280 = vpop.f32.mrf.mxu0
      %v5281 = vadd.f32 %v4594, %v5280
      %v5282 = vpop.f32.mrf.mxu0
      %v5283 = vadd.f32 %v4594, %v5282
      %5284 = vmatmul.bf16.gmra.mxu0 %v4867
      %v5285 = vpop.f32.mrf.mxu0
      %v5286 = vadd.f32 %v4594, %v5285
      %v5287 = vpop.f32.mrf.mxu0
      %v5288 = vadd.f32 %v4594, %v5287
      %5289 = vmatmul.bf16.gmra.mxu0 %v4872
      %v5290 = vpop.f32.mrf.mxu0
      %v5291 = vadd.f32 %v4594, %v5290
      %v5292 = vpop.f32.mrf.mxu0
      %v5293 = vadd.f32 %v4594, %v5292
      %5294 = vmatmul.bf16.gmra.mxu0 %v4877
      %v5295 = vpop.f32.mrf.mxu0
      %v5296 = vadd.f32 %v4594, %v5295
      %v5297 = vpop.f32.mrf.mxu0
      %v5298 = vadd.f32 %v4594, %v5297
      %5299 = vmatmul.bf16.gmra.mxu0 %v4882
      %v5300 = vpop.f32.mrf.mxu0
      %v5301 = vadd.f32 %v4594, %v5300
      %v5302 = vpop.f32.mrf.mxu0
      %v5303 = vadd.f32 %v4594, %v5302
      %5304 = vmatmul.bf16.gmra.mxu0 %v4887
      %v5305 = vpop.f32.mrf.mxu0
      %v5306 = vadd.f32 %v4594, %v5305
      %v5307 = vpop.f32.mrf.mxu0
      %v5308 = vadd.f32 %v4594, %v5307
      %5309 = vmatmul.bf16.gmra.mxu0 %v4892
      %v5310 = vpop.f32.mrf.mxu0
      %v5311 = vadd.f32 %v4594, %v5310
      %v5312 = vpop.f32.mrf.mxu0
      %v5313 = vadd.f32 %v4594, %v5312
      %5314 = vmatmul.bf16.gmra.mxu0 %v4897
      %v5315 = vpop.f32.mrf.mxu0
      %v5316 = vadd.f32 %v4594, %v5315
      %v5317 = vpop.f32.mrf.mxu0
      %v5318 = vadd.f32 %v4594, %v5317
      %5319 = vmatmul.bf16.gmra.mxu0 %v4902
      %v5320 = vpop.f32.mrf.mxu0
      %v5321 = vadd.f32 %v4594, %v5320
      %v5322 = vpop.f32.mrf.mxu0
      %v5323 = vadd.f32 %v4594, %v5322
      %5324 = vmatmul.bf16.gmra.mxu0 %v4907
      %v5325 = vpop.f32.mrf.mxu0
      %v5326 = vadd.f32 %v4594, %v5325
      %v5327 = vpop.f32.mrf.mxu0
      %v5328 = vadd.f32 %v4594, %v5327
      %5329 = vmatmul.bf16.gmra.mxu0 %v4912
      %v5330 = vpop.f32.mrf.mxu0
      %v5331 = vadd.f32 %v4594, %v5330
      %v5332 = vpop.f32.mrf.mxu0
      %v5333 = vadd.f32 %v4594, %v5332
      %5334 = vmatmul.bf16.gmra.mxu0 %v4917
      %v5335 = vpop.f32.mrf.mxu0
      %v5336 = vadd.f32 %v4594, %v5335
      %v5337 = vpop.f32.mrf.mxu0
      %v5338 = vadd.f32 %v4594, %v5337
      %5339 = vmatmul.bf16.gmra.mxu0 %v4922
      %v5340 = vpop.f32.mrf.mxu0
      %v5341 = vadd.f32 %v4594, %v5340
      %v5342 = vpop.f32.mrf.mxu0
      %v5343 = vadd.f32 %v4594, %v5342
      %5344 = vmatmul.bf16.gmra.mxu0 %v4927
      %v5345 = vpop.f32.mrf.mxu0
      %v5346 = vadd.f32 %v4594, %v5345
      %v5347 = vpop.f32.mrf.mxu0
      %v5348 = vadd.f32 %v4594, %v5347
      %5349 = vdwg.mxu0
      %5350 = vmatpush.bf16.msra.mxu0 %v5155
      %5351 = vmatpush.bf16.msra.mxu0 %v5154
      %5352 = vmatpush.bf16.msra.mxu0 %v5153
      %5353 = vmatpush.bf16.msra.mxu0 %v5152
      %5354 = vmatpush.bf16.msra.mxu0 %v5151
      %5355 = vmatpush.bf16.msra.mxu0 %v5150
      %5356 = vmatpush.bf16.msra.mxu0 %v5149
      %5357 = vmatpush.bf16.msra.mxu0 %v5148
      %5358 = vmatmul.bf16.gmra.mxu0 %v4853
      %v5359 = vpop.f32.mrf.mxu0
      %v5360 = vadd.f32 %v5271, %v5359
      %v5361 = vpop.f32.mrf.mxu0
      %v5362 = vadd.f32 %v5273, %v5361
      %5363 = vmatmul.bf16.gmra.mxu0 %v4858
      %v5364 = vpop.f32.mrf.mxu0
      %v5365 = vadd.f32 %v5276, %v5364
      %v5366 = vpop.f32.mrf.mxu0
      %v5367 = vadd.f32 %v5278, %v5366
      %5368 = vmatmul.bf16.gmra.mxu0 %v4863
      %v5369 = vpop.f32.mrf.mxu0
      %v5370 = vadd.f32 %v5281, %v5369
      %v5371 = vpop.f32.mrf.mxu0
      %v5372 = vadd.f32 %v5283, %v5371
      %5373 = vmatmul.bf16.gmra.mxu0 %v4868
      %v5374 = vpop.f32.mrf.mxu0
      %v5375 = vadd.f32 %v5286, %v5374
      %v5376 = vpop.f32.mrf.mxu0
      %v5377 = vadd.f32 %v5288, %v5376
      %5378 = vmatmul.bf16.gmra.mxu0 %v4873
      %v5379 = vpop.f32.mrf.mxu0
      %v5380 = vadd.f32 %v5291, %v5379
      %v5381 = vpop.f32.mrf.mxu0
      %v5382 = vadd.f32 %v5293, %v5381
      %5383 = vmatmul.bf16.gmra.mxu0 %v4878
      %v5384 = vpop.f32.mrf.mxu0
      %v5385 = vadd.f32 %v5296, %v5384
      %v5386 = vpop.f32.mrf.mxu0
      %v5387 = vadd.f32 %v5298, %v5386
      %5388 = vmatmul.bf16.gmra.mxu0 %v4883
      %v5389 = vpop.f32.mrf.mxu0
      %v5390 = vadd.f32 %v5301, %v5389
      %v5391 = vpop.f32.mrf.mxu0
      %v5392 = vadd.f32 %v5303, %v5391
      %5393 = vmatmul.bf16.gmra.mxu0 %v4888
      %v5394 = vpop.f32.mrf.mxu0
      %v5395 = vadd.f32 %v5306, %v5394
      %v5396 = vpop.f32.mrf.mxu0
      %v5397 = vadd.f32 %v5308, %v5396
      %5398 = vmatmul.bf16.gmra.mxu0 %v4893
      %v5399 = vpop.f32.mrf.mxu0
      %v5400 = vadd.f32 %v5311, %v5399
      %v5401 = vpop.f32.mrf.mxu0
      %v5402 = vadd.f32 %v5313, %v5401
      %5403 = vmatmul.bf16.gmra.mxu0 %v4898
      %v5404 = vpop.f32.mrf.mxu0
      %v5405 = vadd.f32 %v5316, %v5404
      %v5406 = vpop.f32.mrf.mxu0
      %v5407 = vadd.f32 %v5318, %v5406
      %5408 = vmatmul.bf16.gmra.mxu0 %v4903
      %v5409 = vpop.f32.mrf.mxu0
      %v5410 = vadd.f32 %v5321, %v5409
      %v5411 = vpop.f32.mrf.mxu0
      %v5412 = vadd.f32 %v5323, %v5411
      %5413 = vmatmul.bf16.gmra.mxu0 %v4908
      %v5414 = vpop.f32.mrf.mxu0
      %v5415 = vadd.f32 %v5326, %v5414
      %v5416 = vpop.f32.mrf.mxu0
      %v5417 = vadd.f32 %v5328, %v5416
      %5418 = vmatmul.bf16.gmra.mxu0 %v4913
      %v5419 = vpop.f32.mrf.mxu0
      %v5420 = vadd.f32 %v5331, %v5419
      %v5421 = vpop.f32.mrf.mxu0
      %v5422 = vadd.f32 %v5333, %v5421
      %5423 = vmatmul.bf16.gmra.mxu0 %v4918
      %v5424 = vpop.f32.mrf.mxu0
      %v5425 = vadd.f32 %v5336, %v5424
      %v5426 = vpop.f32.mrf.mxu0
      %v5427 = vadd.f32 %v5338, %v5426
      %5428 = vmatmul.bf16.gmra.mxu0 %v4923
      %v5429 = vpop.f32.mrf.mxu0
      %v5430 = vadd.f32 %v5341, %v5429
      %v5431 = vpop.f32.mrf.mxu0
      %v5432 = vadd.f32 %v5343, %v5431
      %5433 = vmatmul.bf16.gmra.mxu0 %v4928
      %v5434 = vpop.f32.mrf.mxu0
      %v5435 = vadd.f32 %v5346, %v5434
      %v5436 = vpop.f32.mrf.mxu0
      %v5437 = vadd.f32 %v5348, %v5436
      %5438 = vdwg.mxu0
      %5439 = vmatpush.bf16.msra.mxu0 %v5163
      %5440 = vmatpush.bf16.msra.mxu0 %v5162
      %5441 = vmatpush.bf16.msra.mxu0 %v5161
      %5442 = vmatpush.bf16.msra.mxu0 %v5160
      %5443 = vmatpush.bf16.msra.mxu0 %v5159
      %5444 = vmatpush.bf16.msra.mxu0 %v5158
      %5445 = vmatpush.bf16.msra.mxu0 %v5157
      %5446 = vmatpush.bf16.msra.mxu0 %v5156
      %5447 = vmatmul.bf16.gmra.mxu0 %v4854
      %v5448 = vpop.f32.mrf.mxu0
      %v5449 = vadd.f32 %v5360, %v5448
      %v5450 = vpop.f32.mrf.mxu0
      %v5451 = vadd.f32 %v5362, %v5450
      %5452 = vmatmul.bf16.gmra.mxu0 %v4859
      %v5453 = vpop.f32.mrf.mxu0
      %v5454 = vadd.f32 %v5365, %v5453
      %v5455 = vpop.f32.mrf.mxu0
      %v5456 = vadd.f32 %v5367, %v5455
      %5457 = vmatmul.bf16.gmra.mxu0 %v4864
      %v5458 = vpop.f32.mrf.mxu0
      %v5459 = vadd.f32 %v5370, %v5458
      %v5460 = vpop.f32.mrf.mxu0
      %v5461 = vadd.f32 %v5372, %v5460
      %5462 = vmatmul.bf16.gmra.mxu0 %v4869
      %v5463 = vpop.f32.mrf.mxu0
      %v5464 = vadd.f32 %v5375, %v5463
      %v5465 = vpop.f32.mrf.mxu0
      %v5466 = vadd.f32 %v5377, %v5465
      %5467 = vmatmul.bf16.gmra.mxu0 %v4874
      %v5468 = vpop.f32.mrf.mxu0
      %v5469 = vadd.f32 %v5380, %v5468
      %v5470 = vpop.f32.mrf.mxu0
      %v5471 = vadd.f32 %v5382, %v5470
      %5472 = vmatmul.bf16.gmra.mxu0 %v4879
      %v5473 = vpop.f32.mrf.mxu0
      %v5474 = vadd.f32 %v5385, %v5473
      %v5475 = vpop.f32.mrf.mxu0
      %v5476 = vadd.f32 %v5387, %v5475
      %5477 = vmatmul.bf16.gmra.mxu0 %v4884
      %v5478 = vpop.f32.mrf.mxu0
      %v5479 = vadd.f32 %v5390, %v5478
      %v5480 = vpop.f32.mrf.mxu0
      %v5481 = vadd.f32 %v5392, %v5480
      %5482 = vmatmul.bf16.gmra.mxu0 %v4889
      %v5483 = vpop.f32.mrf.mxu0
      %v5484 = vadd.f32 %v5395, %v5483
      %v5485 = vpop.f32.mrf.mxu0
      %v5486 = vadd.f32 %v5397, %v5485
      %5487 = vmatmul.bf16.gmra.mxu0 %v4894
      %v5488 = vpop.f32.mrf.mxu0
      %v5489 = vadd.f32 %v5400, %v5488
      %v5490 = vpop.f32.mrf.mxu0
      %v5491 = vadd.f32 %v5402, %v5490
      %5492 = vmatmul.bf16.gmra.mxu0 %v4899
      %v5493 = vpop.f32.mrf.mxu0
      %v5494 = vadd.f32 %v5405, %v5493
      %v5495 = vpop.f32.mrf.mxu0
      %v5496 = vadd.f32 %v5407, %v5495
      %5497 = vmatmul.bf16.gmra.mxu0 %v4904
      %v5498 = vpop.f32.mrf.mxu0
      %v5499 = vadd.f32 %v5410, %v5498
      %v5500 = vpop.f32.mrf.mxu0
      %v5501 = vadd.f32 %v5412, %v5500
      %5502 = vmatmul.bf16.gmra.mxu0 %v4909
      %v5503 = vpop.f32.mrf.mxu0
      %v5504 = vadd.f32 %v5415, %v5503
      %v5505 = vpop.f32.mrf.mxu0
      %v5506 = vadd.f32 %v5417, %v5505
      %5507 = vmatmul.bf16.gmra.mxu0 %v4914
      %v5508 = vpop.f32.mrf.mxu0
      %v5509 = vadd.f32 %v5420, %v5508
      %v5510 = vpop.f32.mrf.mxu0
      %v5511 = vadd.f32 %v5422, %v5510
      %5512 = vmatmul.bf16.gmra.mxu0 %v4919
      %v5513 = vpop.f32.mrf.mxu0
      %v5514 = vadd.f32 %v5425, %v5513
      %v5515 = vpop.f32.mrf.mxu0
      %v5516 = vadd.f32 %v5427, %v5515
      %5517 = vmatmul.bf16.gmra.mxu0 %v4924
      %v5518 = vpop.f32.mrf.mxu0
      %v5519 = vadd.f32 %v5430, %v5518
      %v5520 = vpop.f32.mrf.mxu0
      %v5521 = vadd.f32 %v5432, %v5520
      %5522 = vmatmul.bf16.gmra.mxu0 %v4929
      %v5523 = vpop.f32.mrf.mxu0
      %v5524 = vadd.f32 %v5435, %v5523
      %v5525 = vpop.f32.mrf.mxu0
      %v5526 = vadd.f32 %v5437, %v5525
      %5527 = vdwg.mxu0
      %5528 = vmatpush.bf16.msra.mxu0 %v5171
      %5529 = vmatpush.bf16.msra.mxu0 %v5170
      %5530 = vmatpush.bf16.msra.mxu0 %v5169
      %5531 = vmatpush.bf16.msra.mxu0 %v5168
      %5532 = vmatpush.bf16.msra.mxu0 %v5167
      %5533 = vmatpush.bf16.msra.mxu0 %v5166
      %5534 = vmatpush.bf16.msra.mxu0 %v5165
      %5535 = vmatpush.bf16.msra.mxu0 %v5164
      %5536 = vmatmul.bf16.gmra.mxu0 %v4855
      %v5537 = vpop.f32.mrf.mxu0
      %v5538 = vadd.f32 %v5449, %v5537
      %v5539 = vpop.f32.mrf.mxu0
      %v5540 = vadd.f32 %v5451, %v5539
      %5541 = vmatmul.bf16.gmra.mxu0 %v4860
      %v5542 = vpop.f32.mrf.mxu0
      %v5543 = vadd.f32 %v5454, %v5542
      %v5544 = vpop.f32.mrf.mxu0
      %v5545 = vadd.f32 %v5456, %v5544
      %5546 = vmatmul.bf16.gmra.mxu0 %v4865
      %v5547 = vpop.f32.mrf.mxu0
      %v5548 = vadd.f32 %v5459, %v5547
      %v5549 = vpop.f32.mrf.mxu0
      %v5550 = vadd.f32 %v5461, %v5549
      %5551 = vmatmul.bf16.gmra.mxu0 %v4870
      %v5552 = vpop.f32.mrf.mxu0
      %v5553 = vadd.f32 %v5464, %v5552
      %v5554 = vpop.f32.mrf.mxu0
      %v5555 = vadd.f32 %v5466, %v5554
      %5556 = vmatmul.bf16.gmra.mxu0 %v4875
      %v5557 = vpop.f32.mrf.mxu0
      %v5558 = vadd.f32 %v5469, %v5557
      %v5559 = vpop.f32.mrf.mxu0
      %v5560 = vadd.f32 %v5471, %v5559
      %5561 = vmatmul.bf16.gmra.mxu0 %v4880
      %v5562 = vpop.f32.mrf.mxu0
      %v5563 = vadd.f32 %v5474, %v5562
      %v5564 = vpop.f32.mrf.mxu0
      %v5565 = vadd.f32 %v5476, %v5564
      %5566 = vmatmul.bf16.gmra.mxu0 %v4885
      %v5567 = vpop.f32.mrf.mxu0
      %v5568 = vadd.f32 %v5479, %v5567
      %v5569 = vpop.f32.mrf.mxu0
      %v5570 = vadd.f32 %v5481, %v5569
      %5571 = vmatmul.bf16.gmra.mxu0 %v4890
      %v5572 = vpop.f32.mrf.mxu0
      %v5573 = vadd.f32 %v5484, %v5572
      %v5574 = vpop.f32.mrf.mxu0
      %v5575 = vadd.f32 %v5486, %v5574
      %5576 = vmatmul.bf16.gmra.mxu0 %v4895
      %v5577 = vpop.f32.mrf.mxu0
      %v5578 = vadd.f32 %v5489, %v5577
      %v5579 = vpop.f32.mrf.mxu0
      %v5580 = vadd.f32 %v5491, %v5579
      %5581 = vmatmul.bf16.gmra.mxu0 %v4900
      %v5582 = vpop.f32.mrf.mxu0
      %v5583 = vadd.f32 %v5494, %v5582
      %v5584 = vpop.f32.mrf.mxu0
      %v5585 = vadd.f32 %v5496, %v5584
      %5586 = vmatmul.bf16.gmra.mxu0 %v4905
      %v5587 = vpop.f32.mrf.mxu0
      %v5588 = vadd.f32 %v5499, %v5587
      %v5589 = vpop.f32.mrf.mxu0
      %v5590 = vadd.f32 %v5501, %v5589
      %5591 = vmatmul.bf16.gmra.mxu0 %v4910
      %v5592 = vpop.f32.mrf.mxu0
      %v5593 = vadd.f32 %v5504, %v5592
      %v5594 = vpop.f32.mrf.mxu0
      %v5595 = vadd.f32 %v5506, %v5594
      %5596 = vmatmul.bf16.gmra.mxu0 %v4915
      %v5597 = vpop.f32.mrf.mxu0
      %v5598 = vadd.f32 %v5509, %v5597
      %v5599 = vpop.f32.mrf.mxu0
      %v5600 = vadd.f32 %v5511, %v5599
      %5601 = vmatmul.bf16.gmra.mxu0 %v4920
      %v5602 = vpop.f32.mrf.mxu0
      %v5603 = vadd.f32 %v5514, %v5602
      %v5604 = vpop.f32.mrf.mxu0
      %v5605 = vadd.f32 %v5516, %v5604
      %5606 = vmatmul.bf16.gmra.mxu0 %v4925
      %v5607 = vpop.f32.mrf.mxu0
      %v5608 = vadd.f32 %v5519, %v5607
      %v5609 = vpop.f32.mrf.mxu0
      %v5610 = vadd.f32 %v5521, %v5609
      %5611 = vmatmul.bf16.gmra.mxu0 %v4930
      %v5612 = vpop.f32.mrf.mxu0
      %v5613 = vadd.f32 %v5524, %v5612
      %v5614 = vpop.f32.mrf.mxu0
      %v5615 = vadd.f32 %v5526, %v5614
      %5616 = vdwg.mxu0
      %5617 = vmatpush.bf16.msra.mxu0 0
      %5618 = vmatpush.bf16.msra.mxu0 0
      %5619 = vmatpush.bf16.msra.mxu0 0
      %5620 = vmatpush.bf16.msra.mxu0 0
      %5621 = vmatpush.bf16.msra.mxu0 %v5175
      %5622 = vmatpush.bf16.msra.mxu0 %v5174
      %5623 = vmatpush.bf16.msra.mxu0 %v5173
      %5624 = vmatpush.bf16.msra.mxu0 %v5172
      %5625 = vmatmul.bf16.gmra.mxu0 %v5214
      %v5626 = vpop.f32.mrf.mxu0
      %v5627 = vadd.f32 %v5538, %v5626
      %v5628 = vpop.f32.mrf.mxu0
      %v5629 = vadd.f32 %v5540, %v5628
      %5630 = vmatmul.bf16.gmra.mxu0 %v5217
      %v5631 = vpop.f32.mrf.mxu0
      %v5632 = vadd.f32 %v5543, %v5631
      %v5633 = vpop.f32.mrf.mxu0
      %v5634 = vadd.f32 %v5545, %v5633
      %5635 = vmatmul.bf16.gmra.mxu0 %v5220
      %v5636 = vpop.f32.mrf.mxu0
      %v5637 = vadd.f32 %v5548, %v5636
      %v5638 = vpop.f32.mrf.mxu0
      %v5639 = vadd.f32 %v5550, %v5638
      %5640 = vmatmul.bf16.gmra.mxu0 %v5223
      %v5641 = vpop.f32.mrf.mxu0
      %v5642 = vadd.f32 %v5553, %v5641
      %v5643 = vpop.f32.mrf.mxu0
      %v5644 = vadd.f32 %v5555, %v5643
      %5645 = vmatmul.bf16.gmra.mxu0 %v5226
      %v5646 = vpop.f32.mrf.mxu0
      %v5647 = vadd.f32 %v5558, %v5646
      %v5648 = vpop.f32.mrf.mxu0
      %v5649 = vadd.f32 %v5560, %v5648
      %5650 = vmatmul.bf16.gmra.mxu0 %v5229
      %v5651 = vpop.f32.mrf.mxu0
      %v5652 = vadd.f32 %v5563, %v5651
      %v5653 = vpop.f32.mrf.mxu0
      %v5654 = vadd.f32 %v5565, %v5653
      %5655 = vmatmul.bf16.gmra.mxu0 %v5232
      %v5656 = vpop.f32.mrf.mxu0
      %v5657 = vadd.f32 %v5568, %v5656
      %v5658 = vpop.f32.mrf.mxu0
      %v5659 = vadd.f32 %v5570, %v5658
      %5660 = vmatmul.bf16.gmra.mxu0 %v5235
      %v5661 = vpop.f32.mrf.mxu0
      %v5662 = vadd.f32 %v5573, %v5661
      %v5663 = vpop.f32.mrf.mxu0
      %v5664 = vadd.f32 %v5575, %v5663
      %5665 = vmatmul.bf16.gmra.mxu0 %v5238
      %v5666 = vpop.f32.mrf.mxu0
      %v5667 = vadd.f32 %v5578, %v5666
      %v5668 = vpop.f32.mrf.mxu0
      %v5669 = vadd.f32 %v5580, %v5668
      %5670 = vmatmul.bf16.gmra.mxu0 %v5241
      %v5671 = vpop.f32.mrf.mxu0
      %v5672 = vadd.f32 %v5583, %v5671
      %v5673 = vpop.f32.mrf.mxu0
      %v5674 = vadd.f32 %v5585, %v5673
      %5675 = vmatmul.bf16.gmra.mxu0 %v5244
      %v5676 = vpop.f32.mrf.mxu0
      %v5677 = vadd.f32 %v5588, %v5676
      %v5678 = vpop.f32.mrf.mxu0
      %v5679 = vadd.f32 %v5590, %v5678
      %5680 = vmatmul.bf16.gmra.mxu0 %v5247
      %v5681 = vpop.f32.mrf.mxu0
      %v5682 = vadd.f32 %v5593, %v5681
      %v5683 = vpop.f32.mrf.mxu0
      %v5684 = vadd.f32 %v5595, %v5683
      %5685 = vmatmul.bf16.gmra.mxu0 %v5250
      %v5686 = vpop.f32.mrf.mxu0
      %v5687 = vadd.f32 %v5598, %v5686
      %v5688 = vpop.f32.mrf.mxu0
      %v5689 = vadd.f32 %v5600, %v5688
      %5690 = vmatmul.bf16.gmra.mxu0 %v5253
      %v5691 = vpop.f32.mrf.mxu0
      %v5692 = vadd.f32 %v5603, %v5691
      %v5693 = vpop.f32.mrf.mxu0
      %v5694 = vadd.f32 %v5605, %v5693
      %5695 = vmatmul.bf16.gmra.mxu0 %v5256
      %v5696 = vpop.f32.mrf.mxu0
      %v5697 = vadd.f32 %v5608, %v5696
      %v5698 = vpop.f32.mrf.mxu0
      %v5699 = vadd.f32 %v5610, %v5698
      %5700 = vmatmul.bf16.gmra.mxu0 %v5259
      %v5701 = vpop.f32.mrf.mxu0
      %v5702 = vadd.f32 %v5613, %v5701
      %v5703 = vpop.f32.mrf.mxu0
      %v5704 = vadd.f32 %v5615, %v5703
      %5705 = vdwg.mxu0
      %v5706 = vmax.f32 %v5627, 0.0
      %v5707 = vmax.f32 %v5629, 0.0
      %v5708 = vmax.f32 %v5632, 0.0
      %v5709 = vmax.f32 %v5634, 0.0
      %v5710 = vmax.f32 %v5637, 0.0
      %v5711 = vmax.f32 %v5639, 0.0
      %v5712 = vmax.f32 %v5642, 0.0
      %v5713 = vmax.f32 %v5644, 0.0
      %v5714 = vmax.f32 %v5647, 0.0
      %v5715 = vmax.f32 %v5649, 0.0
      %v5716 = vmax.f32 %v5652, 0.0
      %v5717 = vmax.f32 %v5654, 0.0
      %v5718 = vmax.f32 %v5657, 0.0
      %v5719 = vmax.f32 %v5659, 0.0
      %v5720 = vmax.f32 %v5662, 0.0
      %v5721 = vmax.f32 %v5664, 0.0
      %v5722 = vmax.f32 %v5667, 0.0
      %v5723 = vmax.f32 %v5669, 0.0
      %v5724 = vmax.f32 %v5672, 0.0
      %v5725 = vmax.f32 %v5674, 0.0
      %v5726 = vmax.f32 %v5677, 0.0
      %v5727 = vmax.f32 %v5679, 0.0
      %v5728 = vmax.f32 %v5682, 0.0
      %v5729 = vmax.f32 %v5684, 0.0
      %v5730 = vmax.f32 %v5687, 0.0
      %v5731 = vmax.f32 %v5689, 0.0
      %v5732 = vmax.f32 %v5692, 0.0
      %v5733 = vmax.f32 %v5694, 0.0
      %v5734 = vmax.f32 %v5697, 0.0
      %v5735 = vmax.f32 %v5699, 0.0
      %v5736 = vmax.f32 %v5702, 0.0
      %v5737 = vmax.f32 %v5704, 0.0
      %v5738 = vpack.c.bf16 %v5706, %v5706
      %v5739 = vpack.c.bf16 %v5707, %v5707
      %v5740 = vpack.c.bf16 %v5708, %v5708
      %v5741 = vpack.c.bf16 %v5709, %v5709
      %v5742 = vpack.c.bf16 %v5710, %v5710
      %v5743 = vpack.c.bf16 %v5711, %v5711
      %v5744 = vpack.c.bf16 %v5712, %v5712
      %v5745 = vpack.c.bf16 %v5713, %v5713
      %v5746 = vpack.c.bf16 %v5714, %v5714
      %v5747 = vpack.c.bf16 %v5715, %v5715
      %v5748 = vpack.c.bf16 %v5716, %v5716
      %v5749 = vpack.c.bf16 %v5717, %v5717
      %v5750 = vpack.c.bf16 %v5718, %v5718
      %v5751 = vpack.c.bf16 %v5719, %v5719
      %v5752 = vpack.c.bf16 %v5720, %v5720
      %v5753 = vpack.c.bf16 %v5721, %v5721
      %v5754 = vpack.c.bf16 %v5722, %v5722
      %v5755 = vpack.c.bf16 %v5723, %v5723
      %v5756 = vpack.c.bf16 %v5724, %v5724
      %v5757 = vpack.c.bf16 %v5725, %v5725
      %v5758 = vpack.c.bf16 %v5726, %v5726
      %v5759 = vpack.c.bf16 %v5727, %v5727
      %v5760 = vpack.c.bf16 %v5728, %v5728
      %v5761 = vpack.c.bf16 %v5729, %v5729
      %v5762 = vpack.c.bf16 %v5730, %v5730
      %v5763 = vpack.c.bf16 %v5731, %v5731
      %v5764 = vpack.c.bf16 %v5732, %v5732
      %v5765 = vpack.c.bf16 %v5733, %v5733
      %v5766 = vpack.c.bf16 %v5734, %v5734
      %v5767 = vpack.c.bf16 %v5735, %v5735
      %v5768 = vpack.c.bf16 %v5736, %v5736
      %v5769 = vpack.c.bf16 %v5737, %v5737
      %s5770 = scalar_lea.vmem [#allocation3], 16
      %5771 = vst [vmem:[%s5770 + $0x4] sm:$0xf] %v5738
      %5772 = vst [vmem:[%s5770 + $0x8] sm:$0xf] %v5739
      %5773 = vst [vmem:[%s5770 + $0x14] sm:$0xf] %v5740
      %5774 = vst [vmem:[%s5770 + $0x18] sm:$0xf] %v5741
      %5775 = vst [vmem:[%s5770 + $0x24] sm:$0xf] %v5742
      %5776 = vst [vmem:[%s5770 + $0x28] sm:$0xf] %v5743
      %5777 = vst [vmem:[%s5770 + $0x34] sm:$0xf] %v5744
      %5778 = vst [vmem:[%s5770 + $0x38] sm:$0xf] %v5745
      %5779 = vst [vmem:[%s5770 + $0x44] sm:$0xf] %v5746
      %5780 = vst [vmem:[%s5770 + $0x48] sm:$0xf] %v5747
      %5781 = vst [vmem:[%s5770 + $0x54] sm:$0xf] %v5748
      %5782 = vst [vmem:[%s5770 + $0x58] sm:$0xf] %v5749
      %5783 = vst [vmem:[%s5770 + $0x64] sm:$0xf] %v5750
      %5784 = vst [vmem:[%s5770 + $0x68] sm:$0xf] %v5751
      %5785 = vst [vmem:[%s5770 + $0x74] sm:$0xf] %v5752
      %5786 = vst [vmem:[%s5770 + $0x78] sm:$0xf] %v5753
      %5787 = vst [vmem:[%s5770 + $0x84] sm:$0xf] %v5754
      %5788 = vst [vmem:[%s5770 + $0x88] sm:$0xf] %v5755
      %5789 = vst [vmem:[%s5770 + $0x94] sm:$0xf] %v5756
      %5790 = vst [vmem:[%s5770 + $0x98] sm:$0xf] %v5757
      %5791 = vst [vmem:[%s5770 + $0xa4] sm:$0xf] %v5758
      %5792 = vst [vmem:[%s5770 + $0xa8] sm:$0xf] %v5759
      %5793 = vst [vmem:[%s5770 + $0xb4] sm:$0xf] %v5760
      %5794 = vst [vmem:[%s5770 + $0xb8] sm:$0xf] %v5761
      %5795 = vst [vmem:[%s5770 + $0xc4] sm:$0xf] %v5762
      %5796 = vst [vmem:[%s5770 + $0xc8] sm:$0xf] %v5763
      %5797 = vst [vmem:[%s5770 + $0xd4] sm:$0xf] %v5764
      %5798 = vst [vmem:[%s5770 + $0xd8] sm:$0xf] %v5765
      %5799 = vst [vmem:[%s5770 + $0xe4] sm:$0xf] %v5766
      %5800 = vst [vmem:[%s5770 + $0xe8] sm:$0xf] %v5767
      %5801 = vst [vmem:[%s5770 + $0xf4] sm:$0xf] %v5768
      %5802 = vst [vmem:[%s5770 + $0xf8] sm:$0xf] %v5769
      %v5803 = vld [vmem:[#allocation3] sm:$0x8]
      %v5804 = vld [vmem:[#allocation3 + $0x4] sm:$0xf]
      %v5805 = vld [vmem:[#allocation3 + $0x8] sm:$0xf]
      %v5806 = vld [vmem:[#allocation3 + $0x10] sm:$0x8]
      %v5807 = vld [vmem:[#allocation3 + $0x14] sm:$0xf]
      %v5808 = vld [vmem:[#allocation3 + $0x18] sm:$0xf]
      %v5809 = vld [vmem:[#allocation3 + $0x20] sm:$0x8]
      %v5810 = vld [vmem:[#allocation3 + $0x24] sm:$0xf]
      %v5811 = vld [vmem:[#allocation3 + $0x28] sm:$0xf]
      %v5812 = vld [vmem:[#allocation3 + $0x30] sm:$0x8]
      %v5813 = vld [vmem:[#allocation3 + $0x34] sm:$0xf]
      %v5814 = vld [vmem:[#allocation3 + $0x38] sm:$0xf]
      %v5815 = vld [vmem:[#allocation3 + $0x40] sm:$0x8]
      %v5816 = vld [vmem:[#allocation3 + $0x44] sm:$0xf]
      %v5817 = vld [vmem:[#allocation3 + $0x48] sm:$0xf]
      %v5818 = vld [vmem:[#allocation3 + $0x50] sm:$0x8]
      %v5819 = vld [vmem:[#allocation3 + $0x54] sm:$0xf]
      %v5820 = vld [vmem:[#allocation3 + $0x58] sm:$0xf]
      %v5821 = vld [vmem:[#allocation3 + $0x60] sm:$0x8]
      %v5822 = vld [vmem:[#allocation3 + $0x64] sm:$0xf]
      %v5823 = vld [vmem:[#allocation3 + $0x68] sm:$0xf]
      %v5824 = vld [vmem:[#allocation3 + $0x70] sm:$0x8]
      %v5825 = vld [vmem:[#allocation3 + $0x74] sm:$0xf]
      %v5826 = vld [vmem:[#allocation3 + $0x78] sm:$0xf]
      %v5827 = vld [vmem:[#allocation3 + $0x80] sm:$0x8]
      %v5828 = vld [vmem:[#allocation3 + $0x84] sm:$0xf]
      %v5829 = vld [vmem:[#allocation3 + $0x88] sm:$0xf]
      %v5830 = vld [vmem:[#allocation3 + $0x90] sm:$0x8]
      %v5831 = vld [vmem:[#allocation3 + $0x94] sm:$0xf]
      %v5832 = vld [vmem:[#allocation3 + $0x98] sm:$0xf]
      %v5833 = vld [vmem:[#allocation3 + $0xa0] sm:$0x8]
      %v5834 = vld [vmem:[#allocation3 + $0xa4] sm:$0xf]
      %v5835 = vld [vmem:[#allocation3 + $0xa8] sm:$0xf]
      %v5836 = vld [vmem:[#allocation3 + $0xb0] sm:$0x8]
      %v5837 = vld [vmem:[#allocation3 + $0xb4] sm:$0xf]
      %v5838 = vld [vmem:[#allocation3 + $0xb8] sm:$0xf]
      %v5839 = vld [vmem:[#allocation3 + $0xc0] sm:$0x8]
      %v5840 = vld [vmem:[#allocation3 + $0xc4] sm:$0xf]
      %v5841 = vld [vmem:[#allocation3 + $0xc8] sm:$0xf]
      %v5842 = vld [vmem:[#allocation3 + $0xd0] sm:$0x8]
      %v5843 = vld [vmem:[#allocation3 + $0xd4] sm:$0xf]
      %v5844 = vld [vmem:[#allocation3 + $0xd8] sm:$0xf]
      %v5845 = vld [vmem:[#allocation3 + $0xe0] sm:$0x8]
      %v5846 = vld [vmem:[#allocation3 + $0xe4] sm:$0xf]
      %v5847 = vld [vmem:[#allocation3 + $0xe8] sm:$0xf]
      %v5848 = vld [vmem:[#allocation3 + $0xf0] sm:$0x8]
      %v5849 = vld [vmem:[#allocation3 + $0xf4] sm:$0xf]
      %v5850 = vld [vmem:[#allocation3 + $0xf8] sm:$0xf]
      %v5852 = vshrl.u32 %v5803, 16
      %v5854 = vrot.slane %v5852, 7
      %v5855 = vrot.slane %v5854, 4
      %v5857 = vshrl.u32 %v5804, 16
      %v5859 = vrot.slane %v5857, 7
      %v5860 = vshll.u32 %v5804, 16
      %v5862 = vor.u32 %v5859, %v5860
      %v5863 = vsel %vm1010, %v5855, %v5862
      %v5864 = vrot.slane %v5859, 4
      %v5866 = vshrl.u32 %v5805, 16
      %v5868 = vrot.slane %v5866, 7
      %v5869 = vshll.u32 %v5805, 16
      %v5871 = vor.u32 %v5868, %v5869
      %v5872 = vsel %vm1010, %v5864, %v5871
      %v5874 = vshrl.u32 %v5806, 16
      %v5876 = vrot.slane %v5874, 7
      %v5877 = vrot.slane %v5876, 4
      %v5879 = vshrl.u32 %v5807, 16
      %v5881 = vrot.slane %v5879, 7
      %v5882 = vshll.u32 %v5807, 16
      %v5884 = vor.u32 %v5881, %v5882
      %v5885 = vsel %vm1010, %v5877, %v5884
      %v5886 = vrot.slane %v5881, 4
      %v5888 = vshrl.u32 %v5808, 16
      %v5890 = vrot.slane %v5888, 7
      %v5891 = vshll.u32 %v5808, 16
      %v5893 = vor.u32 %v5890, %v5891
      %v5894 = vsel %vm1010, %v5886, %v5893
      %v5896 = vshrl.u32 %v5809, 16
      %v5898 = vrot.slane %v5896, 7
      %v5899 = vrot.slane %v5898, 4
      %v5901 = vshrl.u32 %v5810, 16
      %v5903 = vrot.slane %v5901, 7
      %v5904 = vshll.u32 %v5810, 16
      %v5906 = vor.u32 %v5903, %v5904
      %v5907 = vsel %vm1010, %v5899, %v5906
      %v5908 = vrot.slane %v5903, 4
      %v5910 = vshrl.u32 %v5811, 16
      %v5912 = vrot.slane %v5910, 7
      %v5913 = vshll.u32 %v5811, 16
      %v5915 = vor.u32 %v5912, %v5913
      %v5916 = vsel %vm1010, %v5908, %v5915
      %v5918 = vshrl.u32 %v5812, 16
      %v5920 = vrot.slane %v5918, 7
      %v5921 = vrot.slane %v5920, 4
      %v5923 = vshrl.u32 %v5813, 16
      %v5925 = vrot.slane %v5923, 7
      %v5926 = vshll.u32 %v5813, 16
      %v5928 = vor.u32 %v5925, %v5926
      %v5929 = vsel %vm1010, %v5921, %v5928
      %v5930 = vrot.slane %v5925, 4
      %v5932 = vshrl.u32 %v5814, 16
      %v5934 = vrot.slane %v5932, 7
      %v5935 = vshll.u32 %v5814, 16
      %v5937 = vor.u32 %v5934, %v5935
      %v5938 = vsel %vm1010, %v5930, %v5937
      %v5940 = vshrl.u32 %v5815, 16
      %v5942 = vrot.slane %v5940, 7
      %v5943 = vrot.slane %v5942, 4
      %v5945 = vshrl.u32 %v5816, 16
      %v5947 = vrot.slane %v5945, 7
      %v5948 = vshll.u32 %v5816, 16
      %v5950 = vor.u32 %v5947, %v5948
      %v5951 = vsel %vm1010, %v5943, %v5950
      %v5952 = vrot.slane %v5947, 4
      %v5954 = vshrl.u32 %v5817, 16
      %v5956 = vrot.slane %v5954, 7
      %v5957 = vshll.u32 %v5817, 16
      %v5959 = vor.u32 %v5956, %v5957
      %v5960 = vsel %vm1010, %v5952, %v5959
      %v5962 = vshrl.u32 %v5818, 16
      %v5964 = vrot.slane %v5962, 7
      %v5965 = vrot.slane %v5964, 4
      %v5967 = vshrl.u32 %v5819, 16
      %v5969 = vrot.slane %v5967, 7
      %v5970 = vshll.u32 %v5819, 16
      %v5972 = vor.u32 %v5969, %v5970
      %v5973 = vsel %vm1010, %v5965, %v5972
      %v5974 = vrot.slane %v5969, 4
      %v5976 = vshrl.u32 %v5820, 16
      %v5978 = vrot.slane %v5976, 7
      %v5979 = vshll.u32 %v5820, 16
      %v5981 = vor.u32 %v5978, %v5979
      %v5982 = vsel %vm1010, %v5974, %v5981
      %v5984 = vshrl.u32 %v5821, 16
      %v5986 = vrot.slane %v5984, 7
      %v5987 = vrot.slane %v5986, 4
      %v5989 = vshrl.u32 %v5822, 16
      %v5991 = vrot.slane %v5989, 7
      %v5992 = vshll.u32 %v5822, 16
      %v5994 = vor.u32 %v5991, %v5992
      %v5995 = vsel %vm1010, %v5987, %v5994
      %v5996 = vrot.slane %v5991, 4
      %v5998 = vshrl.u32 %v5823, 16
      %v6000 = vrot.slane %v5998, 7
      %v6001 = vshll.u32 %v5823, 16
      %v6003 = vor.u32 %v6000, %v6001
      %v6004 = vsel %vm1010, %v5996, %v6003
      %v6006 = vshrl.u32 %v5824, 16
      %v6008 = vrot.slane %v6006, 7
      %v6009 = vrot.slane %v6008, 4
      %v6011 = vshrl.u32 %v5825, 16
      %v6013 = vrot.slane %v6011, 7
      %v6014 = vshll.u32 %v5825, 16
      %v6016 = vor.u32 %v6013, %v6014
      %v6017 = vsel %vm1010, %v6009, %v6016
      %v6018 = vrot.slane %v6013, 4
      %v6020 = vshrl.u32 %v5826, 16
      %v6022 = vrot.slane %v6020, 7
      %v6023 = vshll.u32 %v5826, 16
      %v6025 = vor.u32 %v6022, %v6023
      %v6026 = vsel %vm1010, %v6018, %v6025
      %v6028 = vshrl.u32 %v5827, 16
      %v6030 = vrot.slane %v6028, 7
      %v6031 = vrot.slane %v6030, 4
      %v6033 = vshrl.u32 %v5828, 16
      %v6035 = vrot.slane %v6033, 7
      %v6036 = vshll.u32 %v5828, 16
      %v6038 = vor.u32 %v6035, %v6036
      %v6039 = vsel %vm1010, %v6031, %v6038
      %v6040 = vrot.slane %v6035, 4
      %v6042 = vshrl.u32 %v5829, 16
      %v6044 = vrot.slane %v6042, 7
      %v6045 = vshll.u32 %v5829, 16
      %v6047 = vor.u32 %v6044, %v6045
      %v6048 = vsel %vm1010, %v6040, %v6047
      %v6050 = vshrl.u32 %v5830, 16
      %v6052 = vrot.slane %v6050, 7
      %v6053 = vrot.slane %v6052, 4
      %v6055 = vshrl.u32 %v5831, 16
      %v6057 = vrot.slane %v6055, 7
      %v6058 = vshll.u32 %v5831, 16
      %v6060 = vor.u32 %v6057, %v6058
      %v6061 = vsel %vm1010, %v6053, %v6060
      %v6062 = vrot.slane %v6057, 4
      %v6064 = vshrl.u32 %v5832, 16
      %v6066 = vrot.slane %v6064, 7
      %v6067 = vshll.u32 %v5832, 16
      %v6069 = vor.u32 %v6066, %v6067
      %v6070 = vsel %vm1010, %v6062, %v6069
      %v6072 = vshrl.u32 %v5833, 16
      %v6074 = vrot.slane %v6072, 7
      %v6075 = vrot.slane %v6074, 4
      %v6077 = vshrl.u32 %v5834, 16
      %v6079 = vrot.slane %v6077, 7
      %v6080 = vshll.u32 %v5834, 16
      %v6082 = vor.u32 %v6079, %v6080
      %v6083 = vsel %vm1010, %v6075, %v6082
      %v6084 = vrot.slane %v6079, 4
      %v6086 = vshrl.u32 %v5835, 16
      %v6088 = vrot.slane %v6086, 7
      %v6089 = vshll.u32 %v5835, 16
      %v6091 = vor.u32 %v6088, %v6089
      %v6092 = vsel %vm1010, %v6084, %v6091
      %v6094 = vshrl.u32 %v5836, 16
      %v6096 = vrot.slane %v6094, 7
      %v6097 = vrot.slane %v6096, 4
      %v6099 = vshrl.u32 %v5837, 16
      %v6101 = vrot.slane %v6099, 7
      %v6102 = vshll.u32 %v5837, 16
      %v6104 = vor.u32 %v6101, %v6102
      %v6105 = vsel %vm1010, %v6097, %v6104
      %v6106 = vrot.slane %v6101, 4
      %v6108 = vshrl.u32 %v5838, 16
      %v6110 = vrot.slane %v6108, 7
      %v6111 = vshll.u32 %v5838, 16
      %v6113 = vor.u32 %v6110, %v6111
      %v6114 = vsel %vm1010, %v6106, %v6113
      %v6116 = vshrl.u32 %v5839, 16
      %v6118 = vrot.slane %v6116, 7
      %v6119 = vrot.slane %v6118, 4
      %v6121 = vshrl.u32 %v5840, 16
      %v6123 = vrot.slane %v6121, 7
      %v6124 = vshll.u32 %v5840, 16
      %v6126 = vor.u32 %v6123, %v6124
      %v6127 = vsel %vm1010, %v6119, %v6126
      %v6128 = vrot.slane %v6123, 4
      %v6130 = vshrl.u32 %v5841, 16
      %v6132 = vrot.slane %v6130, 7
      %v6133 = vshll.u32 %v5841, 16
      %v6135 = vor.u32 %v6132, %v6133
      %v6136 = vsel %vm1010, %v6128, %v6135
      %v6138 = vshrl.u32 %v5842, 16
      %v6140 = vrot.slane %v6138, 7
      %v6141 = vrot.slane %v6140, 4
      %v6143 = vshrl.u32 %v5843, 16
      %v6145 = vrot.slane %v6143, 7
      %v6146 = vshll.u32 %v5843, 16
      %v6148 = vor.u32 %v6145, %v6146
      %v6149 = vsel %vm1010, %v6141, %v6148
      %v6150 = vrot.slane %v6145, 4
      %v6152 = vshrl.u32 %v5844, 16
      %v6154 = vrot.slane %v6152, 7
      %v6155 = vshll.u32 %v5844, 16
      %v6157 = vor.u32 %v6154, %v6155
      %v6158 = vsel %vm1010, %v6150, %v6157
      %v6160 = vshrl.u32 %v5845, 16
      %v6162 = vrot.slane %v6160, 7
      %v6163 = vrot.slane %v6162, 4
      %v6165 = vshrl.u32 %v5846, 16
      %v6167 = vrot.slane %v6165, 7
      %v6168 = vshll.u32 %v5846, 16
      %v6170 = vor.u32 %v6167, %v6168
      %v6171 = vsel %vm1010, %v6163, %v6170
      %v6172 = vrot.slane %v6167, 4
      %v6174 = vshrl.u32 %v5847, 16
      %v6176 = vrot.slane %v6174, 7
      %v6177 = vshll.u32 %v5847, 16
      %v6179 = vor.u32 %v6176, %v6177
      %v6180 = vsel %vm1010, %v6172, %v6179
      %v6182 = vshrl.u32 %v5848, 16
      %v6184 = vrot.slane %v6182, 7
      %v6185 = vrot.slane %v6184, 4
      %v6187 = vshrl.u32 %v5849, 16
      %v6189 = vrot.slane %v6187, 7
      %v6190 = vshll.u32 %v5849, 16
      %v6192 = vor.u32 %v6189, %v6190
      %v6193 = vsel %vm1010, %v6185, %v6192
      %v6194 = vrot.slane %v6189, 4
      %v6196 = vshrl.u32 %v5850, 16
      %v6198 = vrot.slane %v6196, 7
      %v6199 = vshll.u32 %v5850, 16
      %v6201 = vor.u32 %v6198, %v6199
      %v6202 = vsel %vm1010, %v6194, %v6201
      %6235 = vst [vmem:[#allocation5] sm:$0xf] %v5863
      %6236 = vst [vmem:[#allocation5 + $0x24] sm:$0xf] %v5872
      %6237 = vst [vmem:[#allocation5 + $0x48] sm:$0xf] %v5885
      %6238 = vst [vmem:[#allocation5 + $0x6c] sm:$0xf] %v5894
      %6239 = vst [vmem:[#allocation5 + $0x90] sm:$0xf] %v5907
      %6240 = vst [vmem:[#allocation5 + $0xb4] sm:$0xf] %v5916
      %6241 = vst [vmem:[#allocation5 + $0xd8] sm:$0xf] %v5929
      %6242 = vst [vmem:[#allocation5 + $0xfc] sm:$0xf] %v5938
      %6243 = vst [vmem:[#allocation5 + $0x120] sm:$0xf] %v5951
      %6244 = vst [vmem:[#allocation5 + $0x144] sm:$0xf] %v5960
      %6245 = vst [vmem:[#allocation5 + $0x168] sm:$0xf] %v5973
      %6246 = vst [vmem:[#allocation5 + $0x18c] sm:$0xf] %v5982
      %6247 = vst [vmem:[#allocation5 + $0x1b0] sm:$0xf] %v5995
      %6248 = vst [vmem:[#allocation5 + $0x1d4] sm:$0xf] %v6004
      %6249 = vst [vmem:[#allocation5 + $0x1f8] sm:$0xf] %v6017
      %6250 = vst [vmem:[#allocation5 + $0x21c] sm:$0xf] %v6026
      %6251 = vst [vmem:[#allocation5 + $0x240] sm:$0xf] %v6039
      %6252 = vst [vmem:[#allocation5 + $0x264] sm:$0xf] %v6048
      %6253 = vst [vmem:[#allocation5 + $0x288] sm:$0xf] %v6061
      %6254 = vst [vmem:[#allocation5 + $0x2ac] sm:$0xf] %v6070
      %6255 = vst [vmem:[#allocation5 + $0x2d0] sm:$0xf] %v6083
      %6256 = vst [vmem:[#allocation5 + $0x2f4] sm:$0xf] %v6092
      %6257 = vst [vmem:[#allocation5 + $0x318] sm:$0xf] %v6105
      %6258 = vst [vmem:[#allocation5 + $0x33c] sm:$0xf] %v6114
      %6259 = vst [vmem:[#allocation5 + $0x360] sm:$0xf] %v6127
      %6260 = vst [vmem:[#allocation5 + $0x384] sm:$0xf] %v6136
      %6261 = vst [vmem:[#allocation5 + $0x3a8] sm:$0xf] %v6149
      %6262 = vst [vmem:[#allocation5 + $0x3cc] sm:$0xf] %v6158
      %6263 = vst [vmem:[#allocation5 + $0x3f0] sm:$0xf] %v6171
      %6264 = vst [vmem:[#allocation5 + $0x414] sm:$0xf] %v6180
      %6265 = vst [vmem:[#allocation5 + $0x438] sm:$0xf] %v6193
      %6266 = vst [vmem:[#allocation5 + $0x45c] sm:$0xf] %v6202
      %v6267 = vld [vmem:[#allocation3 + $0x4] sm:$0xf]
      %v6268 = vld [vmem:[#allocation3 + $0x8] sm:$0xf]
      %v6269 = vld [vmem:[#allocation3 + $0x14] sm:$0xf]
      %v6270 = vld [vmem:[#allocation3 + $0x18] sm:$0xf]
      %v6271 = vld [vmem:[#allocation3 + $0x24] sm:$0xf]
      %v6272 = vld [vmem:[#allocation3 + $0x28] sm:$0xf]
      %v6273 = vld [vmem:[#allocation3 + $0x34] sm:$0xf]
      %v6274 = vld [vmem:[#allocation3 + $0x38] sm:$0xf]
      %v6275 = vld [vmem:[#allocation3 + $0x44] sm:$0xf]
      %v6276 = vld [vmem:[#allocation3 + $0x48] sm:$0xf]
      %v6277 = vld [vmem:[#allocation3 + $0x54] sm:$0xf]
      %v6278 = vld [vmem:[#allocation3 + $0x58] sm:$0xf]
      %v6279 = vld [vmem:[#allocation3 + $0x64] sm:$0xf]
      %v6280 = vld [vmem:[#allocation3 + $0x68] sm:$0xf]
      %v6281 = vld [vmem:[#allocation3 + $0x74] sm:$0xf]
      %v6282 = vld [vmem:[#allocation3 + $0x78] sm:$0xf]
      %v6283 = vld [vmem:[#allocation3 + $0x84] sm:$0xf]
      %v6284 = vld [vmem:[#allocation3 + $0x88] sm:$0xf]
      %v6285 = vld [vmem:[#allocation3 + $0x94] sm:$0xf]
      %v6286 = vld [vmem:[#allocation3 + $0x98] sm:$0xf]
      %v6287 = vld [vmem:[#allocation3 + $0xa4] sm:$0xf]
      %v6288 = vld [vmem:[#allocation3 + $0xa8] sm:$0xf]
      %v6289 = vld [vmem:[#allocation3 + $0xb4] sm:$0xf]
      %v6290 = vld [vmem:[#allocation3 + $0xb8] sm:$0xf]
      %v6291 = vld [vmem:[#allocation3 + $0xc4] sm:$0xf]
      %v6292 = vld [vmem:[#allocation3 + $0xc8] sm:$0xf]
      %v6293 = vld [vmem:[#allocation3 + $0xd4] sm:$0xf]
      %v6294 = vld [vmem:[#allocation3 + $0xd8] sm:$0xf]
      %v6295 = vld [vmem:[#allocation3 + $0xe4] sm:$0xf]
      %v6296 = vld [vmem:[#allocation3 + $0xe8] sm:$0xf]
      %v6297 = vld [vmem:[#allocation3 + $0xf4] sm:$0xf]
      %v6298 = vld [vmem:[#allocation3 + $0xf8] sm:$0xf]
      %6299 = vst [vmem:[#allocation5 + $0x4] sm:$0xf] %v6267
      %6300 = vst [vmem:[#allocation5 + $0x28] sm:$0xf] %v6268
      %6301 = vst [vmem:[#allocation5 + $0x4c] sm:$0xf] %v6269
      %6302 = vst [vmem:[#allocation5 + $0x70] sm:$0xf] %v6270
      %6303 = vst [vmem:[#allocation5 + $0x94] sm:$0xf] %v6271
      %6304 = vst [vmem:[#allocation5 + $0xb8] sm:$0xf] %v6272
      %6305 = vst [vmem:[#allocation5 + $0xdc] sm:$0xf] %v6273
      %6306 = vst [vmem:[#allocation5 + $0x100] sm:$0xf] %v6274
      %6307 = vst [vmem:[#allocation5 + $0x124] sm:$0xf] %v6275
      %6308 = vst [vmem:[#allocation5 + $0x148] sm:$0xf] %v6276
      %6309 = vst [vmem:[#allocation5 + $0x16c] sm:$0xf] %v6277
      %6310 = vst [vmem:[#allocation5 + $0x190] sm:$0xf] %v6278
      %6311 = vst [vmem:[#allocation5 + $0x1b4] sm:$0xf] %v6279
      %6312 = vst [vmem:[#allocation5 + $0x1d8] sm:$0xf] %v6280
      %6313 = vst [vmem:[#allocation5 + $0x1fc] sm:$0xf] %v6281
      %6314 = vst [vmem:[#allocation5 + $0x220] sm:$0xf] %v6282
      %6315 = vst [vmem:[#allocation5 + $0x244] sm:$0xf] %v6283
      %6316 = vst [vmem:[#allocation5 + $0x268] sm:$0xf] %v6284
      %6317 = vst [vmem:[#allocation5 + $0x28c] sm:$0xf] %v6285
      %6318 = vst [vmem:[#allocation5 + $0x2b0] sm:$0xf] %v6286
      %6319 = vst [vmem:[#allocation5 + $0x2d4] sm:$0xf] %v6287
      %6320 = vst [vmem:[#allocation5 + $0x2f8] sm:$0xf] %v6288
      %6321 = vst [vmem:[#allocation5 + $0x31c] sm:$0xf] %v6289
      %6322 = vst [vmem:[#allocation5 + $0x340] sm:$0xf] %v6290
      %6323 = vst [vmem:[#allocation5 + $0x364] sm:$0xf] %v6291
      %6324 = vst [vmem:[#allocation5 + $0x388] sm:$0xf] %v6292
      %6325 = vst [vmem:[#allocation5 + $0x3ac] sm:$0xf] %v6293
      %6326 = vst [vmem:[#allocation5 + $0x3d0] sm:$0xf] %v6294
      %6327 = vst [vmem:[#allocation5 + $0x3f4] sm:$0xf] %v6295
      %6328 = vst [vmem:[#allocation5 + $0x418] sm:$0xf] %v6296
      %6329 = vst [vmem:[#allocation5 + $0x43c] sm:$0xf] %v6297
      %6330 = vst [vmem:[#allocation5 + $0x460] sm:$0xf] %v6298
      %v6331 = vld [vmem:[#allocation3 + $0x4] sm:$0xf]
      %v6332 = vld [vmem:[#allocation3 + $0x8] sm:$0xf]
      %v6333 = vld [vmem:[#allocation3 + $0xc] sm:$0x1]
      %v6334 = vld [vmem:[#allocation3 + $0x14] sm:$0xf]
      %v6335 = vld [vmem:[#allocation3 + $0x18] sm:$0xf]
      %v6336 = vld [vmem:[#allocation3 + $0x1c] sm:$0x1]
      %v6337 = vld [vmem:[#allocation3 + $0x24] sm:$0xf]
      %v6338 = vld [vmem:[#allocation3 + $0x28] sm:$0xf]
      %v6339 = vld [vmem:[#allocation3 + $0x2c] sm:$0x1]
      %v6340 = vld [vmem:[#allocation3 + $0x34] sm:$0xf]
      %v6341 = vld [vmem:[#allocation3 + $0x38] sm:$0xf]
      %v6342 = vld [vmem:[#allocation3 + $0x3c] sm:$0x1]
      %v6343 = vld [vmem:[#allocation3 + $0x44] sm:$0xf]
      %v6344 = vld [vmem:[#allocation3 + $0x48] sm:$0xf]
      %v6345 = vld [vmem:[#allocation3 + $0x4c] sm:$0x1]
      %v6346 = vld [vmem:[#allocation3 + $0x54] sm:$0xf]
      %v6347 = vld [vmem:[#allocation3 + $0x58] sm:$0xf]
      %v6348 = vld [vmem:[#allocation3 + $0x5c] sm:$0x1]
      %v6349 = vld [vmem:[#allocation3 + $0x64] sm:$0xf]
      %v6350 = vld [vmem:[#allocation3 + $0x68] sm:$0xf]
      %v6351 = vld [vmem:[#allocation3 + $0x6c] sm:$0x1]
      %v6352 = vld [vmem:[#allocation3 + $0x74] sm:$0xf]
      %v6353 = vld [vmem:[#allocation3 + $0x78] sm:$0xf]
      %v6354 = vld [vmem:[#allocation3 + $0x7c] sm:$0x1]
      %v6355 = vld [vmem:[#allocation3 + $0x84] sm:$0xf]
      %v6356 = vld [vmem:[#allocation3 + $0x88] sm:$0xf]
      %v6357 = vld [vmem:[#allocation3 + $0x8c] sm:$0x1]
      %v6358 = vld [vmem:[#allocation3 + $0x94] sm:$0xf]
      %v6359 = vld [vmem:[#allocation3 + $0x98] sm:$0xf]
      %v6360 = vld [vmem:[#allocation3 + $0x9c] sm:$0x1]
      %v6361 = vld [vmem:[#allocation3 + $0xa4] sm:$0xf]
      %v6362 = vld [vmem:[#allocation3 + $0xa8] sm:$0xf]
      %v6363 = vld [vmem:[#allocation3 + $0xac] sm:$0x1]
      %v6364 = vld [vmem:[#allocation3 + $0xb4] sm:$0xf]
      %v6365 = vld [vmem:[#allocation3 + $0xb8] sm:$0xf]
      %v6366 = vld [vmem:[#allocation3 + $0xbc] sm:$0x1]
      %v6367 = vld [vmem:[#allocation3 + $0xc4] sm:$0xf]
      %v6368 = vld [vmem:[#allocation3 + $0xc8] sm:$0xf]
      %v6369 = vld [vmem:[#allocation3 + $0xcc] sm:$0x1]
      %v6370 = vld [vmem:[#allocation3 + $0xd4] sm:$0xf]
      %v6371 = vld [vmem:[#allocation3 + $0xd8] sm:$0xf]
      %v6372 = vld [vmem:[#allocation3 + $0xdc] sm:$0x1]
      %v6373 = vld [vmem:[#allocation3 + $0xe4] sm:$0xf]
      %v6374 = vld [vmem:[#allocation3 + $0xe8] sm:$0xf]
      %v6375 = vld [vmem:[#allocation3 + $0xec] sm:$0x1]
      %v6376 = vld [vmem:[#allocation3 + $0xf4] sm:$0xf]
      %v6377 = vld [vmem:[#allocation3 + $0xf8] sm:$0xf]
      %v6378 = vld [vmem:[#allocation3 + $0xfc] sm:$0x1]
      %v6380 = vshrl.u32 %v6331, 16
      %v6382 = vrot.slane %v6380, 4
      %v6383 = vshll.u32 %v6331, 16
      %v6385 = vrot.slane %v6383, 5
      %v6386 = vor.u32 %v6382, %v6385
      %v6387 = vrot.slane %v6386, 4
      %v6389 = vshll.u32 %v6332, 16
      %v6391 = vrot.slane %v6389, 5
      %v6392 = vsel %vm1670, %v6387, %v6391
      %v6393 = vshrl.u32 %v6332, 16
      %v6395 = vrot.slane %v6393, 4
      %v6396 = vor.u32 %v6395, %v6391
      %v6397 = vrot.slane %v6396, 4
      %v6399 = vshll.u32 %v6333, 16
      %v6401 = vrot.slane %v6399, 5
      %v6402 = vsel %vm1670, %v6397, %v6401
      %v6404 = vshrl.u32 %v6334, 16
      %v6406 = vrot.slane %v6404, 4
      %v6407 = vshll.u32 %v6334, 16
      %v6409 = vrot.slane %v6407, 5
      %v6410 = vor.u32 %v6406, %v6409
      %v6411 = vrot.slane %v6410, 4
      %v6413 = vshll.u32 %v6335, 16
      %v6415 = vrot.slane %v6413, 5
      %v6416 = vsel %vm1670, %v6411, %v6415
      %v6417 = vshrl.u32 %v6335, 16
      %v6419 = vrot.slane %v6417, 4
      %v6420 = vor.u32 %v6419, %v6415
      %v6421 = vrot.slane %v6420, 4
      %v6423 = vshll.u32 %v6336, 16
      %v6425 = vrot.slane %v6423, 5
      %v6426 = vsel %vm1670, %v6421, %v6425
      %v6428 = vshrl.u32 %v6337, 16
      %v6430 = vrot.slane %v6428, 4
      %v6431 = vshll.u32 %v6337, 16
      %v6433 = vrot.slane %v6431, 5
      %v6434 = vor.u32 %v6430, %v6433
      %v6435 = vrot.slane %v6434, 4
      %v6437 = vshll.u32 %v6338, 16
      %v6439 = vrot.slane %v6437, 5
      %v6440 = vsel %vm1670, %v6435, %v6439
      %v6441 = vshrl.u32 %v6338, 16
      %v6443 = vrot.slane %v6441, 4
      %v6444 = vor.u32 %v6443, %v6439
      %v6445 = vrot.slane %v6444, 4
      %v6447 = vshll.u32 %v6339, 16
      %v6449 = vrot.slane %v6447, 5
      %v6450 = vsel %vm1670, %v6445, %v6449
      %v6452 = vshrl.u32 %v6340, 16
      %v6454 = vrot.slane %v6452, 4
      %v6455 = vshll.u32 %v6340, 16
      %v6457 = vrot.slane %v6455, 5
      %v6458 = vor.u32 %v6454, %v6457
      %v6459 = vrot.slane %v6458, 4
      %v6461 = vshll.u32 %v6341, 16
      %v6463 = vrot.slane %v6461, 5
      %v6464 = vsel %vm1670, %v6459, %v6463
      %v6465 = vshrl.u32 %v6341, 16
      %v6467 = vrot.slane %v6465, 4
      %v6468 = vor.u32 %v6467, %v6463
      %v6469 = vrot.slane %v6468, 4
      %v6471 = vshll.u32 %v6342, 16
      %v6473 = vrot.slane %v6471, 5
      %v6474 = vsel %vm1670, %v6469, %v6473
      %v6476 = vshrl.u32 %v6343, 16
      %v6478 = vrot.slane %v6476, 4
      %v6479 = vshll.u32 %v6343, 16
      %v6481 = vrot.slane %v6479, 5
      %v6482 = vor.u32 %v6478, %v6481
      %v6483 = vrot.slane %v6482, 4
      %v6485 = vshll.u32 %v6344, 16
      %v6487 = vrot.slane %v6485, 5
      %v6488 = vsel %vm1670, %v6483, %v6487
      %v6489 = vshrl.u32 %v6344, 16
      %v6491 = vrot.slane %v6489, 4
      %v6492 = vor.u32 %v6491, %v6487
      %v6493 = vrot.slane %v6492, 4
      %v6495 = vshll.u32 %v6345, 16
      %v6497 = vrot.slane %v6495, 5
      %v6498 = vsel %vm1670, %v6493, %v6497
      %v6500 = vshrl.u32 %v6346, 16
      %v6502 = vrot.slane %v6500, 4
      %v6503 = vshll.u32 %v6346, 16
      %v6505 = vrot.slane %v6503, 5
      %v6506 = vor.u32 %v6502, %v6505
      %v6507 = vrot.slane %v6506, 4
      %v6509 = vshll.u32 %v6347, 16
      %v6511 = vrot.slane %v6509, 5
      %v6512 = vsel %vm1670, %v6507, %v6511
      %v6513 = vshrl.u32 %v6347, 16
      %v6515 = vrot.slane %v6513, 4
      %v6516 = vor.u32 %v6515, %v6511
      %v6517 = vrot.slane %v6516, 4
      %v6519 = vshll.u32 %v6348, 16
      %v6521 = vrot.slane %v6519, 5
      %v6522 = vsel %vm1670, %v6517, %v6521
      %v6524 = vshrl.u32 %v6349, 16
      %v6526 = vrot.slane %v6524, 4
      %v6527 = vshll.u32 %v6349, 16
      %v6529 = vrot.slane %v6527, 5
      %v6530 = vor.u32 %v6526, %v6529
      %v6531 = vrot.slane %v6530, 4
      %v6533 = vshll.u32 %v6350, 16
      %v6535 = vrot.slane %v6533, 5
      %v6536 = vsel %vm1670, %v6531, %v6535
      %v6537 = vshrl.u32 %v6350, 16
      %v6539 = vrot.slane %v6537, 4
      %v6540 = vor.u32 %v6539, %v6535
      %v6541 = vrot.slane %v6540, 4
      %v6543 = vshll.u32 %v6351, 16
      %v6545 = vrot.slane %v6543, 5
      %v6546 = vsel %vm1670, %v6541, %v6545
      %v6548 = vshrl.u32 %v6352, 16
      %v6550 = vrot.slane %v6548, 4
      %v6551 = vshll.u32 %v6352, 16
      %v6553 = vrot.slane %v6551, 5
      %v6554 = vor.u32 %v6550, %v6553
      %v6555 = vrot.slane %v6554, 4
      %v6557 = vshll.u32 %v6353, 16
      %v6559 = vrot.slane %v6557, 5
      %v6560 = vsel %vm1670, %v6555, %v6559
      %v6561 = vshrl.u32 %v6353, 16
      %v6563 = vrot.slane %v6561, 4
      %v6564 = vor.u32 %v6563, %v6559
      %v6565 = vrot.slane %v6564, 4
      %v6567 = vshll.u32 %v6354, 16
      %v6569 = vrot.slane %v6567, 5
      %v6570 = vsel %vm1670, %v6565, %v6569
      %v6572 = vshrl.u32 %v6355, 16
      %v6574 = vrot.slane %v6572, 4
      %v6575 = vshll.u32 %v6355, 16
      %v6577 = vrot.slane %v6575, 5
      %v6578 = vor.u32 %v6574, %v6577
      %v6579 = vrot.slane %v6578, 4
      %v6581 = vshll.u32 %v6356, 16
      %v6583 = vrot.slane %v6581, 5
      %v6584 = vsel %vm1670, %v6579, %v6583
      %v6585 = vshrl.u32 %v6356, 16
      %v6587 = vrot.slane %v6585, 4
      %v6588 = vor.u32 %v6587, %v6583
      %v6589 = vrot.slane %v6588, 4
      %v6591 = vshll.u32 %v6357, 16
      %v6593 = vrot.slane %v6591, 5
      %v6594 = vsel %vm1670, %v6589, %v6593
      %v6596 = vshrl.u32 %v6358, 16
      %v6598 = vrot.slane %v6596, 4
      %v6599 = vshll.u32 %v6358, 16
      %v6601 = vrot.slane %v6599, 5
      %v6602 = vor.u32 %v6598, %v6601
      %v6603 = vrot.slane %v6602, 4
      %v6605 = vshll.u32 %v6359, 16
      %v6607 = vrot.slane %v6605, 5
      %v6608 = vsel %vm1670, %v6603, %v6607
      %v6609 = vshrl.u32 %v6359, 16
      %v6611 = vrot.slane %v6609, 4
      %v6612 = vor.u32 %v6611, %v6607
      %v6613 = vrot.slane %v6612, 4
      %v6615 = vshll.u32 %v6360, 16
      %v6617 = vrot.slane %v6615, 5
      %v6618 = vsel %vm1670, %v6613, %v6617
      %v6620 = vshrl.u32 %v6361, 16
      %v6622 = vrot.slane %v6620, 4
      %v6623 = vshll.u32 %v6361, 16
      %v6625 = vrot.slane %v6623, 5
      %v6626 = vor.u32 %v6622, %v6625
      %v6627 = vrot.slane %v6626, 4
      %v6629 = vshll.u32 %v6362, 16
      %v6631 = vrot.slane %v6629, 5
      %v6632 = vsel %vm1670, %v6627, %v6631
      %v6633 = vshrl.u32 %v6362, 16
      %v6635 = vrot.slane %v6633, 4
      %v6636 = vor.u32 %v6635, %v6631
      %v6637 = vrot.slane %v6636, 4
      %v6639 = vshll.u32 %v6363, 16
      %v6641 = vrot.slane %v6639, 5
      %v6642 = vsel %vm1670, %v6637, %v6641
      %v6644 = vshrl.u32 %v6364, 16
      %v6646 = vrot.slane %v6644, 4
      %v6647 = vshll.u32 %v6364, 16
      %v6649 = vrot.slane %v6647, 5
      %v6650 = vor.u32 %v6646, %v6649
      %v6651 = vrot.slane %v6650, 4
      %v6653 = vshll.u32 %v6365, 16
      %v6655 = vrot.slane %v6653, 5
      %v6656 = vsel %vm1670, %v6651, %v6655
      %v6657 = vshrl.u32 %v6365, 16
      %v6659 = vrot.slane %v6657, 4
      %v6660 = vor.u32 %v6659, %v6655
      %v6661 = vrot.slane %v6660, 4
      %v6663 = vshll.u32 %v6366, 16
      %v6665 = vrot.slane %v6663, 5
      %v6666 = vsel %vm1670, %v6661, %v6665
      %v6668 = vshrl.u32 %v6367, 16
      %v6670 = vrot.slane %v6668, 4
      %v6671 = vshll.u32 %v6367, 16
      %v6673 = vrot.slane %v6671, 5
      %v6674 = vor.u32 %v6670, %v6673
      %v6675 = vrot.slane %v6674, 4
      %v6677 = vshll.u32 %v6368, 16
      %v6679 = vrot.slane %v6677, 5
      %v6680 = vsel %vm1670, %v6675, %v6679
      %v6681 = vshrl.u32 %v6368, 16
      %v6683 = vrot.slane %v6681, 4
      %v6684 = vor.u32 %v6683, %v6679
      %v6685 = vrot.slane %v6684, 4
      %v6687 = vshll.u32 %v6369, 16
      %v6689 = vrot.slane %v6687, 5
      %v6690 = vsel %vm1670, %v6685, %v6689
      %v6692 = vshrl.u32 %v6370, 16
      %v6694 = vrot.slane %v6692, 4
      %v6695 = vshll.u32 %v6370, 16
      %v6697 = vrot.slane %v6695, 5
      %v6698 = vor.u32 %v6694, %v6697
      %v6699 = vrot.slane %v6698, 4
      %v6701 = vshll.u32 %v6371, 16
      %v6703 = vrot.slane %v6701, 5
      %v6704 = vsel %vm1670, %v6699, %v6703
      %v6705 = vshrl.u32 %v6371, 16
      %v6707 = vrot.slane %v6705, 4
      %v6708 = vor.u32 %v6707, %v6703
      %v6709 = vrot.slane %v6708, 4
      %v6711 = vshll.u32 %v6372, 16
      %v6713 = vrot.slane %v6711, 5
      %v6714 = vsel %vm1670, %v6709, %v6713
      %v6716 = vshrl.u32 %v6373, 16
      %v6718 = vrot.slane %v6716, 4
      %v6719 = vshll.u32 %v6373, 16
      %v6721 = vrot.slane %v6719, 5
      %v6722 = vor.u32 %v6718, %v6721
      %v6723 = vrot.slane %v6722, 4
      %v6725 = vshll.u32 %v6374, 16
      %v6727 = vrot.slane %v6725, 5
      %v6728 = vsel %vm1670, %v6723, %v6727
      %v6729 = vshrl.u32 %v6374, 16
      %v6731 = vrot.slane %v6729, 4
      %v6732 = vor.u32 %v6731, %v6727
      %v6733 = vrot.slane %v6732, 4
      %v6735 = vshll.u32 %v6375, 16
      %v6737 = vrot.slane %v6735, 5
      %v6738 = vsel %vm1670, %v6733, %v6737
      %v6740 = vshrl.u32 %v6376, 16
      %v6742 = vrot.slane %v6740, 4
      %v6743 = vshll.u32 %v6376, 16
      %v6745 = vrot.slane %v6743, 5
      %v6746 = vor.u32 %v6742, %v6745
      %v6747 = vrot.slane %v6746, 4
      %v6749 = vshll.u32 %v6377, 16
      %v6751 = vrot.slane %v6749, 5
      %v6752 = vsel %vm1670, %v6747, %v6751
      %v6753 = vshrl.u32 %v6377, 16
      %v6755 = vrot.slane %v6753, 4
      %v6756 = vor.u32 %v6755, %v6751
      %v6757 = vrot.slane %v6756, 4
      %v6759 = vshll.u32 %v6378, 16
      %v6761 = vrot.slane %v6759, 5
      %v6762 = vsel %vm1670, %v6757, %v6761
      %6795 = vst [vmem:[#allocation5 + $0x8] sm:$0xf] %v6392
      %6796 = vst [vmem:[#allocation5 + $0x2c] sm:$0xf] %v6402
      %6797 = vst [vmem:[#allocation5 + $0x50] sm:$0xf] %v6416
      %6798 = vst [vmem:[#allocation5 + $0x74] sm:$0xf] %v6426
      %6799 = vst [vmem:[#allocation5 + $0x98] sm:$0xf] %v6440
      %6800 = vst [vmem:[#allocation5 + $0xbc] sm:$0xf] %v6450
      %6801 = vst [vmem:[#allocation5 + $0xe0] sm:$0xf] %v6464
      %6802 = vst [vmem:[#allocation5 + $0x104] sm:$0xf] %v6474
      %6803 = vst [vmem:[#allocation5 + $0x128] sm:$0xf] %v6488
      %6804 = vst [vmem:[#allocation5 + $0x14c] sm:$0xf] %v6498
      %6805 = vst [vmem:[#allocation5 + $0x170] sm:$0xf] %v6512
      %6806 = vst [vmem:[#allocation5 + $0x194] sm:$0xf] %v6522
      %6807 = vst [vmem:[#allocation5 + $0x1b8] sm:$0xf] %v6536
      %6808 = vst [vmem:[#allocation5 + $0x1dc] sm:$0xf] %v6546
      %6809 = vst [vmem:[#allocation5 + $0x200] sm:$0xf] %v6560
      %6810 = vst [vmem:[#allocation5 + $0x224] sm:$0xf] %v6570
      %6811 = vst [vmem:[#allocation5 + $0x248] sm:$0xf] %v6584
      %6812 = vst [vmem:[#allocation5 + $0x26c] sm:$0xf] %v6594
      %6813 = vst [vmem:[#allocation5 + $0x290] sm:$0xf] %v6608
      %6814 = vst [vmem:[#allocation5 + $0x2b4] sm:$0xf] %v6618
      %6815 = vst [vmem:[#allocation5 + $0x2d8] sm:$0xf] %v6632
      %6816 = vst [vmem:[#allocation5 + $0x2fc] sm:$0xf] %v6642
      %6817 = vst [vmem:[#allocation5 + $0x320] sm:$0xf] %v6656
      %6818 = vst [vmem:[#allocation5 + $0x344] sm:$0xf] %v6666
      %6819 = vst [vmem:[#allocation5 + $0x368] sm:$0xf] %v6680
      %6820 = vst [vmem:[#allocation5 + $0x38c] sm:$0xf] %v6690
      %6821 = vst [vmem:[#allocation5 + $0x3b0] sm:$0xf] %v6704
      %6822 = vst [vmem:[#allocation5 + $0x3d4] sm:$0xf] %v6714
      %6823 = vst [vmem:[#allocation5 + $0x3f8] sm:$0xf] %v6728
      %6824 = vst [vmem:[#allocation5 + $0x41c] sm:$0xf] %v6738
      %6825 = vst [vmem:[#allocation5 + $0x440] sm:$0xf] %v6752
      %6826 = vst [vmem:[#allocation5 + $0x464] sm:$0xf] %v6762
      %v6827 = vld [vmem:[%s5770] sm:$0x8]
      %v6828 = vld [vmem:[%s5770 + $0x4] sm:$0xf]
      %v6829 = vld [vmem:[%s5770 + $0x8] sm:$0xf]
      %v6830 = vld [vmem:[%s5770 + $0x10] sm:$0x8]
      %v6831 = vld [vmem:[%s5770 + $0x14] sm:$0xf]
      %v6832 = vld [vmem:[%s5770 + $0x18] sm:$0xf]
      %v6833 = vld [vmem:[%s5770 + $0x20] sm:$0x8]
      %v6834 = vld [vmem:[%s5770 + $0x24] sm:$0xf]
      %v6835 = vld [vmem:[%s5770 + $0x28] sm:$0xf]
      %v6836 = vld [vmem:[%s5770 + $0x30] sm:$0x8]
      %v6837 = vld [vmem:[%s5770 + $0x34] sm:$0xf]
      %v6838 = vld [vmem:[%s5770 + $0x38] sm:$0xf]
      %v6839 = vld [vmem:[%s5770 + $0x40] sm:$0x8]
      %v6840 = vld [vmem:[%s5770 + $0x44] sm:$0xf]
      %v6841 = vld [vmem:[%s5770 + $0x48] sm:$0xf]
      %v6842 = vld [vmem:[%s5770 + $0x50] sm:$0x8]
      %v6843 = vld [vmem:[%s5770 + $0x54] sm:$0xf]
      %v6844 = vld [vmem:[%s5770 + $0x58] sm:$0xf]
      %v6845 = vld [vmem:[%s5770 + $0x60] sm:$0x8]
      %v6846 = vld [vmem:[%s5770 + $0x64] sm:$0xf]
      %v6847 = vld [vmem:[%s5770 + $0x68] sm:$0xf]
      %v6848 = vld [vmem:[%s5770 + $0x70] sm:$0x8]
      %v6849 = vld [vmem:[%s5770 + $0x74] sm:$0xf]
      %v6850 = vld [vmem:[%s5770 + $0x78] sm:$0xf]
      %v6851 = vld [vmem:[%s5770 + $0x80] sm:$0x8]
      %v6852 = vld [vmem:[%s5770 + $0x84] sm:$0xf]
      %v6853 = vld [vmem:[%s5770 + $0x88] sm:$0xf]
      %v6854 = vld [vmem:[%s5770 + $0x90] sm:$0x8]
      %v6855 = vld [vmem:[%s5770 + $0x94] sm:$0xf]
      %v6856 = vld [vmem:[%s5770 + $0x98] sm:$0xf]
      %v6857 = vld [vmem:[%s5770 + $0xa0] sm:$0x8]
      %v6858 = vld [vmem:[%s5770 + $0xa4] sm:$0xf]
      %v6859 = vld [vmem:[%s5770 + $0xa8] sm:$0xf]
      %v6860 = vld [vmem:[%s5770 + $0xb0] sm:$0x8]
      %v6861 = vld [vmem:[%s5770 + $0xb4] sm:$0xf]
      %v6862 = vld [vmem:[%s5770 + $0xb8] sm:$0xf]
      %v6863 = vld [vmem:[%s5770 + $0xc0] sm:$0x8]
      %v6864 = vld [vmem:[%s5770 + $0xc4] sm:$0xf]
      %v6865 = vld [vmem:[%s5770 + $0xc8] sm:$0xf]
      %v6866 = vld [vmem:[%s5770 + $0xd0] sm:$0x8]
      %v6867 = vld [vmem:[%s5770 + $0xd4] sm:$0xf]
      %v6868 = vld [vmem:[%s5770 + $0xd8] sm:$0xf]
      %v6869 = vld [vmem:[%s5770 + $0xe0] sm:$0x8]
      %v6870 = vld [vmem:[%s5770 + $0xe4] sm:$0xf]
      %v6871 = vld [vmem:[%s5770 + $0xe8] sm:$0xf]
      %v6872 = vld [vmem:[%s5770 + $0xf0] sm:$0x8]
      %v6873 = vld [vmem:[%s5770 + $0xf4] sm:$0xf]
      %v6874 = vld [vmem:[%s5770 + $0xf8] sm:$0xf]
      %v6876 = vshrl.u32 %v6827, 16
      %v6878 = vrot.slane %v6876, 7
      %v6879 = vrot.slane %v6878, 4
      %v6881 = vshrl.u32 %v6828, 16
      %v6883 = vrot.slane %v6881, 7
      %v6884 = vshll.u32 %v6828, 16
      %v6886 = vor.u32 %v6883, %v6884
      %v6887 = vsel %vm1010, %v6879, %v6886
      %v6888 = vrot.slane %v6883, 4
      %v6890 = vshrl.u32 %v6829, 16
      %v6892 = vrot.slane %v6890, 7
      %v6893 = vshll.u32 %v6829, 16
      %v6895 = vor.u32 %v6892, %v6893
      %v6896 = vsel %vm1010, %v6888, %v6895
      %v6898 = vshrl.u32 %v6830, 16
      %v6900 = vrot.slane %v6898, 7
      %v6901 = vrot.slane %v6900, 4
      %v6903 = vshrl.u32 %v6831, 16
      %v6905 = vrot.slane %v6903, 7
      %v6906 = vshll.u32 %v6831, 16
      %v6908 = vor.u32 %v6905, %v6906
      %v6909 = vsel %vm1010, %v6901, %v6908
      %v6910 = vrot.slane %v6905, 4
      %v6912 = vshrl.u32 %v6832, 16
      %v6914 = vrot.slane %v6912, 7
      %v6915 = vshll.u32 %v6832, 16
      %v6917 = vor.u32 %v6914, %v6915
      %v6918 = vsel %vm1010, %v6910, %v6917
      %v6920 = vshrl.u32 %v6833, 16
      %v6922 = vrot.slane %v6920, 7
      %v6923 = vrot.slane %v6922, 4
      %v6925 = vshrl.u32 %v6834, 16
      %v6927 = vrot.slane %v6925, 7
      %v6928 = vshll.u32 %v6834, 16
      %v6930 = vor.u32 %v6927, %v6928
      %v6931 = vsel %vm1010, %v6923, %v6930
      %v6932 = vrot.slane %v6927, 4
      %v6934 = vshrl.u32 %v6835, 16
      %v6936 = vrot.slane %v6934, 7
      %v6937 = vshll.u32 %v6835, 16
      %v6939 = vor.u32 %v6936, %v6937
      %v6940 = vsel %vm1010, %v6932, %v6939
      %v6942 = vshrl.u32 %v6836, 16
      %v6944 = vrot.slane %v6942, 7
      %v6945 = vrot.slane %v6944, 4
      %v6947 = vshrl.u32 %v6837, 16
      %v6949 = vrot.slane %v6947, 7
      %v6950 = vshll.u32 %v6837, 16
      %v6952 = vor.u32 %v6949, %v6950
      %v6953 = vsel %vm1010, %v6945, %v6952
      %v6954 = vrot.slane %v6949, 4
      %v6956 = vshrl.u32 %v6838, 16
      %v6958 = vrot.slane %v6956, 7
      %v6959 = vshll.u32 %v6838, 16
      %v6961 = vor.u32 %v6958, %v6959
      %v6962 = vsel %vm1010, %v6954, %v6961
      %v6964 = vshrl.u32 %v6839, 16
      %v6966 = vrot.slane %v6964, 7
      %v6967 = vrot.slane %v6966, 4
      %v6969 = vshrl.u32 %v6840, 16
      %v6971 = vrot.slane %v6969, 7
      %v6972 = vshll.u32 %v6840, 16
      %v6974 = vor.u32 %v6971, %v6972
      %v6975 = vsel %vm1010, %v6967, %v6974
      %v6976 = vrot.slane %v6971, 4
      %v6978 = vshrl.u32 %v6841, 16
      %v6980 = vrot.slane %v6978, 7
      %v6981 = vshll.u32 %v6841, 16
      %v6983 = vor.u32 %v6980, %v6981
      %v6984 = vsel %vm1010, %v6976, %v6983
      %v6986 = vshrl.u32 %v6842, 16
      %v6988 = vrot.slane %v6986, 7
      %v6989 = vrot.slane %v6988, 4
      %v6991 = vshrl.u32 %v6843, 16
      %v6993 = vrot.slane %v6991, 7
      %v6994 = vshll.u32 %v6843, 16
      %v6996 = vor.u32 %v6993, %v6994
      %v6997 = vsel %vm1010, %v6989, %v6996
      %v6998 = vrot.slane %v6993, 4
      %v7000 = vshrl.u32 %v6844, 16
      %v7002 = vrot.slane %v7000, 7
      %v7003 = vshll.u32 %v6844, 16
      %v7005 = vor.u32 %v7002, %v7003
      %v7006 = vsel %vm1010, %v6998, %v7005
      %v7008 = vshrl.u32 %v6845, 16
      %v7010 = vrot.slane %v7008, 7
      %v7011 = vrot.slane %v7010, 4
      %v7013 = vshrl.u32 %v6846, 16
      %v7015 = vrot.slane %v7013, 7
      %v7016 = vshll.u32 %v6846, 16
      %v7018 = vor.u32 %v7015, %v7016
      %v7019 = vsel %vm1010, %v7011, %v7018
      %v7020 = vrot.slane %v7015, 4
      %v7022 = vshrl.u32 %v6847, 16
      %v7024 = vrot.slane %v7022, 7
      %v7025 = vshll.u32 %v6847, 16
      %v7027 = vor.u32 %v7024, %v7025
      %v7028 = vsel %vm1010, %v7020, %v7027
      %v7030 = vshrl.u32 %v6848, 16
      %v7032 = vrot.slane %v7030, 7
      %v7033 = vrot.slane %v7032, 4
      %v7035 = vshrl.u32 %v6849, 16
      %v7037 = vrot.slane %v7035, 7
      %v7038 = vshll.u32 %v6849, 16
      %v7040 = vor.u32 %v7037, %v7038
      %v7041 = vsel %vm1010, %v7033, %v7040
      %v7042 = vrot.slane %v7037, 4
      %v7044 = vshrl.u32 %v6850, 16
      %v7046 = vrot.slane %v7044, 7
      %v7047 = vshll.u32 %v6850, 16
      %v7049 = vor.u32 %v7046, %v7047
      %v7050 = vsel %vm1010, %v7042, %v7049
      %v7052 = vshrl.u32 %v6851, 16
      %v7054 = vrot.slane %v7052, 7
      %v7055 = vrot.slane %v7054, 4
      %v7057 = vshrl.u32 %v6852, 16
      %v7059 = vrot.slane %v7057, 7
      %v7060 = vshll.u32 %v6852, 16
      %v7062 = vor.u32 %v7059, %v7060
      %v7063 = vsel %vm1010, %v7055, %v7062
      %v7064 = vrot.slane %v7059, 4
      %v7066 = vshrl.u32 %v6853, 16
      %v7068 = vrot.slane %v7066, 7
      %v7069 = vshll.u32 %v6853, 16
      %v7071 = vor.u32 %v7068, %v7069
      %v7072 = vsel %vm1010, %v7064, %v7071
      %v7074 = vshrl.u32 %v6854, 16
      %v7076 = vrot.slane %v7074, 7
      %v7077 = vrot.slane %v7076, 4
      %v7079 = vshrl.u32 %v6855, 16
      %v7081 = vrot.slane %v7079, 7
      %v7082 = vshll.u32 %v6855, 16
      %v7084 = vor.u32 %v7081, %v7082
      %v7085 = vsel %vm1010, %v7077, %v7084
      %v7086 = vrot.slane %v7081, 4
      %v7088 = vshrl.u32 %v6856, 16
      %v7090 = vrot.slane %v7088, 7
      %v7091 = vshll.u32 %v6856, 16
      %v7093 = vor.u32 %v7090, %v7091
      %v7094 = vsel %vm1010, %v7086, %v7093
      %v7096 = vshrl.u32 %v6857, 16
      %v7098 = vrot.slane %v7096, 7
      %v7099 = vrot.slane %v7098, 4
      %v7101 = vshrl.u32 %v6858, 16
      %v7103 = vrot.slane %v7101, 7
      %v7104 = vshll.u32 %v6858, 16
      %v7106 = vor.u32 %v7103, %v7104
      %v7107 = vsel %vm1010, %v7099, %v7106
      %v7108 = vrot.slane %v7103, 4
      %v7110 = vshrl.u32 %v6859, 16
      %v7112 = vrot.slane %v7110, 7
      %v7113 = vshll.u32 %v6859, 16
      %v7115 = vor.u32 %v7112, %v7113
      %v7116 = vsel %vm1010, %v7108, %v7115
      %v7118 = vshrl.u32 %v6860, 16
      %v7120 = vrot.slane %v7118, 7
      %v7121 = vrot.slane %v7120, 4
      %v7123 = vshrl.u32 %v6861, 16
      %v7125 = vrot.slane %v7123, 7
      %v7126 = vshll.u32 %v6861, 16
      %v7128 = vor.u32 %v7125, %v7126
      %v7129 = vsel %vm1010, %v7121, %v7128
      %v7130 = vrot.slane %v7125, 4
      %v7132 = vshrl.u32 %v6862, 16
      %v7134 = vrot.slane %v7132, 7
      %v7135 = vshll.u32 %v6862, 16
      %v7137 = vor.u32 %v7134, %v7135
      %v7138 = vsel %vm1010, %v7130, %v7137
      %v7140 = vshrl.u32 %v6863, 16
      %v7142 = vrot.slane %v7140, 7
      %v7143 = vrot.slane %v7142, 4
      %v7145 = vshrl.u32 %v6864, 16
      %v7147 = vrot.slane %v7145, 7
      %v7148 = vshll.u32 %v6864, 16
      %v7150 = vor.u32 %v7147, %v7148
      %v7151 = vsel %vm1010, %v7143, %v7150
      %v7152 = vrot.slane %v7147, 4
      %v7154 = vshrl.u32 %v6865, 16
      %v7156 = vrot.slane %v7154, 7
      %v7157 = vshll.u32 %v6865, 16
      %v7159 = vor.u32 %v7156, %v7157
      %v7160 = vsel %vm1010, %v7152, %v7159
      %v7162 = vshrl.u32 %v6866, 16
      %v7164 = vrot.slane %v7162, 7
      %v7165 = vrot.slane %v7164, 4
      %v7167 = vshrl.u32 %v6867, 16
      %v7169 = vrot.slane %v7167, 7
      %v7170 = vshll.u32 %v6867, 16
      %v7172 = vor.u32 %v7169, %v7170
      %v7173 = vsel %vm1010, %v7165, %v7172
      %v7174 = vrot.slane %v7169, 4
      %v7176 = vshrl.u32 %v6868, 16
      %v7178 = vrot.slane %v7176, 7
      %v7179 = vshll.u32 %v6868, 16
      %v7181 = vor.u32 %v7178, %v7179
      %v7182 = vsel %vm1010, %v7174, %v7181
      %v7184 = vshrl.u32 %v6869, 16
      %v7186 = vrot.slane %v7184, 7
      %v7187 = vrot.slane %v7186, 4
      %v7189 = vshrl.u32 %v6870, 16
      %v7191 = vrot.slane %v7189, 7
      %v7192 = vshll.u32 %v6870, 16
      %v7194 = vor.u32 %v7191, %v7192
      %v7195 = vsel %vm1010, %v7187, %v7194
      %v7196 = vrot.slane %v7191, 4
      %v7198 = vshrl.u32 %v6871, 16
      %v7200 = vrot.slane %v7198, 7
      %v7201 = vshll.u32 %v6871, 16
      %v7203 = vor.u32 %v7200, %v7201
      %v7204 = vsel %vm1010, %v7196, %v7203
      %v7206 = vshrl.u32 %v6872, 16
      %v7208 = vrot.slane %v7206, 7
      %v7209 = vrot.slane %v7208, 4
      %v7211 = vshrl.u32 %v6873, 16
      %v7213 = vrot.slane %v7211, 7
      %v7214 = vshll.u32 %v6873, 16
      %v7216 = vor.u32 %v7213, %v7214
      %v7217 = vsel %vm1010, %v7209, %v7216
      %v7218 = vrot.slane %v7213, 4
      %v7220 = vshrl.u32 %v6874, 16
      %v7222 = vrot.slane %v7220, 7
      %v7223 = vshll.u32 %v6874, 16
      %v7225 = vor.u32 %v7222, %v7223
      %v7226 = vsel %vm1010, %v7218, %v7225
      %7259 = vst [vmem:[#allocation5 + $0xc] sm:$0xf] %v6887
      %7260 = vst [vmem:[#allocation5 + $0x30] sm:$0xf] %v6896
      %7261 = vst [vmem:[#allocation5 + $0x54] sm:$0xf] %v6909
      %7262 = vst [vmem:[#allocation5 + $0x78] sm:$0xf] %v6918
      %7263 = vst [vmem:[#allocation5 + $0x9c] sm:$0xf] %v6931
      %7264 = vst [vmem:[#allocation5 + $0xc0] sm:$0xf] %v6940
      %7265 = vst [vmem:[#allocation5 + $0xe4] sm:$0xf] %v6953
      %7266 = vst [vmem:[#allocation5 + $0x108] sm:$0xf] %v6962
      %7267 = vst [vmem:[#allocation5 + $0x12c] sm:$0xf] %v6975
      %7268 = vst [vmem:[#allocation5 + $0x150] sm:$0xf] %v6984
      %7269 = vst [vmem:[#allocation5 + $0x174] sm:$0xf] %v6997
      %7270 = vst [vmem:[#allocation5 + $0x198] sm:$0xf] %v7006
      %7271 = vst [vmem:[#allocation5 + $0x1bc] sm:$0xf] %v7019
      %7272 = vst [vmem:[#allocation5 + $0x1e0] sm:$0xf] %v7028
      %7273 = vst [vmem:[#allocation5 + $0x204] sm:$0xf] %v7041
      %7274 = vst [vmem:[#allocation5 + $0x228] sm:$0xf] %v7050
      %7275 = vst [vmem:[#allocation5 + $0x24c] sm:$0xf] %v7063
      %7276 = vst [vmem:[#allocation5 + $0x270] sm:$0xf] %v7072
      %7277 = vst [vmem:[#allocation5 + $0x294] sm:$0xf] %v7085
      %7278 = vst [vmem:[#allocation5 + $0x2b8] sm:$0xf] %v7094
      %7279 = vst [vmem:[#allocation5 + $0x2dc] sm:$0xf] %v7107
      %7280 = vst [vmem:[#allocation5 + $0x300] sm:$0xf] %v7116
      %7281 = vst [vmem:[#allocation5 + $0x324] sm:$0xf] %v7129
      %7282 = vst [vmem:[#allocation5 + $0x348] sm:$0xf] %v7138
      %7283 = vst [vmem:[#allocation5 + $0x36c] sm:$0xf] %v7151
      %7284 = vst [vmem:[#allocation5 + $0x390] sm:$0xf] %v7160
      %7285 = vst [vmem:[#allocation5 + $0x3b4] sm:$0xf] %v7173
      %7286 = vst [vmem:[#allocation5 + $0x3d8] sm:$0xf] %v7182
      %7287 = vst [vmem:[#allocation5 + $0x3fc] sm:$0xf] %v7195
      %7288 = vst [vmem:[#allocation5 + $0x420] sm:$0xf] %v7204
      %7289 = vst [vmem:[#allocation5 + $0x444] sm:$0xf] %v7217
      %7290 = vst [vmem:[#allocation5 + $0x468] sm:$0xf] %v7226
      %v7291 = vld [vmem:[%s5770 + $0x4] sm:$0xf]
      %v7292 = vld [vmem:[%s5770 + $0x8] sm:$0xf]
      %v7293 = vld [vmem:[%s5770 + $0x14] sm:$0xf]
      %v7294 = vld [vmem:[%s5770 + $0x18] sm:$0xf]
      %v7295 = vld [vmem:[%s5770 + $0x24] sm:$0xf]
      %v7296 = vld [vmem:[%s5770 + $0x28] sm:$0xf]
      %v7297 = vld [vmem:[%s5770 + $0x34] sm:$0xf]
      %v7298 = vld [vmem:[%s5770 + $0x38] sm:$0xf]
      %v7299 = vld [vmem:[%s5770 + $0x44] sm:$0xf]
      %v7300 = vld [vmem:[%s5770 + $0x48] sm:$0xf]
      %v7301 = vld [vmem:[%s5770 + $0x54] sm:$0xf]
      %v7302 = vld [vmem:[%s5770 + $0x58] sm:$0xf]
      %v7303 = vld [vmem:[%s5770 + $0x64] sm:$0xf]
      %v7304 = vld [vmem:[%s5770 + $0x68] sm:$0xf]
      %v7305 = vld [vmem:[%s5770 + $0x74] sm:$0xf]
      %v7306 = vld [vmem:[%s5770 + $0x78] sm:$0xf]
      %v7307 = vld [vmem:[%s5770 + $0x84] sm:$0xf]
      %v7308 = vld [vmem:[%s5770 + $0x88] sm:$0xf]
      %v7309 = vld [vmem:[%s5770 + $0x94] sm:$0xf]
      %v7310 = vld [vmem:[%s5770 + $0x98] sm:$0xf]
      %v7311 = vld [vmem:[%s5770 + $0xa4] sm:$0xf]
      %v7312 = vld [vmem:[%s5770 + $0xa8] sm:$0xf]
      %v7313 = vld [vmem:[%s5770 + $0xb4] sm:$0xf]
      %v7314 = vld [vmem:[%s5770 + $0xb8] sm:$0xf]
      %v7315 = vld [vmem:[%s5770 + $0xc4] sm:$0xf]
      %v7316 = vld [vmem:[%s5770 + $0xc8] sm:$0xf]
      %v7317 = vld [vmem:[%s5770 + $0xd4] sm:$0xf]
      %v7318 = vld [vmem:[%s5770 + $0xd8] sm:$0xf]
      %v7319 = vld [vmem:[%s5770 + $0xe4] sm:$0xf]
      %v7320 = vld [vmem:[%s5770 + $0xe8] sm:$0xf]
      %v7321 = vld [vmem:[%s5770 + $0xf4] sm:$0xf]
      %v7322 = vld [vmem:[%s5770 + $0xf8] sm:$0xf]
      %7323 = vst [vmem:[#allocation5 + $0x10] sm:$0xf] %v7291
      %7324 = vst [vmem:[#allocation5 + $0x34] sm:$0xf] %v7292
      %7325 = vst [vmem:[#allocation5 + $0x58] sm:$0xf] %v7293
      %7326 = vst [vmem:[#allocation5 + $0x7c] sm:$0xf] %v7294
      %7327 = vst [vmem:[#allocation5 + $0xa0] sm:$0xf] %v7295
      %7328 = vst [vmem:[#allocation5 + $0xc4] sm:$0xf] %v7296
      %7329 = vst [vmem:[#allocation5 + $0xe8] sm:$0xf] %v7297
      %7330 = vst [vmem:[#allocation5 + $0x10c] sm:$0xf] %v7298
      %7331 = vst [vmem:[#allocation5 + $0x130] sm:$0xf] %v7299
      %7332 = vst [vmem:[#allocation5 + $0x154] sm:$0xf] %v7300
      %7333 = vst [vmem:[#allocation5 + $0x178] sm:$0xf] %v7301
      %7334 = vst [vmem:[#allocation5 + $0x19c] sm:$0xf] %v7302
      %7335 = vst [vmem:[#allocation5 + $0x1c0] sm:$0xf] %v7303
      %7336 = vst [vmem:[#allocation5 + $0x1e4] sm:$0xf] %v7304
      %7337 = vst [vmem:[#allocation5 + $0x208] sm:$0xf] %v7305
      %7338 = vst [vmem:[#allocation5 + $0x22c] sm:$0xf] %v7306
      %7339 = vst [vmem:[#allocation5 + $0x250] sm:$0xf] %v7307
      %7340 = vst [vmem:[#allocation5 + $0x274] sm:$0xf] %v7308
      %7341 = vst [vmem:[#allocation5 + $0x298] sm:$0xf] %v7309
      %7342 = vst [vmem:[#allocation5 + $0x2bc] sm:$0xf] %v7310
      %7343 = vst [vmem:[#allocation5 + $0x2e0] sm:$0xf] %v7311
      %7344 = vst [vmem:[#allocation5 + $0x304] sm:$0xf] %v7312
      %7345 = vst [vmem:[#allocation5 + $0x328] sm:$0xf] %v7313
      %7346 = vst [vmem:[#allocation5 + $0x34c] sm:$0xf] %v7314
      %7347 = vst [vmem:[#allocation5 + $0x370] sm:$0xf] %v7315
      %7348 = vst [vmem:[#allocation5 + $0x394] sm:$0xf] %v7316
      %7349 = vst [vmem:[#allocation5 + $0x3b8] sm:$0xf] %v7317
      %7350 = vst [vmem:[#allocation5 + $0x3dc] sm:$0xf] %v7318
      %7351 = vst [vmem:[#allocation5 + $0x400] sm:$0xf] %v7319
      %7352 = vst [vmem:[#allocation5 + $0x424] sm:$0xf] %v7320
      %7353 = vst [vmem:[#allocation5 + $0x448] sm:$0xf] %v7321
      %7354 = vst [vmem:[#allocation5 + $0x46c] sm:$0xf] %v7322
      %v7355 = vld [vmem:[%s5770 + $0x4] sm:$0xf]
      %v7356 = vld [vmem:[%s5770 + $0x8] sm:$0xf]
      %v7357 = vld [vmem:[%s5770 + $0xc] sm:$0x1]
      %v7358 = vld [vmem:[%s5770 + $0x14] sm:$0xf]
      %v7359 = vld [vmem:[%s5770 + $0x18] sm:$0xf]
      %v7360 = vld [vmem:[%s5770 + $0x1c] sm:$0x1]
      %v7361 = vld [vmem:[%s5770 + $0x24] sm:$0xf]
      %v7362 = vld [vmem:[%s5770 + $0x28] sm:$0xf]
      %v7363 = vld [vmem:[%s5770 + $0x2c] sm:$0x1]
      %v7364 = vld [vmem:[%s5770 + $0x34] sm:$0xf]
      %v7365 = vld [vmem:[%s5770 + $0x38] sm:$0xf]
      %v7366 = vld [vmem:[%s5770 + $0x3c] sm:$0x1]
      %v7367 = vld [vmem:[%s5770 + $0x44] sm:$0xf]
      %v7368 = vld [vmem:[%s5770 + $0x48] sm:$0xf]
      %v7369 = vld [vmem:[%s5770 + $0x4c] sm:$0x1]
      %v7370 = vld [vmem:[%s5770 + $0x54] sm:$0xf]
      %v7371 = vld [vmem:[%s5770 + $0x58] sm:$0xf]
      %v7372 = vld [vmem:[%s5770 + $0x5c] sm:$0x1]
      %v7373 = vld [vmem:[%s5770 + $0x64] sm:$0xf]
      %v7374 = vld [vmem:[%s5770 + $0x68] sm:$0xf]
      %v7375 = vld [vmem:[%s5770 + $0x6c] sm:$0x1]
      %v7376 = vld [vmem:[%s5770 + $0x74] sm:$0xf]
      %v7377 = vld [vmem:[%s5770 + $0x78] sm:$0xf]
      %v7378 = vld [vmem:[%s5770 + $0x7c] sm:$0x1]
      %v7379 = vld [vmem:[%s5770 + $0x84] sm:$0xf]
      %v7380 = vld [vmem:[%s5770 + $0x88] sm:$0xf]
      %v7381 = vld [vmem:[%s5770 + $0x8c] sm:$0x1]
      %v7382 = vld [vmem:[%s5770 + $0x94] sm:$0xf]
      %v7383 = vld [vmem:[%s5770 + $0x98] sm:$0xf]
      %v7384 = vld [vmem:[%s5770 + $0x9c] sm:$0x1]
      %v7385 = vld [vmem:[%s5770 + $0xa4] sm:$0xf]
      %v7386 = vld [vmem:[%s5770 + $0xa8] sm:$0xf]
      %v7387 = vld [vmem:[%s5770 + $0xac] sm:$0x1]
      %v7388 = vld [vmem:[%s5770 + $0xb4] sm:$0xf]
      %v7389 = vld [vmem:[%s5770 + $0xb8] sm:$0xf]
      %v7390 = vld [vmem:[%s5770 + $0xbc] sm:$0x1]
      %v7391 = vld [vmem:[%s5770 + $0xc4] sm:$0xf]
      %v7392 = vld [vmem:[%s5770 + $0xc8] sm:$0xf]
      %v7393 = vld [vmem:[%s5770 + $0xcc] sm:$0x1]
      %v7394 = vld [vmem:[%s5770 + $0xd4] sm:$0xf]
      %v7395 = vld [vmem:[%s5770 + $0xd8] sm:$0xf]
      %v7396 = vld [vmem:[%s5770 + $0xdc] sm:$0x1]
      %v7397 = vld [vmem:[%s5770 + $0xe4] sm:$0xf]
      %v7398 = vld [vmem:[%s5770 + $0xe8] sm:$0xf]
      %v7399 = vld [vmem:[%s5770 + $0xec] sm:$0x1]
      %v7400 = vld [vmem:[%s5770 + $0xf4] sm:$0xf]
      %v7401 = vld [vmem:[%s5770 + $0xf8] sm:$0xf]
      %v7402 = vld [vmem:[%s5770 + $0xfc] sm:$0x1]
      %v7404 = vshrl.u32 %v7355, 16
      %v7406 = vrot.slane %v7404, 4
      %v7407 = vshll.u32 %v7355, 16
      %v7409 = vrot.slane %v7407, 5
      %v7410 = vor.u32 %v7406, %v7409
      %v7411 = vrot.slane %v7410, 4
      %v7413 = vshll.u32 %v7356, 16
      %v7415 = vrot.slane %v7413, 5
      %v7416 = vsel %vm1670, %v7411, %v7415
      %v7417 = vshrl.u32 %v7356, 16
      %v7419 = vrot.slane %v7417, 4
      %v7420 = vor.u32 %v7419, %v7415
      %v7421 = vrot.slane %v7420, 4
      %v7423 = vshll.u32 %v7357, 16
      %v7425 = vrot.slane %v7423, 5
      %v7426 = vsel %vm1670, %v7421, %v7425
      %v7428 = vshrl.u32 %v7358, 16
      %v7430 = vrot.slane %v7428, 4
      %v7431 = vshll.u32 %v7358, 16
      %v7433 = vrot.slane %v7431, 5
      %v7434 = vor.u32 %v7430, %v7433
      %v7435 = vrot.slane %v7434, 4
      %v7437 = vshll.u32 %v7359, 16
      %v7439 = vrot.slane %v7437, 5
      %v7440 = vsel %vm1670, %v7435, %v7439
      %v7441 = vshrl.u32 %v7359, 16
      %v7443 = vrot.slane %v7441, 4
      %v7444 = vor.u32 %v7443, %v7439
      %v7445 = vrot.slane %v7444, 4
      %v7447 = vshll.u32 %v7360, 16
      %v7449 = vrot.slane %v7447, 5
      %v7450 = vsel %vm1670, %v7445, %v7449
      %v7452 = vshrl.u32 %v7361, 16
      %v7454 = vrot.slane %v7452, 4
      %v7455 = vshll.u32 %v7361, 16
      %v7457 = vrot.slane %v7455, 5
      %v7458 = vor.u32 %v7454, %v7457
      %v7459 = vrot.slane %v7458, 4
      %v7461 = vshll.u32 %v7362, 16
      %v7463 = vrot.slane %v7461, 5
      %v7464 = vsel %vm1670, %v7459, %v7463
      %v7465 = vshrl.u32 %v7362, 16
      %v7467 = vrot.slane %v7465, 4
      %v7468 = vor.u32 %v7467, %v7463
      %v7469 = vrot.slane %v7468, 4
      %v7471 = vshll.u32 %v7363, 16
      %v7473 = vrot.slane %v7471, 5
      %v7474 = vsel %vm1670, %v7469, %v7473
      %v7476 = vshrl.u32 %v7364, 16
      %v7478 = vrot.slane %v7476, 4
      %v7479 = vshll.u32 %v7364, 16
      %v7481 = vrot.slane %v7479, 5
      %v7482 = vor.u32 %v7478, %v7481
      %v7483 = vrot.slane %v7482, 4
      %v7485 = vshll.u32 %v7365, 16
      %v7487 = vrot.slane %v7485, 5
      %v7488 = vsel %vm1670, %v7483, %v7487
      %v7489 = vshrl.u32 %v7365, 16
      %v7491 = vrot.slane %v7489, 4
      %v7492 = vor.u32 %v7491, %v7487
      %v7493 = vrot.slane %v7492, 4
      %v7495 = vshll.u32 %v7366, 16
      %v7497 = vrot.slane %v7495, 5
      %v7498 = vsel %vm1670, %v7493, %v7497
      %v7500 = vshrl.u32 %v7367, 16
      %v7502 = vrot.slane %v7500, 4
      %v7503 = vshll.u32 %v7367, 16
      %v7505 = vrot.slane %v7503, 5
      %v7506 = vor.u32 %v7502, %v7505
      %v7507 = vrot.slane %v7506, 4
      %v7509 = vshll.u32 %v7368, 16
      %v7511 = vrot.slane %v7509, 5
      %v7512 = vsel %vm1670, %v7507, %v7511
      %v7513 = vshrl.u32 %v7368, 16
      %v7515 = vrot.slane %v7513, 4
      %v7516 = vor.u32 %v7515, %v7511
      %v7517 = vrot.slane %v7516, 4
      %v7519 = vshll.u32 %v7369, 16
      %v7521 = vrot.slane %v7519, 5
      %v7522 = vsel %vm1670, %v7517, %v7521
      %v7524 = vshrl.u32 %v7370, 16
      %v7526 = vrot.slane %v7524, 4
      %v7527 = vshll.u32 %v7370, 16
      %v7529 = vrot.slane %v7527, 5
      %v7530 = vor.u32 %v7526, %v7529
      %v7531 = vrot.slane %v7530, 4
      %v7533 = vshll.u32 %v7371, 16
      %v7535 = vrot.slane %v7533, 5
      %v7536 = vsel %vm1670, %v7531, %v7535
      %v7537 = vshrl.u32 %v7371, 16
      %v7539 = vrot.slane %v7537, 4
      %v7540 = vor.u32 %v7539, %v7535
      %v7541 = vrot.slane %v7540, 4
      %v7543 = vshll.u32 %v7372, 16
      %v7545 = vrot.slane %v7543, 5
      %v7546 = vsel %vm1670, %v7541, %v7545
      %v7548 = vshrl.u32 %v7373, 16
      %v7550 = vrot.slane %v7548, 4
      %v7551 = vshll.u32 %v7373, 16
      %v7553 = vrot.slane %v7551, 5
      %v7554 = vor.u32 %v7550, %v7553
      %v7555 = vrot.slane %v7554, 4
      %v7557 = vshll.u32 %v7374, 16
      %v7559 = vrot.slane %v7557, 5
      %v7560 = vsel %vm1670, %v7555, %v7559
      %v7561 = vshrl.u32 %v7374, 16
      %v7563 = vrot.slane %v7561, 4
      %v7564 = vor.u32 %v7563, %v7559
      %v7565 = vrot.slane %v7564, 4
      %v7567 = vshll.u32 %v7375, 16
      %v7569 = vrot.slane %v7567, 5
      %v7570 = vsel %vm1670, %v7565, %v7569
      %v7572 = vshrl.u32 %v7376, 16
      %v7574 = vrot.slane %v7572, 4
      %v7575 = vshll.u32 %v7376, 16
      %v7577 = vrot.slane %v7575, 5
      %v7578 = vor.u32 %v7574, %v7577
      %v7579 = vrot.slane %v7578, 4
      %v7581 = vshll.u32 %v7377, 16
      %v7583 = vrot.slane %v7581, 5
      %v7584 = vsel %vm1670, %v7579, %v7583
      %v7585 = vshrl.u32 %v7377, 16
      %v7587 = vrot.slane %v7585, 4
      %v7588 = vor.u32 %v7587, %v7583
      %v7589 = vrot.slane %v7588, 4
      %v7591 = vshll.u32 %v7378, 16
      %v7593 = vrot.slane %v7591, 5
      %v7594 = vsel %vm1670, %v7589, %v7593
      %v7596 = vshrl.u32 %v7379, 16
      %v7598 = vrot.slane %v7596, 4
      %v7599 = vshll.u32 %v7379, 16
      %v7601 = vrot.slane %v7599, 5
      %v7602 = vor.u32 %v7598, %v7601
      %v7603 = vrot.slane %v7602, 4
      %v7605 = vshll.u32 %v7380, 16
      %v7607 = vrot.slane %v7605, 5
      %v7608 = vsel %vm1670, %v7603, %v7607
      %v7609 = vshrl.u32 %v7380, 16
      %v7611 = vrot.slane %v7609, 4
      %v7612 = vor.u32 %v7611, %v7607
      %v7613 = vrot.slane %v7612, 4
      %v7615 = vshll.u32 %v7381, 16
      %v7617 = vrot.slane %v7615, 5
      %v7618 = vsel %vm1670, %v7613, %v7617
      %v7620 = vshrl.u32 %v7382, 16
      %v7622 = vrot.slane %v7620, 4
      %v7623 = vshll.u32 %v7382, 16
      %v7625 = vrot.slane %v7623, 5
      %v7626 = vor.u32 %v7622, %v7625
      %v7627 = vrot.slane %v7626, 4
      %v7629 = vshll.u32 %v7383, 16
      %v7631 = vrot.slane %v7629, 5
      %v7632 = vsel %vm1670, %v7627, %v7631
      %v7633 = vshrl.u32 %v7383, 16
      %v7635 = vrot.slane %v7633, 4
      %v7636 = vor.u32 %v7635, %v7631
      %v7637 = vrot.slane %v7636, 4
      %v7639 = vshll.u32 %v7384, 16
      %v7641 = vrot.slane %v7639, 5
      %v7642 = vsel %vm1670, %v7637, %v7641
      %v7644 = vshrl.u32 %v7385, 16
      %v7646 = vrot.slane %v7644, 4
      %v7647 = vshll.u32 %v7385, 16
      %v7649 = vrot.slane %v7647, 5
      %v7650 = vor.u32 %v7646, %v7649
      %v7651 = vrot.slane %v7650, 4
      %v7653 = vshll.u32 %v7386, 16
      %v7655 = vrot.slane %v7653, 5
      %v7656 = vsel %vm1670, %v7651, %v7655
      %v7657 = vshrl.u32 %v7386, 16
      %v7659 = vrot.slane %v7657, 4
      %v7660 = vor.u32 %v7659, %v7655
      %v7661 = vrot.slane %v7660, 4
      %v7663 = vshll.u32 %v7387, 16
      %v7665 = vrot.slane %v7663, 5
      %v7666 = vsel %vm1670, %v7661, %v7665
      %v7668 = vshrl.u32 %v7388, 16
      %v7670 = vrot.slane %v7668, 4
      %v7671 = vshll.u32 %v7388, 16
      %v7673 = vrot.slane %v7671, 5
      %v7674 = vor.u32 %v7670, %v7673
      %v7675 = vrot.slane %v7674, 4
      %v7677 = vshll.u32 %v7389, 16
      %v7679 = vrot.slane %v7677, 5
      %v7680 = vsel %vm1670, %v7675, %v7679
      %v7681 = vshrl.u32 %v7389, 16
      %v7683 = vrot.slane %v7681, 4
      %v7684 = vor.u32 %v7683, %v7679
      %v7685 = vrot.slane %v7684, 4
      %v7687 = vshll.u32 %v7390, 16
      %v7689 = vrot.slane %v7687, 5
      %v7690 = vsel %vm1670, %v7685, %v7689
      %v7692 = vshrl.u32 %v7391, 16
      %v7694 = vrot.slane %v7692, 4
      %v7695 = vshll.u32 %v7391, 16
      %v7697 = vrot.slane %v7695, 5
      %v7698 = vor.u32 %v7694, %v7697
      %v7699 = vrot.slane %v7698, 4
      %v7701 = vshll.u32 %v7392, 16
      %v7703 = vrot.slane %v7701, 5
      %v7704 = vsel %vm1670, %v7699, %v7703
      %v7705 = vshrl.u32 %v7392, 16
      %v7707 = vrot.slane %v7705, 4
      %v7708 = vor.u32 %v7707, %v7703
      %v7709 = vrot.slane %v7708, 4
      %v7711 = vshll.u32 %v7393, 16
      %v7713 = vrot.slane %v7711, 5
      %v7714 = vsel %vm1670, %v7709, %v7713
      %v7716 = vshrl.u32 %v7394, 16
      %v7718 = vrot.slane %v7716, 4
      %v7719 = vshll.u32 %v7394, 16
      %v7721 = vrot.slane %v7719, 5
      %v7722 = vor.u32 %v7718, %v7721
      %v7723 = vrot.slane %v7722, 4
      %v7725 = vshll.u32 %v7395, 16
      %v7727 = vrot.slane %v7725, 5
      %v7728 = vsel %vm1670, %v7723, %v7727
      %v7729 = vshrl.u32 %v7395, 16
      %v7731 = vrot.slane %v7729, 4
      %v7732 = vor.u32 %v7731, %v7727
      %v7733 = vrot.slane %v7732, 4
      %v7735 = vshll.u32 %v7396, 16
      %v7737 = vrot.slane %v7735, 5
      %v7738 = vsel %vm1670, %v7733, %v7737
      %v7740 = vshrl.u32 %v7397, 16
      %v7742 = vrot.slane %v7740, 4
      %v7743 = vshll.u32 %v7397, 16
      %v7745 = vrot.slane %v7743, 5
      %v7746 = vor.u32 %v7742, %v7745
      %v7747 = vrot.slane %v7746, 4
      %v7749 = vshll.u32 %v7398, 16
      %v7751 = vrot.slane %v7749, 5
      %v7752 = vsel %vm1670, %v7747, %v7751
      %v7753 = vshrl.u32 %v7398, 16
      %v7755 = vrot.slane %v7753, 4
      %v7756 = vor.u32 %v7755, %v7751
      %v7757 = vrot.slane %v7756, 4
      %v7759 = vshll.u32 %v7399, 16
      %v7761 = vrot.slane %v7759, 5
      %v7762 = vsel %vm1670, %v7757, %v7761
      %v7764 = vshrl.u32 %v7400, 16
      %v7766 = vrot.slane %v7764, 4
      %v7767 = vshll.u32 %v7400, 16
      %v7769 = vrot.slane %v7767, 5
      %v7770 = vor.u32 %v7766, %v7769
      %v7771 = vrot.slane %v7770, 4
      %v7773 = vshll.u32 %v7401, 16
      %v7775 = vrot.slane %v7773, 5
      %v7776 = vsel %vm1670, %v7771, %v7775
      %v7777 = vshrl.u32 %v7401, 16
      %v7779 = vrot.slane %v7777, 4
      %v7780 = vor.u32 %v7779, %v7775
      %v7781 = vrot.slane %v7780, 4
      %v7783 = vshll.u32 %v7402, 16
      %v7785 = vrot.slane %v7783, 5
      %v7786 = vsel %vm1670, %v7781, %v7785
      %7819 = vst [vmem:[#allocation5 + $0x14] sm:$0xf] %v7416
      %7820 = vst [vmem:[#allocation5 + $0x38] sm:$0xf] %v7426
      %7821 = vst [vmem:[#allocation5 + $0x5c] sm:$0xf] %v7440
      %7822 = vst [vmem:[#allocation5 + $0x80] sm:$0xf] %v7450
      %7823 = vst [vmem:[#allocation5 + $0xa4] sm:$0xf] %v7464
      %7824 = vst [vmem:[#allocation5 + $0xc8] sm:$0xf] %v7474
      %7825 = vst [vmem:[#allocation5 + $0xec] sm:$0xf] %v7488
      %7826 = vst [vmem:[#allocation5 + $0x110] sm:$0xf] %v7498
      %7827 = vst [vmem:[#allocation5 + $0x134] sm:$0xf] %v7512
      %7828 = vst [vmem:[#allocation5 + $0x158] sm:$0xf] %v7522
      %7829 = vst [vmem:[#allocation5 + $0x17c] sm:$0xf] %v7536
      %7830 = vst [vmem:[#allocation5 + $0x1a0] sm:$0xf] %v7546
      %7831 = vst [vmem:[#allocation5 + $0x1c4] sm:$0xf] %v7560
      %7832 = vst [vmem:[#allocation5 + $0x1e8] sm:$0xf] %v7570
      %7833 = vst [vmem:[#allocation5 + $0x20c] sm:$0xf] %v7584
      %7834 = vst [vmem:[#allocation5 + $0x230] sm:$0xf] %v7594
      %7835 = vst [vmem:[#allocation5 + $0x254] sm:$0xf] %v7608
      %7836 = vst [vmem:[#allocation5 + $0x278] sm:$0xf] %v7618
      %7837 = vst [vmem:[#allocation5 + $0x29c] sm:$0xf] %v7632
      %7838 = vst [vmem:[#allocation5 + $0x2c0] sm:$0xf] %v7642
      %7839 = vst [vmem:[#allocation5 + $0x2e4] sm:$0xf] %v7656
      %7840 = vst [vmem:[#allocation5 + $0x308] sm:$0xf] %v7666
      %7841 = vst [vmem:[#allocation5 + $0x32c] sm:$0xf] %v7680
      %7842 = vst [vmem:[#allocation5 + $0x350] sm:$0xf] %v7690
      %7843 = vst [vmem:[#allocation5 + $0x374] sm:$0xf] %v7704
      %7844 = vst [vmem:[#allocation5 + $0x398] sm:$0xf] %v7714
      %7845 = vst [vmem:[#allocation5 + $0x3bc] sm:$0xf] %v7728
      %7846 = vst [vmem:[#allocation5 + $0x3e0] sm:$0xf] %v7738
      %7847 = vst [vmem:[#allocation5 + $0x404] sm:$0xf] %v7752
      %7848 = vst [vmem:[#allocation5 + $0x428] sm:$0xf] %v7762
      %7849 = vst [vmem:[#allocation5 + $0x44c] sm:$0xf] %v7776
      %7850 = vst [vmem:[#allocation5 + $0x470] sm:$0xf] %v7786
      %s7851 = scalar_lea.vmem [#allocation3], 32
      %v7852 = vld [vmem:[%s7851] sm:$0x8]
      %v7853 = vld [vmem:[%s7851 + $0x4] sm:$0xf]
      %v7854 = vld [vmem:[%s7851 + $0x8] sm:$0xf]
      %v7855 = vld [vmem:[%s7851 + $0x10] sm:$0x8]
      %v7856 = vld [vmem:[%s7851 + $0x14] sm:$0xf]
      %v7857 = vld [vmem:[%s7851 + $0x18] sm:$0xf]
      %v7858 = vld [vmem:[%s7851 + $0x20] sm:$0x8]
      %v7859 = vld [vmem:[%s7851 + $0x24] sm:$0xf]
      %v7860 = vld [vmem:[%s7851 + $0x28] sm:$0xf]
      %v7861 = vld [vmem:[%s7851 + $0x30] sm:$0x8]
      %v7862 = vld [vmem:[%s7851 + $0x34] sm:$0xf]
      %v7863 = vld [vmem:[%s7851 + $0x38] sm:$0xf]
      %v7864 = vld [vmem:[%s7851 + $0x40] sm:$0x8]
      %v7865 = vld [vmem:[%s7851 + $0x44] sm:$0xf]
      %v7866 = vld [vmem:[%s7851 + $0x48] sm:$0xf]
      %v7867 = vld [vmem:[%s7851 + $0x50] sm:$0x8]
      %v7868 = vld [vmem:[%s7851 + $0x54] sm:$0xf]
      %v7869 = vld [vmem:[%s7851 + $0x58] sm:$0xf]
      %v7870 = vld [vmem:[%s7851 + $0x60] sm:$0x8]
      %v7871 = vld [vmem:[%s7851 + $0x64] sm:$0xf]
      %v7872 = vld [vmem:[%s7851 + $0x68] sm:$0xf]
      %v7873 = vld [vmem:[%s7851 + $0x70] sm:$0x8]
      %v7874 = vld [vmem:[%s7851 + $0x74] sm:$0xf]
      %v7875 = vld [vmem:[%s7851 + $0x78] sm:$0xf]
      %v7876 = vld [vmem:[%s7851 + $0x80] sm:$0x8]
      %v7877 = vld [vmem:[%s7851 + $0x84] sm:$0xf]
      %v7878 = vld [vmem:[%s7851 + $0x88] sm:$0xf]
      %v7879 = vld [vmem:[%s7851 + $0x90] sm:$0x8]
      %v7880 = vld [vmem:[%s7851 + $0x94] sm:$0xf]
      %v7881 = vld [vmem:[%s7851 + $0x98] sm:$0xf]
      %v7882 = vld [vmem:[%s7851 + $0xa0] sm:$0x8]
      %v7883 = vld [vmem:[%s7851 + $0xa4] sm:$0xf]
      %v7884 = vld [vmem:[%s7851 + $0xa8] sm:$0xf]
      %v7885 = vld [vmem:[%s7851 + $0xb0] sm:$0x8]
      %v7886 = vld [vmem:[%s7851 + $0xb4] sm:$0xf]
      %v7887 = vld [vmem:[%s7851 + $0xb8] sm:$0xf]
      %v7888 = vld [vmem:[%s7851 + $0xc0] sm:$0x8]
      %v7889 = vld [vmem:[%s7851 + $0xc4] sm:$0xf]
      %v7890 = vld [vmem:[%s7851 + $0xc8] sm:$0xf]
      %v7891 = vld [vmem:[%s7851 + $0xd0] sm:$0x8]
      %v7892 = vld [vmem:[%s7851 + $0xd4] sm:$0xf]
      %v7893 = vld [vmem:[%s7851 + $0xd8] sm:$0xf]
      %v7894 = vld [vmem:[%s7851 + $0xe0] sm:$0x8]
      %v7895 = vld [vmem:[%s7851 + $0xe4] sm:$0xf]
      %v7896 = vld [vmem:[%s7851 + $0xe8] sm:$0xf]
      %v7897 = vld [vmem:[%s7851 + $0xf0] sm:$0x8]
      %v7898 = vld [vmem:[%s7851 + $0xf4] sm:$0xf]
      %v7899 = vld [vmem:[%s7851 + $0xf8] sm:$0xf]
      %v7901 = vshrl.u32 %v7852, 16
      %v7903 = vrot.slane %v7901, 7
      %v7904 = vrot.slane %v7903, 4
      %v7906 = vshrl.u32 %v7853, 16
      %v7908 = vrot.slane %v7906, 7
      %v7909 = vshll.u32 %v7853, 16
      %v7911 = vor.u32 %v7908, %v7909
      %v7912 = vsel %vm1010, %v7904, %v7911
      %v7913 = vrot.slane %v7908, 4
      %v7915 = vshrl.u32 %v7854, 16
      %v7917 = vrot.slane %v7915, 7
      %v7918 = vshll.u32 %v7854, 16
      %v7920 = vor.u32 %v7917, %v7918
      %v7921 = vsel %vm1010, %v7913, %v7920
      %v7923 = vshrl.u32 %v7855, 16
      %v7925 = vrot.slane %v7923, 7
      %v7926 = vrot.slane %v7925, 4
      %v7928 = vshrl.u32 %v7856, 16
      %v7930 = vrot.slane %v7928, 7
      %v7931 = vshll.u32 %v7856, 16
      %v7933 = vor.u32 %v7930, %v7931
      %v7934 = vsel %vm1010, %v7926, %v7933
      %v7935 = vrot.slane %v7930, 4
      %v7937 = vshrl.u32 %v7857, 16
      %v7939 = vrot.slane %v7937, 7
      %v7940 = vshll.u32 %v7857, 16
      %v7942 = vor.u32 %v7939, %v7940
      %v7943 = vsel %vm1010, %v7935, %v7942
      %v7945 = vshrl.u32 %v7858, 16
      %v7947 = vrot.slane %v7945, 7
      %v7948 = vrot.slane %v7947, 4
      %v7950 = vshrl.u32 %v7859, 16
      %v7952 = vrot.slane %v7950, 7
      %v7953 = vshll.u32 %v7859, 16
      %v7955 = vor.u32 %v7952, %v7953
      %v7956 = vsel %vm1010, %v7948, %v7955
      %v7957 = vrot.slane %v7952, 4
      %v7959 = vshrl.u32 %v7860, 16
      %v7961 = vrot.slane %v7959, 7
      %v7962 = vshll.u32 %v7860, 16
      %v7964 = vor.u32 %v7961, %v7962
      %v7965 = vsel %vm1010, %v7957, %v7964
      %v7967 = vshrl.u32 %v7861, 16
      %v7969 = vrot.slane %v7967, 7
      %v7970 = vrot.slane %v7969, 4
      %v7972 = vshrl.u32 %v7862, 16
      %v7974 = vrot.slane %v7972, 7
      %v7975 = vshll.u32 %v7862, 16
      %v7977 = vor.u32 %v7974, %v7975
      %v7978 = vsel %vm1010, %v7970, %v7977
      %v7979 = vrot.slane %v7974, 4
      %v7981 = vshrl.u32 %v7863, 16
      %v7983 = vrot.slane %v7981, 7
      %v7984 = vshll.u32 %v7863, 16
      %v7986 = vor.u32 %v7983, %v7984
      %v7987 = vsel %vm1010, %v7979, %v7986
      %v7989 = vshrl.u32 %v7864, 16
      %v7991 = vrot.slane %v7989, 7
      %v7992 = vrot.slane %v7991, 4
      %v7994 = vshrl.u32 %v7865, 16
      %v7996 = vrot.slane %v7994, 7
      %v7997 = vshll.u32 %v7865, 16
      %v7999 = vor.u32 %v7996, %v7997
      %v8000 = vsel %vm1010, %v7992, %v7999
      %v8001 = vrot.slane %v7996, 4
      %v8003 = vshrl.u32 %v7866, 16
      %v8005 = vrot.slane %v8003, 7
      %v8006 = vshll.u32 %v7866, 16
      %v8008 = vor.u32 %v8005, %v8006
      %v8009 = vsel %vm1010, %v8001, %v8008
      %v8011 = vshrl.u32 %v7867, 16
      %v8013 = vrot.slane %v8011, 7
      %v8014 = vrot.slane %v8013, 4
      %v8016 = vshrl.u32 %v7868, 16
      %v8018 = vrot.slane %v8016, 7
      %v8019 = vshll.u32 %v7868, 16
      %v8021 = vor.u32 %v8018, %v8019
      %v8022 = vsel %vm1010, %v8014, %v8021
      %v8023 = vrot.slane %v8018, 4
      %v8025 = vshrl.u32 %v7869, 16
      %v8027 = vrot.slane %v8025, 7
      %v8028 = vshll.u32 %v7869, 16
      %v8030 = vor.u32 %v8027, %v8028
      %v8031 = vsel %vm1010, %v8023, %v8030
      %v8033 = vshrl.u32 %v7870, 16
      %v8035 = vrot.slane %v8033, 7
      %v8036 = vrot.slane %v8035, 4
      %v8038 = vshrl.u32 %v7871, 16
      %v8040 = vrot.slane %v8038, 7
      %v8041 = vshll.u32 %v7871, 16
      %v8043 = vor.u32 %v8040, %v8041
      %v8044 = vsel %vm1010, %v8036, %v8043
      %v8045 = vrot.slane %v8040, 4
      %v8047 = vshrl.u32 %v7872, 16
      %v8049 = vrot.slane %v8047, 7
      %v8050 = vshll.u32 %v7872, 16
      %v8052 = vor.u32 %v8049, %v8050
      %v8053 = vsel %vm1010, %v8045, %v8052
      %v8055 = vshrl.u32 %v7873, 16
      %v8057 = vrot.slane %v8055, 7
      %v8058 = vrot.slane %v8057, 4
      %v8060 = vshrl.u32 %v7874, 16
      %v8062 = vrot.slane %v8060, 7
      %v8063 = vshll.u32 %v7874, 16
      %v8065 = vor.u32 %v8062, %v8063
      %v8066 = vsel %vm1010, %v8058, %v8065
      %v8067 = vrot.slane %v8062, 4
      %v8069 = vshrl.u32 %v7875, 16
      %v8071 = vrot.slane %v8069, 7
      %v8072 = vshll.u32 %v7875, 16
      %v8074 = vor.u32 %v8071, %v8072
      %v8075 = vsel %vm1010, %v8067, %v8074
      %v8077 = vshrl.u32 %v7876, 16
      %v8079 = vrot.slane %v8077, 7
      %v8080 = vrot.slane %v8079, 4
      %v8082 = vshrl.u32 %v7877, 16
      %v8084 = vrot.slane %v8082, 7
      %v8085 = vshll.u32 %v7877, 16
      %v8087 = vor.u32 %v8084, %v8085
      %v8088 = vsel %vm1010, %v8080, %v8087
      %v8089 = vrot.slane %v8084, 4
      %v8091 = vshrl.u32 %v7878, 16
      %v8093 = vrot.slane %v8091, 7
      %v8094 = vshll.u32 %v7878, 16
      %v8096 = vor.u32 %v8093, %v8094
      %v8097 = vsel %vm1010, %v8089, %v8096
      %v8099 = vshrl.u32 %v7879, 16
      %v8101 = vrot.slane %v8099, 7
      %v8102 = vrot.slane %v8101, 4
      %v8104 = vshrl.u32 %v7880, 16
      %v8106 = vrot.slane %v8104, 7
      %v8107 = vshll.u32 %v7880, 16
      %v8109 = vor.u32 %v8106, %v8107
      %v8110 = vsel %vm1010, %v8102, %v8109
      %v8111 = vrot.slane %v8106, 4
      %v8113 = vshrl.u32 %v7881, 16
      %v8115 = vrot.slane %v8113, 7
      %v8116 = vshll.u32 %v7881, 16
      %v8118 = vor.u32 %v8115, %v8116
      %v8119 = vsel %vm1010, %v8111, %v8118
      %v8121 = vshrl.u32 %v7882, 16
      %v8123 = vrot.slane %v8121, 7
      %v8124 = vrot.slane %v8123, 4
      %v8126 = vshrl.u32 %v7883, 16
      %v8128 = vrot.slane %v8126, 7
      %v8129 = vshll.u32 %v7883, 16
      %v8131 = vor.u32 %v8128, %v8129
      %v8132 = vsel %vm1010, %v8124, %v8131
      %v8133 = vrot.slane %v8128, 4
      %v8135 = vshrl.u32 %v7884, 16
      %v8137 = vrot.slane %v8135, 7
      %v8138 = vshll.u32 %v7884, 16
      %v8140 = vor.u32 %v8137, %v8138
      %v8141 = vsel %vm1010, %v8133, %v8140
      %v8143 = vshrl.u32 %v7885, 16
      %v8145 = vrot.slane %v8143, 7
      %v8146 = vrot.slane %v8145, 4
      %v8148 = vshrl.u32 %v7886, 16
      %v8150 = vrot.slane %v8148, 7
      %v8151 = vshll.u32 %v7886, 16
      %v8153 = vor.u32 %v8150, %v8151
      %v8154 = vsel %vm1010, %v8146, %v8153
      %v8155 = vrot.slane %v8150, 4
      %v8157 = vshrl.u32 %v7887, 16
      %v8159 = vrot.slane %v8157, 7
      %v8160 = vshll.u32 %v7887, 16
      %v8162 = vor.u32 %v8159, %v8160
      %v8163 = vsel %vm1010, %v8155, %v8162
      %v8165 = vshrl.u32 %v7888, 16
      %v8167 = vrot.slane %v8165, 7
      %v8168 = vrot.slane %v8167, 4
      %v8170 = vshrl.u32 %v7889, 16
      %v8172 = vrot.slane %v8170, 7
      %v8173 = vshll.u32 %v7889, 16
      %v8175 = vor.u32 %v8172, %v8173
      %v8176 = vsel %vm1010, %v8168, %v8175
      %v8177 = vrot.slane %v8172, 4
      %v8179 = vshrl.u32 %v7890, 16
      %v8181 = vrot.slane %v8179, 7
      %v8182 = vshll.u32 %v7890, 16
      %v8184 = vor.u32 %v8181, %v8182
      %v8185 = vsel %vm1010, %v8177, %v8184
      %v8187 = vshrl.u32 %v7891, 16
      %v8189 = vrot.slane %v8187, 7
      %v8190 = vrot.slane %v8189, 4
      %v8192 = vshrl.u32 %v7892, 16
      %v8194 = vrot.slane %v8192, 7
      %v8195 = vshll.u32 %v7892, 16
      %v8197 = vor.u32 %v8194, %v8195
      %v8198 = vsel %vm1010, %v8190, %v8197
      %v8199 = vrot.slane %v8194, 4
      %v8201 = vshrl.u32 %v7893, 16
      %v8203 = vrot.slane %v8201, 7
      %v8204 = vshll.u32 %v7893, 16
      %v8206 = vor.u32 %v8203, %v8204
      %v8207 = vsel %vm1010, %v8199, %v8206
      %v8209 = vshrl.u32 %v7894, 16
      %v8211 = vrot.slane %v8209, 7
      %v8212 = vrot.slane %v8211, 4
      %v8214 = vshrl.u32 %v7895, 16
      %v8216 = vrot.slane %v8214, 7
      %v8217 = vshll.u32 %v7895, 16
      %v8219 = vor.u32 %v8216, %v8217
      %v8220 = vsel %vm1010, %v8212, %v8219
      %v8221 = vrot.slane %v8216, 4
      %v8223 = vshrl.u32 %v7896, 16
      %v8225 = vrot.slane %v8223, 7
      %v8226 = vshll.u32 %v7896, 16
      %v8228 = vor.u32 %v8225, %v8226
      %v8229 = vsel %vm1010, %v8221, %v8228
      %v8231 = vshrl.u32 %v7897, 16
      %v8233 = vrot.slane %v8231, 7
      %v8234 = vrot.slane %v8233, 4
      %v8236 = vshrl.u32 %v7898, 16
      %v8238 = vrot.slane %v8236, 7
      %v8239 = vshll.u32 %v7898, 16
      %v8241 = vor.u32 %v8238, %v8239
      %v8242 = vsel %vm1010, %v8234, %v8241
      %v8243 = vrot.slane %v8238, 4
      %v8245 = vshrl.u32 %v7899, 16
      %v8247 = vrot.slane %v8245, 7
      %v8248 = vshll.u32 %v7899, 16
      %v8250 = vor.u32 %v8247, %v8248
      %v8251 = vsel %vm1010, %v8243, %v8250
      %8284 = vst [vmem:[#allocation5 + $0x18] sm:$0xf] %v7912
      %8285 = vst [vmem:[#allocation5 + $0x3c] sm:$0xf] %v7921
      %8286 = vst [vmem:[#allocation5 + $0x60] sm:$0xf] %v7934
      %8287 = vst [vmem:[#allocation5 + $0x84] sm:$0xf] %v7943
      %8288 = vst [vmem:[#allocation5 + $0xa8] sm:$0xf] %v7956
      %8289 = vst [vmem:[#allocation5 + $0xcc] sm:$0xf] %v7965
      %8290 = vst [vmem:[#allocation5 + $0xf0] sm:$0xf] %v7978
      %8291 = vst [vmem:[#allocation5 + $0x114] sm:$0xf] %v7987
      %8292 = vst [vmem:[#allocation5 + $0x138] sm:$0xf] %v8000
      %8293 = vst [vmem:[#allocation5 + $0x15c] sm:$0xf] %v8009
      %8294 = vst [vmem:[#allocation5 + $0x180] sm:$0xf] %v8022
      %8295 = vst [vmem:[#allocation5 + $0x1a4] sm:$0xf] %v8031
      %8296 = vst [vmem:[#allocation5 + $0x1c8] sm:$0xf] %v8044
      %8297 = vst [vmem:[#allocation5 + $0x1ec] sm:$0xf] %v8053
      %8298 = vst [vmem:[#allocation5 + $0x210] sm:$0xf] %v8066
      %8299 = vst [vmem:[#allocation5 + $0x234] sm:$0xf] %v8075
      %8300 = vst [vmem:[#allocation5 + $0x258] sm:$0xf] %v8088
      %8301 = vst [vmem:[#allocation5 + $0x27c] sm:$0xf] %v8097
      %8302 = vst [vmem:[#allocation5 + $0x2a0] sm:$0xf] %v8110
      %8303 = vst [vmem:[#allocation5 + $0x2c4] sm:$0xf] %v8119
      %8304 = vst [vmem:[#allocation5 + $0x2e8] sm:$0xf] %v8132
      %8305 = vst [vmem:[#allocation5 + $0x30c] sm:$0xf] %v8141
      %8306 = vst [vmem:[#allocation5 + $0x330] sm:$0xf] %v8154
      %8307 = vst [vmem:[#allocation5 + $0x354] sm:$0xf] %v8163
      %8308 = vst [vmem:[#allocation5 + $0x378] sm:$0xf] %v8176
      %8309 = vst [vmem:[#allocation5 + $0x39c] sm:$0xf] %v8185
      %8310 = vst [vmem:[#allocation5 + $0x3c0] sm:$0xf] %v8198
      %8311 = vst [vmem:[#allocation5 + $0x3e4] sm:$0xf] %v8207
      %8312 = vst [vmem:[#allocation5 + $0x408] sm:$0xf] %v8220
      %8313 = vst [vmem:[#allocation5 + $0x42c] sm:$0xf] %v8229
      %8314 = vst [vmem:[#allocation5 + $0x450] sm:$0xf] %v8242
      %8315 = vst [vmem:[#allocation5 + $0x474] sm:$0xf] %v8251
      %v8316 = vld [vmem:[%s7851 + $0x4] sm:$0xf]
      %v8317 = vld [vmem:[%s7851 + $0x8] sm:$0xf]
      %v8318 = vld [vmem:[%s7851 + $0x14] sm:$0xf]
      %v8319 = vld [vmem:[%s7851 + $0x18] sm:$0xf]
      %v8320 = vld [vmem:[%s7851 + $0x24] sm:$0xf]
      %v8321 = vld [vmem:[%s7851 + $0x28] sm:$0xf]
      %v8322 = vld [vmem:[%s7851 + $0x34] sm:$0xf]
      %v8323 = vld [vmem:[%s7851 + $0x38] sm:$0xf]
      %v8324 = vld [vmem:[%s7851 + $0x44] sm:$0xf]
      %v8325 = vld [vmem:[%s7851 + $0x48] sm:$0xf]
      %v8326 = vld [vmem:[%s7851 + $0x54] sm:$0xf]
      %v8327 = vld [vmem:[%s7851 + $0x58] sm:$0xf]
      %v8328 = vld [vmem:[%s7851 + $0x64] sm:$0xf]
      %v8329 = vld [vmem:[%s7851 + $0x68] sm:$0xf]
      %v8330 = vld [vmem:[%s7851 + $0x74] sm:$0xf]
      %v8331 = vld [vmem:[%s7851 + $0x78] sm:$0xf]
      %v8332 = vld [vmem:[%s7851 + $0x84] sm:$0xf]
      %v8333 = vld [vmem:[%s7851 + $0x88] sm:$0xf]
      %v8334 = vld [vmem:[%s7851 + $0x94] sm:$0xf]
      %v8335 = vld [vmem:[%s7851 + $0x98] sm:$0xf]
      %v8336 = vld [vmem:[%s7851 + $0xa4] sm:$0xf]
      %v8337 = vld [vmem:[%s7851 + $0xa8] sm:$0xf]
      %v8338 = vld [vmem:[%s7851 + $0xb4] sm:$0xf]
      %v8339 = vld [vmem:[%s7851 + $0xb8] sm:$0xf]
      %v8340 = vld [vmem:[%s7851 + $0xc4] sm:$0xf]
      %v8341 = vld [vmem:[%s7851 + $0xc8] sm:$0xf]
      %v8342 = vld [vmem:[%s7851 + $0xd4] sm:$0xf]
      %v8343 = vld [vmem:[%s7851 + $0xd8] sm:$0xf]
      %v8344 = vld [vmem:[%s7851 + $0xe4] sm:$0xf]
      %v8345 = vld [vmem:[%s7851 + $0xe8] sm:$0xf]
      %v8346 = vld [vmem:[%s7851 + $0xf4] sm:$0xf]
      %v8347 = vld [vmem:[%s7851 + $0xf8] sm:$0xf]
      %8348 = vst [vmem:[#allocation5 + $0x1c] sm:$0xf] %v8316
      %8349 = vst [vmem:[#allocation5 + $0x40] sm:$0xf] %v8317
      %8350 = vst [vmem:[#allocation5 + $0x64] sm:$0xf] %v8318
      %8351 = vst [vmem:[#allocation5 + $0x88] sm:$0xf] %v8319
      %8352 = vst [vmem:[#allocation5 + $0xac] sm:$0xf] %v8320
      %8353 = vst [vmem:[#allocation5 + $0xd0] sm:$0xf] %v8321
      %8354 = vst [vmem:[#allocation5 + $0xf4] sm:$0xf] %v8322
      %8355 = vst [vmem:[#allocation5 + $0x118] sm:$0xf] %v8323
      %8356 = vst [vmem:[#allocation5 + $0x13c] sm:$0xf] %v8324
      %8357 = vst [vmem:[#allocation5 + $0x160] sm:$0xf] %v8325
      %8358 = vst [vmem:[#allocation5 + $0x184] sm:$0xf] %v8326
      %8359 = vst [vmem:[#allocation5 + $0x1a8] sm:$0xf] %v8327
      %8360 = vst [vmem:[#allocation5 + $0x1cc] sm:$0xf] %v8328
      %8361 = vst [vmem:[#allocation5 + $0x1f0] sm:$0xf] %v8329
      %8362 = vst [vmem:[#allocation5 + $0x214] sm:$0xf] %v8330
      %8363 = vst [vmem:[#allocation5 + $0x238] sm:$0xf] %v8331
      %8364 = vst [vmem:[#allocation5 + $0x25c] sm:$0xf] %v8332
      %8365 = vst [vmem:[#allocation5 + $0x280] sm:$0xf] %v8333
      %8366 = vst [vmem:[#allocation5 + $0x2a4] sm:$0xf] %v8334
      %8367 = vst [vmem:[#allocation5 + $0x2c8] sm:$0xf] %v8335
      %8368 = vst [vmem:[#allocation5 + $0x2ec] sm:$0xf] %v8336
      %8369 = vst [vmem:[#allocation5 + $0x310] sm:$0xf] %v8337
      %8370 = vst [vmem:[#allocation5 + $0x334] sm:$0xf] %v8338
      %8371 = vst [vmem:[#allocation5 + $0x358] sm:$0xf] %v8339
      %8372 = vst [vmem:[#allocation5 + $0x37c] sm:$0xf] %v8340
      %8373 = vst [vmem:[#allocation5 + $0x3a0] sm:$0xf] %v8341
      %8374 = vst [vmem:[#allocation5 + $0x3c4] sm:$0xf] %v8342
      %8375 = vst [vmem:[#allocation5 + $0x3e8] sm:$0xf] %v8343
      %8376 = vst [vmem:[#allocation5 + $0x40c] sm:$0xf] %v8344
      %8377 = vst [vmem:[#allocation5 + $0x430] sm:$0xf] %v8345
      %8378 = vst [vmem:[#allocation5 + $0x454] sm:$0xf] %v8346
      %8379 = vst [vmem:[#allocation5 + $0x478] sm:$0xf] %v8347
      %v8380 = vld [vmem:[%s7851 + $0x4] sm:$0xf]
      %v8381 = vld [vmem:[%s7851 + $0x8] sm:$0xf]
      %v8382 = vld [vmem:[%s7851 + $0xc] sm:$0x1]
      %v8383 = vld [vmem:[%s7851 + $0x14] sm:$0xf]
      %v8384 = vld [vmem:[%s7851 + $0x18] sm:$0xf]
      %v8385 = vld [vmem:[%s7851 + $0x1c] sm:$0x1]
      %v8386 = vld [vmem:[%s7851 + $0x24] sm:$0xf]
      %v8387 = vld [vmem:[%s7851 + $0x28] sm:$0xf]
      %v8388 = vld [vmem:[%s7851 + $0x2c] sm:$0x1]
      %v8389 = vld [vmem:[%s7851 + $0x34] sm:$0xf]
      %v8390 = vld [vmem:[%s7851 + $0x38] sm:$0xf]
      %v8391 = vld [vmem:[%s7851 + $0x3c] sm:$0x1]
      %v8392 = vld [vmem:[%s7851 + $0x44] sm:$0xf]
      %v8393 = vld [vmem:[%s7851 + $0x48] sm:$0xf]
      %v8394 = vld [vmem:[%s7851 + $0x4c] sm:$0x1]
      %v8395 = vld [vmem:[%s7851 + $0x54] sm:$0xf]
      %v8396 = vld [vmem:[%s7851 + $0x58] sm:$0xf]
      %v8397 = vld [vmem:[%s7851 + $0x5c] sm:$0x1]
      %v8398 = vld [vmem:[%s7851 + $0x64] sm:$0xf]
      %v8399 = vld [vmem:[%s7851 + $0x68] sm:$0xf]
      %v8400 = vld [vmem:[%s7851 + $0x6c] sm:$0x1]
      %v8401 = vld [vmem:[%s7851 + $0x74] sm:$0xf]
      %v8402 = vld [vmem:[%s7851 + $0x78] sm:$0xf]
      %v8403 = vld [vmem:[%s7851 + $0x7c] sm:$0x1]
      %v8404 = vld [vmem:[%s7851 + $0x84] sm:$0xf]
      %v8405 = vld [vmem:[%s7851 + $0x88] sm:$0xf]
      %v8406 = vld [vmem:[%s7851 + $0x8c] sm:$0x1]
      %v8407 = vld [vmem:[%s7851 + $0x94] sm:$0xf]
      %v8408 = vld [vmem:[%s7851 + $0x98] sm:$0xf]
      %v8409 = vld [vmem:[%s7851 + $0x9c] sm:$0x1]
      %v8410 = vld [vmem:[%s7851 + $0xa4] sm:$0xf]
      %v8411 = vld [vmem:[%s7851 + $0xa8] sm:$0xf]
      %v8412 = vld [vmem:[%s7851 + $0xac] sm:$0x1]
      %v8413 = vld [vmem:[%s7851 + $0xb4] sm:$0xf]
      %v8414 = vld [vmem:[%s7851 + $0xb8] sm:$0xf]
      %v8415 = vld [vmem:[%s7851 + $0xbc] sm:$0x1]
      %v8416 = vld [vmem:[%s7851 + $0xc4] sm:$0xf]
      %v8417 = vld [vmem:[%s7851 + $0xc8] sm:$0xf]
      %v8418 = vld [vmem:[%s7851 + $0xcc] sm:$0x1]
      %v8419 = vld [vmem:[%s7851 + $0xd4] sm:$0xf]
      %v8420 = vld [vmem:[%s7851 + $0xd8] sm:$0xf]
      %v8421 = vld [vmem:[%s7851 + $0xdc] sm:$0x1]
      %v8422 = vld [vmem:[%s7851 + $0xe4] sm:$0xf]
      %v8423 = vld [vmem:[%s7851 + $0xe8] sm:$0xf]
      %v8424 = vld [vmem:[%s7851 + $0xec] sm:$0x1]
      %v8425 = vld [vmem:[%s7851 + $0xf4] sm:$0xf]
      %v8426 = vld [vmem:[%s7851 + $0xf8] sm:$0xf]
      %v8427 = vld [vmem:[%s7851 + $0xfc] sm:$0x1]
      %v8429 = vshrl.u32 %v8380, 16
      %v8431 = vrot.slane %v8429, 4
      %v8432 = vshll.u32 %v8380, 16
      %v8434 = vrot.slane %v8432, 5
      %v8435 = vor.u32 %v8431, %v8434
      %v8436 = vrot.slane %v8435, 4
      %v8438 = vshll.u32 %v8381, 16
      %v8440 = vrot.slane %v8438, 5
      %v8441 = vsel %vm1670, %v8436, %v8440
      %v8442 = vshrl.u32 %v8381, 16
      %v8444 = vrot.slane %v8442, 4
      %v8445 = vor.u32 %v8444, %v8440
      %v8446 = vrot.slane %v8445, 4
      %v8448 = vshll.u32 %v8382, 16
      %v8450 = vrot.slane %v8448, 5
      %v8451 = vsel %vm1670, %v8446, %v8450
      %v8453 = vshrl.u32 %v8383, 16
      %v8455 = vrot.slane %v8453, 4
      %v8456 = vshll.u32 %v8383, 16
      %v8458 = vrot.slane %v8456, 5
      %v8459 = vor.u32 %v8455, %v8458
      %v8460 = vrot.slane %v8459, 4
      %v8462 = vshll.u32 %v8384, 16
      %v8464 = vrot.slane %v8462, 5
      %v8465 = vsel %vm1670, %v8460, %v8464
      %v8466 = vshrl.u32 %v8384, 16
      %v8468 = vrot.slane %v8466, 4
      %v8469 = vor.u32 %v8468, %v8464
      %v8470 = vrot.slane %v8469, 4
      %v8472 = vshll.u32 %v8385, 16
      %v8474 = vrot.slane %v8472, 5
      %v8475 = vsel %vm1670, %v8470, %v8474
      %v8477 = vshrl.u32 %v8386, 16
      %v8479 = vrot.slane %v8477, 4
      %v8480 = vshll.u32 %v8386, 16
      %v8482 = vrot.slane %v8480, 5
      %v8483 = vor.u32 %v8479, %v8482
      %v8484 = vrot.slane %v8483, 4
      %v8486 = vshll.u32 %v8387, 16
      %v8488 = vrot.slane %v8486, 5
      %v8489 = vsel %vm1670, %v8484, %v8488
      %v8490 = vshrl.u32 %v8387, 16
      %v8492 = vrot.slane %v8490, 4
      %v8493 = vor.u32 %v8492, %v8488
      %v8494 = vrot.slane %v8493, 4
      %v8496 = vshll.u32 %v8388, 16
      %v8498 = vrot.slane %v8496, 5
      %v8499 = vsel %vm1670, %v8494, %v8498
      %v8501 = vshrl.u32 %v8389, 16
      %v8503 = vrot.slane %v8501, 4
      %v8504 = vshll.u32 %v8389, 16
      %v8506 = vrot.slane %v8504, 5
      %v8507 = vor.u32 %v8503, %v8506
      %v8508 = vrot.slane %v8507, 4
      %v8510 = vshll.u32 %v8390, 16
      %v8512 = vrot.slane %v8510, 5
      %v8513 = vsel %vm1670, %v8508, %v8512
      %v8514 = vshrl.u32 %v8390, 16
      %v8516 = vrot.slane %v8514, 4
      %v8517 = vor.u32 %v8516, %v8512
      %v8518 = vrot.slane %v8517, 4
      %v8520 = vshll.u32 %v8391, 16
      %v8522 = vrot.slane %v8520, 5
      %v8523 = vsel %vm1670, %v8518, %v8522
      %v8525 = vshrl.u32 %v8392, 16
      %v8527 = vrot.slane %v8525, 4
      %v8528 = vshll.u32 %v8392, 16
      %v8530 = vrot.slane %v8528, 5
      %v8531 = vor.u32 %v8527, %v8530
      %v8532 = vrot.slane %v8531, 4
      %v8534 = vshll.u32 %v8393, 16
      %v8536 = vrot.slane %v8534, 5
      %v8537 = vsel %vm1670, %v8532, %v8536
      %v8538 = vshrl.u32 %v8393, 16
      %v8540 = vrot.slane %v8538, 4
      %v8541 = vor.u32 %v8540, %v8536
      %v8542 = vrot.slane %v8541, 4
      %v8544 = vshll.u32 %v8394, 16
      %v8546 = vrot.slane %v8544, 5
      %v8547 = vsel %vm1670, %v8542, %v8546
      %v8549 = vshrl.u32 %v8395, 16
      %v8551 = vrot.slane %v8549, 4
      %v8552 = vshll.u32 %v8395, 16
      %v8554 = vrot.slane %v8552, 5
      %v8555 = vor.u32 %v8551, %v8554
      %v8556 = vrot.slane %v8555, 4
      %v8558 = vshll.u32 %v8396, 16
      %v8560 = vrot.slane %v8558, 5
      %v8561 = vsel %vm1670, %v8556, %v8560
      %v8562 = vshrl.u32 %v8396, 16
      %v8564 = vrot.slane %v8562, 4
      %v8565 = vor.u32 %v8564, %v8560
      %v8566 = vrot.slane %v8565, 4
      %v8568 = vshll.u32 %v8397, 16
      %v8570 = vrot.slane %v8568, 5
      %v8571 = vsel %vm1670, %v8566, %v8570
      %v8573 = vshrl.u32 %v8398, 16
      %v8575 = vrot.slane %v8573, 4
      %v8576 = vshll.u32 %v8398, 16
      %v8578 = vrot.slane %v8576, 5
      %v8579 = vor.u32 %v8575, %v8578
      %v8580 = vrot.slane %v8579, 4
      %v8582 = vshll.u32 %v8399, 16
      %v8584 = vrot.slane %v8582, 5
      %v8585 = vsel %vm1670, %v8580, %v8584
      %v8586 = vshrl.u32 %v8399, 16
      %v8588 = vrot.slane %v8586, 4
      %v8589 = vor.u32 %v8588, %v8584
      %v8590 = vrot.slane %v8589, 4
      %v8592 = vshll.u32 %v8400, 16
      %v8594 = vrot.slane %v8592, 5
      %v8595 = vsel %vm1670, %v8590, %v8594
      %v8597 = vshrl.u32 %v8401, 16
      %v8599 = vrot.slane %v8597, 4
      %v8600 = vshll.u32 %v8401, 16
      %v8602 = vrot.slane %v8600, 5
      %v8603 = vor.u32 %v8599, %v8602
      %v8604 = vrot.slane %v8603, 4
      %v8606 = vshll.u32 %v8402, 16
      %v8608 = vrot.slane %v8606, 5
      %v8609 = vsel %vm1670, %v8604, %v8608
      %v8610 = vshrl.u32 %v8402, 16
      %v8612 = vrot.slane %v8610, 4
      %v8613 = vor.u32 %v8612, %v8608
      %v8614 = vrot.slane %v8613, 4
      %v8616 = vshll.u32 %v8403, 16
      %v8618 = vrot.slane %v8616, 5
      %v8619 = vsel %vm1670, %v8614, %v8618
      %v8621 = vshrl.u32 %v8404, 16
      %v8623 = vrot.slane %v8621, 4
      %v8624 = vshll.u32 %v8404, 16
      %v8626 = vrot.slane %v8624, 5
      %v8627 = vor.u32 %v8623, %v8626
      %v8628 = vrot.slane %v8627, 4
      %v8630 = vshll.u32 %v8405, 16
      %v8632 = vrot.slane %v8630, 5
      %v8633 = vsel %vm1670, %v8628, %v8632
      %v8634 = vshrl.u32 %v8405, 16
      %v8636 = vrot.slane %v8634, 4
      %v8637 = vor.u32 %v8636, %v8632
      %v8638 = vrot.slane %v8637, 4
      %v8640 = vshll.u32 %v8406, 16
      %v8642 = vrot.slane %v8640, 5
      %v8643 = vsel %vm1670, %v8638, %v8642
      %v8645 = vshrl.u32 %v8407, 16
      %v8647 = vrot.slane %v8645, 4
      %v8648 = vshll.u32 %v8407, 16
      %v8650 = vrot.slane %v8648, 5
      %v8651 = vor.u32 %v8647, %v8650
      %v8652 = vrot.slane %v8651, 4
      %v8654 = vshll.u32 %v8408, 16
      %v8656 = vrot.slane %v8654, 5
      %v8657 = vsel %vm1670, %v8652, %v8656
      %v8658 = vshrl.u32 %v8408, 16
      %v8660 = vrot.slane %v8658, 4
      %v8661 = vor.u32 %v8660, %v8656
      %v8662 = vrot.slane %v8661, 4
      %v8664 = vshll.u32 %v8409, 16
      %v8666 = vrot.slane %v8664, 5
      %v8667 = vsel %vm1670, %v8662, %v8666
      %v8669 = vshrl.u32 %v8410, 16
      %v8671 = vrot.slane %v8669, 4
      %v8672 = vshll.u32 %v8410, 16
      %v8674 = vrot.slane %v8672, 5
      %v8675 = vor.u32 %v8671, %v8674
      %v8676 = vrot.slane %v8675, 4
      %v8678 = vshll.u32 %v8411, 16
      %v8680 = vrot.slane %v8678, 5
      %v8681 = vsel %vm1670, %v8676, %v8680
      %v8682 = vshrl.u32 %v8411, 16
      %v8684 = vrot.slane %v8682, 4
      %v8685 = vor.u32 %v8684, %v8680
      %v8686 = vrot.slane %v8685, 4
      %v8688 = vshll.u32 %v8412, 16
      %v8690 = vrot.slane %v8688, 5
      %v8691 = vsel %vm1670, %v8686, %v8690
      %v8693 = vshrl.u32 %v8413, 16
      %v8695 = vrot.slane %v8693, 4
      %v8696 = vshll.u32 %v8413, 16
      %v8698 = vrot.slane %v8696, 5
      %v8699 = vor.u32 %v8695, %v8698
      %v8700 = vrot.slane %v8699, 4
      %v8702 = vshll.u32 %v8414, 16
      %v8704 = vrot.slane %v8702, 5
      %v8705 = vsel %vm1670, %v8700, %v8704
      %v8706 = vshrl.u32 %v8414, 16
      %v8708 = vrot.slane %v8706, 4
      %v8709 = vor.u32 %v8708, %v8704
      %v8710 = vrot.slane %v8709, 4
      %v8712 = vshll.u32 %v8415, 16
      %v8714 = vrot.slane %v8712, 5
      %v8715 = vsel %vm1670, %v8710, %v8714
      %v8717 = vshrl.u32 %v8416, 16
      %v8719 = vrot.slane %v8717, 4
      %v8720 = vshll.u32 %v8416, 16
      %v8722 = vrot.slane %v8720, 5
      %v8723 = vor.u32 %v8719, %v8722
      %v8724 = vrot.slane %v8723, 4
      %v8726 = vshll.u32 %v8417, 16
      %v8728 = vrot.slane %v8726, 5
      %v8729 = vsel %vm1670, %v8724, %v8728
      %v8730 = vshrl.u32 %v8417, 16
      %v8732 = vrot.slane %v8730, 4
      %v8733 = vor.u32 %v8732, %v8728
      %v8734 = vrot.slane %v8733, 4
      %v8736 = vshll.u32 %v8418, 16
      %v8738 = vrot.slane %v8736, 5
      %v8739 = vsel %vm1670, %v8734, %v8738
      %v8741 = vshrl.u32 %v8419, 16
      %v8743 = vrot.slane %v8741, 4
      %v8744 = vshll.u32 %v8419, 16
      %v8746 = vrot.slane %v8744, 5
      %v8747 = vor.u32 %v8743, %v8746
      %v8748 = vrot.slane %v8747, 4
      %v8750 = vshll.u32 %v8420, 16
      %v8752 = vrot.slane %v8750, 5
      %v8753 = vsel %vm1670, %v8748, %v8752
      %v8754 = vshrl.u32 %v8420, 16
      %v8756 = vrot.slane %v8754, 4
      %v8757 = vor.u32 %v8756, %v8752
      %v8758 = vrot.slane %v8757, 4
      %v8760 = vshll.u32 %v8421, 16
      %v8762 = vrot.slane %v8760, 5
      %v8763 = vsel %vm1670, %v8758, %v8762
      %v8765 = vshrl.u32 %v8422, 16
      %v8767 = vrot.slane %v8765, 4
      %v8768 = vshll.u32 %v8422, 16
      %v8770 = vrot.slane %v8768, 5
      %v8771 = vor.u32 %v8767, %v8770
      %v8772 = vrot.slane %v8771, 4
      %v8774 = vshll.u32 %v8423, 16
      %v8776 = vrot.slane %v8774, 5
      %v8777 = vsel %vm1670, %v8772, %v8776
      %v8778 = vshrl.u32 %v8423, 16
      %v8780 = vrot.slane %v8778, 4
      %v8781 = vor.u32 %v8780, %v8776
      %v8782 = vrot.slane %v8781, 4
      %v8784 = vshll.u32 %v8424, 16
      %v8786 = vrot.slane %v8784, 5
      %v8787 = vsel %vm1670, %v8782, %v8786
      %v8789 = vshrl.u32 %v8425, 16
      %v8791 = vrot.slane %v8789, 4
      %v8792 = vshll.u32 %v8425, 16
      %v8794 = vrot.slane %v8792, 5
      %v8795 = vor.u32 %v8791, %v8794
      %v8796 = vrot.slane %v8795, 4
      %v8798 = vshll.u32 %v8426, 16
      %v8800 = vrot.slane %v8798, 5
      %v8801 = vsel %vm1670, %v8796, %v8800
      %v8802 = vshrl.u32 %v8426, 16
      %v8804 = vrot.slane %v8802, 4
      %v8805 = vor.u32 %v8804, %v8800
      %v8806 = vrot.slane %v8805, 4
      %v8808 = vshll.u32 %v8427, 16
      %v8810 = vrot.slane %v8808, 5
      %v8811 = vsel %vm1670, %v8806, %v8810
      %8844 = vst [vmem:[#allocation5 + $0x20] sm:$0xf] %v8441
      %8845 = vst [vmem:[#allocation5 + $0x44] sm:$0xf] %v8451
      %8846 = vst [vmem:[#allocation5 + $0x68] sm:$0xf] %v8465
      %8847 = vst [vmem:[#allocation5 + $0x8c] sm:$0xf] %v8475
      %8848 = vst [vmem:[#allocation5 + $0xb0] sm:$0xf] %v8489
      %8849 = vst [vmem:[#allocation5 + $0xd4] sm:$0xf] %v8499
      %8850 = vst [vmem:[#allocation5 + $0xf8] sm:$0xf] %v8513
      %8851 = vst [vmem:[#allocation5 + $0x11c] sm:$0xf] %v8523
      %8852 = vst [vmem:[#allocation5 + $0x140] sm:$0xf] %v8537
      %8853 = vst [vmem:[#allocation5 + $0x164] sm:$0xf] %v8547
      %8854 = vst [vmem:[#allocation5 + $0x188] sm:$0xf] %v8561
      %8855 = vst [vmem:[#allocation5 + $0x1ac] sm:$0xf] %v8571
      %8856 = vst [vmem:[#allocation5 + $0x1d0] sm:$0xf] %v8585
      %8857 = vst [vmem:[#allocation5 + $0x1f4] sm:$0xf] %v8595
      %8858 = vst [vmem:[#allocation5 + $0x218] sm:$0xf] %v8609
      %8859 = vst [vmem:[#allocation5 + $0x23c] sm:$0xf] %v8619
      %8860 = vst [vmem:[#allocation5 + $0x260] sm:$0xf] %v8633
      %8861 = vst [vmem:[#allocation5 + $0x284] sm:$0xf] %v8643
      %8862 = vst [vmem:[#allocation5 + $0x2a8] sm:$0xf] %v8657
      %8863 = vst [vmem:[#allocation5 + $0x2cc] sm:$0xf] %v8667
      %8864 = vst [vmem:[#allocation5 + $0x2f0] sm:$0xf] %v8681
      %8865 = vst [vmem:[#allocation5 + $0x314] sm:$0xf] %v8691
      %8866 = vst [vmem:[#allocation5 + $0x338] sm:$0xf] %v8705
      %8867 = vst [vmem:[#allocation5 + $0x35c] sm:$0xf] %v8715
      %8868 = vst [vmem:[#allocation5 + $0x380] sm:$0xf] %v8729
      %8869 = vst [vmem:[#allocation5 + $0x3a4] sm:$0xf] %v8739
      %8870 = vst [vmem:[#allocation5 + $0x3c8] sm:$0xf] %v8753
      %8871 = vst [vmem:[#allocation5 + $0x3ec] sm:$0xf] %v8763
      %8872 = vst [vmem:[#allocation5 + $0x410] sm:$0xf] %v8777
      %8873 = vst [vmem:[#allocation5 + $0x434] sm:$0xf] %v8787
      %8874 = vst [vmem:[#allocation5 + $0x458] sm:$0xf] %v8801
      %8875 = vst [vmem:[#allocation5 + $0x47c] sm:$0xf] %v8811
      %v8876 = vld [vmem:[#allocation5] sm:$0xff]
      %v8877 = vld [vmem:[#allocation5 + $0x8] sm:$0xff]
      %v8878 = vld [vmem:[#allocation5 + $0x10] sm:$0xff]
      %v8879 = vld [vmem:[#allocation5 + $0x18] sm:$0xff]
      %v8880 = vld [vmem:[#allocation5 + $0x20] sm:$0xf]
      %v8881 = vld [vmem:[#allocation5 + $0x24] sm:$0xff]
      %v8882 = vld [vmem:[#allocation5 + $0x2c] sm:$0xff]
      %v8883 = vld [vmem:[#allocation5 + $0x34] sm:$0xff]
      %v8884 = vld [vmem:[#allocation5 + $0x3c] sm:$0xff]
      %v8885 = vld [vmem:[#allocation5 + $0x44] sm:$0xf]
      %v8886 = vld [vmem:[#allocation5 + $0x48] sm:$0xff]
      %v8887 = vld [vmem:[#allocation5 + $0x50] sm:$0xff]
      %v8888 = vld [vmem:[#allocation5 + $0x58] sm:$0xff]
      %v8889 = vld [vmem:[#allocation5 + $0x60] sm:$0xff]
      %v8890 = vld [vmem:[#allocation5 + $0x68] sm:$0xf]
      %v8891 = vld [vmem:[#allocation5 + $0x6c] sm:$0xff]
      %v8892 = vld [vmem:[#allocation5 + $0x74] sm:$0xff]
      %v8893 = vld [vmem:[#allocation5 + $0x7c] sm:$0xff]
      %v8894 = vld [vmem:[#allocation5 + $0x84] sm:$0xff]
      %v8895 = vld [vmem:[#allocation5 + $0x8c] sm:$0xf]
      %v8896 = vld [vmem:[#allocation5 + $0x90] sm:$0xff]
      %v8897 = vld [vmem:[#allocation5 + $0x98] sm:$0xff]
      %v8898 = vld [vmem:[#allocation5 + $0xa0] sm:$0xff]
      %v8899 = vld [vmem:[#allocation5 + $0xa8] sm:$0xff]
      %v8900 = vld [vmem:[#allocation5 + $0xb0] sm:$0xf]
      %v8901 = vld [vmem:[#allocation5 + $0xb4] sm:$0xff]
      %v8902 = vld [vmem:[#allocation5 + $0xbc] sm:$0xff]
      %v8903 = vld [vmem:[#allocation5 + $0xc4] sm:$0xff]
      %v8904 = vld [vmem:[#allocation5 + $0xcc] sm:$0xff]
      %v8905 = vld [vmem:[#allocation5 + $0xd4] sm:$0xf]
      %v8906 = vld [vmem:[#allocation5 + $0xd8] sm:$0xff]
      %v8907 = vld [vmem:[#allocation5 + $0xe0] sm:$0xff]
      %v8908 = vld [vmem:[#allocation5 + $0xe8] sm:$0xff]
      %v8909 = vld [vmem:[#allocation5 + $0xf0] sm:$0xff]
      %v8910 = vld [vmem:[#allocation5 + $0xf8] sm:$0xf]
      %v8911 = vld [vmem:[#allocation5 + $0xfc] sm:$0xff]
      %v8912 = vld [vmem:[#allocation5 + $0x104] sm:$0xff]
      %v8913 = vld [vmem:[#allocation5 + $0x10c] sm:$0xff]
      %v8914 = vld [vmem:[#allocation5 + $0x114] sm:$0xff]
      %v8915 = vld [vmem:[#allocation5 + $0x11c] sm:$0xf]
      %v8916 = vld [vmem:[#allocation5 + $0x120] sm:$0xff]
      %v8917 = vld [vmem:[#allocation5 + $0x128] sm:$0xff]
      %v8918 = vld [vmem:[#allocation5 + $0x130] sm:$0xff]
      %v8919 = vld [vmem:[#allocation5 + $0x138] sm:$0xff]
      %v8920 = vld [vmem:[#allocation5 + $0x140] sm:$0xf]
      %v8921 = vld [vmem:[#allocation5 + $0x144] sm:$0xff]
      %v8922 = vld [vmem:[#allocation5 + $0x14c] sm:$0xff]
      %v8923 = vld [vmem:[#allocation5 + $0x154] sm:$0xff]
      %v8924 = vld [vmem:[#allocation5 + $0x15c] sm:$0xff]
      %v8925 = vld [vmem:[#allocation5 + $0x164] sm:$0xf]
      %v8926 = vld [vmem:[#allocation5 + $0x168] sm:$0xff]
      %v8927 = vld [vmem:[#allocation5 + $0x170] sm:$0xff]
      %v8928 = vld [vmem:[#allocation5 + $0x178] sm:$0xff]
      %v8929 = vld [vmem:[#allocation5 + $0x180] sm:$0xff]
      %v8930 = vld [vmem:[#allocation5 + $0x188] sm:$0xf]
      %v8931 = vld [vmem:[#allocation5 + $0x18c] sm:$0xff]
      %v8932 = vld [vmem:[#allocation5 + $0x194] sm:$0xff]
      %v8933 = vld [vmem:[#allocation5 + $0x19c] sm:$0xff]
      %v8934 = vld [vmem:[#allocation5 + $0x1a4] sm:$0xff]
      %v8935 = vld [vmem:[#allocation5 + $0x1ac] sm:$0xf]
      %v8936 = vld [vmem:[#allocation5 + $0x1b0] sm:$0xff]
      %v8937 = vld [vmem:[#allocation5 + $0x1b8] sm:$0xff]
      %v8938 = vld [vmem:[#allocation5 + $0x1c0] sm:$0xff]
      %v8939 = vld [vmem:[#allocation5 + $0x1c8] sm:$0xff]
      %v8940 = vld [vmem:[#allocation5 + $0x1d0] sm:$0xf]
      %v8941 = vld [vmem:[#allocation5 + $0x1d4] sm:$0xff]
      %v8942 = vld [vmem:[#allocation5 + $0x1dc] sm:$0xff]
      %v8943 = vld [vmem:[#allocation5 + $0x1e4] sm:$0xff]
      %v8944 = vld [vmem:[#allocation5 + $0x1ec] sm:$0xff]
      %v8945 = vld [vmem:[#allocation5 + $0x1f4] sm:$0xf]
      %v8946 = vld [vmem:[#allocation5 + $0x1f8] sm:$0xff]
      %v8947 = vld [vmem:[#allocation5 + $0x200] sm:$0xff]
      %v8948 = vld [vmem:[#allocation5 + $0x208] sm:$0xff]
      %v8949 = vld [vmem:[#allocation5 + $0x210] sm:$0xff]
      %v8950 = vld [vmem:[#allocation5 + $0x218] sm:$0xf]
      %v8951 = vld [vmem:[#allocation5 + $0x21c] sm:$0xff]
      %v8952 = vld [vmem:[#allocation5 + $0x224] sm:$0xff]
      %v8953 = vld [vmem:[#allocation5 + $0x22c] sm:$0xff]
      %v8954 = vld [vmem:[#allocation5 + $0x234] sm:$0xff]
      %v8955 = vld [vmem:[#allocation5 + $0x23c] sm:$0xf]
      %v8956 = vld [vmem:[#allocation5 + $0x240] sm:$0xff]
      %v8957 = vld [vmem:[#allocation5 + $0x248] sm:$0xff]
      %v8958 = vld [vmem:[#allocation5 + $0x250] sm:$0xff]
      %v8959 = vld [vmem:[#allocation5 + $0x258] sm:$0xff]
      %v8960 = vld [vmem:[#allocation5 + $0x260] sm:$0xf]
      %v8961 = vld [vmem:[#allocation5 + $0x264] sm:$0xff]
      %v8962 = vld [vmem:[#allocation5 + $0x26c] sm:$0xff]
      %v8963 = vld [vmem:[#allocation5 + $0x274] sm:$0xff]
      %v8964 = vld [vmem:[#allocation5 + $0x27c] sm:$0xff]
      %v8965 = vld [vmem:[#allocation5 + $0x284] sm:$0xf]
      %v8966 = vld [vmem:[#allocation5 + $0x288] sm:$0xff]
      %v8967 = vld [vmem:[#allocation5 + $0x290] sm:$0xff]
      %v8968 = vld [vmem:[#allocation5 + $0x298] sm:$0xff]
      %v8969 = vld [vmem:[#allocation5 + $0x2a0] sm:$0xff]
      %v8970 = vld [vmem:[#allocation5 + $0x2a8] sm:$0xf]
      %v8971 = vld [vmem:[#allocation5 + $0x2ac] sm:$0xff]
      %v8972 = vld [vmem:[#allocation5 + $0x2b4] sm:$0xff]
      %v8973 = vld [vmem:[#allocation5 + $0x2bc] sm:$0xff]
      %v8974 = vld [vmem:[#allocation5 + $0x2c4] sm:$0xff]
      %v8975 = vld [vmem:[#allocation5 + $0x2cc] sm:$0xf]
      %v8976 = vld [vmem:[#allocation5 + $0x2d0] sm:$0xff]
      %v8977 = vld [vmem:[#allocation5 + $0x2d8] sm:$0xff]
      %v8978 = vld [vmem:[#allocation5 + $0x2e0] sm:$0xff]
      %v8979 = vld [vmem:[#allocation5 + $0x2e8] sm:$0xff]
      %v8980 = vld [vmem:[#allocation5 + $0x2f0] sm:$0xf]
      %v8981 = vld [vmem:[#allocation5 + $0x2f4] sm:$0xff]
      %v8982 = vld [vmem:[#allocation5 + $0x2fc] sm:$0xff]
      %v8983 = vld [vmem:[#allocation5 + $0x304] sm:$0xff]
      %v8984 = vld [vmem:[#allocation5 + $0x30c] sm:$0xff]
      %v8985 = vld [vmem:[#allocation5 + $0x314] sm:$0xf]
      %v8986 = vld [vmem:[#allocation5 + $0x318] sm:$0xff]
      %v8987 = vld [vmem:[#allocation5 + $0x320] sm:$0xff]
      %v8988 = vld [vmem:[#allocation5 + $0x328] sm:$0xff]
      %v8989 = vld [vmem:[#allocation5 + $0x330] sm:$0xff]
      %v8990 = vld [vmem:[#allocation5 + $0x338] sm:$0xf]
      %v8991 = vld [vmem:[#allocation5 + $0x33c] sm:$0xff]
      %v8992 = vld [vmem:[#allocation5 + $0x344] sm:$0xff]
      %v8993 = vld [vmem:[#allocation5 + $0x34c] sm:$0xff]
      %v8994 = vld [vmem:[#allocation5 + $0x354] sm:$0xff]
      %v8995 = vld [vmem:[#allocation5 + $0x35c] sm:$0xf]
      %v8996 = vld [vmem:[#allocation5 + $0x360] sm:$0xff]
      %v8997 = vld [vmem:[#allocation5 + $0x368] sm:$0xff]
      %v8998 = vld [vmem:[#allocation5 + $0x370] sm:$0xff]
      %v8999 = vld [vmem:[#allocation5 + $0x378] sm:$0xff]
      %v9000 = vld [vmem:[#allocation5 + $0x380] sm:$0xf]
      %v9001 = vld [vmem:[#allocation5 + $0x384] sm:$0xff]
      %v9002 = vld [vmem:[#allocation5 + $0x38c] sm:$0xff]
      %v9003 = vld [vmem:[#allocation5 + $0x394] sm:$0xff]
      %v9004 = vld [vmem:[#allocation5 + $0x39c] sm:$0xff]
      %v9005 = vld [vmem:[#allocation5 + $0x3a4] sm:$0xf]
      %v9006 = vld [vmem:[#allocation5 + $0x3a8] sm:$0xff]
      %v9007 = vld [vmem:[#allocation5 + $0x3b0] sm:$0xff]
      %v9008 = vld [vmem:[#allocation5 + $0x3b8] sm:$0xff]
      %v9009 = vld [vmem:[#allocation5 + $0x3c0] sm:$0xff]
      %v9010 = vld [vmem:[#allocation5 + $0x3c8] sm:$0xf]
      %v9011 = vld [vmem:[#allocation5 + $0x3cc] sm:$0xff]
      %v9012 = vld [vmem:[#allocation5 + $0x3d4] sm:$0xff]
      %v9013 = vld [vmem:[#allocation5 + $0x3dc] sm:$0xff]
      %v9014 = vld [vmem:[#allocation5 + $0x3e4] sm:$0xff]
      %v9015 = vld [vmem:[#allocation5 + $0x3ec] sm:$0xf]
      %v9016 = vld [vmem:[#allocation5 + $0x3f0] sm:$0xff]
      %v9017 = vld [vmem:[#allocation5 + $0x3f8] sm:$0xff]
      %v9018 = vld [vmem:[#allocation5 + $0x400] sm:$0xff]
      %v9019 = vld [vmem:[#allocation5 + $0x408] sm:$0xff]
      %v9020 = vld [vmem:[#allocation5 + $0x410] sm:$0xf]
      %v9021 = vld [vmem:[#allocation5 + $0x414] sm:$0xff]
      %v9022 = vld [vmem:[#allocation5 + $0x41c] sm:$0xff]
      %v9023 = vld [vmem:[#allocation5 + $0x424] sm:$0xff]
      %v9024 = vld [vmem:[#allocation5 + $0x42c] sm:$0xff]
      %v9025 = vld [vmem:[#allocation5 + $0x434] sm:$0xf]
      %v9026 = vld [vmem:[#allocation5 + $0x438] sm:$0xff]
      %v9027 = vld [vmem:[#allocation5 + $0x440] sm:$0xff]
      %v9028 = vld [vmem:[#allocation5 + $0x448] sm:$0xff]
      %v9029 = vld [vmem:[#allocation5 + $0x450] sm:$0xff]
      %v9030 = vld [vmem:[#allocation5 + $0x458] sm:$0xf]
      %v9031 = vld [vmem:[#allocation5 + $0x45c] sm:$0xff]
      %v9032 = vld [vmem:[#allocation5 + $0x464] sm:$0xff]
      %v9033 = vld [vmem:[#allocation5 + $0x46c] sm:$0xff]
      %v9034 = vld [vmem:[#allocation5 + $0x474] sm:$0xff]
      %v9035 = vld [vmem:[#allocation5 + $0x47c] sm:$0xf]
      %v9036 = vld [vmem:[%s5] sm:$0xff]
      %v9037 = vld [vmem:[%s5 + $0x8] sm:$0xff]
      %v9038 = vld [vmem:[%s5 + $0x10] sm:$0xff]
      %v9039 = vld [vmem:[%s5 + $0x18] sm:$0xff]
      %v9040 = vld [vmem:[%s5 + $0x20] sm:$0xff]
      %v9041 = vld [vmem:[%s5 + $0x28] sm:$0xff]
      %v9042 = vld [vmem:[%s5 + $0x30] sm:$0xff]
      %v9043 = vld [vmem:[%s5 + $0x38] sm:$0xff]
      %v9044 = vld [vmem:[%s5 + $0x40] sm:$0xff]
      %v9045 = vld [vmem:[%s5 + $0x48] sm:$0xff]
      %v9046 = vld [vmem:[%s5 + $0x50] sm:$0xff]
      %v9047 = vld [vmem:[%s5 + $0x58] sm:$0xff]
      %v9048 = vld [vmem:[%s5 + $0x60] sm:$0xff]
      %v9049 = vld [vmem:[%s5 + $0x68] sm:$0xff]
      %v9050 = vld [vmem:[%s5 + $0x70] sm:$0xff]
      %v9051 = vld [vmem:[%s5 + $0x78] sm:$0xff]
      %v9052 = vld [vmem:[%s5 + $0x80] sm:$0xff]
      %v9053 = vld [vmem:[%s5 + $0x88] sm:$0xff]
      %v9054 = vld [vmem:[%s5 + $0x90] sm:$0xff]
      %v9055 = vld [vmem:[%s5 + $0x98] sm:$0xff]
      %v9056 = vld [vmem:[%s5 + $0xa0] sm:$0xff]
      %v9057 = vld [vmem:[%s5 + $0xa8] sm:$0xff]
      %v9058 = vld [vmem:[%s5 + $0xb0] sm:$0xff]
      %v9059 = vld [vmem:[%s5 + $0xb8] sm:$0xff]
      %v9060 = vld [vmem:[%s5 + $0xc0] sm:$0xff]
      %v9061 = vld [vmem:[%s5 + $0xc8] sm:$0xff]
      %v9062 = vld [vmem:[%s5 + $0xd0] sm:$0xff]
      %v9063 = vld [vmem:[%s5 + $0xd8] sm:$0xff]
      %v9064 = vld [vmem:[%s5 + $0xe0] sm:$0xff]
      %v9065 = vld [vmem:[%s5 + $0xe8] sm:$0xff]
      %v9066 = vld [vmem:[%s5 + $0xf0] sm:$0xff]
      %v9067 = vld [vmem:[%s5 + $0xf8] sm:$0xff]
      %v9068 = vld [vmem:[%s5 + $0x100] sm:$0xff]
      %v9069 = vld [vmem:[%s5 + $0x108] sm:$0xff]
      %v9070 = vld [vmem:[%s5 + $0x110] sm:$0xff]
      %v9071 = vld [vmem:[%s5 + $0x118] sm:$0xff]
      %v9072 = vld [vmem:[%s5 + $0x120] sm:$0xff]
      %v9073 = vld [vmem:[%s5 + $0x128] sm:$0xff]
      %v9074 = vld [vmem:[%s5 + $0x130] sm:$0xff]
      %v9075 = vld [vmem:[%s5 + $0x138] sm:$0xff]
      %v9076 = vld [vmem:[%s5 + $0x140] sm:$0xff]
      %v9077 = vld [vmem:[%s5 + $0x148] sm:$0xff]
      %v9078 = vld [vmem:[%s5 + $0x150] sm:$0xff]
      %v9079 = vld [vmem:[%s5 + $0x158] sm:$0xff]
      %v9080 = vld [vmem:[%s5 + $0x160] sm:$0xff]
      %v9081 = vld [vmem:[%s5 + $0x168] sm:$0xff]
      %v9082 = vld [vmem:[%s5 + $0x170] sm:$0xff]
      %v9083 = vld [vmem:[%s5 + $0x178] sm:$0xff]
      %v9084 = vld [vmem:[%s5 + $0x180] sm:$0xff]
      %v9085 = vld [vmem:[%s5 + $0x188] sm:$0xff]
      %v9086 = vld [vmem:[%s5 + $0x190] sm:$0xff]
      %v9087 = vld [vmem:[%s5 + $0x198] sm:$0xff]
      %v9088 = vld [vmem:[%s5 + $0x1a0] sm:$0xff]
      %v9089 = vld [vmem:[%s5 + $0x1a8] sm:$0xff]
      %v9090 = vld [vmem:[%s5 + $0x1b0] sm:$0xff]
      %v9091 = vld [vmem:[%s5 + $0x1b8] sm:$0xff]
      %v9092 = vld [vmem:[%s5 + $0x1c0] sm:$0xff]
      %v9093 = vld [vmem:[%s5 + $0x1c8] sm:$0xff]
      %v9094 = vld [vmem:[%s5 + $0x1d0] sm:$0xff]
      %v9095 = vld [vmem:[%s5 + $0x1d8] sm:$0xff]
      %v9096 = vld [vmem:[%s5 + $0x1e0] sm:$0xff]
      %v9097 = vld [vmem:[%s5 + $0x1e8] sm:$0xff]
      %v9098 = vld [vmem:[%s5 + $0x1f0] sm:$0xff]
      %v9099 = vld [vmem:[%s5 + $0x1f8] sm:$0xff]
      %v9100 = vld [vmem:[%s5 + $0x200] sm:$0xff]
      %v9101 = vld [vmem:[%s5 + $0x208] sm:$0xff]
      %v9102 = vld [vmem:[%s5 + $0x210] sm:$0xff]
      %v9103 = vld [vmem:[%s5 + $0x218] sm:$0xff]
      %v9104 = vld [vmem:[%s5 + $0x220] sm:$0xff]
      %v9105 = vld [vmem:[%s5 + $0x228] sm:$0xff]
      %v9106 = vld [vmem:[%s5 + $0x230] sm:$0xff]
      %v9107 = vld [vmem:[%s5 + $0x238] sm:$0xff]
      %v9108 = vld [vmem:[%s5 + $0x240] sm:$0xff]
      %v9109 = vld [vmem:[%s5 + $0x248] sm:$0xff]
      %v9110 = vld [vmem:[%s5 + $0x250] sm:$0xff]
      %v9111 = vld [vmem:[%s5 + $0x258] sm:$0xff]
      %v9112 = vld [vmem:[%s5 + $0x260] sm:$0xff]
      %v9113 = vld [vmem:[%s5 + $0x268] sm:$0xff]
      %v9114 = vld [vmem:[%s5 + $0x270] sm:$0xff]
      %v9115 = vld [vmem:[%s5 + $0x278] sm:$0xff]
      %v9116 = vld [vmem:[%s5 + $0x280] sm:$0xff]
      %v9117 = vld [vmem:[%s5 + $0x288] sm:$0xff]
      %v9118 = vld [vmem:[%s5 + $0x290] sm:$0xff]
      %v9119 = vld [vmem:[%s5 + $0x298] sm:$0xff]
      %v9120 = vld [vmem:[%s5 + $0x2a0] sm:$0xff]
      %v9121 = vld [vmem:[%s5 + $0x2a8] sm:$0xff]
      %v9122 = vld [vmem:[%s5 + $0x2b0] sm:$0xff]
      %v9123 = vld [vmem:[%s5 + $0x2b8] sm:$0xff]
      %v9124 = vld [vmem:[%s5 + $0x2c0] sm:$0xff]
      %v9125 = vld [vmem:[%s5 + $0x2c8] sm:$0xff]
      %v9126 = vld [vmem:[%s5 + $0x2d0] sm:$0xff]
      %v9127 = vld [vmem:[%s5 + $0x2d8] sm:$0xff]
      %v9128 = vld [vmem:[%s5 + $0x2e0] sm:$0xff]
      %v9129 = vld [vmem:[%s5 + $0x2e8] sm:$0xff]
      %v9130 = vld [vmem:[%s5 + $0x2f0] sm:$0xff]
      %v9131 = vld [vmem:[%s5 + $0x2f8] sm:$0xff]
      %v9132 = vld [vmem:[%s5 + $0x300] sm:$0xff]
      %v9133 = vld [vmem:[%s5 + $0x308] sm:$0xff]
      %v9134 = vld [vmem:[%s5 + $0x310] sm:$0xff]
      %v9135 = vld [vmem:[%s5 + $0x318] sm:$0xff]
      %v9136 = vld [vmem:[%s5 + $0x320] sm:$0xff]
      %v9137 = vld [vmem:[%s5 + $0x328] sm:$0xff]
      %v9138 = vld [vmem:[%s5 + $0x330] sm:$0xff]
      %v9139 = vld [vmem:[%s5 + $0x338] sm:$0xff]
      %v9140 = vld [vmem:[%s5 + $0x340] sm:$0xff]
      %v9141 = vld [vmem:[%s5 + $0x348] sm:$0xff]
      %v9142 = vld [vmem:[%s5 + $0x350] sm:$0xff]
      %v9143 = vld [vmem:[%s5 + $0x358] sm:$0xff]
      %v9144 = vld [vmem:[%s5 + $0x360] sm:$0xff]
      %v9145 = vld [vmem:[%s5 + $0x368] sm:$0xff]
      %v9146 = vld [vmem:[%s5 + $0x370] sm:$0xff]
      %v9147 = vld [vmem:[%s5 + $0x378] sm:$0xff]
      %v9148 = vld [vmem:[%s5 + $0x380] sm:$0xff]
      %v9149 = vld [vmem:[%s5 + $0x388] sm:$0xff]
      %v9150 = vld [vmem:[%s5 + $0x390] sm:$0xff]
      %v9151 = vld [vmem:[%s5 + $0x398] sm:$0xff]
      %v9152 = vld [vmem:[%s5 + $0x3a0] sm:$0xff]
      %v9153 = vld [vmem:[%s5 + $0x3a8] sm:$0xff]
      %v9154 = vld [vmem:[%s5 + $0x3b0] sm:$0xff]
      %v9155 = vld [vmem:[%s5 + $0x3b8] sm:$0xff]
      %v9156 = vld [vmem:[%s5 + $0x3c0] sm:$0xff]
      %v9157 = vld [vmem:[%s5 + $0x3c8] sm:$0xff]
      %v9158 = vld [vmem:[%s5 + $0x3d0] sm:$0xff]
      %v9159 = vld [vmem:[%s5 + $0x3d8] sm:$0xff]
      %v9160 = vld [vmem:[%s5 + $0x3e0] sm:$0xff]
      %v9161 = vld [vmem:[%s5 + $0x3e8] sm:$0xff]
      %v9162 = vld [vmem:[%s5 + $0x3f0] sm:$0xff]
      %v9163 = vld [vmem:[%s5 + $0x3f8] sm:$0xff]
      %v9164 = vld [vmem:[%s5 + $0x400] sm:$0xff]
      %v9165 = vld [vmem:[%s5 + $0x408] sm:$0xff]
      %v9166 = vld [vmem:[%s5 + $0x410] sm:$0xff]
      %v9167 = vld [vmem:[%s5 + $0x418] sm:$0xff]
      %v9168 = vld [vmem:[%s5 + $0x420] sm:$0xff]
      %v9169 = vld [vmem:[%s5 + $0x428] sm:$0xff]
      %v9170 = vld [vmem:[%s5 + $0x430] sm:$0xff]
      %v9171 = vld [vmem:[%s5 + $0x438] sm:$0xff]
      %v9172 = vld [vmem:[%s5 + $0x440] sm:$0xff]
      %v9173 = vld [vmem:[%s5 + $0x448] sm:$0xff]
      %v9174 = vld [vmem:[%s5 + $0x450] sm:$0xff]
      %v9175 = vld [vmem:[%s5 + $0x458] sm:$0xff]
      %v9176 = vld [vmem:[%s5 + $0x460] sm:$0xff]
      %v9177 = vld [vmem:[%s5 + $0x468] sm:$0xff]
      %v9178 = vld [vmem:[%s5 + $0x470] sm:$0xff]
      %v9179 = vld [vmem:[%s5 + $0x478] sm:$0xff]
      %v9180 = vld [vmem:[%s6] sm:$0x3]
      %v9182 = vperm.slane %v9180, 0
      %v9183 = vperm.slane %v9180, 1
      %v9346 = vunpack.c.l.b16 %v8876
      %v9347 = vunpack.c.h.b16 %v8876
      %v9348 = vunpack.c.l.b16 %v8877
      %v9349 = vunpack.c.h.b16 %v8877
      %v9350 = vunpack.c.l.b16 %v8878
      %v9351 = vunpack.c.h.b16 %v8878
      %v9352 = vunpack.c.l.b16 %v8879
      %v9353 = vunpack.c.h.b16 %v8879
      %v9354 = vunpack.c.l.b16 %v8880
      %v9355 = vunpack.c.l.b16 %v8881
      %v9356 = vunpack.c.h.b16 %v8881
      %v9357 = vunpack.c.l.b16 %v8882
      %v9358 = vunpack.c.h.b16 %v8882
      %v9359 = vunpack.c.l.b16 %v8883
      %v9360 = vunpack.c.h.b16 %v8883
      %v9361 = vunpack.c.l.b16 %v8884
      %v9362 = vunpack.c.h.b16 %v8884
      %v9363 = vunpack.c.l.b16 %v8885
      %v9364 = vunpack.c.l.b16 %v8886
      %v9365 = vunpack.c.h.b16 %v8886
      %v9366 = vunpack.c.l.b16 %v8887
      %v9367 = vunpack.c.h.b16 %v8887
      %v9368 = vunpack.c.l.b16 %v8888
      %v9369 = vunpack.c.h.b16 %v8888
      %v9370 = vunpack.c.l.b16 %v8889
      %v9371 = vunpack.c.h.b16 %v8889
      %v9372 = vunpack.c.l.b16 %v8890
      %v9373 = vunpack.c.l.b16 %v8891
      %v9374 = vunpack.c.h.b16 %v8891
      %v9375 = vunpack.c.l.b16 %v8892
      %v9376 = vunpack.c.h.b16 %v8892
      %v9377 = vunpack.c.l.b16 %v8893
      %v9378 = vunpack.c.h.b16 %v8893
      %v9379 = vunpack.c.l.b16 %v8894
      %v9380 = vunpack.c.h.b16 %v8894
      %v9381 = vunpack.c.l.b16 %v8895
      %v9382 = vunpack.c.l.b16 %v8896
      %v9383 = vunpack.c.h.b16 %v8896
      %v9384 = vunpack.c.l.b16 %v8897
      %v9385 = vunpack.c.h.b16 %v8897
      %v9386 = vunpack.c.l.b16 %v8898
      %v9387 = vunpack.c.h.b16 %v8898
      %v9388 = vunpack.c.l.b16 %v8899
      %v9389 = vunpack.c.h.b16 %v8899
      %v9390 = vunpack.c.l.b16 %v8900
      %v9391 = vunpack.c.l.b16 %v8901
      %v9392 = vunpack.c.h.b16 %v8901
      %v9393 = vunpack.c.l.b16 %v8902
      %v9394 = vunpack.c.h.b16 %v8902
      %v9395 = vunpack.c.l.b16 %v8903
      %v9396 = vunpack.c.h.b16 %v8903
      %v9397 = vunpack.c.l.b16 %v8904
      %v9398 = vunpack.c.h.b16 %v8904
      %v9399 = vunpack.c.l.b16 %v8905
      %v9400 = vunpack.c.l.b16 %v8906
      %v9401 = vunpack.c.h.b16 %v8906
      %v9402 = vunpack.c.l.b16 %v8907
      %v9403 = vunpack.c.h.b16 %v8907
      %v9404 = vunpack.c.l.b16 %v8908
      %v9405 = vunpack.c.h.b16 %v8908
      %v9406 = vunpack.c.l.b16 %v8909
      %v9407 = vunpack.c.h.b16 %v8909
      %v9408 = vunpack.c.l.b16 %v8910
      %v9409 = vunpack.c.l.b16 %v8911
      %v9410 = vunpack.c.h.b16 %v8911
      %v9411 = vunpack.c.l.b16 %v8912
      %v9412 = vunpack.c.h.b16 %v8912
      %v9413 = vunpack.c.l.b16 %v8913
      %v9414 = vunpack.c.h.b16 %v8913
      %v9415 = vunpack.c.l.b16 %v8914
      %v9416 = vunpack.c.h.b16 %v8914
      %v9417 = vunpack.c.l.b16 %v8915
      %v9418 = vunpack.c.l.b16 %v8916
      %v9419 = vunpack.c.h.b16 %v8916
      %v9420 = vunpack.c.l.b16 %v8917
      %v9421 = vunpack.c.h.b16 %v8917
      %v9422 = vunpack.c.l.b16 %v8918
      %v9423 = vunpack.c.h.b16 %v8918
      %v9424 = vunpack.c.l.b16 %v8919
      %v9425 = vunpack.c.h.b16 %v8919
      %v9426 = vunpack.c.l.b16 %v8920
      %v9427 = vunpack.c.l.b16 %v8921
      %v9428 = vunpack.c.h.b16 %v8921
      %v9429 = vunpack.c.l.b16 %v8922
      %v9430 = vunpack.c.h.b16 %v8922
      %v9431 = vunpack.c.l.b16 %v8923
      %v9432 = vunpack.c.h.b16 %v8923
      %v9433 = vunpack.c.l.b16 %v8924
      %v9434 = vunpack.c.h.b16 %v8924
      %v9435 = vunpack.c.l.b16 %v8925
      %v9436 = vunpack.c.l.b16 %v8926
      %v9437 = vunpack.c.h.b16 %v8926
      %v9438 = vunpack.c.l.b16 %v8927
      %v9439 = vunpack.c.h.b16 %v8927
      %v9440 = vunpack.c.l.b16 %v8928
      %v9441 = vunpack.c.h.b16 %v8928
      %v9442 = vunpack.c.l.b16 %v8929
      %v9443 = vunpack.c.h.b16 %v8929
      %v9444 = vunpack.c.l.b16 %v8930
      %v9445 = vunpack.c.l.b16 %v8931
      %v9446 = vunpack.c.h.b16 %v8931
      %v9447 = vunpack.c.l.b16 %v8932
      %v9448 = vunpack.c.h.b16 %v8932
      %v9449 = vunpack.c.l.b16 %v8933
      %v9450 = vunpack.c.h.b16 %v8933
      %v9451 = vunpack.c.l.b16 %v8934
      %v9452 = vunpack.c.h.b16 %v8934
      %v9453 = vunpack.c.l.b16 %v8935
      %v9454 = vunpack.c.l.b16 %v8936
      %v9455 = vunpack.c.h.b16 %v8936
      %v9456 = vunpack.c.l.b16 %v8937
      %v9457 = vunpack.c.h.b16 %v8937
      %v9458 = vunpack.c.l.b16 %v8938
      %v9459 = vunpack.c.h.b16 %v8938
      %v9460 = vunpack.c.l.b16 %v8939
      %v9461 = vunpack.c.h.b16 %v8939
      %v9462 = vunpack.c.l.b16 %v8940
      %v9463 = vunpack.c.l.b16 %v8941
      %v9464 = vunpack.c.h.b16 %v8941
      %v9465 = vunpack.c.l.b16 %v8942
      %v9466 = vunpack.c.h.b16 %v8942
      %v9467 = vunpack.c.l.b16 %v8943
      %v9468 = vunpack.c.h.b16 %v8943
      %v9469 = vunpack.c.l.b16 %v8944
      %v9470 = vunpack.c.h.b16 %v8944
      %v9471 = vunpack.c.l.b16 %v8945
      %v9472 = vunpack.c.l.b16 %v8946
      %v9473 = vunpack.c.h.b16 %v8946
      %v9474 = vunpack.c.l.b16 %v8947
      %v9475 = vunpack.c.h.b16 %v8947
      %v9476 = vunpack.c.l.b16 %v8948
      %v9477 = vunpack.c.h.b16 %v8948
      %v9478 = vunpack.c.l.b16 %v8949
      %v9479 = vunpack.c.h.b16 %v8949
      %v9480 = vunpack.c.l.b16 %v8950
      %v9481 = vunpack.c.l.b16 %v8951
      %v9482 = vunpack.c.h.b16 %v8951
      %v9483 = vunpack.c.l.b16 %v8952
      %v9484 = vunpack.c.h.b16 %v8952
      %v9485 = vunpack.c.l.b16 %v8953
      %v9486 = vunpack.c.h.b16 %v8953
      %v9487 = vunpack.c.l.b16 %v8954
      %v9488 = vunpack.c.h.b16 %v8954
      %v9489 = vunpack.c.l.b16 %v8955
      %v9490 = vunpack.c.l.b16 %v8956
      %v9491 = vunpack.c.h.b16 %v8956
      %v9492 = vunpack.c.l.b16 %v8957
      %v9493 = vunpack.c.h.b16 %v8957
      %v9494 = vunpack.c.l.b16 %v8958
      %v9495 = vunpack.c.h.b16 %v8958
      %v9496 = vunpack.c.l.b16 %v8959
      %v9497 = vunpack.c.h.b16 %v8959
      %v9498 = vunpack.c.l.b16 %v8960
      %v9499 = vunpack.c.l.b16 %v8961
      %v9500 = vunpack.c.h.b16 %v8961
      %v9501 = vunpack.c.l.b16 %v8962
      %v9502 = vunpack.c.h.b16 %v8962
      %v9503 = vunpack.c.l.b16 %v8963
      %v9504 = vunpack.c.h.b16 %v8963
      %v9505 = vunpack.c.l.b16 %v8964
      %v9506 = vunpack.c.h.b16 %v8964
      %v9507 = vunpack.c.l.b16 %v8965
      %v9508 = vunpack.c.l.b16 %v8966
      %v9509 = vunpack.c.h.b16 %v8966
      %v9510 = vunpack.c.l.b16 %v8967
      %v9511 = vunpack.c.h.b16 %v8967
      %v9512 = vunpack.c.l.b16 %v8968
      %v9513 = vunpack.c.h.b16 %v8968
      %v9514 = vunpack.c.l.b16 %v8969
      %v9515 = vunpack.c.h.b16 %v8969
      %v9516 = vunpack.c.l.b16 %v8970
      %v9517 = vunpack.c.l.b16 %v8971
      %v9518 = vunpack.c.h.b16 %v8971
      %v9519 = vunpack.c.l.b16 %v8972
      %v9520 = vunpack.c.h.b16 %v8972
      %v9521 = vunpack.c.l.b16 %v8973
      %v9522 = vunpack.c.h.b16 %v8973
      %v9523 = vunpack.c.l.b16 %v8974
      %v9524 = vunpack.c.h.b16 %v8974
      %v9525 = vunpack.c.l.b16 %v8975
      %v9526 = vunpack.c.l.b16 %v8976
      %v9527 = vunpack.c.h.b16 %v8976
      %v9528 = vunpack.c.l.b16 %v8977
      %v9529 = vunpack.c.h.b16 %v8977
      %v9530 = vunpack.c.l.b16 %v8978
      %v9531 = vunpack.c.h.b16 %v8978
      %v9532 = vunpack.c.l.b16 %v8979
      %v9533 = vunpack.c.h.b16 %v8979
      %v9534 = vunpack.c.l.b16 %v8980
      %v9535 = vunpack.c.l.b16 %v8981
      %v9536 = vunpack.c.h.b16 %v8981
      %v9537 = vunpack.c.l.b16 %v8982
      %v9538 = vunpack.c.h.b16 %v8982
      %v9539 = vunpack.c.l.b16 %v8983
      %v9540 = vunpack.c.h.b16 %v8983
      %v9541 = vunpack.c.l.b16 %v8984
      %v9542 = vunpack.c.h.b16 %v8984
      %v9543 = vunpack.c.l.b16 %v8985
      %v9544 = vunpack.c.l.b16 %v8986
      %v9545 = vunpack.c.h.b16 %v8986
      %v9546 = vunpack.c.l.b16 %v8987
      %v9547 = vunpack.c.h.b16 %v8987
      %v9548 = vunpack.c.l.b16 %v8988
      %v9549 = vunpack.c.h.b16 %v8988
      %v9550 = vunpack.c.l.b16 %v8989
      %v9551 = vunpack.c.h.b16 %v8989
      %v9552 = vunpack.c.l.b16 %v8990
      %v9553 = vunpack.c.l.b16 %v8991
      %v9554 = vunpack.c.h.b16 %v8991
      %v9555 = vunpack.c.l.b16 %v8992
      %v9556 = vunpack.c.h.b16 %v8992
      %v9557 = vunpack.c.l.b16 %v8993
      %v9558 = vunpack.c.h.b16 %v8993
      %v9559 = vunpack.c.l.b16 %v8994
      %v9560 = vunpack.c.h.b16 %v8994
      %v9561 = vunpack.c.l.b16 %v8995
      %v9562 = vunpack.c.l.b16 %v8996
      %v9563 = vunpack.c.h.b16 %v8996
      %v9564 = vunpack.c.l.b16 %v8997
      %v9565 = vunpack.c.h.b16 %v8997
      %v9566 = vunpack.c.l.b16 %v8998
      %v9567 = vunpack.c.h.b16 %v8998
      %v9568 = vunpack.c.l.b16 %v8999
      %v9569 = vunpack.c.h.b16 %v8999
      %v9570 = vunpack.c.l.b16 %v9000
      %v9571 = vunpack.c.l.b16 %v9001
      %v9572 = vunpack.c.h.b16 %v9001
      %v9573 = vunpack.c.l.b16 %v9002
      %v9574 = vunpack.c.h.b16 %v9002
      %v9575 = vunpack.c.l.b16 %v9003
      %v9576 = vunpack.c.h.b16 %v9003
      %v9577 = vunpack.c.l.b16 %v9004
      %v9578 = vunpack.c.h.b16 %v9004
      %v9579 = vunpack.c.l.b16 %v9005
      %v9580 = vunpack.c.l.b16 %v9006
      %v9581 = vunpack.c.h.b16 %v9006
      %v9582 = vunpack.c.l.b16 %v9007
      %v9583 = vunpack.c.h.b16 %v9007
      %v9584 = vunpack.c.l.b16 %v9008
      %v9585 = vunpack.c.h.b16 %v9008
      %v9586 = vunpack.c.l.b16 %v9009
      %v9587 = vunpack.c.h.b16 %v9009
      %v9588 = vunpack.c.l.b16 %v9010
      %v9589 = vunpack.c.l.b16 %v9011
      %v9590 = vunpack.c.h.b16 %v9011
      %v9591 = vunpack.c.l.b16 %v9012
      %v9592 = vunpack.c.h.b16 %v9012
      %v9593 = vunpack.c.l.b16 %v9013
      %v9594 = vunpack.c.h.b16 %v9013
      %v9595 = vunpack.c.l.b16 %v9014
      %v9596 = vunpack.c.h.b16 %v9014
      %v9597 = vunpack.c.l.b16 %v9015
      %v9598 = vunpack.c.l.b16 %v9016
      %v9599 = vunpack.c.h.b16 %v9016
      %v9600 = vunpack.c.l.b16 %v9017
      %v9601 = vunpack.c.h.b16 %v9017
      %v9602 = vunpack.c.l.b16 %v9018
      %v9603 = vunpack.c.h.b16 %v9018
      %v9604 = vunpack.c.l.b16 %v9019
      %v9605 = vunpack.c.h.b16 %v9019
      %v9606 = vunpack.c.l.b16 %v9020
      %v9607 = vunpack.c.l.b16 %v9021
      %v9608 = vunpack.c.h.b16 %v9021
      %v9609 = vunpack.c.l.b16 %v9022
      %v9610 = vunpack.c.h.b16 %v9022
      %v9611 = vunpack.c.l.b16 %v9023
      %v9612 = vunpack.c.h.b16 %v9023
      %v9613 = vunpack.c.l.b16 %v9024
      %v9614 = vunpack.c.h.b16 %v9024
      %v9615 = vunpack.c.l.b16 %v9025
      %v9616 = vunpack.c.l.b16 %v9026
      %v9617 = vunpack.c.h.b16 %v9026
      %v9618 = vunpack.c.l.b16 %v9027
      %v9619 = vunpack.c.h.b16 %v9027
      %v9620 = vunpack.c.l.b16 %v9028
      %v9621 = vunpack.c.h.b16 %v9028
      %v9622 = vunpack.c.l.b16 %v9029
      %v9623 = vunpack.c.h.b16 %v9029
      %v9624 = vunpack.c.l.b16 %v9030
      %v9625 = vunpack.c.l.b16 %v9031
      %v9626 = vunpack.c.h.b16 %v9031
      %v9627 = vunpack.c.l.b16 %v9032
      %v9628 = vunpack.c.h.b16 %v9032
      %v9629 = vunpack.c.l.b16 %v9033
      %v9630 = vunpack.c.h.b16 %v9033
      %v9631 = vunpack.c.l.b16 %v9034
      %v9632 = vunpack.c.h.b16 %v9034
      %v9633 = vunpack.c.l.b16 %v9035
      %v9634 = vpack.c.b16 %v9355, %v9346
      %v9635 = vpack.c.b16 %v9356, %v9347
      %v9636 = vpack.c.b16 %v9357, %v9348
      %v9637 = vpack.c.b16 %v9358, %v9349
      %v9638 = vpack.c.b16 %v9359, %v9350
      %v9639 = vpack.c.b16 %v9360, %v9351
      %v9640 = vpack.c.b16 %v9361, %v9352
      %v9641 = vpack.c.b16 %v9362, %v9353
      %v9642 = vpack.c.b16 %v9363, %v9354
      %v9643 = vpack.c.b16 %v9373, %v9364
      %v9644 = vpack.c.b16 %v9374, %v9365
      %v9645 = vpack.c.b16 %v9375, %v9366
      %v9646 = vpack.c.b16 %v9376, %v9367
      %v9647 = vpack.c.b16 %v9377, %v9368
      %v9648 = vpack.c.b16 %v9378, %v9369
      %v9649 = vpack.c.b16 %v9379, %v9370
      %v9650 = vpack.c.b16 %v9380, %v9371
      %v9651 = vpack.c.b16 %v9381, %v9372
      %v9652 = vpack.c.b16 %v9391, %v9382
      %v9653 = vpack.c.b16 %v9392, %v9383
      %v9654 = vpack.c.b16 %v9393, %v9384
      %v9655 = vpack.c.b16 %v9394, %v9385
      %v9656 = vpack.c.b16 %v9395, %v9386
      %v9657 = vpack.c.b16 %v9396, %v9387
      %v9658 = vpack.c.b16 %v9397, %v9388
      %v9659 = vpack.c.b16 %v9398, %v9389
      %v9660 = vpack.c.b16 %v9399, %v9390
      %v9661 = vpack.c.b16 %v9409, %v9400
      %v9662 = vpack.c.b16 %v9410, %v9401
      %v9663 = vpack.c.b16 %v9411, %v9402
      %v9664 = vpack.c.b16 %v9412, %v9403
      %v9665 = vpack.c.b16 %v9413, %v9404
      %v9666 = vpack.c.b16 %v9414, %v9405
      %v9667 = vpack.c.b16 %v9415, %v9406
      %v9668 = vpack.c.b16 %v9416, %v9407
      %v9669 = vpack.c.b16 %v9417, %v9408
      %v9670 = vpack.c.b16 %v9427, %v9418
      %v9671 = vpack.c.b16 %v9428, %v9419
      %v9672 = vpack.c.b16 %v9429, %v9420
      %v9673 = vpack.c.b16 %v9430, %v9421
      %v9674 = vpack.c.b16 %v9431, %v9422
      %v9675 = vpack.c.b16 %v9432, %v9423
      %v9676 = vpack.c.b16 %v9433, %v9424
      %v9677 = vpack.c.b16 %v9434, %v9425
      %v9678 = vpack.c.b16 %v9435, %v9426
      %v9679 = vpack.c.b16 %v9445, %v9436
      %v9680 = vpack.c.b16 %v9446, %v9437
      %v9681 = vpack.c.b16 %v9447, %v9438
      %v9682 = vpack.c.b16 %v9448, %v9439
      %v9683 = vpack.c.b16 %v9449, %v9440
      %v9684 = vpack.c.b16 %v9450, %v9441
      %v9685 = vpack.c.b16 %v9451, %v9442
      %v9686 = vpack.c.b16 %v9452, %v9443
      %v9687 = vpack.c.b16 %v9453, %v9444
      %v9688 = vpack.c.b16 %v9463, %v9454
      %v9689 = vpack.c.b16 %v9464, %v9455
      %v9690 = vpack.c.b16 %v9465, %v9456
      %v9691 = vpack.c.b16 %v9466, %v9457
      %v9692 = vpack.c.b16 %v9467, %v9458
      %v9693 = vpack.c.b16 %v9468, %v9459
      %v9694 = vpack.c.b16 %v9469, %v9460
      %v9695 = vpack.c.b16 %v9470, %v9461
      %v9696 = vpack.c.b16 %v9471, %v9462
      %v9697 = vpack.c.b16 %v9481, %v9472
      %v9698 = vpack.c.b16 %v9482, %v9473
      %v9699 = vpack.c.b16 %v9483, %v9474
      %v9700 = vpack.c.b16 %v9484, %v9475
      %v9701 = vpack.c.b16 %v9485, %v9476
      %v9702 = vpack.c.b16 %v9486, %v9477
      %v9703 = vpack.c.b16 %v9487, %v9478
      %v9704 = vpack.c.b16 %v9488, %v9479
      %v9705 = vpack.c.b16 %v9489, %v9480
      %v9706 = vpack.c.b16 %v9499, %v9490
      %v9707 = vpack.c.b16 %v9500, %v9491
      %v9708 = vpack.c.b16 %v9501, %v9492
      %v9709 = vpack.c.b16 %v9502, %v9493
      %v9710 = vpack.c.b16 %v9503, %v9494
      %v9711 = vpack.c.b16 %v9504, %v9495
      %v9712 = vpack.c.b16 %v9505, %v9496
      %v9713 = vpack.c.b16 %v9506, %v9497
      %v9714 = vpack.c.b16 %v9507, %v9498
      %v9715 = vpack.c.b16 %v9517, %v9508
      %v9716 = vpack.c.b16 %v9518, %v9509
      %v9717 = vpack.c.b16 %v9519, %v9510
      %v9718 = vpack.c.b16 %v9520, %v9511
      %v9719 = vpack.c.b16 %v9521, %v9512
      %v9720 = vpack.c.b16 %v9522, %v9513
      %v9721 = vpack.c.b16 %v9523, %v9514
      %v9722 = vpack.c.b16 %v9524, %v9515
      %v9723 = vpack.c.b16 %v9525, %v9516
      %v9724 = vpack.c.b16 %v9535, %v9526
      %v9725 = vpack.c.b16 %v9536, %v9527
      %v9726 = vpack.c.b16 %v9537, %v9528
      %v9727 = vpack.c.b16 %v9538, %v9529
      %v9728 = vpack.c.b16 %v9539, %v9530
      %v9729 = vpack.c.b16 %v9540, %v9531
      %v9730 = vpack.c.b16 %v9541, %v9532
      %v9731 = vpack.c.b16 %v9542, %v9533
      %v9732 = vpack.c.b16 %v9543, %v9534
      %v9733 = vpack.c.b16 %v9553, %v9544
      %v9734 = vpack.c.b16 %v9554, %v9545
      %v9735 = vpack.c.b16 %v9555, %v9546
      %v9736 = vpack.c.b16 %v9556, %v9547
      %v9737 = vpack.c.b16 %v9557, %v9548
      %v9738 = vpack.c.b16 %v9558, %v9549
      %v9739 = vpack.c.b16 %v9559, %v9550
      %v9740 = vpack.c.b16 %v9560, %v9551
      %v9741 = vpack.c.b16 %v9561, %v9552
      %v9742 = vpack.c.b16 %v9571, %v9562
      %v9743 = vpack.c.b16 %v9572, %v9563
      %v9744 = vpack.c.b16 %v9573, %v9564
      %v9745 = vpack.c.b16 %v9574, %v9565
      %v9746 = vpack.c.b16 %v9575, %v9566
      %v9747 = vpack.c.b16 %v9576, %v9567
      %v9748 = vpack.c.b16 %v9577, %v9568
      %v9749 = vpack.c.b16 %v9578, %v9569
      %v9750 = vpack.c.b16 %v9579, %v9570
      %v9751 = vpack.c.b16 %v9589, %v9580
      %v9752 = vpack.c.b16 %v9590, %v9581
      %v9753 = vpack.c.b16 %v9591, %v9582
      %v9754 = vpack.c.b16 %v9592, %v9583
      %v9755 = vpack.c.b16 %v9593, %v9584
      %v9756 = vpack.c.b16 %v9594, %v9585
      %v9757 = vpack.c.b16 %v9595, %v9586
      %v9758 = vpack.c.b16 %v9596, %v9587
      %v9759 = vpack.c.b16 %v9597, %v9588
      %v9760 = vpack.c.b16 %v9607, %v9598
      %v9761 = vpack.c.b16 %v9608, %v9599
      %v9762 = vpack.c.b16 %v9609, %v9600
      %v9763 = vpack.c.b16 %v9610, %v9601
      %v9764 = vpack.c.b16 %v9611, %v9602
      %v9765 = vpack.c.b16 %v9612, %v9603
      %v9766 = vpack.c.b16 %v9613, %v9604
      %v9767 = vpack.c.b16 %v9614, %v9605
      %v9768 = vpack.c.b16 %v9615, %v9606
      %v9769 = vpack.c.b16 %v9625, %v9616
      %v9770 = vpack.c.b16 %v9626, %v9617
      %v9771 = vpack.c.b16 %v9627, %v9618
      %v9772 = vpack.c.b16 %v9628, %v9619
      %v9773 = vpack.c.b16 %v9629, %v9620
      %v9774 = vpack.c.b16 %v9630, %v9621
      %v9775 = vpack.c.b16 %v9631, %v9622
      %v9776 = vpack.c.b16 %v9632, %v9623
      %v9777 = vpack.c.b16 %v9633, %v9624
      %v10066 = vunpack.c.l.b16 %v9036
      %v10067 = vunpack.c.h.b16 %v9036
      %v10068 = vunpack.c.l.b16 %v9037
      %v10069 = vunpack.c.h.b16 %v9037
      %v10070 = vunpack.c.l.b16 %v9038
      %v10071 = vunpack.c.h.b16 %v9038
      %v10072 = vunpack.c.l.b16 %v9039
      %v10073 = vunpack.c.h.b16 %v9039
      %v10074 = vunpack.c.l.b16 %v9040
      %v10075 = vunpack.c.h.b16 %v9040
      %v10076 = vunpack.c.l.b16 %v9041
      %v10077 = vunpack.c.h.b16 %v9041
      %v10078 = vunpack.c.l.b16 %v9042
      %v10079 = vunpack.c.h.b16 %v9042
      %v10080 = vunpack.c.l.b16 %v9043
      %v10081 = vunpack.c.h.b16 %v9043
      %v10082 = vunpack.c.l.b16 %v9044
      %v10083 = vunpack.c.h.b16 %v9044
      %v10084 = vunpack.c.l.b16 %v9045
      %v10085 = vunpack.c.h.b16 %v9045
      %v10086 = vunpack.c.l.b16 %v9046
      %v10087 = vunpack.c.h.b16 %v9046
      %v10088 = vunpack.c.l.b16 %v9047
      %v10089 = vunpack.c.h.b16 %v9047
      %v10090 = vunpack.c.l.b16 %v9048
      %v10091 = vunpack.c.h.b16 %v9048
      %v10092 = vunpack.c.l.b16 %v9049
      %v10093 = vunpack.c.h.b16 %v9049
      %v10094 = vunpack.c.l.b16 %v9050
      %v10095 = vunpack.c.h.b16 %v9050
      %v10096 = vunpack.c.l.b16 %v9051
      %v10097 = vunpack.c.h.b16 %v9051
      %v10098 = vunpack.c.l.b16 %v9052
      %v10099 = vunpack.c.h.b16 %v9052
      %v10100 = vunpack.c.l.b16 %v9053
      %v10101 = vunpack.c.h.b16 %v9053
      %v10102 = vunpack.c.l.b16 %v9054
      %v10103 = vunpack.c.h.b16 %v9054
      %v10104 = vunpack.c.l.b16 %v9055
      %v10105 = vunpack.c.h.b16 %v9055
      %v10106 = vunpack.c.l.b16 %v9056
      %v10107 = vunpack.c.h.b16 %v9056
      %v10108 = vunpack.c.l.b16 %v9057
      %v10109 = vunpack.c.h.b16 %v9057
      %v10110 = vunpack.c.l.b16 %v9058
      %v10111 = vunpack.c.h.b16 %v9058
      %v10112 = vunpack.c.l.b16 %v9059
      %v10113 = vunpack.c.h.b16 %v9059
      %v10114 = vunpack.c.l.b16 %v9060
      %v10115 = vunpack.c.h.b16 %v9060
      %v10116 = vunpack.c.l.b16 %v9061
      %v10117 = vunpack.c.h.b16 %v9061
      %v10118 = vunpack.c.l.b16 %v9062
      %v10119 = vunpack.c.h.b16 %v9062
      %v10120 = vunpack.c.l.b16 %v9063
      %v10121 = vunpack.c.h.b16 %v9063
      %v10122 = vunpack.c.l.b16 %v9064
      %v10123 = vunpack.c.h.b16 %v9064
      %v10124 = vunpack.c.l.b16 %v9065
      %v10125 = vunpack.c.h.b16 %v9065
      %v10126 = vunpack.c.l.b16 %v9066
      %v10127 = vunpack.c.h.b16 %v9066
      %v10128 = vunpack.c.l.b16 %v9067
      %v10129 = vunpack.c.h.b16 %v9067
      %v10130 = vunpack.c.l.b16 %v9068
      %v10131 = vunpack.c.h.b16 %v9068
      %v10132 = vunpack.c.l.b16 %v9069
      %v10133 = vunpack.c.h.b16 %v9069
      %v10134 = vunpack.c.l.b16 %v9070
      %v10135 = vunpack.c.h.b16 %v9070
      %v10136 = vunpack.c.l.b16 %v9071
      %v10137 = vunpack.c.h.b16 %v9071
      %v10138 = vunpack.c.l.b16 %v9072
      %v10139 = vunpack.c.h.b16 %v9072
      %v10140 = vunpack.c.l.b16 %v9073
      %v10141 = vunpack.c.h.b16 %v9073
      %v10142 = vunpack.c.l.b16 %v9074
      %v10143 = vunpack.c.h.b16 %v9074
      %v10144 = vunpack.c.l.b16 %v9075
      %v10145 = vunpack.c.h.b16 %v9075
      %v10146 = vunpack.c.l.b16 %v9076
      %v10147 = vunpack.c.h.b16 %v9076
      %v10148 = vunpack.c.l.b16 %v9077
      %v10149 = vunpack.c.h.b16 %v9077
      %v10150 = vunpack.c.l.b16 %v9078
      %v10151 = vunpack.c.h.b16 %v9078
      %v10152 = vunpack.c.l.b16 %v9079
      %v10153 = vunpack.c.h.b16 %v9079
      %v10154 = vunpack.c.l.b16 %v9080
      %v10155 = vunpack.c.h.b16 %v9080
      %v10156 = vunpack.c.l.b16 %v9081
      %v10157 = vunpack.c.h.b16 %v9081
      %v10158 = vunpack.c.l.b16 %v9082
      %v10159 = vunpack.c.h.b16 %v9082
      %v10160 = vunpack.c.l.b16 %v9083
      %v10161 = vunpack.c.h.b16 %v9083
      %v10162 = vunpack.c.l.b16 %v9084
      %v10163 = vunpack.c.h.b16 %v9084
      %v10164 = vunpack.c.l.b16 %v9085
      %v10165 = vunpack.c.h.b16 %v9085
      %v10166 = vunpack.c.l.b16 %v9086
      %v10167 = vunpack.c.h.b16 %v9086
      %v10168 = vunpack.c.l.b16 %v9087
      %v10169 = vunpack.c.h.b16 %v9087
      %v10170 = vunpack.c.l.b16 %v9088
      %v10171 = vunpack.c.h.b16 %v9088
      %v10172 = vunpack.c.l.b16 %v9089
      %v10173 = vunpack.c.h.b16 %v9089
      %v10174 = vunpack.c.l.b16 %v9090
      %v10175 = vunpack.c.h.b16 %v9090
      %v10176 = vunpack.c.l.b16 %v9091
      %v10177 = vunpack.c.h.b16 %v9091
      %v10178 = vunpack.c.l.b16 %v9092
      %v10179 = vunpack.c.h.b16 %v9092
      %v10180 = vunpack.c.l.b16 %v9093
      %v10181 = vunpack.c.h.b16 %v9093
      %v10182 = vunpack.c.l.b16 %v9094
      %v10183 = vunpack.c.h.b16 %v9094
      %v10184 = vunpack.c.l.b16 %v9095
      %v10185 = vunpack.c.h.b16 %v9095
      %v10186 = vunpack.c.l.b16 %v9096
      %v10187 = vunpack.c.h.b16 %v9096
      %v10188 = vunpack.c.l.b16 %v9097
      %v10189 = vunpack.c.h.b16 %v9097
      %v10190 = vunpack.c.l.b16 %v9098
      %v10191 = vunpack.c.h.b16 %v9098
      %v10192 = vunpack.c.l.b16 %v9099
      %v10193 = vunpack.c.h.b16 %v9099
      %v10194 = vunpack.c.l.b16 %v9100
      %v10195 = vunpack.c.h.b16 %v9100
      %v10196 = vunpack.c.l.b16 %v9101
      %v10197 = vunpack.c.h.b16 %v9101
      %v10198 = vunpack.c.l.b16 %v9102
      %v10199 = vunpack.c.h.b16 %v9102
      %v10200 = vunpack.c.l.b16 %v9103
      %v10201 = vunpack.c.h.b16 %v9103
      %v10202 = vunpack.c.l.b16 %v9104
      %v10203 = vunpack.c.h.b16 %v9104
      %v10204 = vunpack.c.l.b16 %v9105
      %v10205 = vunpack.c.h.b16 %v9105
      %v10206 = vunpack.c.l.b16 %v9106
      %v10207 = vunpack.c.h.b16 %v9106
      %v10208 = vunpack.c.l.b16 %v9107
      %v10209 = vunpack.c.h.b16 %v9107
      %v10210 = vunpack.c.l.b16 %v9108
      %v10211 = vunpack.c.h.b16 %v9108
      %v10212 = vunpack.c.l.b16 %v9109
      %v10213 = vunpack.c.h.b16 %v9109
      %v10214 = vunpack.c.l.b16 %v9110
      %v10215 = vunpack.c.h.b16 %v9110
      %v10216 = vunpack.c.l.b16 %v9111
      %v10217 = vunpack.c.h.b16 %v9111
      %v10218 = vunpack.c.l.b16 %v9112
      %v10219 = vunpack.c.h.b16 %v9112
      %v10220 = vunpack.c.l.b16 %v9113
      %v10221 = vunpack.c.h.b16 %v9113
      %v10222 = vunpack.c.l.b16 %v9114
      %v10223 = vunpack.c.h.b16 %v9114
      %v10224 = vunpack.c.l.b16 %v9115
      %v10225 = vunpack.c.h.b16 %v9115
      %v10226 = vunpack.c.l.b16 %v9116
      %v10227 = vunpack.c.h.b16 %v9116
      %v10228 = vunpack.c.l.b16 %v9117
      %v10229 = vunpack.c.h.b16 %v9117
      %v10230 = vunpack.c.l.b16 %v9118
      %v10231 = vunpack.c.h.b16 %v9118
      %v10232 = vunpack.c.l.b16 %v9119
      %v10233 = vunpack.c.h.b16 %v9119
      %v10234 = vunpack.c.l.b16 %v9120
      %v10235 = vunpack.c.h.b16 %v9120
      %v10236 = vunpack.c.l.b16 %v9121
      %v10237 = vunpack.c.h.b16 %v9121
      %v10238 = vunpack.c.l.b16 %v9122
      %v10239 = vunpack.c.h.b16 %v9122
      %v10240 = vunpack.c.l.b16 %v9123
      %v10241 = vunpack.c.h.b16 %v9123
      %v10242 = vunpack.c.l.b16 %v9124
      %v10243 = vunpack.c.h.b16 %v9124
      %v10244 = vunpack.c.l.b16 %v9125
      %v10245 = vunpack.c.h.b16 %v9125
      %v10246 = vunpack.c.l.b16 %v9126
      %v10247 = vunpack.c.h.b16 %v9126
      %v10248 = vunpack.c.l.b16 %v9127
      %v10249 = vunpack.c.h.b16 %v9127
      %v10250 = vunpack.c.l.b16 %v9128
      %v10251 = vunpack.c.h.b16 %v9128
      %v10252 = vunpack.c.l.b16 %v9129
      %v10253 = vunpack.c.h.b16 %v9129
      %v10254 = vunpack.c.l.b16 %v9130
      %v10255 = vunpack.c.h.b16 %v9130
      %v10256 = vunpack.c.l.b16 %v9131
      %v10257 = vunpack.c.h.b16 %v9131
      %v10258 = vunpack.c.l.b16 %v9132
      %v10259 = vunpack.c.h.b16 %v9132
      %v10260 = vunpack.c.l.b16 %v9133
      %v10261 = vunpack.c.h.b16 %v9133
      %v10262 = vunpack.c.l.b16 %v9134
      %v10263 = vunpack.c.h.b16 %v9134
      %v10264 = vunpack.c.l.b16 %v9135
      %v10265 = vunpack.c.h.b16 %v9135
      %v10266 = vunpack.c.l.b16 %v9136
      %v10267 = vunpack.c.h.b16 %v9136
      %v10268 = vunpack.c.l.b16 %v9137
      %v10269 = vunpack.c.h.b16 %v9137
      %v10270 = vunpack.c.l.b16 %v9138
      %v10271 = vunpack.c.h.b16 %v9138
      %v10272 = vunpack.c.l.b16 %v9139
      %v10273 = vunpack.c.h.b16 %v9139
      %v10274 = vunpack.c.l.b16 %v9140
      %v10275 = vunpack.c.h.b16 %v9140
      %v10276 = vunpack.c.l.b16 %v9141
      %v10277 = vunpack.c.h.b16 %v9141
      %v10278 = vunpack.c.l.b16 %v9142
      %v10279 = vunpack.c.h.b16 %v9142
      %v10280 = vunpack.c.l.b16 %v9143
      %v10281 = vunpack.c.h.b16 %v9143
      %v10282 = vunpack.c.l.b16 %v9144
      %v10283 = vunpack.c.h.b16 %v9144
      %v10284 = vunpack.c.l.b16 %v9145
      %v10285 = vunpack.c.h.b16 %v9145
      %v10286 = vunpack.c.l.b16 %v9146
      %v10287 = vunpack.c.h.b16 %v9146
      %v10288 = vunpack.c.l.b16 %v9147
      %v10289 = vunpack.c.h.b16 %v9147
      %v10290 = vunpack.c.l.b16 %v9148
      %v10291 = vunpack.c.h.b16 %v9148
      %v10292 = vunpack.c.l.b16 %v9149
      %v10293 = vunpack.c.h.b16 %v9149
      %v10294 = vunpack.c.l.b16 %v9150
      %v10295 = vunpack.c.h.b16 %v9150
      %v10296 = vunpack.c.l.b16 %v9151
      %v10297 = vunpack.c.h.b16 %v9151
      %v10298 = vunpack.c.l.b16 %v9152
      %v10299 = vunpack.c.h.b16 %v9152
      %v10300 = vunpack.c.l.b16 %v9153
      %v10301 = vunpack.c.h.b16 %v9153
      %v10302 = vunpack.c.l.b16 %v9154
      %v10303 = vunpack.c.h.b16 %v9154
      %v10304 = vunpack.c.l.b16 %v9155
      %v10305 = vunpack.c.h.b16 %v9155
      %v10306 = vunpack.c.l.b16 %v9156
      %v10307 = vunpack.c.h.b16 %v9156
      %v10308 = vunpack.c.l.b16 %v9157
      %v10309 = vunpack.c.h.b16 %v9157
      %v10310 = vunpack.c.l.b16 %v9158
      %v10311 = vunpack.c.h.b16 %v9158
      %v10312 = vunpack.c.l.b16 %v9159
      %v10313 = vunpack.c.h.b16 %v9159
      %v10314 = vunpack.c.l.b16 %v9160
      %v10315 = vunpack.c.h.b16 %v9160
      %v10316 = vunpack.c.l.b16 %v9161
      %v10317 = vunpack.c.h.b16 %v9161
      %v10318 = vunpack.c.l.b16 %v9162
      %v10319 = vunpack.c.h.b16 %v9162
      %v10320 = vunpack.c.l.b16 %v9163
      %v10321 = vunpack.c.h.b16 %v9163
      %v10322 = vunpack.c.l.b16 %v9164
      %v10323 = vunpack.c.h.b16 %v9164
      %v10324 = vunpack.c.l.b16 %v9165
      %v10325 = vunpack.c.h.b16 %v9165
      %v10326 = vunpack.c.l.b16 %v9166
      %v10327 = vunpack.c.h.b16 %v9166
      %v10328 = vunpack.c.l.b16 %v9167
      %v10329 = vunpack.c.h.b16 %v9167
      %v10330 = vunpack.c.l.b16 %v9168
      %v10331 = vunpack.c.h.b16 %v9168
      %v10332 = vunpack.c.l.b16 %v9169
      %v10333 = vunpack.c.h.b16 %v9169
      %v10334 = vunpack.c.l.b16 %v9170
      %v10335 = vunpack.c.h.b16 %v9170
      %v10336 = vunpack.c.l.b16 %v9171
      %v10337 = vunpack.c.h.b16 %v9171
      %v10338 = vunpack.c.l.b16 %v9172
      %v10339 = vunpack.c.h.b16 %v9172
      %v10340 = vunpack.c.l.b16 %v9173
      %v10341 = vunpack.c.h.b16 %v9173
      %v10342 = vunpack.c.l.b16 %v9174
      %v10343 = vunpack.c.h.b16 %v9174
      %v10344 = vunpack.c.l.b16 %v9175
      %v10345 = vunpack.c.h.b16 %v9175
      %v10346 = vunpack.c.l.b16 %v9176
      %v10347 = vunpack.c.h.b16 %v9176
      %v10348 = vunpack.c.l.b16 %v9177
      %v10349 = vunpack.c.h.b16 %v9177
      %v10350 = vunpack.c.l.b16 %v9178
      %v10351 = vunpack.c.h.b16 %v9178
      %v10352 = vunpack.c.l.b16 %v9179
      %v10353 = vunpack.c.h.b16 %v9179
      %v10354 = vpack.c.b16 %v10068, %v10066
      %v10355 = vpack.c.b16 %v10069, %v10067
      %v10356 = vpack.c.b16 %v10072, %v10070
      %v10357 = vpack.c.b16 %v10073, %v10071
      %v10358 = vpack.c.b16 %v10076, %v10074
      %v10359 = vpack.c.b16 %v10077, %v10075
      %v10360 = vpack.c.b16 %v10080, %v10078
      %v10361 = vpack.c.b16 %v10081, %v10079
      %v10362 = vpack.c.b16 %v10084, %v10082
      %v10363 = vpack.c.b16 %v10085, %v10083
      %v10364 = vpack.c.b16 %v10088, %v10086
      %v10365 = vpack.c.b16 %v10089, %v10087
      %v10366 = vpack.c.b16 %v10092, %v10090
      %v10367 = vpack.c.b16 %v10093, %v10091
      %v10368 = vpack.c.b16 %v10096, %v10094
      %v10369 = vpack.c.b16 %v10097, %v10095
      %v10370 = vpack.c.b16 %v10100, %v10098
      %v10371 = vpack.c.b16 %v10101, %v10099
      %v10372 = vpack.c.b16 %v10104, %v10102
      %v10373 = vpack.c.b16 %v10105, %v10103
      %v10374 = vpack.c.b16 %v10108, %v10106
      %v10375 = vpack.c.b16 %v10109, %v10107
      %v10376 = vpack.c.b16 %v10112, %v10110
      %v10377 = vpack.c.b16 %v10113, %v10111
      %v10378 = vpack.c.b16 %v10116, %v10114
      %v10379 = vpack.c.b16 %v10117, %v10115
      %v10380 = vpack.c.b16 %v10120, %v10118
      %v10381 = vpack.c.b16 %v10121, %v10119
      %v10382 = vpack.c.b16 %v10124, %v10122
      %v10383 = vpack.c.b16 %v10125, %v10123
      %v10384 = vpack.c.b16 %v10128, %v10126
      %v10385 = vpack.c.b16 %v10129, %v10127
      %v10386 = vpack.c.b16 %v10132, %v10130
      %v10387 = vpack.c.b16 %v10133, %v10131
      %v10388 = vpack.c.b16 %v10136, %v10134
      %v10389 = vpack.c.b16 %v10137, %v10135
      %v10390 = vpack.c.b16 %v10140, %v10138
      %v10391 = vpack.c.b16 %v10141, %v10139
      %v10392 = vpack.c.b16 %v10144, %v10142
      %v10393 = vpack.c.b16 %v10145, %v10143
      %v10394 = vpack.c.b16 %v10148, %v10146
      %v10395 = vpack.c.b16 %v10149, %v10147
      %v10396 = vpack.c.b16 %v10152, %v10150
      %v10397 = vpack.c.b16 %v10153, %v10151
      %v10398 = vpack.c.b16 %v10156, %v10154
      %v10399 = vpack.c.b16 %v10157, %v10155
      %v10400 = vpack.c.b16 %v10160, %v10158
      %v10401 = vpack.c.b16 %v10161, %v10159
      %v10402 = vpack.c.b16 %v10164, %v10162
      %v10403 = vpack.c.b16 %v10165, %v10163
      %v10404 = vpack.c.b16 %v10168, %v10166
      %v10405 = vpack.c.b16 %v10169, %v10167
      %v10406 = vpack.c.b16 %v10172, %v10170
      %v10407 = vpack.c.b16 %v10173, %v10171
      %v10408 = vpack.c.b16 %v10176, %v10174
      %v10409 = vpack.c.b16 %v10177, %v10175
      %v10410 = vpack.c.b16 %v10180, %v10178
      %v10411 = vpack.c.b16 %v10181, %v10179
      %v10412 = vpack.c.b16 %v10184, %v10182
      %v10413 = vpack.c.b16 %v10185, %v10183
      %v10414 = vpack.c.b16 %v10188, %v10186
      %v10415 = vpack.c.b16 %v10189, %v10187
      %v10416 = vpack.c.b16 %v10192, %v10190
      %v10417 = vpack.c.b16 %v10193, %v10191
      %v10418 = vpack.c.b16 %v10196, %v10194
      %v10419 = vpack.c.b16 %v10197, %v10195
      %v10420 = vpack.c.b16 %v10200, %v10198
      %v10421 = vpack.c.b16 %v10201, %v10199
      %v10422 = vpack.c.b16 %v10204, %v10202
      %v10423 = vpack.c.b16 %v10205, %v10203
      %v10424 = vpack.c.b16 %v10208, %v10206
      %v10425 = vpack.c.b16 %v10209, %v10207
      %v10426 = vpack.c.b16 %v10212, %v10210
      %v10427 = vpack.c.b16 %v10213, %v10211
      %v10428 = vpack.c.b16 %v10216, %v10214
      %v10429 = vpack.c.b16 %v10217, %v10215
      %v10430 = vpack.c.b16 %v10220, %v10218
      %v10431 = vpack.c.b16 %v10221, %v10219
      %v10432 = vpack.c.b16 %v10224, %v10222
      %v10433 = vpack.c.b16 %v10225, %v10223
      %v10434 = vpack.c.b16 %v10228, %v10226
      %v10435 = vpack.c.b16 %v10229, %v10227
      %v10436 = vpack.c.b16 %v10232, %v10230
      %v10437 = vpack.c.b16 %v10233, %v10231
      %v10438 = vpack.c.b16 %v10236, %v10234
      %v10439 = vpack.c.b16 %v10237, %v10235
      %v10440 = vpack.c.b16 %v10240, %v10238
      %v10441 = vpack.c.b16 %v10241, %v10239
      %v10442 = vpack.c.b16 %v10244, %v10242
      %v10443 = vpack.c.b16 %v10245, %v10243
      %v10444 = vpack.c.b16 %v10248, %v10246
      %v10445 = vpack.c.b16 %v10249, %v10247
      %v10446 = vpack.c.b16 %v10252, %v10250
      %v10447 = vpack.c.b16 %v10253, %v10251
      %v10448 = vpack.c.b16 %v10256, %v10254
      %v10449 = vpack.c.b16 %v10257, %v10255
      %v10450 = vpack.c.b16 %v10260, %v10258
      %v10451 = vpack.c.b16 %v10261, %v10259
      %v10452 = vpack.c.b16 %v10264, %v10262
      %v10453 = vpack.c.b16 %v10265, %v10263
      %v10454 = vpack.c.b16 %v10268, %v10266
      %v10455 = vpack.c.b16 %v10269, %v10267
      %v10456 = vpack.c.b16 %v10272, %v10270
      %v10457 = vpack.c.b16 %v10273, %v10271
      %v10458 = vpack.c.b16 %v10276, %v10274
      %v10459 = vpack.c.b16 %v10277, %v10275
      %v10460 = vpack.c.b16 %v10280, %v10278
      %v10461 = vpack.c.b16 %v10281, %v10279
      %v10462 = vpack.c.b16 %v10284, %v10282
      %v10463 = vpack.c.b16 %v10285, %v10283
      %v10464 = vpack.c.b16 %v10288, %v10286
      %v10465 = vpack.c.b16 %v10289, %v10287
      %v10466 = vpack.c.b16 %v10292, %v10290
      %v10467 = vpack.c.b16 %v10293, %v10291
      %v10468 = vpack.c.b16 %v10296, %v10294
      %v10469 = vpack.c.b16 %v10297, %v10295
      %v10470 = vpack.c.b16 %v10300, %v10298
      %v10471 = vpack.c.b16 %v10301, %v10299
      %v10472 = vpack.c.b16 %v10304, %v10302
      %v10473 = vpack.c.b16 %v10305, %v10303
      %v10474 = vpack.c.b16 %v10308, %v10306
      %v10475 = vpack.c.b16 %v10309, %v10307
      %v10476 = vpack.c.b16 %v10312, %v10310
      %v10477 = vpack.c.b16 %v10313, %v10311
      %v10478 = vpack.c.b16 %v10316, %v10314
      %v10479 = vpack.c.b16 %v10317, %v10315
      %v10480 = vpack.c.b16 %v10320, %v10318
      %v10481 = vpack.c.b16 %v10321, %v10319
      %v10482 = vpack.c.b16 %v10324, %v10322
      %v10483 = vpack.c.b16 %v10325, %v10323
      %v10484 = vpack.c.b16 %v10328, %v10326
      %v10485 = vpack.c.b16 %v10329, %v10327
      %v10486 = vpack.c.b16 %v10332, %v10330
      %v10487 = vpack.c.b16 %v10333, %v10331
      %v10488 = vpack.c.b16 %v10336, %v10334
      %v10489 = vpack.c.b16 %v10337, %v10335
      %v10490 = vpack.c.b16 %v10340, %v10338
      %v10491 = vpack.c.b16 %v10341, %v10339
      %v10492 = vpack.c.b16 %v10344, %v10342
      %v10493 = vpack.c.b16 %v10345, %v10343
      %v10494 = vpack.c.b16 %v10348, %v10346
      %v10495 = vpack.c.b16 %v10349, %v10347
      %v10496 = vpack.c.b16 %v10352, %v10350
      %v10497 = vpack.c.b16 %v10353, %v10351
      %10642 = vmatpush.bf16.msra.mxu0 %v10368
      %10643 = vmatpush.bf16.msra.mxu0 %v10366
      %10644 = vmatpush.bf16.msra.mxu0 %v10364
      %10645 = vmatpush.bf16.msra.mxu0 %v10362
      %10646 = vmatpush.bf16.msra.mxu0 %v10360
      %10647 = vmatpush.bf16.msra.mxu0 %v10358
      %10648 = vmatpush.bf16.msra.mxu0 %v10356
      %10649 = vmatpush.bf16.msra.mxu0 %v10354
      %10650 = vmatmul.bf16.gmra.mxu0 %v9634
      %v10651 = vpop.f32.mrf.mxu0
      %v10652 = vadd.f32 %v9182, %v10651
      %v10653 = vpop.f32.mrf.mxu0
      %v10654 = vadd.f32 %v9182, %v10653
      %10655 = vmatmul.bf16.gmra.mxu0 %v9643
      %v10656 = vpop.f32.mrf.mxu0
      %v10657 = vadd.f32 %v9182, %v10656
      %v10658 = vpop.f32.mrf.mxu0
      %v10659 = vadd.f32 %v9182, %v10658
      %10660 = vmatmul.bf16.gmra.mxu0 %v9652
      %v10661 = vpop.f32.mrf.mxu0
      %v10662 = vadd.f32 %v9182, %v10661
      %v10663 = vpop.f32.mrf.mxu0
      %v10664 = vadd.f32 %v9182, %v10663
      %10665 = vmatmul.bf16.gmra.mxu0 %v9661
      %v10666 = vpop.f32.mrf.mxu0
      %v10667 = vadd.f32 %v9182, %v10666
      %v10668 = vpop.f32.mrf.mxu0
      %v10669 = vadd.f32 %v9182, %v10668
      %10670 = vmatmul.bf16.gmra.mxu0 %v9670
      %v10671 = vpop.f32.mrf.mxu0
      %v10672 = vadd.f32 %v9182, %v10671
      %v10673 = vpop.f32.mrf.mxu0
      %v10674 = vadd.f32 %v9182, %v10673
      %10675 = vmatmul.bf16.gmra.mxu0 %v9679
      %v10676 = vpop.f32.mrf.mxu0
      %v10677 = vadd.f32 %v9182, %v10676
      %v10678 = vpop.f32.mrf.mxu0
      %v10679 = vadd.f32 %v9182, %v10678
      %10680 = vmatmul.bf16.gmra.mxu0 %v9688
      %v10681 = vpop.f32.mrf.mxu0
      %v10682 = vadd.f32 %v9182, %v10681
      %v10683 = vpop.f32.mrf.mxu0
      %v10684 = vadd.f32 %v9182, %v10683
      %10685 = vmatmul.bf16.gmra.mxu0 %v9697
      %v10686 = vpop.f32.mrf.mxu0
      %v10687 = vadd.f32 %v9182, %v10686
      %v10688 = vpop.f32.mrf.mxu0
      %v10689 = vadd.f32 %v9182, %v10688
      %10690 = vmatmul.bf16.gmra.mxu0 %v9706
      %v10691 = vpop.f32.mrf.mxu0
      %v10692 = vadd.f32 %v9182, %v10691
      %v10693 = vpop.f32.mrf.mxu0
      %v10694 = vadd.f32 %v9182, %v10693
      %10695 = vmatmul.bf16.gmra.mxu0 %v9715
      %v10696 = vpop.f32.mrf.mxu0
      %v10697 = vadd.f32 %v9182, %v10696
      %v10698 = vpop.f32.mrf.mxu0
      %v10699 = vadd.f32 %v9182, %v10698
      %10700 = vmatmul.bf16.gmra.mxu0 %v9724
      %v10701 = vpop.f32.mrf.mxu0
      %v10702 = vadd.f32 %v9182, %v10701
      %v10703 = vpop.f32.mrf.mxu0
      %v10704 = vadd.f32 %v9182, %v10703
      %10705 = vmatmul.bf16.gmra.mxu0 %v9733
      %v10706 = vpop.f32.mrf.mxu0
      %v10707 = vadd.f32 %v9182, %v10706
      %v10708 = vpop.f32.mrf.mxu0
      %v10709 = vadd.f32 %v9182, %v10708
      %10710 = vmatmul.bf16.gmra.mxu0 %v9742
      %v10711 = vpop.f32.mrf.mxu0
      %v10712 = vadd.f32 %v9182, %v10711
      %v10713 = vpop.f32.mrf.mxu0
      %v10714 = vadd.f32 %v9182, %v10713
      %10715 = vmatmul.bf16.gmra.mxu0 %v9751
      %v10716 = vpop.f32.mrf.mxu0
      %v10717 = vadd.f32 %v9182, %v10716
      %v10718 = vpop.f32.mrf.mxu0
      %v10719 = vadd.f32 %v9182, %v10718
      %10720 = vmatmul.bf16.gmra.mxu0 %v9760
      %v10721 = vpop.f32.mrf.mxu0
      %v10722 = vadd.f32 %v9182, %v10721
      %v10723 = vpop.f32.mrf.mxu0
      %v10724 = vadd.f32 %v9182, %v10723
      %10725 = vmatmul.bf16.gmra.mxu0 %v9769
      %v10726 = vpop.f32.mrf.mxu0
      %v10727 = vadd.f32 %v9182, %v10726
      %v10728 = vpop.f32.mrf.mxu0
      %v10729 = vadd.f32 %v9182, %v10728
      %10730 = vdwg.mxu0
      %10731 = vmatpush.bf16.msra.mxu0 %v10384
      %10732 = vmatpush.bf16.msra.mxu0 %v10382
      %10733 = vmatpush.bf16.msra.mxu0 %v10380
      %10734 = vmatpush.bf16.msra.mxu0 %v10378
      %10735 = vmatpush.bf16.msra.mxu0 %v10376
      %10736 = vmatpush.bf16.msra.mxu0 %v10374
      %10737 = vmatpush.bf16.msra.mxu0 %v10372
      %10738 = vmatpush.bf16.msra.mxu0 %v10370
      %10739 = vmatmul.bf16.gmra.mxu0 %v9635
      %v10740 = vpop.f32.mrf.mxu0
      %v10741 = vadd.f32 %v10652, %v10740
      %v10742 = vpop.f32.mrf.mxu0
      %v10743 = vadd.f32 %v10654, %v10742
      %10744 = vmatmul.bf16.gmra.mxu0 %v9644
      %v10745 = vpop.f32.mrf.mxu0
      %v10746 = vadd.f32 %v10657, %v10745
      %v10747 = vpop.f32.mrf.mxu0
      %v10748 = vadd.f32 %v10659, %v10747
      %10749 = vmatmul.bf16.gmra.mxu0 %v9653
      %v10750 = vpop.f32.mrf.mxu0
      %v10751 = vadd.f32 %v10662, %v10750
      %v10752 = vpop.f32.mrf.mxu0
      %v10753 = vadd.f32 %v10664, %v10752
      %10754 = vmatmul.bf16.gmra.mxu0 %v9662
      %v10755 = vpop.f32.mrf.mxu0
      %v10756 = vadd.f32 %v10667, %v10755
      %v10757 = vpop.f32.mrf.mxu0
      %v10758 = vadd.f32 %v10669, %v10757
      %10759 = vmatmul.bf16.gmra.mxu0 %v9671
      %v10760 = vpop.f32.mrf.mxu0
      %v10761 = vadd.f32 %v10672, %v10760
      %v10762 = vpop.f32.mrf.mxu0
      %v10763 = vadd.f32 %v10674, %v10762
      %10764 = vmatmul.bf16.gmra.mxu0 %v9680
      %v10765 = vpop.f32.mrf.mxu0
      %v10766 = vadd.f32 %v10677, %v10765
      %v10767 = vpop.f32.mrf.mxu0
      %v10768 = vadd.f32 %v10679, %v10767
      %10769 = vmatmul.bf16.gmra.mxu0 %v9689
      %v10770 = vpop.f32.mrf.mxu0
      %v10771 = vadd.f32 %v10682, %v10770
      %v10772 = vpop.f32.mrf.mxu0
      %v10773 = vadd.f32 %v10684, %v10772
      %10774 = vmatmul.bf16.gmra.mxu0 %v9698
      %v10775 = vpop.f32.mrf.mxu0
      %v10776 = vadd.f32 %v10687, %v10775
      %v10777 = vpop.f32.mrf.mxu0
      %v10778 = vadd.f32 %v10689, %v10777
      %10779 = vmatmul.bf16.gmra.mxu0 %v9707
      %v10780 = vpop.f32.mrf.mxu0
      %v10781 = vadd.f32 %v10692, %v10780
      %v10782 = vpop.f32.mrf.mxu0
      %v10783 = vadd.f32 %v10694, %v10782
      %10784 = vmatmul.bf16.gmra.mxu0 %v9716
      %v10785 = vpop.f32.mrf.mxu0
      %v10786 = vadd.f32 %v10697, %v10785
      %v10787 = vpop.f32.mrf.mxu0
      %v10788 = vadd.f32 %v10699, %v10787
      %10789 = vmatmul.bf16.gmra.mxu0 %v9725
      %v10790 = vpop.f32.mrf.mxu0
      %v10791 = vadd.f32 %v10702, %v10790
      %v10792 = vpop.f32.mrf.mxu0
      %v10793 = vadd.f32 %v10704, %v10792
      %10794 = vmatmul.bf16.gmra.mxu0 %v9734
      %v10795 = vpop.f32.mrf.mxu0
      %v10796 = vadd.f32 %v10707, %v10795
      %v10797 = vpop.f32.mrf.mxu0
      %v10798 = vadd.f32 %v10709, %v10797
      %10799 = vmatmul.bf16.gmra.mxu0 %v9743
      %v10800 = vpop.f32.mrf.mxu0
      %v10801 = vadd.f32 %v10712, %v10800
      %v10802 = vpop.f32.mrf.mxu0
      %v10803 = vadd.f32 %v10714, %v10802
      %10804 = vmatmul.bf16.gmra.mxu0 %v9752
      %v10805 = vpop.f32.mrf.mxu0
      %v10806 = vadd.f32 %v10717, %v10805
      %v10807 = vpop.f32.mrf.mxu0
      %v10808 = vadd.f32 %v10719, %v10807
      %10809 = vmatmul.bf16.gmra.mxu0 %v9761
      %v10810 = vpop.f32.mrf.mxu0
      %v10811 = vadd.f32 %v10722, %v10810
      %v10812 = vpop.f32.mrf.mxu0
      %v10813 = vadd.f32 %v10724, %v10812
      %10814 = vmatmul.bf16.gmra.mxu0 %v9770
      %v10815 = vpop.f32.mrf.mxu0
      %v10816 = vadd.f32 %v10727, %v10815
      %v10817 = vpop.f32.mrf.mxu0
      %v10818 = vadd.f32 %v10729, %v10817
      %10819 = vdwg.mxu0
      %10820 = vmatpush.bf16.msra.mxu0 %v10400
      %10821 = vmatpush.bf16.msra.mxu0 %v10398
      %10822 = vmatpush.bf16.msra.mxu0 %v10396
      %10823 = vmatpush.bf16.msra.mxu0 %v10394
      %10824 = vmatpush.bf16.msra.mxu0 %v10392
      %10825 = vmatpush.bf16.msra.mxu0 %v10390
      %10826 = vmatpush.bf16.msra.mxu0 %v10388
      %10827 = vmatpush.bf16.msra.mxu0 %v10386
      %10828 = vmatmul.bf16.gmra.mxu0 %v9636
      %v10829 = vpop.f32.mrf.mxu0
      %v10830 = vadd.f32 %v10741, %v10829
      %v10831 = vpop.f32.mrf.mxu0
      %v10832 = vadd.f32 %v10743, %v10831
      %10833 = vmatmul.bf16.gmra.mxu0 %v9645
      %v10834 = vpop.f32.mrf.mxu0
      %v10835 = vadd.f32 %v10746, %v10834
      %v10836 = vpop.f32.mrf.mxu0
      %v10837 = vadd.f32 %v10748, %v10836
      %10838 = vmatmul.bf16.gmra.mxu0 %v9654
      %v10839 = vpop.f32.mrf.mxu0
      %v10840 = vadd.f32 %v10751, %v10839
      %v10841 = vpop.f32.mrf.mxu0
      %v10842 = vadd.f32 %v10753, %v10841
      %10843 = vmatmul.bf16.gmra.mxu0 %v9663
      %v10844 = vpop.f32.mrf.mxu0
      %v10845 = vadd.f32 %v10756, %v10844
      %v10846 = vpop.f32.mrf.mxu0
      %v10847 = vadd.f32 %v10758, %v10846
      %10848 = vmatmul.bf16.gmra.mxu0 %v9672
      %v10849 = vpop.f32.mrf.mxu0
      %v10850 = vadd.f32 %v10761, %v10849
      %v10851 = vpop.f32.mrf.mxu0
      %v10852 = vadd.f32 %v10763, %v10851
      %10853 = vmatmul.bf16.gmra.mxu0 %v9681
      %v10854 = vpop.f32.mrf.mxu0
      %v10855 = vadd.f32 %v10766, %v10854
      %v10856 = vpop.f32.mrf.mxu0
      %v10857 = vadd.f32 %v10768, %v10856
      %10858 = vmatmul.bf16.gmra.mxu0 %v9690
      %v10859 = vpop.f32.mrf.mxu0
      %v10860 = vadd.f32 %v10771, %v10859
      %v10861 = vpop.f32.mrf.mxu0
      %v10862 = vadd.f32 %v10773, %v10861
      %10863 = vmatmul.bf16.gmra.mxu0 %v9699
      %v10864 = vpop.f32.mrf.mxu0
      %v10865 = vadd.f32 %v10776, %v10864
      %v10866 = vpop.f32.mrf.mxu0
      %v10867 = vadd.f32 %v10778, %v10866
      %10868 = vmatmul.bf16.gmra.mxu0 %v9708
      %v10869 = vpop.f32.mrf.mxu0
      %v10870 = vadd.f32 %v10781, %v10869
      %v10871 = vpop.f32.mrf.mxu0
      %v10872 = vadd.f32 %v10783, %v10871
      %10873 = vmatmul.bf16.gmra.mxu0 %v9717
      %v10874 = vpop.f32.mrf.mxu0
      %v10875 = vadd.f32 %v10786, %v10874
      %v10876 = vpop.f32.mrf.mxu0
      %v10877 = vadd.f32 %v10788, %v10876
      %10878 = vmatmul.bf16.gmra.mxu0 %v9726
      %v10879 = vpop.f32.mrf.mxu0
      %v10880 = vadd.f32 %v10791, %v10879
      %v10881 = vpop.f32.mrf.mxu0
      %v10882 = vadd.f32 %v10793, %v10881
      %10883 = vmatmul.bf16.gmra.mxu0 %v9735
      %v10884 = vpop.f32.mrf.mxu0
      %v10885 = vadd.f32 %v10796, %v10884
      %v10886 = vpop.f32.mrf.mxu0
      %v10887 = vadd.f32 %v10798, %v10886
      %10888 = vmatmul.bf16.gmra.mxu0 %v9744
      %v10889 = vpop.f32.mrf.mxu0
      %v10890 = vadd.f32 %v10801, %v10889
      %v10891 = vpop.f32.mrf.mxu0
      %v10892 = vadd.f32 %v10803, %v10891
      %10893 = vmatmul.bf16.gmra.mxu0 %v9753
      %v10894 = vpop.f32.mrf.mxu0
      %v10895 = vadd.f32 %v10806, %v10894
      %v10896 = vpop.f32.mrf.mxu0
      %v10897 = vadd.f32 %v10808, %v10896
      %10898 = vmatmul.bf16.gmra.mxu0 %v9762
      %v10899 = vpop.f32.mrf.mxu0
      %v10900 = vadd.f32 %v10811, %v10899
      %v10901 = vpop.f32.mrf.mxu0
      %v10902 = vadd.f32 %v10813, %v10901
      %10903 = vmatmul.bf16.gmra.mxu0 %v9771
      %v10904 = vpop.f32.mrf.mxu0
      %v10905 = vadd.f32 %v10816, %v10904
      %v10906 = vpop.f32.mrf.mxu0
      %v10907 = vadd.f32 %v10818, %v10906
      %10908 = vdwg.mxu0
      %10909 = vmatpush.bf16.msra.mxu0 %v10416
      %10910 = vmatpush.bf16.msra.mxu0 %v10414
      %10911 = vmatpush.bf16.msra.mxu0 %v10412
      %10912 = vmatpush.bf16.msra.mxu0 %v10410
      %10913 = vmatpush.bf16.msra.mxu0 %v10408
      %10914 = vmatpush.bf16.msra.mxu0 %v10406
      %10915 = vmatpush.bf16.msra.mxu0 %v10404
      %10916 = vmatpush.bf16.msra.mxu0 %v10402
      %10917 = vmatmul.bf16.gmra.mxu0 %v9637
      %v10918 = vpop.f32.mrf.mxu0
      %v10919 = vadd.f32 %v10830, %v10918
      %v10920 = vpop.f32.mrf.mxu0
      %v10921 = vadd.f32 %v10832, %v10920
      %10922 = vmatmul.bf16.gmra.mxu0 %v9646
      %v10923 = vpop.f32.mrf.mxu0
      %v10924 = vadd.f32 %v10835, %v10923
      %v10925 = vpop.f32.mrf.mxu0
      %v10926 = vadd.f32 %v10837, %v10925
      %10927 = vmatmul.bf16.gmra.mxu0 %v9655
      %v10928 = vpop.f32.mrf.mxu0
      %v10929 = vadd.f32 %v10840, %v10928
      %v10930 = vpop.f32.mrf.mxu0
      %v10931 = vadd.f32 %v10842, %v10930
      %10932 = vmatmul.bf16.gmra.mxu0 %v9664
      %v10933 = vpop.f32.mrf.mxu0
      %v10934 = vadd.f32 %v10845, %v10933
      %v10935 = vpop.f32.mrf.mxu0
      %v10936 = vadd.f32 %v10847, %v10935
      %10937 = vmatmul.bf16.gmra.mxu0 %v9673
      %v10938 = vpop.f32.mrf.mxu0
      %v10939 = vadd.f32 %v10850, %v10938
      %v10940 = vpop.f32.mrf.mxu0
      %v10941 = vadd.f32 %v10852, %v10940
      %10942 = vmatmul.bf16.gmra.mxu0 %v9682
      %v10943 = vpop.f32.mrf.mxu0
      %v10944 = vadd.f32 %v10855, %v10943
      %v10945 = vpop.f32.mrf.mxu0
      %v10946 = vadd.f32 %v10857, %v10945
      %10947 = vmatmul.bf16.gmra.mxu0 %v9691
      %v10948 = vpop.f32.mrf.mxu0
      %v10949 = vadd.f32 %v10860, %v10948
      %v10950 = vpop.f32.mrf.mxu0
      %v10951 = vadd.f32 %v10862, %v10950
      %10952 = vmatmul.bf16.gmra.mxu0 %v9700
      %v10953 = vpop.f32.mrf.mxu0
      %v10954 = vadd.f32 %v10865, %v10953
      %v10955 = vpop.f32.mrf.mxu0
      %v10956 = vadd.f32 %v10867, %v10955
      %10957 = vmatmul.bf16.gmra.mxu0 %v9709
      %v10958 = vpop.f32.mrf.mxu0
      %v10959 = vadd.f32 %v10870, %v10958
      %v10960 = vpop.f32.mrf.mxu0
      %v10961 = vadd.f32 %v10872, %v10960
      %10962 = vmatmul.bf16.gmra.mxu0 %v9718
      %v10963 = vpop.f32.mrf.mxu0
      %v10964 = vadd.f32 %v10875, %v10963
      %v10965 = vpop.f32.mrf.mxu0
      %v10966 = vadd.f32 %v10877, %v10965
      %10967 = vmatmul.bf16.gmra.mxu0 %v9727
      %v10968 = vpop.f32.mrf.mxu0
      %v10969 = vadd.f32 %v10880, %v10968
      %v10970 = vpop.f32.mrf.mxu0
      %v10971 = vadd.f32 %v10882, %v10970
      %10972 = vmatmul.bf16.gmra.mxu0 %v9736
      %v10973 = vpop.f32.mrf.mxu0
      %v10974 = vadd.f32 %v10885, %v10973
      %v10975 = vpop.f32.mrf.mxu0
      %v10976 = vadd.f32 %v10887, %v10975
      %10977 = vmatmul.bf16.gmra.mxu0 %v9745
      %v10978 = vpop.f32.mrf.mxu0
      %v10979 = vadd.f32 %v10890, %v10978
      %v10980 = vpop.f32.mrf.mxu0
      %v10981 = vadd.f32 %v10892, %v10980
      %10982 = vmatmul.bf16.gmra.mxu0 %v9754
      %v10983 = vpop.f32.mrf.mxu0
      %v10984 = vadd.f32 %v10895, %v10983
      %v10985 = vpop.f32.mrf.mxu0
      %v10986 = vadd.f32 %v10897, %v10985
      %10987 = vmatmul.bf16.gmra.mxu0 %v9763
      %v10988 = vpop.f32.mrf.mxu0
      %v10989 = vadd.f32 %v10900, %v10988
      %v10990 = vpop.f32.mrf.mxu0
      %v10991 = vadd.f32 %v10902, %v10990
      %10992 = vmatmul.bf16.gmra.mxu0 %v9772
      %v10993 = vpop.f32.mrf.mxu0
      %v10994 = vadd.f32 %v10905, %v10993
      %v10995 = vpop.f32.mrf.mxu0
      %v10996 = vadd.f32 %v10907, %v10995
      %10997 = vdwg.mxu0
      %10998 = vmatpush.bf16.msra.mxu0 %v10432
      %10999 = vmatpush.bf16.msra.mxu0 %v10430
      %11000 = vmatpush.bf16.msra.mxu0 %v10428
      %11001 = vmatpush.bf16.msra.mxu0 %v10426
      %11002 = vmatpush.bf16.msra.mxu0 %v10424
      %11003 = vmatpush.bf16.msra.mxu0 %v10422
      %11004 = vmatpush.bf16.msra.mxu0 %v10420
      %11005 = vmatpush.bf16.msra.mxu0 %v10418
      %11006 = vmatmul.bf16.gmra.mxu0 %v9638
      %v11007 = vpop.f32.mrf.mxu0
      %v11008 = vadd.f32 %v10919, %v11007
      %v11009 = vpop.f32.mrf.mxu0
      %v11010 = vadd.f32 %v10921, %v11009
      %11011 = vmatmul.bf16.gmra.mxu0 %v9647
      %v11012 = vpop.f32.mrf.mxu0
      %v11013 = vadd.f32 %v10924, %v11012
      %v11014 = vpop.f32.mrf.mxu0
      %v11015 = vadd.f32 %v10926, %v11014
      %11016 = vmatmul.bf16.gmra.mxu0 %v9656
      %v11017 = vpop.f32.mrf.mxu0
      %v11018 = vadd.f32 %v10929, %v11017
      %v11019 = vpop.f32.mrf.mxu0
      %v11020 = vadd.f32 %v10931, %v11019
      %11021 = vmatmul.bf16.gmra.mxu0 %v9665
      %v11022 = vpop.f32.mrf.mxu0
      %v11023 = vadd.f32 %v10934, %v11022
      %v11024 = vpop.f32.mrf.mxu0
      %v11025 = vadd.f32 %v10936, %v11024
      %11026 = vmatmul.bf16.gmra.mxu0 %v9674
      %v11027 = vpop.f32.mrf.mxu0
      %v11028 = vadd.f32 %v10939, %v11027
      %v11029 = vpop.f32.mrf.mxu0
      %v11030 = vadd.f32 %v10941, %v11029
      %11031 = vmatmul.bf16.gmra.mxu0 %v9683
      %v11032 = vpop.f32.mrf.mxu0
      %v11033 = vadd.f32 %v10944, %v11032
      %v11034 = vpop.f32.mrf.mxu0
      %v11035 = vadd.f32 %v10946, %v11034
      %11036 = vmatmul.bf16.gmra.mxu0 %v9692
      %v11037 = vpop.f32.mrf.mxu0
      %v11038 = vadd.f32 %v10949, %v11037
      %v11039 = vpop.f32.mrf.mxu0
      %v11040 = vadd.f32 %v10951, %v11039
      %11041 = vmatmul.bf16.gmra.mxu0 %v9701
      %v11042 = vpop.f32.mrf.mxu0
      %v11043 = vadd.f32 %v10954, %v11042
      %v11044 = vpop.f32.mrf.mxu0
      %v11045 = vadd.f32 %v10956, %v11044
      %11046 = vmatmul.bf16.gmra.mxu0 %v9710
      %v11047 = vpop.f32.mrf.mxu0
      %v11048 = vadd.f32 %v10959, %v11047
      %v11049 = vpop.f32.mrf.mxu0
      %v11050 = vadd.f32 %v10961, %v11049
      %11051 = vmatmul.bf16.gmra.mxu0 %v9719
      %v11052 = vpop.f32.mrf.mxu0
      %v11053 = vadd.f32 %v10964, %v11052
      %v11054 = vpop.f32.mrf.mxu0
      %v11055 = vadd.f32 %v10966, %v11054
      %11056 = vmatmul.bf16.gmra.mxu0 %v9728
      %v11057 = vpop.f32.mrf.mxu0
      %v11058 = vadd.f32 %v10969, %v11057
      %v11059 = vpop.f32.mrf.mxu0
      %v11060 = vadd.f32 %v10971, %v11059
      %11061 = vmatmul.bf16.gmra.mxu0 %v9737
      %v11062 = vpop.f32.mrf.mxu0
      %v11063 = vadd.f32 %v10974, %v11062
      %v11064 = vpop.f32.mrf.mxu0
      %v11065 = vadd.f32 %v10976, %v11064
      %11066 = vmatmul.bf16.gmra.mxu0 %v9746
      %v11067 = vpop.f32.mrf.mxu0
      %v11068 = vadd.f32 %v10979, %v11067
      %v11069 = vpop.f32.mrf.mxu0
      %v11070 = vadd.f32 %v10981, %v11069
      %11071 = vmatmul.bf16.gmra.mxu0 %v9755
      %v11072 = vpop.f32.mrf.mxu0
      %v11073 = vadd.f32 %v10984, %v11072
      %v11074 = vpop.f32.mrf.mxu0
      %v11075 = vadd.f32 %v10986, %v11074
      %11076 = vmatmul.bf16.gmra.mxu0 %v9764
      %v11077 = vpop.f32.mrf.mxu0
      %v11078 = vadd.f32 %v10989, %v11077
      %v11079 = vpop.f32.mrf.mxu0
      %v11080 = vadd.f32 %v10991, %v11079
      %11081 = vmatmul.bf16.gmra.mxu0 %v9773
      %v11082 = vpop.f32.mrf.mxu0
      %v11083 = vadd.f32 %v10994, %v11082
      %v11084 = vpop.f32.mrf.mxu0
      %v11085 = vadd.f32 %v10996, %v11084
      %11086 = vdwg.mxu0
      %11087 = vmatpush.bf16.msra.mxu0 %v10448
      %11088 = vmatpush.bf16.msra.mxu0 %v10446
      %11089 = vmatpush.bf16.msra.mxu0 %v10444
      %11090 = vmatpush.bf16.msra.mxu0 %v10442
      %11091 = vmatpush.bf16.msra.mxu0 %v10440
      %11092 = vmatpush.bf16.msra.mxu0 %v10438
      %11093 = vmatpush.bf16.msra.mxu0 %v10436
      %11094 = vmatpush.bf16.msra.mxu0 %v10434
      %11095 = vmatmul.bf16.gmra.mxu0 %v9639
      %v11096 = vpop.f32.mrf.mxu0
      %v11097 = vadd.f32 %v11008, %v11096
      %v11098 = vpop.f32.mrf.mxu0
      %v11099 = vadd.f32 %v11010, %v11098
      %11100 = vmatmul.bf16.gmra.mxu0 %v9648
      %v11101 = vpop.f32.mrf.mxu0
      %v11102 = vadd.f32 %v11013, %v11101
      %v11103 = vpop.f32.mrf.mxu0
      %v11104 = vadd.f32 %v11015, %v11103
      %11105 = vmatmul.bf16.gmra.mxu0 %v9657
      %v11106 = vpop.f32.mrf.mxu0
      %v11107 = vadd.f32 %v11018, %v11106
      %v11108 = vpop.f32.mrf.mxu0
      %v11109 = vadd.f32 %v11020, %v11108
      %11110 = vmatmul.bf16.gmra.mxu0 %v9666
      %v11111 = vpop.f32.mrf.mxu0
      %v11112 = vadd.f32 %v11023, %v11111
      %v11113 = vpop.f32.mrf.mxu0
      %v11114 = vadd.f32 %v11025, %v11113
      %11115 = vmatmul.bf16.gmra.mxu0 %v9675
      %v11116 = vpop.f32.mrf.mxu0
      %v11117 = vadd.f32 %v11028, %v11116
      %v11118 = vpop.f32.mrf.mxu0
      %v11119 = vadd.f32 %v11030, %v11118
      %11120 = vmatmul.bf16.gmra.mxu0 %v9684
      %v11121 = vpop.f32.mrf.mxu0
      %v11122 = vadd.f32 %v11033, %v11121
      %v11123 = vpop.f32.mrf.mxu0
      %v11124 = vadd.f32 %v11035, %v11123
      %11125 = vmatmul.bf16.gmra.mxu0 %v9693
      %v11126 = vpop.f32.mrf.mxu0
      %v11127 = vadd.f32 %v11038, %v11126
      %v11128 = vpop.f32.mrf.mxu0
      %v11129 = vadd.f32 %v11040, %v11128
      %11130 = vmatmul.bf16.gmra.mxu0 %v9702
      %v11131 = vpop.f32.mrf.mxu0
      %v11132 = vadd.f32 %v11043, %v11131
      %v11133 = vpop.f32.mrf.mxu0
      %v11134 = vadd.f32 %v11045, %v11133
      %11135 = vmatmul.bf16.gmra.mxu0 %v9711
      %v11136 = vpop.f32.mrf.mxu0
      %v11137 = vadd.f32 %v11048, %v11136
      %v11138 = vpop.f32.mrf.mxu0
      %v11139 = vadd.f32 %v11050, %v11138
      %11140 = vmatmul.bf16.gmra.mxu0 %v9720
      %v11141 = vpop.f32.mrf.mxu0
      %v11142 = vadd.f32 %v11053, %v11141
      %v11143 = vpop.f32.mrf.mxu0
      %v11144 = vadd.f32 %v11055, %v11143
      %11145 = vmatmul.bf16.gmra.mxu0 %v9729
      %v11146 = vpop.f32.mrf.mxu0
      %v11147 = vadd.f32 %v11058, %v11146
      %v11148 = vpop.f32.mrf.mxu0
      %v11149 = vadd.f32 %v11060, %v11148
      %11150 = vmatmul.bf16.gmra.mxu0 %v9738
      %v11151 = vpop.f32.mrf.mxu0
      %v11152 = vadd.f32 %v11063, %v11151
      %v11153 = vpop.f32.mrf.mxu0
      %v11154 = vadd.f32 %v11065, %v11153
      %11155 = vmatmul.bf16.gmra.mxu0 %v9747
      %v11156 = vpop.f32.mrf.mxu0
      %v11157 = vadd.f32 %v11068, %v11156
      %v11158 = vpop.f32.mrf.mxu0
      %v11159 = vadd.f32 %v11070, %v11158
      %11160 = vmatmul.bf16.gmra.mxu0 %v9756
      %v11161 = vpop.f32.mrf.mxu0
      %v11162 = vadd.f32 %v11073, %v11161
      %v11163 = vpop.f32.mrf.mxu0
      %v11164 = vadd.f32 %v11075, %v11163
      %11165 = vmatmul.bf16.gmra.mxu0 %v9765
      %v11166 = vpop.f32.mrf.mxu0
      %v11167 = vadd.f32 %v11078, %v11166
      %v11168 = vpop.f32.mrf.mxu0
      %v11169 = vadd.f32 %v11080, %v11168
      %11170 = vmatmul.bf16.gmra.mxu0 %v9774
      %v11171 = vpop.f32.mrf.mxu0
      %v11172 = vadd.f32 %v11083, %v11171
      %v11173 = vpop.f32.mrf.mxu0
      %v11174 = vadd.f32 %v11085, %v11173
      %11175 = vdwg.mxu0
      %11176 = vmatpush.bf16.msra.mxu0 %v10464
      %11177 = vmatpush.bf16.msra.mxu0 %v10462
      %11178 = vmatpush.bf16.msra.mxu0 %v10460
      %11179 = vmatpush.bf16.msra.mxu0 %v10458
      %11180 = vmatpush.bf16.msra.mxu0 %v10456
      %11181 = vmatpush.bf16.msra.mxu0 %v10454
      %11182 = vmatpush.bf16.msra.mxu0 %v10452
      %11183 = vmatpush.bf16.msra.mxu0 %v10450
      %11184 = vmatmul.bf16.gmra.mxu0 %v9640
      %v11185 = vpop.f32.mrf.mxu0
      %v11186 = vadd.f32 %v11097, %v11185
      %v11187 = vpop.f32.mrf.mxu0
      %v11188 = vadd.f32 %v11099, %v11187
      %11189 = vmatmul.bf16.gmra.mxu0 %v9649
      %v11190 = vpop.f32.mrf.mxu0
      %v11191 = vadd.f32 %v11102, %v11190
      %v11192 = vpop.f32.mrf.mxu0
      %v11193 = vadd.f32 %v11104, %v11192
      %11194 = vmatmul.bf16.gmra.mxu0 %v9658
      %v11195 = vpop.f32.mrf.mxu0
      %v11196 = vadd.f32 %v11107, %v11195
      %v11197 = vpop.f32.mrf.mxu0
      %v11198 = vadd.f32 %v11109, %v11197
      %11199 = vmatmul.bf16.gmra.mxu0 %v9667
      %v11200 = vpop.f32.mrf.mxu0
      %v11201 = vadd.f32 %v11112, %v11200
      %v11202 = vpop.f32.mrf.mxu0
      %v11203 = vadd.f32 %v11114, %v11202
      %11204 = vmatmul.bf16.gmra.mxu0 %v9676
      %v11205 = vpop.f32.mrf.mxu0
      %v11206 = vadd.f32 %v11117, %v11205
      %v11207 = vpop.f32.mrf.mxu0
      %v11208 = vadd.f32 %v11119, %v11207
      %11209 = vmatmul.bf16.gmra.mxu0 %v9685
      %v11210 = vpop.f32.mrf.mxu0
      %v11211 = vadd.f32 %v11122, %v11210
      %v11212 = vpop.f32.mrf.mxu0
      %v11213 = vadd.f32 %v11124, %v11212
      %11214 = vmatmul.bf16.gmra.mxu0 %v9694
      %v11215 = vpop.f32.mrf.mxu0
      %v11216 = vadd.f32 %v11127, %v11215
      %v11217 = vpop.f32.mrf.mxu0
      %v11218 = vadd.f32 %v11129, %v11217
      %11219 = vmatmul.bf16.gmra.mxu0 %v9703
      %v11220 = vpop.f32.mrf.mxu0
      %v11221 = vadd.f32 %v11132, %v11220
      %v11222 = vpop.f32.mrf.mxu0
      %v11223 = vadd.f32 %v11134, %v11222
      %11224 = vmatmul.bf16.gmra.mxu0 %v9712
      %v11225 = vpop.f32.mrf.mxu0
      %v11226 = vadd.f32 %v11137, %v11225
      %v11227 = vpop.f32.mrf.mxu0
      %v11228 = vadd.f32 %v11139, %v11227
      %11229 = vmatmul.bf16.gmra.mxu0 %v9721
      %v11230 = vpop.f32.mrf.mxu0
      %v11231 = vadd.f32 %v11142, %v11230
      %v11232 = vpop.f32.mrf.mxu0
      %v11233 = vadd.f32 %v11144, %v11232
      %11234 = vmatmul.bf16.gmra.mxu0 %v9730
      %v11235 = vpop.f32.mrf.mxu0
      %v11236 = vadd.f32 %v11147, %v11235
      %v11237 = vpop.f32.mrf.mxu0
      %v11238 = vadd.f32 %v11149, %v11237
      %11239 = vmatmul.bf16.gmra.mxu0 %v9739
      %v11240 = vpop.f32.mrf.mxu0
      %v11241 = vadd.f32 %v11152, %v11240
      %v11242 = vpop.f32.mrf.mxu0
      %v11243 = vadd.f32 %v11154, %v11242
      %11244 = vmatmul.bf16.gmra.mxu0 %v9748
      %v11245 = vpop.f32.mrf.mxu0
      %v11246 = vadd.f32 %v11157, %v11245
      %v11247 = vpop.f32.mrf.mxu0
      %v11248 = vadd.f32 %v11159, %v11247
      %11249 = vmatmul.bf16.gmra.mxu0 %v9757
      %v11250 = vpop.f32.mrf.mxu0
      %v11251 = vadd.f32 %v11162, %v11250
      %v11252 = vpop.f32.mrf.mxu0
      %v11253 = vadd.f32 %v11164, %v11252
      %11254 = vmatmul.bf16.gmra.mxu0 %v9766
      %v11255 = vpop.f32.mrf.mxu0
      %v11256 = vadd.f32 %v11167, %v11255
      %v11257 = vpop.f32.mrf.mxu0
      %v11258 = vadd.f32 %v11169, %v11257
      %11259 = vmatmul.bf16.gmra.mxu0 %v9775
      %v11260 = vpop.f32.mrf.mxu0
      %v11261 = vadd.f32 %v11172, %v11260
      %v11262 = vpop.f32.mrf.mxu0
      %v11263 = vadd.f32 %v11174, %v11262
      %11264 = vdwg.mxu0
      %11265 = vmatpush.bf16.msra.mxu0 %v10480
      %11266 = vmatpush.bf16.msra.mxu0 %v10478
      %11267 = vmatpush.bf16.msra.mxu0 %v10476
      %11268 = vmatpush.bf16.msra.mxu0 %v10474
      %11269 = vmatpush.bf16.msra.mxu0 %v10472
      %11270 = vmatpush.bf16.msra.mxu0 %v10470
      %11271 = vmatpush.bf16.msra.mxu0 %v10468
      %11272 = vmatpush.bf16.msra.mxu0 %v10466
      %11273 = vmatmul.bf16.gmra.mxu0 %v9641
      %v11274 = vpop.f32.mrf.mxu0
      %v11275 = vadd.f32 %v11186, %v11274
      %v11276 = vpop.f32.mrf.mxu0
      %v11277 = vadd.f32 %v11188, %v11276
      %11278 = vmatmul.bf16.gmra.mxu0 %v9650
      %v11279 = vpop.f32.mrf.mxu0
      %v11280 = vadd.f32 %v11191, %v11279
      %v11281 = vpop.f32.mrf.mxu0
      %v11282 = vadd.f32 %v11193, %v11281
      %11283 = vmatmul.bf16.gmra.mxu0 %v9659
      %v11284 = vpop.f32.mrf.mxu0
      %v11285 = vadd.f32 %v11196, %v11284
      %v11286 = vpop.f32.mrf.mxu0
      %v11287 = vadd.f32 %v11198, %v11286
      %11288 = vmatmul.bf16.gmra.mxu0 %v9668
      %v11289 = vpop.f32.mrf.mxu0
      %v11290 = vadd.f32 %v11201, %v11289
      %v11291 = vpop.f32.mrf.mxu0
      %v11292 = vadd.f32 %v11203, %v11291
      %11293 = vmatmul.bf16.gmra.mxu0 %v9677
      %v11294 = vpop.f32.mrf.mxu0
      %v11295 = vadd.f32 %v11206, %v11294
      %v11296 = vpop.f32.mrf.mxu0
      %v11297 = vadd.f32 %v11208, %v11296
      %11298 = vmatmul.bf16.gmra.mxu0 %v9686
      %v11299 = vpop.f32.mrf.mxu0
      %v11300 = vadd.f32 %v11211, %v11299
      %v11301 = vpop.f32.mrf.mxu0
      %v11302 = vadd.f32 %v11213, %v11301
      %11303 = vmatmul.bf16.gmra.mxu0 %v9695
      %v11304 = vpop.f32.mrf.mxu0
      %v11305 = vadd.f32 %v11216, %v11304
      %v11306 = vpop.f32.mrf.mxu0
      %v11307 = vadd.f32 %v11218, %v11306
      %11308 = vmatmul.bf16.gmra.mxu0 %v9704
      %v11309 = vpop.f32.mrf.mxu0
      %v11310 = vadd.f32 %v11221, %v11309
      %v11311 = vpop.f32.mrf.mxu0
      %v11312 = vadd.f32 %v11223, %v11311
      %11313 = vmatmul.bf16.gmra.mxu0 %v9713
      %v11314 = vpop.f32.mrf.mxu0
      %v11315 = vadd.f32 %v11226, %v11314
      %v11316 = vpop.f32.mrf.mxu0
      %v11317 = vadd.f32 %v11228, %v11316
      %11318 = vmatmul.bf16.gmra.mxu0 %v9722
      %v11319 = vpop.f32.mrf.mxu0
      %v11320 = vadd.f32 %v11231, %v11319
      %v11321 = vpop.f32.mrf.mxu0
      %v11322 = vadd.f32 %v11233, %v11321
      %11323 = vmatmul.bf16.gmra.mxu0 %v9731
      %v11324 = vpop.f32.mrf.mxu0
      %v11325 = vadd.f32 %v11236, %v11324
      %v11326 = vpop.f32.mrf.mxu0
      %v11327 = vadd.f32 %v11238, %v11326
      %11328 = vmatmul.bf16.gmra.mxu0 %v9740
      %v11329 = vpop.f32.mrf.mxu0
      %v11330 = vadd.f32 %v11241, %v11329
      %v11331 = vpop.f32.mrf.mxu0
      %v11332 = vadd.f32 %v11243, %v11331
      %11333 = vmatmul.bf16.gmra.mxu0 %v9749
      %v11334 = vpop.f32.mrf.mxu0
      %v11335 = vadd.f32 %v11246, %v11334
      %v11336 = vpop.f32.mrf.mxu0
      %v11337 = vadd.f32 %v11248, %v11336
      %11338 = vmatmul.bf16.gmra.mxu0 %v9758
      %v11339 = vpop.f32.mrf.mxu0
      %v11340 = vadd.f32 %v11251, %v11339
      %v11341 = vpop.f32.mrf.mxu0
      %v11342 = vadd.f32 %v11253, %v11341
      %11343 = vmatmul.bf16.gmra.mxu0 %v9767
      %v11344 = vpop.f32.mrf.mxu0
      %v11345 = vadd.f32 %v11256, %v11344
      %v11346 = vpop.f32.mrf.mxu0
      %v11347 = vadd.f32 %v11258, %v11346
      %11348 = vmatmul.bf16.gmra.mxu0 %v9776
      %v11349 = vpop.f32.mrf.mxu0
      %v11350 = vadd.f32 %v11261, %v11349
      %v11351 = vpop.f32.mrf.mxu0
      %v11352 = vadd.f32 %v11263, %v11351
      %11353 = vdwg.mxu0
      %11354 = vmatpush.bf16.msra.mxu0 %v10496
      %11355 = vmatpush.bf16.msra.mxu0 %v10494
      %11356 = vmatpush.bf16.msra.mxu0 %v10492
      %11357 = vmatpush.bf16.msra.mxu0 %v10490
      %11358 = vmatpush.bf16.msra.mxu0 %v10488
      %11359 = vmatpush.bf16.msra.mxu0 %v10486
      %11360 = vmatpush.bf16.msra.mxu0 %v10484
      %11361 = vmatpush.bf16.msra.mxu0 %v10482
      %11362 = vmatmul.bf16.gmra.mxu0 %v9642
      %v11363 = vpop.f32.mrf.mxu0
      %v11364 = vadd.f32 %v11275, %v11363
      %v11365 = vpop.f32.mrf.mxu0
      %v11366 = vadd.f32 %v11277, %v11365
      %11367 = vmatmul.bf16.gmra.mxu0 %v9651
      %v11368 = vpop.f32.mrf.mxu0
      %v11369 = vadd.f32 %v11280, %v11368
      %v11370 = vpop.f32.mrf.mxu0
      %v11371 = vadd.f32 %v11282, %v11370
      %11372 = vmatmul.bf16.gmra.mxu0 %v9660
      %v11373 = vpop.f32.mrf.mxu0
      %v11374 = vadd.f32 %v11285, %v11373
      %v11375 = vpop.f32.mrf.mxu0
      %v11376 = vadd.f32 %v11287, %v11375
      %11377 = vmatmul.bf16.gmra.mxu0 %v9669
      %v11378 = vpop.f32.mrf.mxu0
      %v11379 = vadd.f32 %v11290, %v11378
      %v11380 = vpop.f32.mrf.mxu0
      %v11381 = vadd.f32 %v11292, %v11380
      %11382 = vmatmul.bf16.gmra.mxu0 %v9678
      %v11383 = vpop.f32.mrf.mxu0
      %v11384 = vadd.f32 %v11295, %v11383
      %v11385 = vpop.f32.mrf.mxu0
      %v11386 = vadd.f32 %v11297, %v11385
      %11387 = vmatmul.bf16.gmra.mxu0 %v9687
      %v11388 = vpop.f32.mrf.mxu0
      %v11389 = vadd.f32 %v11300, %v11388
      %v11390 = vpop.f32.mrf.mxu0
      %v11391 = vadd.f32 %v11302, %v11390
      %11392 = vmatmul.bf16.gmra.mxu0 %v9696
      %v11393 = vpop.f32.mrf.mxu0
      %v11394 = vadd.f32 %v11305, %v11393
      %v11395 = vpop.f32.mrf.mxu0
      %v11396 = vadd.f32 %v11307, %v11395
      %11397 = vmatmul.bf16.gmra.mxu0 %v9705
      %v11398 = vpop.f32.mrf.mxu0
      %v11399 = vadd.f32 %v11310, %v11398
      %v11400 = vpop.f32.mrf.mxu0
      %v11401 = vadd.f32 %v11312, %v11400
      %11402 = vmatmul.bf16.gmra.mxu0 %v9714
      %v11403 = vpop.f32.mrf.mxu0
      %v11404 = vadd.f32 %v11315, %v11403
      %v11405 = vpop.f32.mrf.mxu0
      %v11406 = vadd.f32 %v11317, %v11405
      %11407 = vmatmul.bf16.gmra.mxu0 %v9723
      %v11408 = vpop.f32.mrf.mxu0
      %v11409 = vadd.f32 %v11320, %v11408
      %v11410 = vpop.f32.mrf.mxu0
      %v11411 = vadd.f32 %v11322, %v11410
      %11412 = vmatmul.bf16.gmra.mxu0 %v9732
      %v11413 = vpop.f32.mrf.mxu0
      %v11414 = vadd.f32 %v11325, %v11413
      %v11415 = vpop.f32.mrf.mxu0
      %v11416 = vadd.f32 %v11327, %v11415
      %11417 = vmatmul.bf16.gmra.mxu0 %v9741
      %v11418 = vpop.f32.mrf.mxu0
      %v11419 = vadd.f32 %v11330, %v11418
      %v11420 = vpop.f32.mrf.mxu0
      %v11421 = vadd.f32 %v11332, %v11420
      %11422 = vmatmul.bf16.gmra.mxu0 %v9750
      %v11423 = vpop.f32.mrf.mxu0
      %v11424 = vadd.f32 %v11335, %v11423
      %v11425 = vpop.f32.mrf.mxu0
      %v11426 = vadd.f32 %v11337, %v11425
      %11427 = vmatmul.bf16.gmra.mxu0 %v9759
      %v11428 = vpop.f32.mrf.mxu0
      %v11429 = vadd.f32 %v11340, %v11428
      %v11430 = vpop.f32.mrf.mxu0
      %v11431 = vadd.f32 %v11342, %v11430
      %11432 = vmatmul.bf16.gmra.mxu0 %v9768
      %v11433 = vpop.f32.mrf.mxu0
      %v11434 = vadd.f32 %v11345, %v11433
      %v11435 = vpop.f32.mrf.mxu0
      %v11436 = vadd.f32 %v11347, %v11435
      %11437 = vmatmul.bf16.gmra.mxu0 %v9777
      %v11438 = vpop.f32.mrf.mxu0
      %v11439 = vadd.f32 %v11350, %v11438
      %v11440 = vpop.f32.mrf.mxu0
      %v11441 = vadd.f32 %v11352, %v11440
      %11442 = vdwg.mxu0
      %11443 = vmatpush.bf16.msra.mxu0 %v10369
      %11444 = vmatpush.bf16.msra.mxu0 %v10367
      %11445 = vmatpush.bf16.msra.mxu0 %v10365
      %11446 = vmatpush.bf16.msra.mxu0 %v10363
      %11447 = vmatpush.bf16.msra.mxu0 %v10361
      %11448 = vmatpush.bf16.msra.mxu0 %v10359
      %11449 = vmatpush.bf16.msra.mxu0 %v10357
      %11450 = vmatpush.bf16.msra.mxu0 %v10355
      %11451 = vmatmul.bf16.gmra.mxu0 %v9634
      %v11452 = vpop.f32.mrf.mxu0
      %v11453 = vadd.f32 %v9183, %v11452
      %v11454 = vpop.f32.mrf.mxu0
      %v11455 = vadd.f32 %v9183, %v11454
      %11456 = vmatmul.bf16.gmra.mxu0 %v9643
      %v11457 = vpop.f32.mrf.mxu0
      %v11458 = vadd.f32 %v9183, %v11457
      %v11459 = vpop.f32.mrf.mxu0
      %v11460 = vadd.f32 %v9183, %v11459
      %11461 = vmatmul.bf16.gmra.mxu0 %v9652
      %v11462 = vpop.f32.mrf.mxu0
      %v11463 = vadd.f32 %v9183, %v11462
      %v11464 = vpop.f32.mrf.mxu0
      %v11465 = vadd.f32 %v9183, %v11464
      %11466 = vmatmul.bf16.gmra.mxu0 %v9661
      %v11467 = vpop.f32.mrf.mxu0
      %v11468 = vadd.f32 %v9183, %v11467
      %v11469 = vpop.f32.mrf.mxu0
      %v11470 = vadd.f32 %v9183, %v11469
      %11471 = vmatmul.bf16.gmra.mxu0 %v9670
      %v11472 = vpop.f32.mrf.mxu0
      %v11473 = vadd.f32 %v9183, %v11472
      %v11474 = vpop.f32.mrf.mxu0
      %v11475 = vadd.f32 %v9183, %v11474
      %11476 = vmatmul.bf16.gmra.mxu0 %v9679
      %v11477 = vpop.f32.mrf.mxu0
      %v11478 = vadd.f32 %v9183, %v11477
      %v11479 = vpop.f32.mrf.mxu0
      %v11480 = vadd.f32 %v9183, %v11479
      %11481 = vmatmul.bf16.gmra.mxu0 %v9688
      %v11482 = vpop.f32.mrf.mxu0
      %v11483 = vadd.f32 %v9183, %v11482
      %v11484 = vpop.f32.mrf.mxu0
      %v11485 = vadd.f32 %v9183, %v11484
      %11486 = vmatmul.bf16.gmra.mxu0 %v9697
      %v11487 = vpop.f32.mrf.mxu0
      %v11488 = vadd.f32 %v9183, %v11487
      %v11489 = vpop.f32.mrf.mxu0
      %v11490 = vadd.f32 %v9183, %v11489
      %11491 = vmatmul.bf16.gmra.mxu0 %v9706
      %v11492 = vpop.f32.mrf.mxu0
      %v11493 = vadd.f32 %v9183, %v11492
      %v11494 = vpop.f32.mrf.mxu0
      %v11495 = vadd.f32 %v9183, %v11494
      %11496 = vmatmul.bf16.gmra.mxu0 %v9715
      %v11497 = vpop.f32.mrf.mxu0
      %v11498 = vadd.f32 %v9183, %v11497
      %v11499 = vpop.f32.mrf.mxu0
      %v11500 = vadd.f32 %v9183, %v11499
      %11501 = vmatmul.bf16.gmra.mxu0 %v9724
      %v11502 = vpop.f32.mrf.mxu0
      %v11503 = vadd.f32 %v9183, %v11502
      %v11504 = vpop.f32.mrf.mxu0
      %v11505 = vadd.f32 %v9183, %v11504
      %11506 = vmatmul.bf16.gmra.mxu0 %v9733
      %v11507 = vpop.f32.mrf.mxu0
      %v11508 = vadd.f32 %v9183, %v11507
      %v11509 = vpop.f32.mrf.mxu0
      %v11510 = vadd.f32 %v9183, %v11509
      %11511 = vmatmul.bf16.gmra.mxu0 %v9742
      %v11512 = vpop.f32.mrf.mxu0
      %v11513 = vadd.f32 %v9183, %v11512
      %v11514 = vpop.f32.mrf.mxu0
      %v11515 = vadd.f32 %v9183, %v11514
      %11516 = vmatmul.bf16.gmra.mxu0 %v9751
      %v11517 = vpop.f32.mrf.mxu0
      %v11518 = vadd.f32 %v9183, %v11517
      %v11519 = vpop.f32.mrf.mxu0
      %v11520 = vadd.f32 %v9183, %v11519
      %11521 = vmatmul.bf16.gmra.mxu0 %v9760
      %v11522 = vpop.f32.mrf.mxu0
      %v11523 = vadd.f32 %v9183, %v11522
      %v11524 = vpop.f32.mrf.mxu0
      %v11525 = vadd.f32 %v9183, %v11524
      %11526 = vmatmul.bf16.gmra.mxu0 %v9769
      %v11527 = vpop.f32.mrf.mxu0
      %v11528 = vadd.f32 %v9183, %v11527
      %v11529 = vpop.f32.mrf.mxu0
      %v11530 = vadd.f32 %v9183, %v11529
      %11531 = vdwg.mxu0
      %11532 = vmatpush.bf16.msra.mxu0 %v10385
      %11533 = vmatpush.bf16.msra.mxu0 %v10383
      %11534 = vmatpush.bf16.msra.mxu0 %v10381
      %11535 = vmatpush.bf16.msra.mxu0 %v10379
      %11536 = vmatpush.bf16.msra.mxu0 %v10377
      %11537 = vmatpush.bf16.msra.mxu0 %v10375
      %11538 = vmatpush.bf16.msra.mxu0 %v10373
      %11539 = vmatpush.bf16.msra.mxu0 %v10371
      %11540 = vmatmul.bf16.gmra.mxu0 %v9635
      %v11541 = vpop.f32.mrf.mxu0
      %v11542 = vadd.f32 %v11453, %v11541
      %v11543 = vpop.f32.mrf.mxu0
      %v11544 = vadd.f32 %v11455, %v11543
      %11545 = vmatmul.bf16.gmra.mxu0 %v9644
      %v11546 = vpop.f32.mrf.mxu0
      %v11547 = vadd.f32 %v11458, %v11546
      %v11548 = vpop.f32.mrf.mxu0
      %v11549 = vadd.f32 %v11460, %v11548
      %11550 = vmatmul.bf16.gmra.mxu0 %v9653
      %v11551 = vpop.f32.mrf.mxu0
      %v11552 = vadd.f32 %v11463, %v11551
      %v11553 = vpop.f32.mrf.mxu0
      %v11554 = vadd.f32 %v11465, %v11553
      %11555 = vmatmul.bf16.gmra.mxu0 %v9662
      %v11556 = vpop.f32.mrf.mxu0
      %v11557 = vadd.f32 %v11468, %v11556
      %v11558 = vpop.f32.mrf.mxu0
      %v11559 = vadd.f32 %v11470, %v11558
      %11560 = vmatmul.bf16.gmra.mxu0 %v9671
      %v11561 = vpop.f32.mrf.mxu0
      %v11562 = vadd.f32 %v11473, %v11561
      %v11563 = vpop.f32.mrf.mxu0
      %v11564 = vadd.f32 %v11475, %v11563
      %11565 = vmatmul.bf16.gmra.mxu0 %v9680
      %v11566 = vpop.f32.mrf.mxu0
      %v11567 = vadd.f32 %v11478, %v11566
      %v11568 = vpop.f32.mrf.mxu0
      %v11569 = vadd.f32 %v11480, %v11568
      %11570 = vmatmul.bf16.gmra.mxu0 %v9689
      %v11571 = vpop.f32.mrf.mxu0
      %v11572 = vadd.f32 %v11483, %v11571
      %v11573 = vpop.f32.mrf.mxu0
      %v11574 = vadd.f32 %v11485, %v11573
      %11575 = vmatmul.bf16.gmra.mxu0 %v9698
      %v11576 = vpop.f32.mrf.mxu0
      %v11577 = vadd.f32 %v11488, %v11576
      %v11578 = vpop.f32.mrf.mxu0
      %v11579 = vadd.f32 %v11490, %v11578
      %11580 = vmatmul.bf16.gmra.mxu0 %v9707
      %v11581 = vpop.f32.mrf.mxu0
      %v11582 = vadd.f32 %v11493, %v11581
      %v11583 = vpop.f32.mrf.mxu0
      %v11584 = vadd.f32 %v11495, %v11583
      %11585 = vmatmul.bf16.gmra.mxu0 %v9716
      %v11586 = vpop.f32.mrf.mxu0
      %v11587 = vadd.f32 %v11498, %v11586
      %v11588 = vpop.f32.mrf.mxu0
      %v11589 = vadd.f32 %v11500, %v11588
      %11590 = vmatmul.bf16.gmra.mxu0 %v9725
      %v11591 = vpop.f32.mrf.mxu0
      %v11592 = vadd.f32 %v11503, %v11591
      %v11593 = vpop.f32.mrf.mxu0
      %v11594 = vadd.f32 %v11505, %v11593
      %11595 = vmatmul.bf16.gmra.mxu0 %v9734
      %v11596 = vpop.f32.mrf.mxu0
      %v11597 = vadd.f32 %v11508, %v11596
      %v11598 = vpop.f32.mrf.mxu0
      %v11599 = vadd.f32 %v11510, %v11598
      %11600 = vmatmul.bf16.gmra.mxu0 %v9743
      %v11601 = vpop.f32.mrf.mxu0
      %v11602 = vadd.f32 %v11513, %v11601
      %v11603 = vpop.f32.mrf.mxu0
      %v11604 = vadd.f32 %v11515, %v11603
      %11605 = vmatmul.bf16.gmra.mxu0 %v9752
      %v11606 = vpop.f32.mrf.mxu0
      %v11607 = vadd.f32 %v11518, %v11606
      %v11608 = vpop.f32.mrf.mxu0
      %v11609 = vadd.f32 %v11520, %v11608
      %11610 = vmatmul.bf16.gmra.mxu0 %v9761
      %v11611 = vpop.f32.mrf.mxu0
      %v11612 = vadd.f32 %v11523, %v11611
      %v11613 = vpop.f32.mrf.mxu0
      %v11614 = vadd.f32 %v11525, %v11613
      %11615 = vmatmul.bf16.gmra.mxu0 %v9770
      %v11616 = vpop.f32.mrf.mxu0
      %v11617 = vadd.f32 %v11528, %v11616
      %v11618 = vpop.f32.mrf.mxu0
      %v11619 = vadd.f32 %v11530, %v11618
      %11620 = vdwg.mxu0
      %11621 = vmatpush.bf16.msra.mxu0 %v10401
      %11622 = vmatpush.bf16.msra.mxu0 %v10399
      %11623 = vmatpush.bf16.msra.mxu0 %v10397
      %11624 = vmatpush.bf16.msra.mxu0 %v10395
      %11625 = vmatpush.bf16.msra.mxu0 %v10393
      %11626 = vmatpush.bf16.msra.mxu0 %v10391
      %11627 = vmatpush.bf16.msra.mxu0 %v10389
      %11628 = vmatpush.bf16.msra.mxu0 %v10387
      %11629 = vmatmul.bf16.gmra.mxu0 %v9636
      %v11630 = vpop.f32.mrf.mxu0
      %v11631 = vadd.f32 %v11542, %v11630
      %v11632 = vpop.f32.mrf.mxu0
      %v11633 = vadd.f32 %v11544, %v11632
      %11634 = vmatmul.bf16.gmra.mxu0 %v9645
      %v11635 = vpop.f32.mrf.mxu0
      %v11636 = vadd.f32 %v11547, %v11635
      %v11637 = vpop.f32.mrf.mxu0
      %v11638 = vadd.f32 %v11549, %v11637
      %11639 = vmatmul.bf16.gmra.mxu0 %v9654
      %v11640 = vpop.f32.mrf.mxu0
      %v11641 = vadd.f32 %v11552, %v11640
      %v11642 = vpop.f32.mrf.mxu0
      %v11643 = vadd.f32 %v11554, %v11642
      %11644 = vmatmul.bf16.gmra.mxu0 %v9663
      %v11645 = vpop.f32.mrf.mxu0
      %v11646 = vadd.f32 %v11557, %v11645
      %v11647 = vpop.f32.mrf.mxu0
      %v11648 = vadd.f32 %v11559, %v11647
      %11649 = vmatmul.bf16.gmra.mxu0 %v9672
      %v11650 = vpop.f32.mrf.mxu0
      %v11651 = vadd.f32 %v11562, %v11650
      %v11652 = vpop.f32.mrf.mxu0
      %v11653 = vadd.f32 %v11564, %v11652
      %11654 = vmatmul.bf16.gmra.mxu0 %v9681
      %v11655 = vpop.f32.mrf.mxu0
      %v11656 = vadd.f32 %v11567, %v11655
      %v11657 = vpop.f32.mrf.mxu0
      %v11658 = vadd.f32 %v11569, %v11657
      %11659 = vmatmul.bf16.gmra.mxu0 %v9690
      %v11660 = vpop.f32.mrf.mxu0
      %v11661 = vadd.f32 %v11572, %v11660
      %v11662 = vpop.f32.mrf.mxu0
      %v11663 = vadd.f32 %v11574, %v11662
      %11664 = vmatmul.bf16.gmra.mxu0 %v9699
      %v11665 = vpop.f32.mrf.mxu0
      %v11666 = vadd.f32 %v11577, %v11665
      %v11667 = vpop.f32.mrf.mxu0
      %v11668 = vadd.f32 %v11579, %v11667
      %11669 = vmatmul.bf16.gmra.mxu0 %v9708
      %v11670 = vpop.f32.mrf.mxu0
      %v11671 = vadd.f32 %v11582, %v11670
      %v11672 = vpop.f32.mrf.mxu0
      %v11673 = vadd.f32 %v11584, %v11672
      %11674 = vmatmul.bf16.gmra.mxu0 %v9717
      %v11675 = vpop.f32.mrf.mxu0
      %v11676 = vadd.f32 %v11587, %v11675
      %v11677 = vpop.f32.mrf.mxu0
      %v11678 = vadd.f32 %v11589, %v11677
      %11679 = vmatmul.bf16.gmra.mxu0 %v9726
      %v11680 = vpop.f32.mrf.mxu0
      %v11681 = vadd.f32 %v11592, %v11680
      %v11682 = vpop.f32.mrf.mxu0
      %v11683 = vadd.f32 %v11594, %v11682
      %11684 = vmatmul.bf16.gmra.mxu0 %v9735
      %v11685 = vpop.f32.mrf.mxu0
      %v11686 = vadd.f32 %v11597, %v11685
      %v11687 = vpop.f32.mrf.mxu0
      %v11688 = vadd.f32 %v11599, %v11687
      %11689 = vmatmul.bf16.gmra.mxu0 %v9744
      %v11690 = vpop.f32.mrf.mxu0
      %v11691 = vadd.f32 %v11602, %v11690
      %v11692 = vpop.f32.mrf.mxu0
      %v11693 = vadd.f32 %v11604, %v11692
      %11694 = vmatmul.bf16.gmra.mxu0 %v9753
      %v11695 = vpop.f32.mrf.mxu0
      %v11696 = vadd.f32 %v11607, %v11695
      %v11697 = vpop.f32.mrf.mxu0
      %v11698 = vadd.f32 %v11609, %v11697
      %11699 = vmatmul.bf16.gmra.mxu0 %v9762
      %v11700 = vpop.f32.mrf.mxu0
      %v11701 = vadd.f32 %v11612, %v11700
      %v11702 = vpop.f32.mrf.mxu0
      %v11703 = vadd.f32 %v11614, %v11702
      %11704 = vmatmul.bf16.gmra.mxu0 %v9771
      %v11705 = vpop.f32.mrf.mxu0
      %v11706 = vadd.f32 %v11617, %v11705
      %v11707 = vpop.f32.mrf.mxu0
      %v11708 = vadd.f32 %v11619, %v11707
      %11709 = vdwg.mxu0
      %11710 = vmatpush.bf16.msra.mxu0 %v10417
      %11711 = vmatpush.bf16.msra.mxu0 %v10415
      %11712 = vmatpush.bf16.msra.mxu0 %v10413
      %11713 = vmatpush.bf16.msra.mxu0 %v10411
      %11714 = vmatpush.bf16.msra.mxu0 %v10409
      %11715 = vmatpush.bf16.msra.mxu0 %v10407
      %11716 = vmatpush.bf16.msra.mxu0 %v10405
      %11717 = vmatpush.bf16.msra.mxu0 %v10403
      %11718 = vmatmul.bf16.gmra.mxu0 %v9637
      %v11719 = vpop.f32.mrf.mxu0
      %v11720 = vadd.f32 %v11631, %v11719
      %v11721 = vpop.f32.mrf.mxu0
      %v11722 = vadd.f32 %v11633, %v11721
      %11723 = vmatmul.bf16.gmra.mxu0 %v9646
      %v11724 = vpop.f32.mrf.mxu0
      %v11725 = vadd.f32 %v11636, %v11724
      %v11726 = vpop.f32.mrf.mxu0
      %v11727 = vadd.f32 %v11638, %v11726
      %11728 = vmatmul.bf16.gmra.mxu0 %v9655
      %v11729 = vpop.f32.mrf.mxu0
      %v11730 = vadd.f32 %v11641, %v11729
      %v11731 = vpop.f32.mrf.mxu0
      %v11732 = vadd.f32 %v11643, %v11731
      %11733 = vmatmul.bf16.gmra.mxu0 %v9664
      %v11734 = vpop.f32.mrf.mxu0
      %v11735 = vadd.f32 %v11646, %v11734
      %v11736 = vpop.f32.mrf.mxu0
      %v11737 = vadd.f32 %v11648, %v11736
      %11738 = vmatmul.bf16.gmra.mxu0 %v9673
      %v11739 = vpop.f32.mrf.mxu0
      %v11740 = vadd.f32 %v11651, %v11739
      %v11741 = vpop.f32.mrf.mxu0
      %v11742 = vadd.f32 %v11653, %v11741
      %11743 = vmatmul.bf16.gmra.mxu0 %v9682
      %v11744 = vpop.f32.mrf.mxu0
      %v11745 = vadd.f32 %v11656, %v11744
      %v11746 = vpop.f32.mrf.mxu0
      %v11747 = vadd.f32 %v11658, %v11746
      %11748 = vmatmul.bf16.gmra.mxu0 %v9691
      %v11749 = vpop.f32.mrf.mxu0
      %v11750 = vadd.f32 %v11661, %v11749
      %v11751 = vpop.f32.mrf.mxu0
      %v11752 = vadd.f32 %v11663, %v11751
      %11753 = vmatmul.bf16.gmra.mxu0 %v9700
      %v11754 = vpop.f32.mrf.mxu0
      %v11755 = vadd.f32 %v11666, %v11754
      %v11756 = vpop.f32.mrf.mxu0
      %v11757 = vadd.f32 %v11668, %v11756
      %11758 = vmatmul.bf16.gmra.mxu0 %v9709
      %v11759 = vpop.f32.mrf.mxu0
      %v11760 = vadd.f32 %v11671, %v11759
      %v11761 = vpop.f32.mrf.mxu0
      %v11762 = vadd.f32 %v11673, %v11761
      %11763 = vmatmul.bf16.gmra.mxu0 %v9718
      %v11764 = vpop.f32.mrf.mxu0
      %v11765 = vadd.f32 %v11676, %v11764
      %v11766 = vpop.f32.mrf.mxu0
      %v11767 = vadd.f32 %v11678, %v11766
      %11768 = vmatmul.bf16.gmra.mxu0 %v9727
      %v11769 = vpop.f32.mrf.mxu0
      %v11770 = vadd.f32 %v11681, %v11769
      %v11771 = vpop.f32.mrf.mxu0
      %v11772 = vadd.f32 %v11683, %v11771
      %11773 = vmatmul.bf16.gmra.mxu0 %v9736
      %v11774 = vpop.f32.mrf.mxu0
      %v11775 = vadd.f32 %v11686, %v11774
      %v11776 = vpop.f32.mrf.mxu0
      %v11777 = vadd.f32 %v11688, %v11776
      %11778 = vmatmul.bf16.gmra.mxu0 %v9745
      %v11779 = vpop.f32.mrf.mxu0
      %v11780 = vadd.f32 %v11691, %v11779
      %v11781 = vpop.f32.mrf.mxu0
      %v11782 = vadd.f32 %v11693, %v11781
      %11783 = vmatmul.bf16.gmra.mxu0 %v9754
      %v11784 = vpop.f32.mrf.mxu0
      %v11785 = vadd.f32 %v11696, %v11784
      %v11786 = vpop.f32.mrf.mxu0
      %v11787 = vadd.f32 %v11698, %v11786
      %11788 = vmatmul.bf16.gmra.mxu0 %v9763
      %v11789 = vpop.f32.mrf.mxu0
      %v11790 = vadd.f32 %v11701, %v11789
      %v11791 = vpop.f32.mrf.mxu0
      %v11792 = vadd.f32 %v11703, %v11791
      %11793 = vmatmul.bf16.gmra.mxu0 %v9772
      %v11794 = vpop.f32.mrf.mxu0
      %v11795 = vadd.f32 %v11706, %v11794
      %v11796 = vpop.f32.mrf.mxu0
      %v11797 = vadd.f32 %v11708, %v11796
      %11798 = vdwg.mxu0
      %11799 = vmatpush.bf16.msra.mxu0 %v10433
      %11800 = vmatpush.bf16.msra.mxu0 %v10431
      %11801 = vmatpush.bf16.msra.mxu0 %v10429
      %11802 = vmatpush.bf16.msra.mxu0 %v10427
      %11803 = vmatpush.bf16.msra.mxu0 %v10425
      %11804 = vmatpush.bf16.msra.mxu0 %v10423
      %11805 = vmatpush.bf16.msra.mxu0 %v10421
      %11806 = vmatpush.bf16.msra.mxu0 %v10419
      %11807 = vmatmul.bf16.gmra.mxu0 %v9638
      %v11808 = vpop.f32.mrf.mxu0
      %v11809 = vadd.f32 %v11720, %v11808
      %v11810 = vpop.f32.mrf.mxu0
      %v11811 = vadd.f32 %v11722, %v11810
      %11812 = vmatmul.bf16.gmra.mxu0 %v9647
      %v11813 = vpop.f32.mrf.mxu0
      %v11814 = vadd.f32 %v11725, %v11813
      %v11815 = vpop.f32.mrf.mxu0
      %v11816 = vadd.f32 %v11727, %v11815
      %11817 = vmatmul.bf16.gmra.mxu0 %v9656
      %v11818 = vpop.f32.mrf.mxu0
      %v11819 = vadd.f32 %v11730, %v11818
      %v11820 = vpop.f32.mrf.mxu0
      %v11821 = vadd.f32 %v11732, %v11820
      %11822 = vmatmul.bf16.gmra.mxu0 %v9665
      %v11823 = vpop.f32.mrf.mxu0
      %v11824 = vadd.f32 %v11735, %v11823
      %v11825 = vpop.f32.mrf.mxu0
      %v11826 = vadd.f32 %v11737, %v11825
      %11827 = vmatmul.bf16.gmra.mxu0 %v9674
      %v11828 = vpop.f32.mrf.mxu0
      %v11829 = vadd.f32 %v11740, %v11828
      %v11830 = vpop.f32.mrf.mxu0
      %v11831 = vadd.f32 %v11742, %v11830
      %11832 = vmatmul.bf16.gmra.mxu0 %v9683
      %v11833 = vpop.f32.mrf.mxu0
      %v11834 = vadd.f32 %v11745, %v11833
      %v11835 = vpop.f32.mrf.mxu0
      %v11836 = vadd.f32 %v11747, %v11835
      %11837 = vmatmul.bf16.gmra.mxu0 %v9692
      %v11838 = vpop.f32.mrf.mxu0
      %v11839 = vadd.f32 %v11750, %v11838
      %v11840 = vpop.f32.mrf.mxu0
      %v11841 = vadd.f32 %v11752, %v11840
      %11842 = vmatmul.bf16.gmra.mxu0 %v9701
      %v11843 = vpop.f32.mrf.mxu0
      %v11844 = vadd.f32 %v11755, %v11843
      %v11845 = vpop.f32.mrf.mxu0
      %v11846 = vadd.f32 %v11757, %v11845
      %11847 = vmatmul.bf16.gmra.mxu0 %v9710
      %v11848 = vpop.f32.mrf.mxu0
      %v11849 = vadd.f32 %v11760, %v11848
      %v11850 = vpop.f32.mrf.mxu0
      %v11851 = vadd.f32 %v11762, %v11850
      %11852 = vmatmul.bf16.gmra.mxu0 %v9719
      %v11853 = vpop.f32.mrf.mxu0
      %v11854 = vadd.f32 %v11765, %v11853
      %v11855 = vpop.f32.mrf.mxu0
      %v11856 = vadd.f32 %v11767, %v11855
      %11857 = vmatmul.bf16.gmra.mxu0 %v9728
      %v11858 = vpop.f32.mrf.mxu0
      %v11859 = vadd.f32 %v11770, %v11858
      %v11860 = vpop.f32.mrf.mxu0
      %v11861 = vadd.f32 %v11772, %v11860
      %11862 = vmatmul.bf16.gmra.mxu0 %v9737
      %v11863 = vpop.f32.mrf.mxu0
      %v11864 = vadd.f32 %v11775, %v11863
      %v11865 = vpop.f32.mrf.mxu0
      %v11866 = vadd.f32 %v11777, %v11865
      %11867 = vmatmul.bf16.gmra.mxu0 %v9746
      %v11868 = vpop.f32.mrf.mxu0
      %v11869 = vadd.f32 %v11780, %v11868
      %v11870 = vpop.f32.mrf.mxu0
      %v11871 = vadd.f32 %v11782, %v11870
      %11872 = vmatmul.bf16.gmra.mxu0 %v9755
      %v11873 = vpop.f32.mrf.mxu0
      %v11874 = vadd.f32 %v11785, %v11873
      %v11875 = vpop.f32.mrf.mxu0
      %v11876 = vadd.f32 %v11787, %v11875
      %11877 = vmatmul.bf16.gmra.mxu0 %v9764
      %v11878 = vpop.f32.mrf.mxu0
      %v11879 = vadd.f32 %v11790, %v11878
      %v11880 = vpop.f32.mrf.mxu0
      %v11881 = vadd.f32 %v11792, %v11880
      %11882 = vmatmul.bf16.gmra.mxu0 %v9773
      %v11883 = vpop.f32.mrf.mxu0
      %v11884 = vadd.f32 %v11795, %v11883
      %v11885 = vpop.f32.mrf.mxu0
      %v11886 = vadd.f32 %v11797, %v11885
      %11887 = vdwg.mxu0
      %11888 = vmatpush.bf16.msra.mxu0 %v10449
      %11889 = vmatpush.bf16.msra.mxu0 %v10447
      %11890 = vmatpush.bf16.msra.mxu0 %v10445
      %11891 = vmatpush.bf16.msra.mxu0 %v10443
      %11892 = vmatpush.bf16.msra.mxu0 %v10441
      %11893 = vmatpush.bf16.msra.mxu0 %v10439
      %11894 = vmatpush.bf16.msra.mxu0 %v10437
      %11895 = vmatpush.bf16.msra.mxu0 %v10435
      %11896 = vmatmul.bf16.gmra.mxu0 %v9639
      %v11897 = vpop.f32.mrf.mxu0
      %v11898 = vadd.f32 %v11809, %v11897
      %v11899 = vpop.f32.mrf.mxu0
      %v11900 = vadd.f32 %v11811, %v11899
      %11901 = vmatmul.bf16.gmra.mxu0 %v9648
      %v11902 = vpop.f32.mrf.mxu0
      %v11903 = vadd.f32 %v11814, %v11902
      %v11904 = vpop.f32.mrf.mxu0
      %v11905 = vadd.f32 %v11816, %v11904
      %11906 = vmatmul.bf16.gmra.mxu0 %v9657
      %v11907 = vpop.f32.mrf.mxu0
      %v11908 = vadd.f32 %v11819, %v11907
      %v11909 = vpop.f32.mrf.mxu0
      %v11910 = vadd.f32 %v11821, %v11909
      %11911 = vmatmul.bf16.gmra.mxu0 %v9666
      %v11912 = vpop.f32.mrf.mxu0
      %v11913 = vadd.f32 %v11824, %v11912
      %v11914 = vpop.f32.mrf.mxu0
      %v11915 = vadd.f32 %v11826, %v11914
      %11916 = vmatmul.bf16.gmra.mxu0 %v9675
      %v11917 = vpop.f32.mrf.mxu0
      %v11918 = vadd.f32 %v11829, %v11917
      %v11919 = vpop.f32.mrf.mxu0
      %v11920 = vadd.f32 %v11831, %v11919
      %11921 = vmatmul.bf16.gmra.mxu0 %v9684
      %v11922 = vpop.f32.mrf.mxu0
      %v11923 = vadd.f32 %v11834, %v11922
      %v11924 = vpop.f32.mrf.mxu0
      %v11925 = vadd.f32 %v11836, %v11924
      %11926 = vmatmul.bf16.gmra.mxu0 %v9693
      %v11927 = vpop.f32.mrf.mxu0
      %v11928 = vadd.f32 %v11839, %v11927
      %v11929 = vpop.f32.mrf.mxu0
      %v11930 = vadd.f32 %v11841, %v11929
      %11931 = vmatmul.bf16.gmra.mxu0 %v9702
      %v11932 = vpop.f32.mrf.mxu0
      %v11933 = vadd.f32 %v11844, %v11932
      %v11934 = vpop.f32.mrf.mxu0
      %v11935 = vadd.f32 %v11846, %v11934
      %11936 = vmatmul.bf16.gmra.mxu0 %v9711
      %v11937 = vpop.f32.mrf.mxu0
      %v11938 = vadd.f32 %v11849, %v11937
      %v11939 = vpop.f32.mrf.mxu0
      %v11940 = vadd.f32 %v11851, %v11939
      %11941 = vmatmul.bf16.gmra.mxu0 %v9720
      %v11942 = vpop.f32.mrf.mxu0
      %v11943 = vadd.f32 %v11854, %v11942
      %v11944 = vpop.f32.mrf.mxu0
      %v11945 = vadd.f32 %v11856, %v11944
      %11946 = vmatmul.bf16.gmra.mxu0 %v9729
      %v11947 = vpop.f32.mrf.mxu0
      %v11948 = vadd.f32 %v11859, %v11947
      %v11949 = vpop.f32.mrf.mxu0
      %v11950 = vadd.f32 %v11861, %v11949
      %11951 = vmatmul.bf16.gmra.mxu0 %v9738
      %v11952 = vpop.f32.mrf.mxu0
      %v11953 = vadd.f32 %v11864, %v11952
      %v11954 = vpop.f32.mrf.mxu0
      %v11955 = vadd.f32 %v11866, %v11954
      %11956 = vmatmul.bf16.gmra.mxu0 %v9747
      %v11957 = vpop.f32.mrf.mxu0
      %v11958 = vadd.f32 %v11869, %v11957
      %v11959 = vpop.f32.mrf.mxu0
      %v11960 = vadd.f32 %v11871, %v11959
      %11961 = vmatmul.bf16.gmra.mxu0 %v9756
      %v11962 = vpop.f32.mrf.mxu0
      %v11963 = vadd.f32 %v11874, %v11962
      %v11964 = vpop.f32.mrf.mxu0
      %v11965 = vadd.f32 %v11876, %v11964
      %11966 = vmatmul.bf16.gmra.mxu0 %v9765
      %v11967 = vpop.f32.mrf.mxu0
      %v11968 = vadd.f32 %v11879, %v11967
      %v11969 = vpop.f32.mrf.mxu0
      %v11970 = vadd.f32 %v11881, %v11969
      %11971 = vmatmul.bf16.gmra.mxu0 %v9774
      %v11972 = vpop.f32.mrf.mxu0
      %v11973 = vadd.f32 %v11884, %v11972
      %v11974 = vpop.f32.mrf.mxu0
      %v11975 = vadd.f32 %v11886, %v11974
      %11976 = vdwg.mxu0
      %11977 = vmatpush.bf16.msra.mxu0 %v10465
      %11978 = vmatpush.bf16.msra.mxu0 %v10463
      %11979 = vmatpush.bf16.msra.mxu0 %v10461
      %11980 = vmatpush.bf16.msra.mxu0 %v10459
      %11981 = vmatpush.bf16.msra.mxu0 %v10457
      %11982 = vmatpush.bf16.msra.mxu0 %v10455
      %11983 = vmatpush.bf16.msra.mxu0 %v10453
      %11984 = vmatpush.bf16.msra.mxu0 %v10451
      %11985 = vmatmul.bf16.gmra.mxu0 %v9640
      %v11986 = vpop.f32.mrf.mxu0
      %v11987 = vadd.f32 %v11898, %v11986
      %v11988 = vpop.f32.mrf.mxu0
      %v11989 = vadd.f32 %v11900, %v11988
      %11990 = vmatmul.bf16.gmra.mxu0 %v9649
      %v11991 = vpop.f32.mrf.mxu0
      %v11992 = vadd.f32 %v11903, %v11991
      %v11993 = vpop.f32.mrf.mxu0
      %v11994 = vadd.f32 %v11905, %v11993
      %11995 = vmatmul.bf16.gmra.mxu0 %v9658
      %v11996 = vpop.f32.mrf.mxu0
      %v11997 = vadd.f32 %v11908, %v11996
      %v11998 = vpop.f32.mrf.mxu0
      %v11999 = vadd.f32 %v11910, %v11998
      %12000 = vmatmul.bf16.gmra.mxu0 %v9667
      %v12001 = vpop.f32.mrf.mxu0
      %v12002 = vadd.f32 %v11913, %v12001
      %v12003 = vpop.f32.mrf.mxu0
      %v12004 = vadd.f32 %v11915, %v12003
      %12005 = vmatmul.bf16.gmra.mxu0 %v9676
      %v12006 = vpop.f32.mrf.mxu0
      %v12007 = vadd.f32 %v11918, %v12006
      %v12008 = vpop.f32.mrf.mxu0
      %v12009 = vadd.f32 %v11920, %v12008
      %12010 = vmatmul.bf16.gmra.mxu0 %v9685
      %v12011 = vpop.f32.mrf.mxu0
      %v12012 = vadd.f32 %v11923, %v12011
      %v12013 = vpop.f32.mrf.mxu0
      %v12014 = vadd.f32 %v11925, %v12013
      %12015 = vmatmul.bf16.gmra.mxu0 %v9694
      %v12016 = vpop.f32.mrf.mxu0
      %v12017 = vadd.f32 %v11928, %v12016
      %v12018 = vpop.f32.mrf.mxu0
      %v12019 = vadd.f32 %v11930, %v12018
      %12020 = vmatmul.bf16.gmra.mxu0 %v9703
      %v12021 = vpop.f32.mrf.mxu0
      %v12022 = vadd.f32 %v11933, %v12021
      %v12023 = vpop.f32.mrf.mxu0
      %v12024 = vadd.f32 %v11935, %v12023
      %12025 = vmatmul.bf16.gmra.mxu0 %v9712
      %v12026 = vpop.f32.mrf.mxu0
      %v12027 = vadd.f32 %v11938, %v12026
      %v12028 = vpop.f32.mrf.mxu0
      %v12029 = vadd.f32 %v11940, %v12028
      %12030 = vmatmul.bf16.gmra.mxu0 %v9721
      %v12031 = vpop.f32.mrf.mxu0
      %v12032 = vadd.f32 %v11943, %v12031
      %v12033 = vpop.f32.mrf.mxu0
      %v12034 = vadd.f32 %v11945, %v12033
      %12035 = vmatmul.bf16.gmra.mxu0 %v9730
      %v12036 = vpop.f32.mrf.mxu0
      %v12037 = vadd.f32 %v11948, %v12036
      %v12038 = vpop.f32.mrf.mxu0
      %v12039 = vadd.f32 %v11950, %v12038
      %12040 = vmatmul.bf16.gmra.mxu0 %v9739
      %v12041 = vpop.f32.mrf.mxu0
      %v12042 = vadd.f32 %v11953, %v12041
      %v12043 = vpop.f32.mrf.mxu0
      %v12044 = vadd.f32 %v11955, %v12043
      %12045 = vmatmul.bf16.gmra.mxu0 %v9748
      %v12046 = vpop.f32.mrf.mxu0
      %v12047 = vadd.f32 %v11958, %v12046
      %v12048 = vpop.f32.mrf.mxu0
      %v12049 = vadd.f32 %v11960, %v12048
      %12050 = vmatmul.bf16.gmra.mxu0 %v9757
      %v12051 = vpop.f32.mrf.mxu0
      %v12052 = vadd.f32 %v11963, %v12051
      %v12053 = vpop.f32.mrf.mxu0
      %v12054 = vadd.f32 %v11965, %v12053
      %12055 = vmatmul.bf16.gmra.mxu0 %v9766
      %v12056 = vpop.f32.mrf.mxu0
      %v12057 = vadd.f32 %v11968, %v12056
      %v12058 = vpop.f32.mrf.mxu0
      %v12059 = vadd.f32 %v11970, %v12058
      %12060 = vmatmul.bf16.gmra.mxu0 %v9775
      %v12061 = vpop.f32.mrf.mxu0
      %v12062 = vadd.f32 %v11973, %v12061
      %v12063 = vpop.f32.mrf.mxu0
      %v12064 = vadd.f32 %v11975, %v12063
      %12065 = vdwg.mxu0
      %12066 = vmatpush.bf16.msra.mxu0 %v10481
      %12067 = vmatpush.bf16.msra.mxu0 %v10479
      %12068 = vmatpush.bf16.msra.mxu0 %v10477
      %12069 = vmatpush.bf16.msra.mxu0 %v10475
      %12070 = vmatpush.bf16.msra.mxu0 %v10473
      %12071 = vmatpush.bf16.msra.mxu0 %v10471
      %12072 = vmatpush.bf16.msra.mxu0 %v10469
      %12073 = vmatpush.bf16.msra.mxu0 %v10467
      %12074 = vmatmul.bf16.gmra.mxu0 %v9641
      %v12075 = vpop.f32.mrf.mxu0
      %v12076 = vadd.f32 %v11987, %v12075
      %v12077 = vpop.f32.mrf.mxu0
      %v12078 = vadd.f32 %v11989, %v12077
      %12079 = vmatmul.bf16.gmra.mxu0 %v9650
      %v12080 = vpop.f32.mrf.mxu0
      %v12081 = vadd.f32 %v11992, %v12080
      %v12082 = vpop.f32.mrf.mxu0
      %v12083 = vadd.f32 %v11994, %v12082
      %12084 = vmatmul.bf16.gmra.mxu0 %v9659
      %v12085 = vpop.f32.mrf.mxu0
      %v12086 = vadd.f32 %v11997, %v12085
      %v12087 = vpop.f32.mrf.mxu0
      %v12088 = vadd.f32 %v11999, %v12087
      %12089 = vmatmul.bf16.gmra.mxu0 %v9668
      %v12090 = vpop.f32.mrf.mxu0
      %v12091 = vadd.f32 %v12002, %v12090
      %v12092 = vpop.f32.mrf.mxu0
      %v12093 = vadd.f32 %v12004, %v12092
      %12094 = vmatmul.bf16.gmra.mxu0 %v9677
      %v12095 = vpop.f32.mrf.mxu0
      %v12096 = vadd.f32 %v12007, %v12095
      %v12097 = vpop.f32.mrf.mxu0
      %v12098 = vadd.f32 %v12009, %v12097
      %12099 = vmatmul.bf16.gmra.mxu0 %v9686
      %v12100 = vpop.f32.mrf.mxu0
      %v12101 = vadd.f32 %v12012, %v12100
      %v12102 = vpop.f32.mrf.mxu0
      %v12103 = vadd.f32 %v12014, %v12102
      %12104 = vmatmul.bf16.gmra.mxu0 %v9695
      %v12105 = vpop.f32.mrf.mxu0
      %v12106 = vadd.f32 %v12017, %v12105
      %v12107 = vpop.f32.mrf.mxu0
      %v12108 = vadd.f32 %v12019, %v12107
      %12109 = vmatmul.bf16.gmra.mxu0 %v9704
      %v12110 = vpop.f32.mrf.mxu0
      %v12111 = vadd.f32 %v12022, %v12110
      %v12112 = vpop.f32.mrf.mxu0
      %v12113 = vadd.f32 %v12024, %v12112
      %12114 = vmatmul.bf16.gmra.mxu0 %v9713
      %v12115 = vpop.f32.mrf.mxu0
      %v12116 = vadd.f32 %v12027, %v12115
      %v12117 = vpop.f32.mrf.mxu0
      %v12118 = vadd.f32 %v12029, %v12117
      %12119 = vmatmul.bf16.gmra.mxu0 %v9722
      %v12120 = vpop.f32.mrf.mxu0
      %v12121 = vadd.f32 %v12032, %v12120
      %v12122 = vpop.f32.mrf.mxu0
      %v12123 = vadd.f32 %v12034, %v12122
      %12124 = vmatmul.bf16.gmra.mxu0 %v9731
      %v12125 = vpop.f32.mrf.mxu0
      %v12126 = vadd.f32 %v12037, %v12125
      %v12127 = vpop.f32.mrf.mxu0
      %v12128 = vadd.f32 %v12039, %v12127
      %12129 = vmatmul.bf16.gmra.mxu0 %v9740
      %v12130 = vpop.f32.mrf.mxu0
      %v12131 = vadd.f32 %v12042, %v12130
      %v12132 = vpop.f32.mrf.mxu0
      %v12133 = vadd.f32 %v12044, %v12132
      %12134 = vmatmul.bf16.gmra.mxu0 %v9749
      %v12135 = vpop.f32.mrf.mxu0
      %v12136 = vadd.f32 %v12047, %v12135
      %v12137 = vpop.f32.mrf.mxu0
      %v12138 = vadd.f32 %v12049, %v12137
      %12139 = vmatmul.bf16.gmra.mxu0 %v9758
      %v12140 = vpop.f32.mrf.mxu0
      %v12141 = vadd.f32 %v12052, %v12140
      %v12142 = vpop.f32.mrf.mxu0
      %v12143 = vadd.f32 %v12054, %v12142
      %12144 = vmatmul.bf16.gmra.mxu0 %v9767
      %v12145 = vpop.f32.mrf.mxu0
      %v12146 = vadd.f32 %v12057, %v12145
      %v12147 = vpop.f32.mrf.mxu0
      %v12148 = vadd.f32 %v12059, %v12147
      %12149 = vmatmul.bf16.gmra.mxu0 %v9776
      %v12150 = vpop.f32.mrf.mxu0
      %v12151 = vadd.f32 %v12062, %v12150
      %v12152 = vpop.f32.mrf.mxu0
      %v12153 = vadd.f32 %v12064, %v12152
      %12154 = vdwg.mxu0
      %12155 = vmatpush.bf16.msra.mxu0 %v10497
      %12156 = vmatpush.bf16.msra.mxu0 %v10495
      %12157 = vmatpush.bf16.msra.mxu0 %v10493
      %12158 = vmatpush.bf16.msra.mxu0 %v10491
      %12159 = vmatpush.bf16.msra.mxu0 %v10489
      %12160 = vmatpush.bf16.msra.mxu0 %v10487
      %12161 = vmatpush.bf16.msra.mxu0 %v10485
      %12162 = vmatpush.bf16.msra.mxu0 %v10483
      %12163 = vmatmul.bf16.gmra.mxu0 %v9642
      %v12164 = vpop.f32.mrf.mxu0
      %v12165 = vadd.f32 %v12076, %v12164
      %v12166 = vpop.f32.mrf.mxu0
      %v12167 = vadd.f32 %v12078, %v12166
      %12168 = vmatmul.bf16.gmra.mxu0 %v9651
      %v12169 = vpop.f32.mrf.mxu0
      %v12170 = vadd.f32 %v12081, %v12169
      %v12171 = vpop.f32.mrf.mxu0
      %v12172 = vadd.f32 %v12083, %v12171
      %12173 = vmatmul.bf16.gmra.mxu0 %v9660
      %v12174 = vpop.f32.mrf.mxu0
      %v12175 = vadd.f32 %v12086, %v12174
      %v12176 = vpop.f32.mrf.mxu0
      %v12177 = vadd.f32 %v12088, %v12176
      %12178 = vmatmul.bf16.gmra.mxu0 %v9669
      %v12179 = vpop.f32.mrf.mxu0
      %v12180 = vadd.f32 %v12091, %v12179
      %v12181 = vpop.f32.mrf.mxu0
      %v12182 = vadd.f32 %v12093, %v12181
      %12183 = vmatmul.bf16.gmra.mxu0 %v9678
      %v12184 = vpop.f32.mrf.mxu0
      %v12185 = vadd.f32 %v12096, %v12184
      %v12186 = vpop.f32.mrf.mxu0
      %v12187 = vadd.f32 %v12098, %v12186
      %12188 = vmatmul.bf16.gmra.mxu0 %v9687
      %v12189 = vpop.f32.mrf.mxu0
      %v12190 = vadd.f32 %v12101, %v12189
      %v12191 = vpop.f32.mrf.mxu0
      %v12192 = vadd.f32 %v12103, %v12191
      %12193 = vmatmul.bf16.gmra.mxu0 %v9696
      %v12194 = vpop.f32.mrf.mxu0
      %v12195 = vadd.f32 %v12106, %v12194
      %v12196 = vpop.f32.mrf.mxu0
      %v12197 = vadd.f32 %v12108, %v12196
      %12198 = vmatmul.bf16.gmra.mxu0 %v9705
      %v12199 = vpop.f32.mrf.mxu0
      %v12200 = vadd.f32 %v12111, %v12199
      %v12201 = vpop.f32.mrf.mxu0
      %v12202 = vadd.f32 %v12113, %v12201
      %12203 = vmatmul.bf16.gmra.mxu0 %v9714
      %v12204 = vpop.f32.mrf.mxu0
      %v12205 = vadd.f32 %v12116, %v12204
      %v12206 = vpop.f32.mrf.mxu0
      %v12207 = vadd.f32 %v12118, %v12206
      %12208 = vmatmul.bf16.gmra.mxu0 %v9723
      %v12209 = vpop.f32.mrf.mxu0
      %v12210 = vadd.f32 %v12121, %v12209
      %v12211 = vpop.f32.mrf.mxu0
      %v12212 = vadd.f32 %v12123, %v12211
      %12213 = vmatmul.bf16.gmra.mxu0 %v9732
      %v12214 = vpop.f32.mrf.mxu0
      %v12215 = vadd.f32 %v12126, %v12214
      %v12216 = vpop.f32.mrf.mxu0
      %v12217 = vadd.f32 %v12128, %v12216
      %12218 = vmatmul.bf16.gmra.mxu0 %v9741
      %v12219 = vpop.f32.mrf.mxu0
      %v12220 = vadd.f32 %v12131, %v12219
      %v12221 = vpop.f32.mrf.mxu0
      %v12222 = vadd.f32 %v12133, %v12221
      %12223 = vmatmul.bf16.gmra.mxu0 %v9750
      %v12224 = vpop.f32.mrf.mxu0
      %v12225 = vadd.f32 %v12136, %v12224
      %v12226 = vpop.f32.mrf.mxu0
      %v12227 = vadd.f32 %v12138, %v12226
      %12228 = vmatmul.bf16.gmra.mxu0 %v9759
      %v12229 = vpop.f32.mrf.mxu0
      %v12230 = vadd.f32 %v12141, %v12229
      %v12231 = vpop.f32.mrf.mxu0
      %v12232 = vadd.f32 %v12143, %v12231
      %12233 = vmatmul.bf16.gmra.mxu0 %v9768
      %v12234 = vpop.f32.mrf.mxu0
      %v12235 = vadd.f32 %v12146, %v12234
      %v12236 = vpop.f32.mrf.mxu0
      %v12237 = vadd.f32 %v12148, %v12236
      %12238 = vmatmul.bf16.gmra.mxu0 %v9777
      %v12239 = vpop.f32.mrf.mxu0
      %v12240 = vadd.f32 %v12151, %v12239
      %v12241 = vpop.f32.mrf.mxu0
      %v12242 = vadd.f32 %v12153, %v12241
      %12243 = vdwg.mxu0
      %v12244 = vmax.f32 %v11364, 0.0
      %v12245 = vmax.f32 %v12165, 0.0
      %v12246 = vmax.f32 %v11366, 0.0
      %v12247 = vmax.f32 %v12167, 0.0
      %v12248 = vmax.f32 %v11369, 0.0
      %v12249 = vmax.f32 %v12170, 0.0
      %v12250 = vmax.f32 %v11371, 0.0
      %v12251 = vmax.f32 %v12172, 0.0
      %v12252 = vmax.f32 %v11374, 0.0
      %v12253 = vmax.f32 %v12175, 0.0
      %v12254 = vmax.f32 %v11376, 0.0
      %v12255 = vmax.f32 %v12177, 0.0
      %v12256 = vmax.f32 %v11379, 0.0
      %v12257 = vmax.f32 %v12180, 0.0
      %v12258 = vmax.f32 %v11381, 0.0
      %v12259 = vmax.f32 %v12182, 0.0
      %v12260 = vmax.f32 %v11384, 0.0
      %v12261 = vmax.f32 %v12185, 0.0
      %v12262 = vmax.f32 %v11386, 0.0
      %v12263 = vmax.f32 %v12187, 0.0
      %v12264 = vmax.f32 %v11389, 0.0
      %v12265 = vmax.f32 %v12190, 0.0
      %v12266 = vmax.f32 %v11391, 0.0
      %v12267 = vmax.f32 %v12192, 0.0
      %v12268 = vmax.f32 %v11394, 0.0
      %v12269 = vmax.f32 %v12195, 0.0
      %v12270 = vmax.f32 %v11396, 0.0
      %v12271 = vmax.f32 %v12197, 0.0
      %v12272 = vmax.f32 %v11399, 0.0
      %v12273 = vmax.f32 %v12200, 0.0
      %v12274 = vmax.f32 %v11401, 0.0
      %v12275 = vmax.f32 %v12202, 0.0
      %v12276 = vmax.f32 %v11404, 0.0
      %v12277 = vmax.f32 %v12205, 0.0
      %v12278 = vmax.f32 %v11406, 0.0
      %v12279 = vmax.f32 %v12207, 0.0
      %v12280 = vmax.f32 %v11409, 0.0
      %v12281 = vmax.f32 %v12210, 0.0
      %v12282 = vmax.f32 %v11411, 0.0
      %v12283 = vmax.f32 %v12212, 0.0
      %v12284 = vmax.f32 %v11414, 0.0
      %v12285 = vmax.f32 %v12215, 0.0
      %v12286 = vmax.f32 %v11416, 0.0
      %v12287 = vmax.f32 %v12217, 0.0
      %v12288 = vmax.f32 %v11419, 0.0
      %v12289 = vmax.f32 %v12220, 0.0
      %v12290 = vmax.f32 %v11421, 0.0
      %v12291 = vmax.f32 %v12222, 0.0
      %v12292 = vmax.f32 %v11424, 0.0
      %v12293 = vmax.f32 %v12225, 0.0
      %v12294 = vmax.f32 %v11426, 0.0
      %v12295 = vmax.f32 %v12227, 0.0
      %v12296 = vmax.f32 %v11429, 0.0
      %v12297 = vmax.f32 %v12230, 0.0
      %v12298 = vmax.f32 %v11431, 0.0
      %v12299 = vmax.f32 %v12232, 0.0
      %v12300 = vmax.f32 %v11434, 0.0
      %v12301 = vmax.f32 %v12235, 0.0
      %v12302 = vmax.f32 %v11436, 0.0
      %v12303 = vmax.f32 %v12237, 0.0
      %v12304 = vmax.f32 %v11439, 0.0
      %v12305 = vmax.f32 %v12240, 0.0
      %v12306 = vmax.f32 %v11441, 0.0
      %v12307 = vmax.f32 %v12242, 0.0
      %v12308 = vld [vmem:[%s7] sm:$0x3]
      %v12310 = vperm.slane %v12308, 0
      %v12311 = vperm.slane %v12308, 1
      %v12314 = vmul.f32 %v12244, %v12310
      %v12315 = vmul.f32 %v12245, %v12311
      %v12316 = vmul.f32 %v12246, %v12310
      %v12317 = vmul.f32 %v12247, %v12311
      %v12318 = vmul.f32 %v12248, %v12310
      %v12319 = vmul.f32 %v12249, %v12311
      %v12320 = vmul.f32 %v12250, %v12310
      %v12321 = vmul.f32 %v12251, %v12311
      %v12322 = vmul.f32 %v12252, %v12310
      %v12323 = vmul.f32 %v12253, %v12311
      %v12324 = vmul.f32 %v12254, %v12310
      %v12325 = vmul.f32 %v12255, %v12311
      %v12326 = vmul.f32 %v12256, %v12310
      %v12327 = vmul.f32 %v12257, %v12311
      %v12328 = vmul.f32 %v12258, %v12310
      %v12329 = vmul.f32 %v12259, %v12311
      %v12330 = vmul.f32 %v12260, %v12310
      %v12331 = vmul.f32 %v12261, %v12311
      %v12332 = vmul.f32 %v12262, %v12310
      %v12333 = vmul.f32 %v12263, %v12311
      %v12334 = vmul.f32 %v12264, %v12310
      %v12335 = vmul.f32 %v12265, %v12311
      %v12336 = vmul.f32 %v12266, %v12310
      %v12337 = vmul.f32 %v12267, %v12311
      %v12338 = vmul.f32 %v12268, %v12310
      %v12339 = vmul.f32 %v12269, %v12311
      %v12340 = vmul.f32 %v12270, %v12310
      %v12341 = vmul.f32 %v12271, %v12311
      %v12342 = vmul.f32 %v12272, %v12310
      %v12343 = vmul.f32 %v12273, %v12311
      %v12344 = vmul.f32 %v12274, %v12310
      %v12345 = vmul.f32 %v12275, %v12311
      %v12346 = vmul.f32 %v12276, %v12310
      %v12347 = vmul.f32 %v12277, %v12311
      %v12348 = vmul.f32 %v12278, %v12310
      %v12349 = vmul.f32 %v12279, %v12311
      %v12350 = vmul.f32 %v12280, %v12310
      %v12351 = vmul.f32 %v12281, %v12311
      %v12352 = vmul.f32 %v12282, %v12310
      %v12353 = vmul.f32 %v12283, %v12311
      %v12354 = vmul.f32 %v12284, %v12310
      %v12355 = vmul.f32 %v12285, %v12311
      %v12356 = vmul.f32 %v12286, %v12310
      %v12357 = vmul.f32 %v12287, %v12311
      %v12358 = vmul.f32 %v12288, %v12310
      %v12359 = vmul.f32 %v12289, %v12311
      %v12360 = vmul.f32 %v12290, %v12310
      %v12361 = vmul.f32 %v12291, %v12311
      %v12362 = vmul.f32 %v12292, %v12310
      %v12363 = vmul.f32 %v12293, %v12311
      %v12364 = vmul.f32 %v12294, %v12310
      %v12365 = vmul.f32 %v12295, %v12311
      %v12366 = vmul.f32 %v12296, %v12310
      %v12367 = vmul.f32 %v12297, %v12311
      %v12368 = vmul.f32 %v12298, %v12310
      %v12369 = vmul.f32 %v12299, %v12311
      %v12370 = vmul.f32 %v12300, %v12310
      %v12371 = vmul.f32 %v12301, %v12311
      %v12372 = vmul.f32 %v12302, %v12310
      %v12373 = vmul.f32 %v12303, %v12311
      %v12374 = vmul.f32 %v12304, %v12310
      %v12375 = vmul.f32 %v12305, %v12311
      %v12376 = vmul.f32 %v12306, %v12310
      %v12377 = vmul.f32 %v12307, %v12311
      %v12378 = vadd.f32 %v12314, %v12315
      %12379 = vadd.xlane.f32.xlu0 %v12378
      %v12380 = vpop.xlane.xlu0 %12379
      %v12381 = vadd.f32 %v12316, %v12317
      %12382 = vadd.xlane.f32.xlu0 %v12381
      %v12383 = vpop.xlane.xlu0 %12382
      %v12384 = vadd.f32 %v12318, %v12319
      %12385 = vadd.xlane.f32.xlu0 %v12384
      %v12386 = vpop.xlane.xlu0 %12385
      %v12387 = vadd.f32 %v12320, %v12321
      %12388 = vadd.xlane.f32.xlu0 %v12387
      %v12389 = vpop.xlane.xlu0 %12388
      %v12390 = vadd.f32 %v12322, %v12323
      %12391 = vadd.xlane.f32.xlu0 %v12390
      %v12392 = vpop.xlane.xlu0 %12391
      %v12393 = vadd.f32 %v12324, %v12325
      %12394 = vadd.xlane.f32.xlu0 %v12393
      %v12395 = vpop.xlane.xlu0 %12394
      %v12396 = vadd.f32 %v12326, %v12327
      %12397 = vadd.xlane.f32.xlu0 %v12396
      %v12398 = vpop.xlane.xlu0 %12397
      %v12399 = vadd.f32 %v12328, %v12329
      %12400 = vadd.xlane.f32.xlu0 %v12399
      %v12401 = vpop.xlane.xlu0 %12400
      %v12402 = vadd.f32 %v12330, %v12331
      %12403 = vadd.xlane.f32.xlu0 %v12402
      %v12404 = vpop.xlane.xlu0 %12403
      %v12405 = vadd.f32 %v12332, %v12333
      %12406 = vadd.xlane.f32.xlu0 %v12405
      %v12407 = vpop.xlane.xlu0 %12406
      %v12408 = vadd.f32 %v12334, %v12335
      %12409 = vadd.xlane.f32.xlu0 %v12408
      %v12410 = vpop.xlane.xlu0 %12409
      %v12411 = vadd.f32 %v12336, %v12337
      %12412 = vadd.xlane.f32.xlu0 %v12411
      %v12413 = vpop.xlane.xlu0 %12412
      %v12414 = vadd.f32 %v12338, %v12339
      %12415 = vadd.xlane.f32.xlu0 %v12414
      %v12416 = vpop.xlane.xlu0 %12415
      %v12417 = vadd.f32 %v12340, %v12341
      %12418 = vadd.xlane.f32.xlu0 %v12417
      %v12419 = vpop.xlane.xlu0 %12418
      %v12420 = vadd.f32 %v12342, %v12343
      %12421 = vadd.xlane.f32.xlu0 %v12420
      %v12422 = vpop.xlane.xlu0 %12421
      %v12423 = vadd.f32 %v12344, %v12345
      %12424 = vadd.xlane.f32.xlu0 %v12423
      %v12425 = vpop.xlane.xlu0 %12424
      %v12426 = vadd.f32 %v12346, %v12347
      %12427 = vadd.xlane.f32.xlu0 %v12426
      %v12428 = vpop.xlane.xlu0 %12427
      %v12429 = vadd.f32 %v12348, %v12349
      %12430 = vadd.xlane.f32.xlu0 %v12429
      %v12431 = vpop.xlane.xlu0 %12430
      %v12432 = vadd.f32 %v12350, %v12351
      %12433 = vadd.xlane.f32.xlu0 %v12432
      %v12434 = vpop.xlane.xlu0 %12433
      %v12435 = vadd.f32 %v12352, %v12353
      %12436 = vadd.xlane.f32.xlu0 %v12435
      %v12437 = vpop.xlane.xlu0 %12436
      %v12438 = vadd.f32 %v12354, %v12355
      %12439 = vadd.xlane.f32.xlu0 %v12438
      %v12440 = vpop.xlane.xlu0 %12439
      %v12441 = vadd.f32 %v12356, %v12357
      %12442 = vadd.xlane.f32.xlu0 %v12441
      %v12443 = vpop.xlane.xlu0 %12442
      %v12444 = vadd.f32 %v12358, %v12359
      %12445 = vadd.xlane.f32.xlu0 %v12444
      %v12446 = vpop.xlane.xlu0 %12445
      %v12447 = vadd.f32 %v12360, %v12361
      %12448 = vadd.xlane.f32.xlu0 %v12447
      %v12449 = vpop.xlane.xlu0 %12448
      %v12450 = vadd.f32 %v12362, %v12363
      %12451 = vadd.xlane.f32.xlu0 %v12450
      %v12452 = vpop.xlane.xlu0 %12451
      %v12453 = vadd.f32 %v12364, %v12365
      %12454 = vadd.xlane.f32.xlu0 %v12453
      %v12455 = vpop.xlane.xlu0 %12454
      %v12456 = vadd.f32 %v12366, %v12367
      %12457 = vadd.xlane.f32.xlu0 %v12456
      %v12458 = vpop.xlane.xlu0 %12457
      %v12459 = vadd.f32 %v12368, %v12369
      %12460 = vadd.xlane.f32.xlu0 %v12459
      %v12461 = vpop.xlane.xlu0 %12460
      %v12462 = vadd.f32 %v12370, %v12371
      %12463 = vadd.xlane.f32.xlu0 %v12462
      %v12464 = vpop.xlane.xlu0 %12463
      %v12465 = vadd.f32 %v12372, %v12373
      %12466 = vadd.xlane.f32.xlu0 %v12465
      %v12467 = vpop.xlane.xlu0 %12466
      %v12468 = vadd.f32 %v12374, %v12375
      %12469 = vadd.xlane.f32.xlu0 %v12468
      %v12470 = vpop.xlane.xlu0 %12469
      %v12471 = vadd.f32 %v12376, %v12377
      %12472 = vadd.xlane.f32.xlu0 %v12471
      %v12473 = vpop.xlane.xlu0 %12472
      %v12474 = vld [vmem:[#allocation6] sm:$0x1]
      %v12476 = vperm.slane %v12474, 0
      %v12478 = vadd.f32 %v12380, %v12476
      %v12479 = vadd.f32 %v12383, %v12476
      %v12480 = vadd.f32 %v12386, %v12476
      %v12481 = vadd.f32 %v12389, %v12476
      %v12482 = vadd.f32 %v12392, %v12476
      %v12483 = vadd.f32 %v12395, %v12476
      %v12484 = vadd.f32 %v12398, %v12476
      %v12485 = vadd.f32 %v12401, %v12476
      %v12486 = vadd.f32 %v12404, %v12476
      %v12487 = vadd.f32 %v12407, %v12476
      %v12488 = vadd.f32 %v12410, %v12476
      %v12489 = vadd.f32 %v12413, %v12476
      %v12490 = vadd.f32 %v12416, %v12476
      %v12491 = vadd.f32 %v12419, %v12476
      %v12492 = vadd.f32 %v12422, %v12476
      %v12493 = vadd.f32 %v12425, %v12476
      %v12494 = vadd.f32 %v12428, %v12476
      %v12495 = vadd.f32 %v12431, %v12476
      %v12496 = vadd.f32 %v12434, %v12476
      %v12497 = vadd.f32 %v12437, %v12476
      %v12498 = vadd.f32 %v12440, %v12476
      %v12499 = vadd.f32 %v12443, %v12476
      %v12500 = vadd.f32 %v12446, %v12476
      %v12501 = vadd.f32 %v12449, %v12476
      %v12502 = vadd.f32 %v12452, %v12476
      %v12503 = vadd.f32 %v12455, %v12476
      %v12504 = vadd.f32 %v12458, %v12476
      %v12505 = vadd.f32 %v12461, %v12476
      %v12506 = vadd.f32 %v12464, %v12476
      %v12507 = vadd.f32 %v12467, %v12476
      %v12508 = vadd.f32 %v12470, %v12476
      %v12509 = vadd.f32 %v12473, %v12476
      %v12510 = vadd.f32 %v12478, 1.0
      %v12511 = vadd.f32 %v12479, 1.0
      %v12512 = vadd.f32 %v12480, 1.0
      %v12513 = vadd.f32 %v12481, 1.0
      %v12514 = vadd.f32 %v12482, 1.0
      %v12515 = vadd.f32 %v12483, 1.0
      %v12516 = vadd.f32 %v12484, 1.0
      %v12517 = vadd.f32 %v12485, 1.0
      %v12518 = vadd.f32 %v12486, 1.0
      %v12519 = vadd.f32 %v12487, 1.0
      %v12520 = vadd.f32 %v12488, 1.0
      %v12521 = vadd.f32 %v12489, 1.0
      %v12522 = vadd.f32 %v12490, 1.0
      %v12523 = vadd.f32 %v12491, 1.0
      %v12524 = vadd.f32 %v12492, 1.0
      %v12525 = vadd.f32 %v12493, 1.0
      %v12526 = vadd.f32 %v12494, 1.0
      %v12527 = vadd.f32 %v12495, 1.0
      %v12528 = vadd.f32 %v12496, 1.0
      %v12529 = vadd.f32 %v12497, 1.0
      %v12530 = vadd.f32 %v12498, 1.0
      %v12531 = vadd.f32 %v12499, 1.0
      %v12532 = vadd.f32 %v12500, 1.0
      %v12533 = vadd.f32 %v12501, 1.0
      %v12534 = vadd.f32 %v12502, 1.0
      %v12535 = vadd.f32 %v12503, 1.0
      %v12536 = vadd.f32 %v12504, 1.0
      %v12537 = vadd.f32 %v12505, 1.0
      %v12538 = vadd.f32 %v12506, 1.0
      %v12539 = vadd.f32 %v12507, 1.0
      %v12540 = vadd.f32 %v12508, 1.0
      %v12541 = vadd.f32 %v12509, 1.0
      %12543 = vset.pattern.permute.xlu0 0
      %12544 = vperm.xlu0 %12543, %v12510
      %v12545 = vpop.permute.xlu0 %12544
      %12548 = vset.pattern.permute.xlu0 0
      %12549 = vperm.xlu0 %12548, %v12511
      %v12550 = vpop.permute.xlu0 %12549
      %12553 = vset.pattern.permute.xlu0 0
      %12554 = vperm.xlu0 %12553, %v12512
      %v12555 = vpop.permute.xlu0 %12554
      %12558 = vset.pattern.permute.xlu0 0
      %12559 = vperm.xlu0 %12558, %v12513
      %v12560 = vpop.permute.xlu0 %12559
      %12563 = vset.pattern.permute.xlu0 0
      %12564 = vperm.xlu0 %12563, %v12514
      %v12565 = vpop.permute.xlu0 %12564
      %12568 = vset.pattern.permute.xlu0 0
      %12569 = vperm.xlu0 %12568, %v12515
      %v12570 = vpop.permute.xlu0 %12569
      %12573 = vset.pattern.permute.xlu0 0
      %12574 = vperm.xlu0 %12573, %v12516
      %v12575 = vpop.permute.xlu0 %12574
      %12578 = vset.pattern.permute.xlu0 0
      %12579 = vperm.xlu0 %12578, %v12517
      %v12580 = vpop.permute.xlu0 %12579
      %12583 = vset.pattern.permute.xlu0 0
      %12584 = vperm.xlu0 %12583, %v12518
      %v12585 = vpop.permute.xlu0 %12584
      %12588 = vset.pattern.permute.xlu0 0
      %12589 = vperm.xlu0 %12588, %v12519
      %v12590 = vpop.permute.xlu0 %12589
      %12593 = vset.pattern.permute.xlu0 0
      %12594 = vperm.xlu0 %12593, %v12520
      %v12595 = vpop.permute.xlu0 %12594
      %12598 = vset.pattern.permute.xlu0 0
      %12599 = vperm.xlu0 %12598, %v12521
      %v12600 = vpop.permute.xlu0 %12599
      %12603 = vset.pattern.permute.xlu0 0
      %12604 = vperm.xlu0 %12603, %v12522
      %v12605 = vpop.permute.xlu0 %12604
      %12608 = vset.pattern.permute.xlu0 0
      %12609 = vperm.xlu0 %12608, %v12523
      %v12610 = vpop.permute.xlu0 %12609
      %12613 = vset.pattern.permute.xlu0 0
      %12614 = vperm.xlu0 %12613, %v12524
      %v12615 = vpop.permute.xlu0 %12614
      %12618 = vset.pattern.permute.xlu0 0
      %12619 = vperm.xlu0 %12618, %v12525
      %v12620 = vpop.permute.xlu0 %12619
      %12623 = vset.pattern.permute.xlu0 0
      %12624 = vperm.xlu0 %12623, %v12526
      %v12625 = vpop.permute.xlu0 %12624
      %12628 = vset.pattern.permute.xlu0 0
      %12629 = vperm.xlu0 %12628, %v12527
      %v12630 = vpop.permute.xlu0 %12629
      %12633 = vset.pattern.permute.xlu0 0
      %12634 = vperm.xlu0 %12633, %v12528
      %v12635 = vpop.permute.xlu0 %12634
      %12638 = vset.pattern.permute.xlu0 0
      %12639 = vperm.xlu0 %12638, %v12529
      %v12640 = vpop.permute.xlu0 %12639
      %12643 = vset.pattern.permute.xlu0 0
      %12644 = vperm.xlu0 %12643, %v12530
      %v12645 = vpop.permute.xlu0 %12644
      %12648 = vset.pattern.permute.xlu0 0
      %12649 = vperm.xlu0 %12648, %v12531
      %v12650 = vpop.permute.xlu0 %12649
      %12653 = vset.pattern.permute.xlu0 0
      %12654 = vperm.xlu0 %12653, %v12532
      %v12655 = vpop.permute.xlu0 %12654
      %12658 = vset.pattern.permute.xlu0 0
      %12659 = vperm.xlu0 %12658, %v12533
      %v12660 = vpop.permute.xlu0 %12659
      %12663 = vset.pattern.permute.xlu0 0
      %12664 = vperm.xlu0 %12663, %v12534
      %v12665 = vpop.permute.xlu0 %12664
      %12668 = vset.pattern.permute.xlu0 0
      %12669 = vperm.xlu0 %12668, %v12535
      %v12670 = vpop.permute.xlu0 %12669
      %12673 = vset.pattern.permute.xlu0 0
      %12674 = vperm.xlu0 %12673, %v12536
      %v12675 = vpop.permute.xlu0 %12674
      %12678 = vset.pattern.permute.xlu0 0
      %12679 = vperm.xlu0 %12678, %v12537
      %v12680 = vpop.permute.xlu0 %12679
      %12683 = vset.pattern.permute.xlu0 0
      %12684 = vperm.xlu0 %12683, %v12538
      %v12685 = vpop.permute.xlu0 %12684
      %12688 = vset.pattern.permute.xlu0 0
      %12689 = vperm.xlu0 %12688, %v12539
      %v12690 = vpop.permute.xlu0 %12689
      %12693 = vset.pattern.permute.xlu0 0
      %12694 = vperm.xlu0 %12693, %v12540
      %v12695 = vpop.permute.xlu0 %12694
      %12698 = vset.pattern.permute.xlu0 0
      %12699 = vperm.xlu0 %12698, %v12541
      %v12700 = vpop.permute.xlu0 %12699
      %v12702 = vmul.f32 %v12244, %v12545
      %v12703 = vmul.f32 %v12245, %v12545
      %v12704 = vmul.f32 %v12246, %v12550
      %v12705 = vmul.f32 %v12247, %v12550
      %v12706 = vmul.f32 %v12248, %v12555
      %v12707 = vmul.f32 %v12249, %v12555
      %v12708 = vmul.f32 %v12250, %v12560
      %v12709 = vmul.f32 %v12251, %v12560
      %v12710 = vmul.f32 %v12252, %v12565
      %v12711 = vmul.f32 %v12253, %v12565
      %v12712 = vmul.f32 %v12254, %v12570
      %v12713 = vmul.f32 %v12255, %v12570
      %v12714 = vmul.f32 %v12256, %v12575
      %v12715 = vmul.f32 %v12257, %v12575
      %v12716 = vmul.f32 %v12258, %v12580
      %v12717 = vmul.f32 %v12259, %v12580
      %v12718 = vmul.f32 %v12260, %v12585
      %v12719 = vmul.f32 %v12261, %v12585
      %v12720 = vmul.f32 %v12262, %v12590
      %v12721 = vmul.f32 %v12263, %v12590
      %v12722 = vmul.f32 %v12264, %v12595
      %v12723 = vmul.f32 %v12265, %v12595
      %v12724 = vmul.f32 %v12266, %v12600
      %v12725 = vmul.f32 %v12267, %v12600
      %v12726 = vmul.f32 %v12268, %v12605
      %v12727 = vmul.f32 %v12269, %v12605
      %v12728 = vmul.f32 %v12270, %v12610
      %v12729 = vmul.f32 %v12271, %v12610
      %v12730 = vmul.f32 %v12272, %v12615
      %v12731 = vmul.f32 %v12273, %v12615
      %v12732 = vmul.f32 %v12274, %v12620
      %v12733 = vmul.f32 %v12275, %v12620
      %v12734 = vmul.f32 %v12276, %v12625
      %v12735 = vmul.f32 %v12277, %v12625
      %v12736 = vmul.f32 %v12278, %v12630
      %v12737 = vmul.f32 %v12279, %v12630
      %v12738 = vmul.f32 %v12280, %v12635
      %v12739 = vmul.f32 %v12281, %v12635
      %v12740 = vmul.f32 %v12282, %v12640
      %v12741 = vmul.f32 %v12283, %v12640
      %v12742 = vmul.f32 %v12284, %v12645
      %v12743 = vmul.f32 %v12285, %v12645
      %v12744 = vmul.f32 %v12286, %v12650
      %v12745 = vmul.f32 %v12287, %v12650
      %v12746 = vmul.f32 %v12288, %v12655
      %v12747 = vmul.f32 %v12289, %v12655
      %v12748 = vmul.f32 %v12290, %v12660
      %v12749 = vmul.f32 %v12291, %v12660
      %v12750 = vmul.f32 %v12292, %v12665
      %v12751 = vmul.f32 %v12293, %v12665
      %v12752 = vmul.f32 %v12294, %v12670
      %v12753 = vmul.f32 %v12295, %v12670
      %v12754 = vmul.f32 %v12296, %v12675
      %v12755 = vmul.f32 %v12297, %v12675
      %v12756 = vmul.f32 %v12298, %v12680
      %v12757 = vmul.f32 %v12299, %v12680
      %v12758 = vmul.f32 %v12300, %v12685
      %v12759 = vmul.f32 %v12301, %v12685
      %v12760 = vmul.f32 %v12302, %v12690
      %v12761 = vmul.f32 %v12303, %v12690
      %v12762 = vmul.f32 %v12304, %v12695
      %v12763 = vmul.f32 %v12305, %v12695
      %v12764 = vmul.f32 %v12306, %v12700
      %v12765 = vmul.f32 %v12307, %v12700
      %v12766 = vadd.f32 %v12702, %v12704
      %v12767 = vadd.f32 %v12766, %v12706
      %v12768 = vadd.f32 %v12767, %v12708
      %v12769 = vadd.f32 %v12768, %v12710
      %v12770 = vadd.f32 %v12769, %v12712
      %v12771 = vadd.f32 %v12770, %v12714
      %v12772 = vadd.f32 %v12771, %v12716
      %v12773 = vadd.f32 %v12772, %v12718
      %v12774 = vadd.f32 %v12773, %v12720
      %v12775 = vadd.f32 %v12774, %v12722
      %v12776 = vadd.f32 %v12775, %v12724
      %v12777 = vadd.f32 %v12776, %v12726
      %v12778 = vadd.f32 %v12777, %v12728
      %v12779 = vadd.f32 %v12778, %v12730
      %v12780 = vadd.f32 %v12779, %v12732
      %v12781 = vadd.f32 %v12780, %v12734
      %v12782 = vadd.f32 %v12781, %v12736
      %v12783 = vadd.f32 %v12782, %v12738
      %v12784 = vadd.f32 %v12783, %v12740
      %v12785 = vadd.f32 %v12784, %v12742
      %v12786 = vadd.f32 %v12785, %v12744
      %v12787 = vadd.f32 %v12786, %v12746
      %v12788 = vadd.f32 %v12787, %v12748
      %v12789 = vadd.f32 %v12788, %v12750
      %v12790 = vadd.f32 %v12789, %v12752
      %v12791 = vadd.f32 %v12790, %v12754
      %v12792 = vadd.f32 %v12791, %v12756
      %v12793 = vadd.f32 %v12792, %v12758
      %v12794 = vadd.f32 %v12793, %v12760
      %v12795 = vadd.f32 %v12794, %v12762
      %v12796 = vadd.f32 %v12795, %v12764
      %v12797 = vrot.slane %v12796, 4
      %v12798 = vadd.f32 %v12796, %v12797
      %v12799 = vrot.slane %v12798, 2
      %v12800 = vadd.f32 %v12798, %v12799
      %v12801 = vrot.slane %v12800, 1
      %v12802 = vadd.f32 %v12800, %v12801
      %v12803 = vadd.f32 %v12703, %v12705
      %v12804 = vadd.f32 %v12803, %v12707
      %v12805 = vadd.f32 %v12804, %v12709
      %v12806 = vadd.f32 %v12805, %v12711
      %v12807 = vadd.f32 %v12806, %v12713
      %v12808 = vadd.f32 %v12807, %v12715
      %v12809 = vadd.f32 %v12808, %v12717
      %v12810 = vadd.f32 %v12809, %v12719
      %v12811 = vadd.f32 %v12810, %v12721
      %v12812 = vadd.f32 %v12811, %v12723
      %v12813 = vadd.f32 %v12812, %v12725
      %v12814 = vadd.f32 %v12813, %v12727
      %v12815 = vadd.f32 %v12814, %v12729
      %v12816 = vadd.f32 %v12815, %v12731
      %v12817 = vadd.f32 %v12816, %v12733
      %v12818 = vadd.f32 %v12817, %v12735
      %v12819 = vadd.f32 %v12818, %v12737
      %v12820 = vadd.f32 %v12819, %v12739
      %v12821 = vadd.f32 %v12820, %v12741
      %v12822 = vadd.f32 %v12821, %v12743
      %v12823 = vadd.f32 %v12822, %v12745
      %v12824 = vadd.f32 %v12823, %v12747
      %v12825 = vadd.f32 %v12824, %v12749
      %v12826 = vadd.f32 %v12825, %v12751
      %v12827 = vadd.f32 %v12826, %v12753
      %v12828 = vadd.f32 %v12827, %v12755
      %v12829 = vadd.f32 %v12828, %v12757
      %v12830 = vadd.f32 %v12829, %v12759
      %v12831 = vadd.f32 %v12830, %v12761
      %v12832 = vadd.f32 %v12831, %v12763
      %v12833 = vadd.f32 %v12832, %v12765
      %v12834 = vrot.slane %v12833, 4
      %v12835 = vadd.f32 %v12833, %v12834
      %v12836 = vrot.slane %v12835, 2
      %v12837 = vadd.f32 %v12835, %v12836
      %v12838 = vrot.slane %v12837, 1
      %v12839 = vadd.f32 %v12837, %v12838
      %v12840 = vmul.f32 %v12802, 0.00390625
      %v12841 = vmul.f32 %v12839, 0.00390625
      %v12844 = vrot.slane %v12841, 7
      %vm12845 = vcmask 1040384
      %v12846 = vsel %vm12845, %v12840, %v12844
      %v12848 = vlaneseq
      %vm12849 = vcmp.ge.s32.totalorder %v12848, 0
      %vm12850 = vcmp.lt.s32.totalorder %v12848, 256
      %vm12851 = vmand %vm12849, %vm12850
      %12852 = vst.msk [vmem:[%s332] sm:$0x3] %vm12851, %v12846
      %p12853 = scmp.lt.s32.totalorder %s22, 1
      %s12854 = scalar_select %p12853, %s22, 1
      %s12855 = smul.addr %s12854, 2
      %s12856 = scalar_lea.vmem %s9, %s12855
      // Predicated region
      $region57: #{noisy_topk_gating_forward.1} parent=55 // pred_check
        %p12857 = pneg %p234
      $region58: #{noisy_topk_gating_forward.1} parent=55 // pred_check_branch
        %12859 = sbr.rel (%p12857) target = $region60
      $region59: #{noisy_topk_gating_forward.1} parent=55 // pred_region
        _
      $region60: #{noisy_topk_gating_forward.1} parent=55 // pred_fallthru
        _
    $region56: #{noisy_topk_gating_forward.1} parent=5 // pred_fallthru
      _
    %p12860 = scmp.le.s32.totalorder 2, %s17
    // Predicated region
    $region61: #{noisy_topk_gating_forward.1} parent=5 // pred_check
      %p12861 = pneg %p12860
    $region62: #{noisy_topk_gating_forward.1} parent=5 // pred_check_branch
      %12863 = sbr.rel (%p12861) target = $region64
    $region63: #{noisy_topk_gating_forward.1} parent=5 // pred_region
      %s12864 = ssub.s32 %s17, 2
      // Predicated region
      $region65: #{noisy_topk_gating_forward.1} parent=63 // pred_check
        %p12865 = pneg %p240
      $region66: #{noisy_topk_gating_forward.1} parent=63 // pred_check_branch
        %12867 = sbr.rel (%p12865) target = $region68
      $region67: #{noisy_topk_gating_forward.1} parent=63 // pred_region
        %p12868 = scmp.lt.s32.totalorder %s23, 1
        %s12869 = scalar_select %p12868, %s23, 1
        %s12870 = smul.addr %s12869, 2
        %s12871 = scalar_lea.vmem %s9, %s12870
      $region68: #{noisy_topk_gating_forward.1} parent=63 // pred_fallthru
        _
    $region64: #{noisy_topk_gating_forward.1} parent=5 // pred_fallthru
      _
  $region6: #{noisy_topk_gating_forward.1} parent=0 // loop_footer
    %s21 = sadd.s32 1, %s17
  $region7: #{noisy_topk_gating_forward.1} parent=0 // loop_footer_branch
    %16 = sbr.rel target = $region3
  $region8: #{noisy_topk_gating_forward.1} parent=0 // loop_exit
    _

</llo_original>
